<compile_context>
chip_gen: v7x
topology: tpu7x:2x2x1
jax: 0.10.0
libtpu: 0.0.40
codegen_flags: <defaults>
</compile_context>

<pallas_src>
import math
import functools
import numpy as np

import jax
import jax.numpy as jnp
from jax import lax
from jax.experimental import pallas as pl
from jax.experimental.pallas import tpu as pltpu

EMBED_DIM = 64
FFN_HIDDEN_DIM = 128
LATENT_DIM = 16
NHEAD = 4
NUM_LAYERS = 2
SEQ_LEN = 1900          # module default
SEQ_LEN_DEMO = 128      # small demo sequence length used in __main__

HEAD_DIM = EMBED_DIM // NHEAD


def build_positional_encoding(d_model, max_len):
    position = np.arange(0, max_len, dtype=np.float32)[:, None]
    div_term = np.exp(np.arange(0, d_model, 2, dtype=np.float32)
                      * -(np.log(10000.0) / d_model))
    pe = np.zeros((max_len, d_model), dtype=np.float32)
    pe[:, 0::2] = np.sin(position * div_term)
    pe[:, 1::2] = np.cos(position * div_term)
    return jnp.asarray(pe)                       # (S, E)


def _layer0_shared_prefix(pe, params):
    """Batch/z-independent layer-0 prefix computed once per call in plain XLA:
    x_shared = layer_norm(pe + causal_self_attn(pe), ln1[0])."""
    E, H, Dh = EMBED_DIM, NHEAD, HEAD_DIM
    S = pe.shape[0]
    w_in, b_in = params["sa_in_w"][0], params["sa_in_b"][0]      # (3E,E),(3E,)
    w_out, b_out = params["sa_out_w"][0], params["sa_out_b"][0]  # (E,E),(E,)
    qkv = pe @ w_in.T + b_in                                     # (S, 3E)
    q, k, v = jnp.split(qkv, 3, axis=-1)

    def heads(t):
        return t.reshape(S, H, Dh).transpose(1, 0, 2)            # (H, S, Dh)

    q, k, v = heads(q), heads(k), heads(v)
    scores = jnp.einsum("hqd,hkd->hqk", q, k) / math.sqrt(Dh)
    qi = jnp.arange(S)[:, None]
    ki = jnp.arange(S)[None, :]
    scores = jnp.where(ki <= qi, scores, -1e30)                  # causal mask
    p = jax.nn.softmax(scores, axis=-1)
    ctx = jnp.einsum("hqk,hkd->hqd", p, v).transpose(1, 0, 2).reshape(S, E)
    sa = ctx @ w_out.T + b_out
    x = pe + sa
    mu = jnp.mean(x, axis=-1, keepdims=True)
    var = jnp.mean(jnp.square(x - mu), axis=-1, keepdims=True)
    return ((x - mu) * lax.rsqrt(var + 1e-5) * params["ln1_w"][0]
            + params["ln1_b"][0])                                # (S, E) f32


def generator_kernel(z_ref, xs_ref,
                     emb_w_ref, emb_b_ref,
                     sa_q_w_ref, sa_q_b_ref, sa_k_w_ref, sa_k_b_ref,
                     sa_v_w_ref, sa_v_b_ref, sa_o_w_ref, sa_o_b_ref,
                     ca_v_w_ref, ca_v_b_ref, ca_o_w_ref, ca_o_b_ref,
                     ln1_w_ref, ln1_b_ref, ln2_w_ref, ln2_b_ref,
                     ln3_w_ref, ln3_b_ref,
                     ff1_w_ref, ff1_b_ref, ff2_w_ref, ff2_b_ref,
                     out_w_ref, out_b_ref,
                     o_ref,
                     ctx_ref,
                     *, block_b, seq_len, use_bf16_exp):
    S = seq_len
    E, H, Dh = EMBED_DIM, NHEAD, HEAD_DIM
    nb = block_b
    scale = 1.0 / math.sqrt(Dh)
    bf16 = jnp.bfloat16
    f32 = jnp.float32

    # KV/Q tile size for the flash-style self-attention (S=128 demo -> 1 tile).
    # TODO(synk): pad S to a multiple of 128 for the real SEQ_LEN=1900 so the
    # multi-tile path (and causal tile skipping) is actually used.
    T = 128 if (S % 128 == 0) else S
    n_tiles = S // T

    # Additive causal bias for the DIAGONAL tile only (off-diagonal tiles are
    # either fully visible or skipped entirely).  Built once per grid step.
    k_idx = lax.broadcasted_iota(jnp.int32, (T, T), 0)   # key index  (sublanes)
    q_idx = lax.broadcasted_iota(jnp.int32, (T, T), 1)   # query index (lanes)
    diag_bias = jnp.where(k_idx <= q_idx, 0.0, -1e30).astype(f32)

    if use_bf16_exp:
        # v6e/v7x EUP has a bf16 path; row max / sum / rescale stay f32.
        def softmax_exp(x):
            return jnp.exp(x.astype(bf16))
    else:
        def softmax_exp(x):
            return jnp.exp(x)

    def linear(x, w, b):
        # seq-major linear: x (R, In) @ w (Out, In)^T + b (1, Out) -> (R, Out)
        y = lax.dot_general(x.astype(bf16), w, (((1,), (1,)), ((), ())),
                            preferred_element_type=f32)
        return y + b

    def layer_norm(x, w, b, eps=1e-5):
        mu = jnp.mean(x, axis=-1, keepdims=True)
        var = jnp.mean(jnp.square(x - mu), axis=-1, keepdims=True)
        return (x - mu) * lax.rsqrt(var + eps) * w + b

    def mha_self(x_sm, l):
        """Causal multi-head self-attention over `nb` independent length-S
        sequences stacked as x_sm (nb*S, E).  Feature-major q/k/v, flash-style
        KV tiling with per-(batch, head, q-tile) online softmax; the context is
        slice-stored feature-major straight into ctx_ref (E, nb*S)."""
        xb = x_sm.astype(bf16)

        def proj_fm(w_ref, b_ref):
            # feature-major projection: W (E, E) @ x^T -> (E, nb*S)
            y = lax.dot_general(w_ref[l], xb, (((1,), (1,)), ((), ())),
                                preferred_element_type=f32)
            return (y + b_ref[l]).astype(bf16)

        q = proj_fm(sa_q_w_ref, sa_q_b_ref)          # (E, nb*S)
        k = proj_fm(sa_k_w_ref, sa_k_b_ref)
        v = proj_fm(sa_v_w_ref, sa_v_b_ref)

        for b in range(nb):                          # static; lane-aligned cols
            c0 = b * S
            for h in range(H):                       # static; sublane-aligned rows
                r0 = h * Dh
                qh = q[r0:r0 + Dh, c0:c0 + S]        # (Dh, S) bf16
                kh = k[r0:r0 + Dh, c0:c0 + S]
                vh = v[r0:r0 + Dh, c0:c0 + S]
                for qt in range(n_tiles):
                    q_blk = qh[:, qt * T:(qt + 1) * T]            # (Dh, T)
                    m = l_sum = acc = None
                    for kt in range(qt + 1):       # causal: skip masked tiles
                        k_blk = kh[:, kt * T:(kt + 1) * T]
                        v_blk = vh[:, kt * T:(kt + 1) * T]
                        s = lax.dot_general(k_blk, q_blk,
                                            (((0,), (0,)), ((), ())),
                                            preferred_element_type=f32) * scale
                        if kt == qt:
                            s = s + diag_bias                     # (Tk, Tq)
                        m_cur = jnp.max(s, axis=0, keepdims=True)  # (1, T)
                        if m is None:              # first (or only) kv tile
                            m_new = m_cur
                            p = softmax_exp(s - m_new)
                            l_sum = jnp.sum(p.astype(f32), axis=0,
                                            keepdims=True)
                            acc = lax.dot_general(v_blk, p.astype(bf16),
                                                  (((1,), (0,)), ((), ())),
                                                  preferred_element_type=f32)
                        else:                      # online-softmax update
                            m_new = jnp.maximum(m, m_cur)
                            alpha = jnp.exp(m - m_new)            # (1, T) f32
                            p = softmax_exp(s - m_new)
                            l_sum = alpha * l_sum + jnp.sum(
                                p.astype(f32), axis=0, keepdims=True)
                            acc = acc * alpha + lax.dot_general(
                                v_blk, p.astype(bf16),
                                (((1,), (0,)), ((), ())),
                                preferred_element_type=f32)
                        m = m_new
                    out_tile = acc * pl.reciprocal(l_sum, approx=True)  # (Dh,T)
                    ctx_ref[r0:r0 + Dh, c0 + qt * T:c0 + (qt + 1) * T] = \
                        out_tile.astype(bf16)

        # Out-projection brings the context back to seq-major (nb*S, E).
        sa = lax.dot_general(ctx_ref[...], sa_o_w_ref[l],
                             (((0,), (1,)), ((), ())),
                             preferred_element_type=f32)
        return sa + sa_o_b_ref[l]

    def cross_attn_vec(mem, l):
        # Memory has sequence length 1: softmax over one key == 1 exactly, so
        # the cross-attention output is out_proj(V(memory)), query-independent.
        v_mem = linear(mem, ca_v_w_ref[l], ca_v_b_ref[l])     # (nb, E)
        return linear(v_mem, ca_o_w_ref[l], ca_o_b_ref[l])    # (nb, E)

    def add_row_vec(x_sm, vec):
        # broadcast-add vec[b] to that batch's S rows; both reshapes are free.
        x3 = x_sm.reshape(nb, S, E) + vec[:, None, :]
        return x3.reshape(nb * S, E)

    def ffn(x, l):
        h = jnp.maximum(linear(x, ff1_w_ref[l], ff1_b_ref[l]), 0.0)
        return linear(h, ff2_w_ref[l], ff2_b_ref[l])

    # ---- memory = embedding(z) : (nb, E) ----
    mem = linear(z_ref[0], emb_w_ref[...], emb_b_ref[...])

    # ---- layer 0 : the z-independent prefix x_shared was precomputed in XLA;
    #      only the batch-dependent cross-attn / FFN tail runs here.
    xs = xs_ref[...]                                            # (S, E)
    ca0 = cross_attn_vec(mem, 0)                                # (nb, E)
    x = (xs[None, :, :] + ca0[:, None, :]).reshape(nb * S, E)
    x = layer_norm(x, ln2_w_ref[0], ln2_b_ref[0])
    x = layer_norm(x + ffn(x, 0), ln3_w_ref[0], ln3_b_ref[0])

    # ---- remaining layers : fully batch-dependent ----
    for l in range(1, NUM_LAYERS):
        x = layer_norm(x + mha_self(x, l), ln1_w_ref[l], ln1_b_ref[l])
        x = layer_norm(add_row_vec(x, cross_attn_vec(mem, l)),
                       ln2_w_ref[l], ln2_b_ref[l])
        x = layer_norm(x + ffn(x, l), ln3_w_ref[l], ln3_b_ref[l])

    # ---- output projection, stored lane-dense as one (1, nb*S) row ----
    y = lax.dot_general(out_w_ref[...], x.astype(bf16), (((1,), (1,)), ((), ())),
                        preferred_element_type=f32) + out_b_ref[...]
    o_ref[...] = y[None]                                        # (1, 1, nb*S)


KERNEL_PARAM_ORDER = (
    "emb_w", "emb_b",
    "sa_q_w", "sa_q_b", "sa_k_w", "sa_k_b", "sa_v_w", "sa_v_b",
    "sa_o_w", "sa_o_b",
    "ca_v_w", "ca_v_b", "ca_o_w", "ca_o_b",
    "ln1_w", "ln1_b", "ln2_w", "ln2_b", "ln3_w", "ln3_b",
    "ff1_w", "ff1_b", "ff2_w", "ff2_b",
    "out_w", "out_b",
)


def _prepare_params(params):
    """Offline weight re-layout: split the fused attention in_proj per role,
    keep only the V slice of the cross-attention in_proj (softmax over a single
    memory key is exactly 1), reshape biases/LN params for broadcasting, and
    cast matmul weights to bf16 (accumulation stays f32)."""
    E, F, L = EMBED_DIM, FFN_HIDDEN_DIM, NUM_LAYERS
    bf, f32 = jnp.bfloat16, jnp.float32
    sa_in_w, sa_in_b = params["sa_in_w"], params["sa_in_b"]
    ca_in_w, ca_in_b = params["ca_in_w"], params["ca_in_b"]
    return dict(
        emb_w=params["emb_w"].astype(bf),
        emb_b=params["emb_b"].reshape(1, E).astype(f32),
        sa_q_w=sa_in_w[:, 0 * E:1 * E, :].astype(bf),
        sa_q_b=sa_in_b[:, 0 * E:1 * E].reshape(L, E, 1).astype(f32),
        sa_k_w=sa_in_w[:, 1 * E:2 * E, :].astype(bf),
        sa_k_b=sa_in_b[:, 1 * E:2 * E].reshape(L, E, 1).astype(f32),
        sa_v_w=sa_in_w[:, 2 * E:3 * E, :].astype(bf),
        sa_v_b=sa_in_b[:, 2 * E:3 * E].reshape(L, E, 1).astype(f32),
        sa_o_w=params["sa_out_w"].astype(bf),
        sa_o_b=params["sa_out_b"].reshape(L, 1, E).astype(f32),
        ca_v_w=ca_in_w[:, 2 * E:3 * E, :].astype(bf),
        ca_v_b=ca_in_b[:, 2 * E:3 * E].reshape(L, 1, E).astype(f32),
        ca_o_w=params["ca_out_w"].astype(bf),
        ca_o_b=params["ca_out_b"].reshape(L, 1, E).astype(f32),
        ln1_w=params["ln1_w"].reshape(L, 1, E).astype(f32),
        ln1_b=params["ln1_b"].reshape(L, 1, E).astype(f32),
        ln2_w=params["ln2_w"].reshape(L, 1, E).astype(f32),
        ln2_b=params["ln2_b"].reshape(L, 1, E).astype(f32),
        ln3_w=params["ln3_w"].reshape(L, 1, E).astype(f32),
        ln3_b=params["ln3_b"].reshape(L, 1, E).astype(f32),
        ff1_w=params["ff1_w"].astype(bf),
        ff1_b=params["ff1_b"].reshape(L, 1, F).astype(f32),
        ff2_w=params["ff2_w"].astype(bf),
        ff2_b=params["ff2_b"].reshape(L, 1, E).astype(f32),
        out_w=params["out_w"].astype(bf),
        out_b=params["out_b"].reshape(1, 1).astype(f32),
    )


@functools.partial(jax.jit, static_argnames=("seq_len",))
def generator_forward(z, params, seq_len=SEQ_LEN_DEMO):
    B = z.shape[0]
    kind = jax.devices()[0].device_kind.lower()
    is_v7 = "v7" in kind
    use_bf16_exp = ("v6" in kind) or is_v7       # f32 exp on v5e and older

    # Batch-block to amortize per-step overhead / weight traffic; keep the
    # block within v7x's smaller VMEM, but always give the grid >= 2 'parallel'
    # steps when B > 1 so both v7x TensorCores are busy (free on 1-TC parts).
    max_block = 8 if is_v7 else 16
    block_b = min(B, max_block)
    num_blocks = -(-B // block_b)
    if num_blocks < 2 and B > 1:
        block_b = -(-B // 2)
        num_blocks = -(-B // block_b)
    b_pad = num_blocks * block_b
    if b_pad != B:
        z = jnp.concatenate(
            [z, jnp.zeros((b_pad - B, z.shape[1]), z.dtype)], axis=0)
    z_blocks = z.reshape(num_blocks, block_b, LATENT_DIM)

    pe = build_positional_encoding(EMBED_DIM, seq_len)        # trace-time const
    # z-independent layer-0 prefix, computed ONCE per call in plain XLA.
    x_shared = _layer0_shared_prefix(pe, params)              # (S, E) f32
    kp = _prepare_params(params)
    plist = [kp[name] for name in KERNEL_PARAM_ORDER]

    def full_spec(a):
        nd = a.ndim
        return pl.BlockSpec(a.shape, lambda i, _nd=nd: (0,) * _nd)

    in_specs = ([pl.BlockSpec((1, block_b, LATENT_DIM), lambda i: (i, 0, 0)),
                 pl.BlockSpec((seq_len, EMBED_DIM), lambda i: (0, 0))]
                + [full_spec(a) for a in plist])

    out = pl.pallas_call(
        functools.partial(generator_kernel, block_b=block_b, seq_len=seq_len,
                          use_bf16_exp=use_bf16_exp),
        grid=(num_blocks,),
        in_specs=in_specs,
        out_specs=pl.BlockSpec((1, 1, block_b * seq_len), lambda i: (i, 0, 0)),
        out_shape=jax.ShapeDtypeStruct((num_blocks, 1, block_b * seq_len),
                                       jnp.float32),
        scratch_shapes=[
            # feature-major attention-context scratch, reused per layer
            pltpu.VMEM((EMBED_DIM, block_b * seq_len), jnp.bfloat16)],
        compiler_params=pltpu.CompilerParams(
            dimension_semantics=("parallel",),
            vmem_limit_bytes=(48 if is_v7 else 100) << 20),
    )(z_blocks, x_shared, *plist)
    # lane-dense store in-kernel; the (B, S) view is a free row-major reshape.
    return out.reshape(b_pad, seq_len)[:B]


def init_params(key):
    E, F, L, Z = EMBED_DIM, FFN_HIDDEN_DIM, NUM_LAYERS, LATENT_DIM
    keys = iter(jax.random.split(key, 24))

    def w(shape, scale=0.05):
        return jax.random.normal(next(keys), shape, jnp.float32) * scale

    return dict(
        emb_w=w((E, Z)), emb_b=w((E,), 0.01),
        sa_in_w=w((L, 3 * E, E)), sa_in_b=w((L, 3 * E), 0.01),
        sa_out_w=w((L, E, E)), sa_out_b=w((L, E), 0.01),
        ca_in_w=w((L, 3 * E, E)), ca_in_b=w((L, 3 * E), 0.01),
        ca_out_w=w((L, E, E)), ca_out_b=w((L, E), 0.01),
        ln1_w=jnp.ones((L, E), jnp.float32), ln1_b=jnp.zeros((L, E), jnp.float32),
        ln2_w=jnp.ones((L, E), jnp.float32), ln2_b=jnp.zeros((L, E), jnp.float32),
        ln3_w=jnp.ones((L, E), jnp.float32), ln3_b=jnp.zeros((L, E), jnp.float32),
        ff1_w=w((L, F, E)), ff1_b=w((L, F), 0.01),
        ff2_w=w((L, E, F)), ff2_b=w((L, E), 0.01),
        out_w=w((1, E)), out_b=w((1,), 0.01),
    )


if __name__ == "__main__":
    key = jax.random.PRNGKey(0)
    pkey, zkey = jax.random.split(key)
    params = init_params(pkey)

    batch = 2
    z = jax.random.normal(zkey, (batch, LATENT_DIM), jnp.float32)

    out = generator_forward(z, params, seq_len=SEQ_LEN_DEMO)
    jax.block_until_ready(out)

    assert out.shape == (batch, SEQ_LEN_DEMO), out.shape
    assert bool(jnp.all(jnp.isfinite(out)))
    print("KERNEL_OK")
</pallas_src>

<mosaic_0001>
module attributes {stable_mosaic.version = 11 : i64} {
  func.func @generator_kernel(%arg0: i32, %arg1: memref<1x1x16xf32, #tpu.memory_space<vmem>>, %arg2: memref<128x64xf32, #tpu.memory_space<vmem>>, %arg3: memref<64x16xbf16, #tpu.memory_space<vmem>>, %arg4: memref<1x64xf32, #tpu.memory_space<vmem>>, %arg5: memref<2x64x64xbf16, #tpu.memory_space<vmem>>, %arg6: memref<2x64x1xf32, #tpu.memory_space<vmem>>, %arg7: memref<2x64x64xbf16, #tpu.memory_space<vmem>>, %arg8: memref<2x64x1xf32, #tpu.memory_space<vmem>>, %arg9: memref<2x64x64xbf16, #tpu.memory_space<vmem>>, %arg10: memref<2x64x1xf32, #tpu.memory_space<vmem>>, %arg11: memref<2x64x64xbf16, #tpu.memory_space<vmem>>, %arg12: memref<2x1x64xf32, #tpu.memory_space<vmem>>, %arg13: memref<2x64x64xbf16, #tpu.memory_space<vmem>>, %arg14: memref<2x1x64xf32, #tpu.memory_space<vmem>>, %arg15: memref<2x64x64xbf16, #tpu.memory_space<vmem>>, %arg16: memref<2x1x64xf32, #tpu.memory_space<vmem>>, %arg17: memref<2x1x64xf32, #tpu.memory_space<vmem>>, %arg18: memref<2x1x64xf32, #tpu.memory_space<vmem>>, %arg19: memref<2x1x64xf32, #tpu.memory_space<vmem>>, %arg20: memref<2x1x64xf32, #tpu.memory_space<vmem>>, %arg21: memref<2x1x64xf32, #tpu.memory_space<vmem>>, %arg22: memref<2x1x64xf32, #tpu.memory_space<vmem>>, %arg23: memref<2x128x64xbf16, #tpu.memory_space<vmem>>, %arg24: memref<2x1x128xf32, #tpu.memory_space<vmem>>, %arg25: memref<2x64x128xbf16, #tpu.memory_space<vmem>>, %arg26: memref<2x1x64xf32, #tpu.memory_space<vmem>>, %arg27: memref<1x64xbf16, #tpu.memory_space<vmem>>, %arg28: memref<1x1xf32, #tpu.memory_space<vmem>>, %arg29: memref<1x1x128xf32, #tpu.memory_space<vmem>>, %arg30: memref<64x128xbf16, #tpu.memory_space<vmem>>) attributes {dimension_semantics = [#tpu.dimension_semantics<parallel>], iteration_bounds = array<i64: 2>, scalar_prefetch = 0 : i64, scratch_operands = 1 : i64, tpu.core_type = #tpu.core_type<tc>, window_params = [{transform_indices = @transform_0, window_bounds = array<i64: 1, 1, 16>}, {pipeline_mode = #tpu.pipeline_mode<synchronous>, transform_indices = @transform_1, window_bounds = array<i64: 128, 64>}, {pipeline_mode = #tpu.pipeline_mode<synchronous>, transform_indices = @transform_2, window_bounds = array<i64: 64, 16>}, {pipeline_mode = #tpu.pipeline_mode<synchronous>, transform_indices = @transform_3, window_bounds = array<i64: 1, 64>}, {pipeline_mode = #tpu.pipeline_mode<synchronous>, transform_indices = @transform_4, window_bounds = array<i64: 2, 64, 64>}, {pipeline_mode = #tpu.pipeline_mode<synchronous>, transform_indices = @transform_5, window_bounds = array<i64: 2, 64, 1>}, {pipeline_mode = #tpu.pipeline_mode<synchronous>, transform_indices = @transform_6, window_bounds = array<i64: 2, 64, 64>}, {pipeline_mode = #tpu.pipeline_mode<synchronous>, transform_indices = @transform_7, window_bounds = array<i64: 2, 64, 1>}, {pipeline_mode = #tpu.pipeline_mode<synchronous>, transform_indices = @transform_8, window_bounds = array<i64: 2, 64, 64>}, {pipeline_mode = #tpu.pipeline_mode<synchronous>, transform_indices = @transform_9, window_bounds = array<i64: 2, 64, 1>}, {pipeline_mode = #tpu.pipeline_mode<synchronous>, transform_indices = @transform_10, window_bounds = array<i64: 2, 64, 64>}, {pipeline_mode = #tpu.pipeline_mode<synchronous>, transform_indices = @transform_11, window_bounds = array<i64: 2, 1, 64>}, {pipeline_mode = #tpu.pipeline_mode<synchronous>, transform_indices = @transform_12, window_bounds = array<i64: 2, 64, 64>}, {pipeline_mode = #tpu.pipeline_mode<synchronous>, transform_indices = @transform_13, window_bounds = array<i64: 2, 1, 64>}, {pipeline_mode = #tpu.pipeline_mode<synchronous>, transform_indices = @transform_14, window_bounds = array<i64: 2, 64, 64>}, {pipeline_mode = #tpu.pipeline_mode<synchronous>, transform_indices = @transform_15, window_bounds = array<i64: 2, 1, 64>}, {pipeline_mode = #tpu.pipeline_mode<synchronous>, transform_indices = @transform_16, window_bounds = array<i64: 2, 1, 64>}, {pipeline_mode = #tpu.pipeline_mode<synchronous>, transform_indices = @transform_17, window_bounds = array<i64: 2, 1, 64>}, {pipeline_mode = #tpu.pipeline_mode<synchronous>, transform_indices = @transform_18, window_bounds = array<i64: 2, 1, 64>}, {pipeline_mode = #tpu.pipeline_mode<synchronous>, transform_indices = @transform_19, window_bounds = array<i64: 2, 1, 64>}, {pipeline_mode = #tpu.pipeline_mode<synchronous>, transform_indices = @transform_20, window_bounds = array<i64: 2, 1, 64>}, {pipeline_mode = #tpu.pipeline_mode<synchronous>, transform_indices = @transform_21, window_bounds = array<i64: 2, 1, 64>}, {pipeline_mode = #tpu.pipeline_mode<synchronous>, transform_indices = @transform_22, window_bounds = array<i64: 2, 128, 64>}, {pipeline_mode = #tpu.pipeline_mode<synchronous>, transform_indices = @transform_23, window_bounds = array<i64: 2, 1, 128>}, {pipeline_mode = #tpu.pipeline_mode<synchronous>, transform_indices = @transform_24, window_bounds = array<i64: 2, 64, 128>}, {pipeline_mode = #tpu.pipeline_mode<synchronous>, transform_indices = @transform_25, window_bounds = array<i64: 2, 1, 64>}, {pipeline_mode = #tpu.pipeline_mode<synchronous>, transform_indices = @transform_26, window_bounds = array<i64: 1, 64>}, {pipeline_mode = #tpu.pipeline_mode<synchronous>, transform_indices = @transform_27, window_bounds = array<i64: 1, 1>}, {transform_indices = @transform_28, window_bounds = array<i64: 1, 1, 128>}]} {
    %0 = tpu.iota {dimensions = array<i32: 0>} : vector<128x128xi32>
    %1 = tpu.iota {dimensions = array<i32: 1>} : vector<128x128xi32>
    %2 = arith.cmpi sle, %0, %1 : vector<128x128xi32>
    %cst = arith.constant 0.000000e+00 : f32
    %cst_0 = arith.constant -1.000000e+30 : f32
    %3 = vector.broadcast %cst : f32 to vector<128x128xf32>
    %4 = vector.broadcast %cst_0 : f32 to vector<128x128xf32>
    %5 = arith.select %2, %3, %4 : vector<128x128xi1>, vector<128x128xf32>
    %c0 = arith.constant 0 : index
    %c0_1 = arith.constant 0 : index
    %c0_2 = arith.constant 0 : index
    %6 = vector.load %arg1[%c0, %c0_1, %c0_2] : memref<1x1x16xf32, #tpu.memory_space<vmem>>, vector<1x1x16xf32>
    %7 = vector.shape_cast %6 : vector<1x1x16xf32> to vector<1x16xf32>
    %c0_3 = arith.constant 0 : index
    %c0_4 = arith.constant 0 : index
    %8 = vector.load %arg3[%c0_3, %c0_4] : memref<64x16xbf16, #tpu.memory_space<vmem>>, vector<64x16xbf16>
    %c0_5 = arith.constant 0 : index
    %c0_6 = arith.constant 0 : index
    %9 = vector.load %arg4[%c0_5, %c0_6] : memref<1x64xf32, #tpu.memory_space<vmem>>, vector<1x64xf32>
    %10 = arith.truncf %7 : vector<1x16xf32> to vector<1x16xbf16>
    %cst_7 = arith.constant dense<0.000000e+00> : vector<1x64xf32>
    %11 = tpu.matmul %10, %8, %cst_7 {dimension_numbers = #tpu.dot_dimension_numbers<[1], [1], [0], [0], [0, 0, 1, 0], [], []>} : vector<1x16xbf16>, vector<64x16xbf16>, vector<1x64xf32> -> vector<1x64xf32>
    %12 = arith.addf %11, %9 : vector<1x64xf32>
    %c0_8 = arith.constant 0 : index
    %c0_9 = arith.constant 0 : index
    %13 = vector.load %arg2[%c0_8, %c0_9] : memref<128x64xf32, #tpu.memory_space<vmem>>, vector<128x64xf32>
    %c0_10 = arith.constant 0 : index
    %c0_11 = arith.constant 0 : index
    %c0_12 = arith.constant 0 : index
    %14 = vector.load %arg13[%c0_10, %c0_11, %c0_12] : memref<2x64x64xbf16, #tpu.memory_space<vmem>>, vector<1x64x64xbf16>
    %15 = vector.shape_cast %14 : vector<1x64x64xbf16> to vector<64x64xbf16>
    %c0_13 = arith.constant 0 : index
    %c0_14 = arith.constant 0 : index
    %c0_15 = arith.constant 0 : index
    %16 = vector.load %arg14[%c0_13, %c0_14, %c0_15] : memref<2x1x64xf32, #tpu.memory_space<vmem>>, vector<1x1x64xf32>
    %17 = vector.shape_cast %16 : vector<1x1x64xf32> to vector<1x64xf32>
    %18 = arith.truncf %12 : vector<1x64xf32> to vector<1x64xbf16>
    %cst_16 = arith.constant dense<0.000000e+00> : vector<1x64xf32>
    %19 = tpu.matmul %18, %15, %cst_16 {dimension_numbers = #tpu.dot_dimension_numbers<[1], [1], [0], [0], [0, 0, 1, 0], [], []>} : vector<1x64xbf16>, vector<64x64xbf16>, vector<1x64xf32> -> vector<1x64xf32>
    %20 = arith.addf %19, %17 : vector<1x64xf32>
    %c0_17 = arith.constant 0 : index
    %c0_18 = arith.constant 0 : index
    %c0_19 = arith.constant 0 : index
    %21 = vector.load %arg15[%c0_17, %c0_18, %c0_19] : memref<2x64x64xbf16, #tpu.memory_space<vmem>>, vector<1x64x64xbf16>
    %22 = vector.shape_cast %21 : vector<1x64x64xbf16> to vector<64x64xbf16>
    %c0_20 = arith.constant 0 : index
    %c0_21 = arith.constant 0 : index
    %c0_22 = arith.constant 0 : index
    %23 = vector.load %arg16[%c0_20, %c0_21, %c0_22] : memref<2x1x64xf32, #tpu.memory_space<vmem>>, vector<1x1x64xf32>
    %24 = vector.shape_cast %23 : vector<1x1x64xf32> to vector<1x64xf32>
    %25 = arith.truncf %20 : vector<1x64xf32> to vector<1x64xbf16>
    %cst_23 = arith.constant dense<0.000000e+00> : vector<1x64xf32>
    %26 = tpu.matmul %25, %22, %cst_23 {dimension_numbers = #tpu.dot_dimension_numbers<[1], [1], [0], [0], [0, 0, 1, 0], [], []>} : vector<1x64xbf16>, vector<64x64xbf16>, vector<1x64xf32> -> vector<1x64xf32>
    %27 = arith.addf %26, %24 : vector<1x64xf32>
    %28 = vector.shape_cast %13 : vector<128x64xf32> to vector<1x128x64xf32>
    %29 = vector.shape_cast %27 : vector<1x64xf32> to vector<1x1x64xf32>
    %30 = vector.broadcast %29 : vector<1x1x64xf32> to vector<1x128x64xf32>
    %31 = arith.addf %28, %30 : vector<1x128x64xf32>
    %32 = vector.shape_cast %31 : vector<1x128x64xf32> to vector<128x64xf32>
    %c0_24 = arith.constant 0 : index
    %c0_25 = arith.constant 0 : index
    %c0_26 = arith.constant 0 : index
    %33 = vector.load %arg19[%c0_24, %c0_25, %c0_26] : memref<2x1x64xf32, #tpu.memory_space<vmem>>, vector<1x1x64xf32>
    %34 = vector.shape_cast %33 : vector<1x1x64xf32> to vector<1x64xf32>
    %c0_27 = arith.constant 0 : index
    %c0_28 = arith.constant 0 : index
    %c0_29 = arith.constant 0 : index
    %35 = vector.load %arg20[%c0_27, %c0_28, %c0_29] : memref<2x1x64xf32, #tpu.memory_space<vmem>>, vector<1x1x64xf32>
    %36 = vector.shape_cast %35 : vector<1x1x64xf32> to vector<1x64xf32>
    %cst_30 = arith.constant dense<0.000000e+00> : vector<128xf32>
    %37 = vector.multi_reduction <add>, %32, %cst_30 [1] : vector<128x64xf32> to vector<128xf32>
    %38 = vector.shape_cast %37 : vector<128xf32> to vector<128x1xf32>
    %cst_31 = arith.constant 6.400000e+01 : f32
    %39 = vector.broadcast %cst_31 : f32 to vector<128x1xf32>
    %40 = arith.divf %38, %39 : vector<128x1xf32>
    %41 = vector.broadcast %40 : vector<128x1xf32> to vector<128x64xf32>
    %42 = arith.subf %32, %41 : vector<128x64xf32>
    %43 = arith.mulf %42, %42 : vector<128x64xf32>
    %cst_32 = arith.constant dense<0.000000e+00> : vector<128xf32>
    %44 = vector.multi_reduction <add>, %43, %cst_32 [1] : vector<128x64xf32> to vector<128xf32>
    %45 = vector.shape_cast %44 : vector<128xf32> to vector<128x1xf32>
    %cst_33 = arith.constant 6.400000e+01 : f32
    %46 = vector.broadcast %cst_33 : f32 to vector<128x1xf32>
    %47 = arith.divf %45, %46 : vector<128x1xf32>
    %48 = vector.broadcast %40 : vector<128x1xf32> to vector<128x64xf32>
    %49 = arith.subf %32, %48 : vector<128x64xf32>
    %cst_34 = arith.constant 9.99999974E-6 : f32
    %50 = vector.broadcast %cst_34 : f32 to vector<128x1xf32>
    %51 = arith.addf %47, %50 : vector<128x1xf32>
    %52 = math.rsqrt %51 : vector<128x1xf32>
    %53 = vector.broadcast %52 : vector<128x1xf32> to vector<128x64xf32>
    %54 = arith.mulf %49, %53 : vector<128x64xf32>
    %55 = vector.broadcast %34 : vector<1x64xf32> to vector<128x64xf32>
    %56 = arith.mulf %54, %55 : vector<128x64xf32>
    %57 = vector.broadcast %36 : vector<1x64xf32> to vector<128x64xf32>
    %58 = arith.addf %56, %57 : vector<128x64xf32>
    %c0_35 = arith.constant 0 : index
    %c0_36 = arith.constant 0 : index
    %c0_37 = arith.constant 0 : index
    %59 = vector.load %arg23[%c0_35, %c0_36, %c0_37] : memref<2x128x64xbf16, #tpu.memory_space<vmem>>, vector<1x128x64xbf16>
    %60 = vector.shape_cast %59 : vector<1x128x64xbf16> to vector<128x64xbf16>
    %c0_38 = arith.constant 0 : index
    %c0_39 = arith.constant 0 : index
    %c0_40 = arith.constant 0 : index
    %61 = vector.load %arg24[%c0_38, %c0_39, %c0_40] : memref<2x1x128xf32, #tpu.memory_space<vmem>>, vector<1x1x128xf32>
    %62 = vector.shape_cast %61 : vector<1x1x128xf32> to vector<1x128xf32>
    %63 = arith.truncf %58 : vector<128x64xf32> to vector<128x64xbf16>
    %cst_41 = arith.constant dense<0.000000e+00> : vector<128x128xf32>
    %64 = tpu.matmul %63, %60, %cst_41 {dimension_numbers = #tpu.dot_dimension_numbers<[1], [1], [0], [0], [0, 0, 1, 0], [], []>} : vector<128x64xbf16>, vector<128x64xbf16>, vector<128x128xf32> -> vector<128x128xf32>
    %65 = vector.broadcast %62 : vector<1x128xf32> to vector<128x128xf32>
    %66 = arith.addf %64, %65 : vector<128x128xf32>
    %cst_42 = arith.constant 0.000000e+00 : f32
    %67 = vector.broadcast %cst_42 : f32 to vector<128x128xf32>
    %68 = arith.maximumf %66, %67 : vector<128x128xf32>
    %c0_43 = arith.constant 0 : index
    %c0_44 = arith.constant 0 : index
    %c0_45 = arith.constant 0 : index
    %69 = vector.load %arg25[%c0_43, %c0_44, %c0_45] : memref<2x64x128xbf16, #tpu.memory_space<vmem>>, vector<1x64x128xbf16>
    %70 = vector.shape_cast %69 : vector<1x64x128xbf16> to vector<64x128xbf16>
    %c0_46 = arith.constant 0 : index
    %c0_47 = arith.constant 0 : index
    %c0_48 = arith.constant 0 : index
    %71 = vector.load %arg26[%c0_46, %c0_47, %c0_48] : memref<2x1x64xf32, #tpu.memory_space<vmem>>, vector<1x1x64xf32>
    %72 = vector.shape_cast %71 : vector<1x1x64xf32> to vector<1x64xf32>
    %73 = arith.truncf %68 : vector<128x128xf32> to vector<128x128xbf16>
    %cst_49 = arith.constant dense<0.000000e+00> : vector<128x64xf32>
    %74 = tpu.matmul %73, %70, %cst_49 {dimension_numbers = #tpu.dot_dimension_numbers<[1], [1], [0], [0], [0, 0, 1, 0], [], []>} : vector<128x128xbf16>, vector<64x128xbf16>, vector<128x64xf32> -> vector<128x64xf32>
    %75 = vector.broadcast %72 : vector<1x64xf32> to vector<128x64xf32>
    %76 = arith.addf %74, %75 : vector<128x64xf32>
    %77 = arith.addf %58, %76 : vector<128x64xf32>
    %c0_50 = arith.constant 0 : index
    %c0_51 = arith.constant 0 : index
    %c0_52 = arith.constant 0 : index
    %78 = vector.load %arg21[%c0_50, %c0_51, %c0_52] : memref<2x1x64xf32, #tpu.memory_space<vmem>>, vector<1x1x64xf32>
    %79 = vector.shape_cast %78 : vector<1x1x64xf32> to vector<1x64xf32>
    %c0_53 = arith.constant 0 : index
    %c0_54 = arith.constant 0 : index
    %c0_55 = arith.constant 0 : index
    %80 = vector.load %arg22[%c0_53, %c0_54, %c0_55] : memref<2x1x64xf32, #tpu.memory_space<vmem>>, vector<1x1x64xf32>
    %81 = vector.shape_cast %80 : vector<1x1x64xf32> to vector<1x64xf32>
    %cst_56 = arith.constant dense<0.000000e+00> : vector<128xf32>
    %82 = vector.multi_reduction <add>, %77, %cst_56 [1] : vector<128x64xf32> to vector<128xf32>
    %83 = vector.shape_cast %82 : vector<128xf32> to vector<128x1xf32>
    %cst_57 = arith.constant 6.400000e+01 : f32
    %84 = vector.broadcast %cst_57 : f32 to vector<128x1xf32>
    %85 = arith.divf %83, %84 : vector<128x1xf32>
    %86 = vector.broadcast %85 : vector<128x1xf32> to vector<128x64xf32>
    %87 = arith.subf %77, %86 : vector<128x64xf32>
    %88 = arith.mulf %87, %87 : vector<128x64xf32>
    %cst_58 = arith.constant dense<0.000000e+00> : vector<128xf32>
    %89 = vector.multi_reduction <add>, %88, %cst_58 [1] : vector<128x64xf32> to vector<128xf32>
    %90 = vector.shape_cast %89 : vector<128xf32> to vector<128x1xf32>
    %cst_59 = arith.constant 6.400000e+01 : f32
    %91 = vector.broadcast %cst_59 : f32 to vector<128x1xf32>
    %92 = arith.divf %90, %91 : vector<128x1xf32>
    %93 = vector.broadcast %85 : vector<128x1xf32> to vector<128x64xf32>
    %94 = arith.subf %77, %93 : vector<128x64xf32>
    %cst_60 = arith.constant 9.99999974E-6 : f32
    %95 = vector.broadcast %cst_60 : f32 to vector<128x1xf32>
    %96 = arith.addf %92, %95 : vector<128x1xf32>
    %97 = math.rsqrt %96 : vector<128x1xf32>
    %98 = vector.broadcast %97 : vector<128x1xf32> to vector<128x64xf32>
    %99 = arith.mulf %94, %98 : vector<128x64xf32>
    %100 = vector.broadcast %79 : vector<1x64xf32> to vector<128x64xf32>
    %101 = arith.mulf %99, %100 : vector<128x64xf32>
    %102 = vector.broadcast %81 : vector<1x64xf32> to vector<128x64xf32>
    %103 = arith.addf %101, %102 : vector<128x64xf32>
    %104 = arith.truncf %103 : vector<128x64xf32> to vector<128x64xbf16>
    %c1 = arith.constant 1 : index
    %c0_61 = arith.constant 0 : index
    %c0_62 = arith.constant 0 : index
    %105 = vector.load %arg5[%c1, %c0_61, %c0_62] : memref<2x64x64xbf16, #tpu.memory_space<vmem>>, vector<1x64x64xbf16>
    %106 = vector.shape_cast %105 : vector<1x64x64xbf16> to vector<64x64xbf16>
    %cst_63 = arith.constant dense<0.000000e+00> : vector<64x128xf32>
    %107 = tpu.matmul %106, %104, %cst_63 {dimension_numbers = #tpu.dot_dimension_numbers<[1], [1], [0], [0], [0, 0, 1, 0], [], []>} : vector<64x64xbf16>, vector<128x64xbf16>, vector<64x128xf32> -> vector<64x128xf32>
    %c1_64 = arith.constant 1 : index
    %c0_65 = arith.constant 0 : index
    %c0_66 = arith.constant 0 : index
    %108 = vector.load %arg6[%c1_64, %c0_65, %c0_66] : memref<2x64x1xf32, #tpu.memory_space<vmem>>, vector<1x64x1xf32>
    %109 = vector.shape_cast %108 : vector<1x64x1xf32> to vector<64x1xf32>
    %110 = vector.broadcast %109 : vector<64x1xf32> to vector<64x128xf32>
    %111 = arith.addf %107, %110 : vector<64x128xf32>
    %112 = arith.truncf %111 : vector<64x128xf32> to vector<64x128xbf16>
    %c1_67 = arith.constant 1 : index
    %c0_68 = arith.constant 0 : index
    %c0_69 = arith.constant 0 : index
    %113 = vector.load %arg7[%c1_67, %c0_68, %c0_69] : memref<2x64x64xbf16, #tpu.memory_space<vmem>>, vector<1x64x64xbf16>
    %114 = vector.shape_cast %113 : vector<1x64x64xbf16> to vector<64x64xbf16>
    %cst_70 = arith.constant dense<0.000000e+00> : vector<64x128xf32>
    %115 = tpu.matmul %114, %104, %cst_70 {dimension_numbers = #tpu.dot_dimension_numbers<[1], [1], [0], [0], [0, 0, 1, 0], [], []>} : vector<64x64xbf16>, vector<128x64xbf16>, vector<64x128xf32> -> vector<64x128xf32>
    %c1_71 = arith.constant 1 : index
    %c0_72 = arith.constant 0 : index
    %c0_73 = arith.constant 0 : index
    %116 = vector.load %arg8[%c1_71, %c0_72, %c0_73] : memref<2x64x1xf32, #tpu.memory_space<vmem>>, vector<1x64x1xf32>
    %117 = vector.shape_cast %116 : vector<1x64x1xf32> to vector<64x1xf32>
    %118 = vector.broadcast %117 : vector<64x1xf32> to vector<64x128xf32>
    %119 = arith.addf %115, %118 : vector<64x128xf32>
    %120 = arith.truncf %119 : vector<64x128xf32> to vector<64x128xbf16>
    %c1_74 = arith.constant 1 : index
    %c0_75 = arith.constant 0 : index
    %c0_76 = arith.constant 0 : index
    %121 = vector.load %arg9[%c1_74, %c0_75, %c0_76] : memref<2x64x64xbf16, #tpu.memory_space<vmem>>, vector<1x64x64xbf16>
    %122 = vector.shape_cast %121 : vector<1x64x64xbf16> to vector<64x64xbf16>
    %cst_77 = arith.constant dense<0.000000e+00> : vector<64x128xf32>
    %123 = tpu.matmul %122, %104, %cst_77 {dimension_numbers = #tpu.dot_dimension_numbers<[1], [1], [0], [0], [0, 0, 1, 0], [], []>} : vector<64x64xbf16>, vector<128x64xbf16>, vector<64x128xf32> -> vector<64x128xf32>
    %c1_78 = arith.constant 1 : index
    %c0_79 = arith.constant 0 : index
    %c0_80 = arith.constant 0 : index
    %124 = vector.load %arg10[%c1_78, %c0_79, %c0_80] : memref<2x64x1xf32, #tpu.memory_space<vmem>>, vector<1x64x1xf32>
    %125 = vector.shape_cast %124 : vector<1x64x1xf32> to vector<64x1xf32>
    %126 = vector.broadcast %125 : vector<64x1xf32> to vector<64x128xf32>
    %127 = arith.addf %123, %126 : vector<64x128xf32>
    %128 = arith.truncf %127 : vector<64x128xf32> to vector<64x128xbf16>
    %129 = vector.extract_strided_slice %112 {offsets = [0, 0], sizes = [16, 128], strides = [1, 1]} : vector<64x128xbf16> to vector<16x128xbf16>
    %130 = vector.extract_strided_slice %120 {offsets = [0, 0], sizes = [16, 128], strides = [1, 1]} : vector<64x128xbf16> to vector<16x128xbf16>
    %131 = vector.extract_strided_slice %128 {offsets = [0, 0], sizes = [16, 128], strides = [1, 1]} : vector<64x128xbf16> to vector<16x128xbf16>
    %cst_81 = arith.constant dense<0.000000e+00> : vector<128x128xf32>
    %132 = tpu.matmul %130, %129, %cst_81 {dimension_numbers = #tpu.dot_dimension_numbers<[0], [0], [1], [1], [0, 1, 1, 1], [], []>} : vector<16x128xbf16>, vector<16x128xbf16>, vector<128x128xf32> -> vector<128x128xf32>
    %cst_82 = arith.constant 2.500000e-01 : f32
    %133 = vector.broadcast %cst_82 : f32 to vector<128x128xf32>
    %134 = arith.mulf %132, %133 : vector<128x128xf32>
    %135 = arith.addf %134, %5 : vector<128x128xf32>
    %cst_83 = arith.constant dense<0xFF800000> : vector<128xf32>
    %136 = vector.multi_reduction <maximumf>, %135, %cst_83 [0] : vector<128x128xf32> to vector<128xf32>
    %137 = vector.shape_cast %136 : vector<128xf32> to vector<1x128xf32>
    %138 = vector.broadcast %137 : vector<1x128xf32> to vector<128x128xf32>
    %139 = arith.subf %135, %138 : vector<128x128xf32>
    %140 = math.exp %139 : vector<128x128xf32>
    %cst_84 = arith.constant dense<0.000000e+00> : vector<128xf32>
    %141 = vector.multi_reduction <add>, %140, %cst_84 [0] : vector<128x128xf32> to vector<128xf32>
    %142 = vector.shape_cast %141 : vector<128xf32> to vector<1x128xf32>
    %143 = arith.truncf %140 : vector<128x128xf32> to vector<128x128xbf16>
    %cst_85 = arith.constant dense<0.000000e+00> : vector<16x128xf32>
    %144 = tpu.matmul %131, %143, %cst_85 {dimension_numbers = #tpu.dot_dimension_numbers<[1], [0], [0], [1], [0, 0, 1, 1], [], []>} : vector<16x128xbf16>, vector<128x128xbf16>, vector<16x128xf32> -> vector<16x128xf32>
    %145 = tpu.reciprocal %142 {approx = true} : vector<1x128xf32> -> vector<1x128xf32>
    %146 = vector.broadcast %145 : vector<1x128xf32> to vector<16x128xf32>
    %147 = arith.mulf %144, %146 : vector<16x128xf32>
    %148 = arith.truncf %147 : vector<16x128xf32> to vector<16x128xbf16>
    %c0_86 = arith.constant 0 : index
    %c0_87 = arith.constant 0 : index
    %149 = vector.load %arg30[%c0_86, %c0_87] : memref<64x128xbf16, #tpu.memory_space<vmem>>, vector<16x128xbf16>
    tpu.vector_store %arg30[%c0_86, %c0_87], %148 {strides = array<i32>} : memref<64x128xbf16, #tpu.memory_space<vmem>>, vector<16x128xbf16>,
    %150 = vector.extract_strided_slice %112 {offsets = [16, 0], sizes = [16, 128], strides = [1, 1]} : vector<64x128xbf16> to vector<16x128xbf16>
    %151 = vector.extract_strided_slice %120 {offsets = [16, 0], sizes = [16, 128], strides = [1, 1]} : vector<64x128xbf16> to vector<16x128xbf16>
    %152 = vector.extract_strided_slice %128 {offsets = [16, 0], sizes = [16, 128], strides = [1, 1]} : vector<64x128xbf16> to vector<16x128xbf16>
    %cst_88 = arith.constant dense<0.000000e+00> : vector<128x128xf32>
    %153 = tpu.matmul %151, %150, %cst_88 {dimension_numbers = #tpu.dot_dimension_numbers<[0], [0], [1], [1], [0, 1, 1, 1], [], []>} : vector<16x128xbf16>, vector<16x128xbf16>, vector<128x128xf32> -> vector<128x128xf32>
    %cst_89 = arith.constant 2.500000e-01 : f32
    %154 = vector.broadcast %cst_89 : f32 to vector<128x128xf32>
    %155 = arith.mulf %153, %154 : vector<128x128xf32>
    %156 = arith.addf %155, %5 : vector<128x128xf32>
    %cst_90 = arith.constant dense<0xFF800000> : vector<128xf32>
    %157 = vector.multi_reduction <maximumf>, %156, %cst_90 [0] : vector<128x128xf32> to vector<128xf32>
    %158 = vector.shape_cast %157 : vector<128xf32> to vector<1x128xf32>
    %159 = vector.broadcast %158 : vector<1x128xf32> to vector<128x128xf32>
    %160 = arith.subf %156, %159 : vector<128x128xf32>
    %161 = math.exp %160 : vector<128x128xf32>
    %cst_91 = arith.constant dense<0.000000e+00> : vector<128xf32>
    %162 = vector.multi_reduction <add>, %161, %cst_91 [0] : vector<128x128xf32> to vector<128xf32>
    %163 = vector.shape_cast %162 : vector<128xf32> to vector<1x128xf32>
    %164 = arith.truncf %161 : vector<128x128xf32> to vector<128x128xbf16>
    %cst_92 = arith.constant dense<0.000000e+00> : vector<16x128xf32>
    %165 = tpu.matmul %152, %164, %cst_92 {dimension_numbers = #tpu.dot_dimension_numbers<[1], [0], [0], [1], [0, 0, 1, 1], [], []>} : vector<16x128xbf16>, vector<128x128xbf16>, vector<16x128xf32> -> vector<16x128xf32>
    %166 = tpu.reciprocal %163 {approx = true} : vector<1x128xf32> -> vector<1x128xf32>
    %167 = vector.broadcast %166 : vector<1x128xf32> to vector<16x128xf32>
    %168 = arith.mulf %165, %167 : vector<16x128xf32>
    %169 = arith.truncf %168 : vector<16x128xf32> to vector<16x128xbf16>
    %c16 = arith.constant 16 : index
    %c0_93 = arith.constant 0 : index
    %170 = vector.load %arg30[%c16, %c0_93] : memref<64x128xbf16, #tpu.memory_space<vmem>>, vector<16x128xbf16>
    tpu.vector_store %arg30[%c16, %c0_93], %169 {strides = array<i32>} : memref<64x128xbf16, #tpu.memory_space<vmem>>, vector<16x128xbf16>,
    %171 = vector.extract_strided_slice %112 {offsets = [32, 0], sizes = [16, 128], strides = [1, 1]} : vector<64x128xbf16> to vector<16x128xbf16>
    %172 = vector.extract_strided_slice %120 {offsets = [32, 0], sizes = [16, 128], strides = [1, 1]} : vector<64x128xbf16> to vector<16x128xbf16>
    %173 = vector.extract_strided_slice %128 {offsets = [32, 0], sizes = [16, 128], strides = [1, 1]} : vector<64x128xbf16> to vector<16x128xbf16>
    %cst_94 = arith.constant dense<0.000000e+00> : vector<128x128xf32>
    %174 = tpu.matmul %172, %171, %cst_94 {dimension_numbers = #tpu.dot_dimension_numbers<[0], [0], [1], [1], [0, 1, 1, 1], [], []>} : vector<16x128xbf16>, vector<16x128xbf16>, vector<128x128xf32> -> vector<128x128xf32>
    %cst_95 = arith.constant 2.500000e-01 : f32
    %175 = vector.broadcast %cst_95 : f32 to vector<128x128xf32>
    %176 = arith.mulf %174, %175 : vector<128x128xf32>
    %177 = arith.addf %176, %5 : vector<128x128xf32>
    %cst_96 = arith.constant dense<0xFF800000> : vector<128xf32>
    %178 = vector.multi_reduction <maximumf>, %177, %cst_96 [0] : vector<128x128xf32> to vector<128xf32>
    %179 = vector.shape_cast %178 : vector<128xf32> to vector<1x128xf32>
    %180 = vector.broadcast %179 : vector<1x128xf32> to vector<128x128xf32>
    %181 = arith.subf %177, %180 : vector<128x128xf32>
    %182 = math.exp %181 : vector<128x128xf32>
    %cst_97 = arith.constant dense<0.000000e+00> : vector<128xf32>
    %183 = vector.multi_reduction <add>, %182, %cst_97 [0] : vector<128x128xf32> to vector<128xf32>
    %184 = vector.shape_cast %183 : vector<128xf32> to vector<1x128xf32>
    %185 = arith.truncf %182 : vector<128x128xf32> to vector<128x128xbf16>
    %cst_98 = arith.constant dense<0.000000e+00> : vector<16x128xf32>
    %186 = tpu.matmul %173, %185, %cst_98 {dimension_numbers = #tpu.dot_dimension_numbers<[1], [0], [0], [1], [0, 0, 1, 1], [], []>} : vector<16x128xbf16>, vector<128x128xbf16>, vector<16x128xf32> -> vector<16x128xf32>
    %187 = tpu.reciprocal %184 {approx = true} : vector<1x128xf32> -> vector<1x128xf32>
    %188 = vector.broadcast %187 : vector<1x128xf32> to vector<16x128xf32>
    %189 = arith.mulf %186, %188 : vector<16x128xf32>
    %190 = arith.truncf %189 : vector<16x128xf32> to vector<16x128xbf16>
    %c32 = arith.constant 32 : index
    %c0_99 = arith.constant 0 : index
    %191 = vector.load %arg30[%c32, %c0_99] : memref<64x128xbf16, #tpu.memory_space<vmem>>, vector<16x128xbf16>
    tpu.vector_store %arg30[%c32, %c0_99], %190 {strides = array<i32>} : memref<64x128xbf16, #tpu.memory_space<vmem>>, vector<16x128xbf16>,
    %192 = vector.extract_strided_slice %112 {offsets = [48, 0], sizes = [16, 128], strides = [1, 1]} : vector<64x128xbf16> to vector<16x128xbf16>
    %193 = vector.extract_strided_slice %120 {offsets = [48, 0], sizes = [16, 128], strides = [1, 1]} : vector<64x128xbf16> to vector<16x128xbf16>
    %194 = vector.extract_strided_slice %128 {offsets = [48, 0], sizes = [16, 128], strides = [1, 1]} : vector<64x128xbf16> to vector<16x128xbf16>
    %cst_100 = arith.constant dense<0.000000e+00> : vector<128x128xf32>
    %195 = tpu.matmul %193, %192, %cst_100 {dimension_numbers = #tpu.dot_dimension_numbers<[0], [0], [1], [1], [0, 1, 1, 1], [], []>} : vector<16x128xbf16>, vector<16x128xbf16>, vector<128x128xf32> -> vector<128x128xf32>
    %cst_101 = arith.constant 2.500000e-01 : f32
    %196 = vector.broadcast %cst_101 : f32 to vector<128x128xf32>
    %197 = arith.mulf %195, %196 : vector<128x128xf32>
    %198 = arith.addf %197, %5 : vector<128x128xf32>
    %cst_102 = arith.constant dense<0xFF800000> : vector<128xf32>
    %199 = vector.multi_reduction <maximumf>, %198, %cst_102 [0] : vector<128x128xf32> to vector<128xf32>
    %200 = vector.shape_cast %199 : vector<128xf32> to vector<1x128xf32>
    %201 = vector.broadcast %200 : vector<1x128xf32> to vector<128x128xf32>
    %202 = arith.subf %198, %201 : vector<128x128xf32>
    %203 = math.exp %202 : vector<128x128xf32>
    %cst_103 = arith.constant dense<0.000000e+00> : vector<128xf32>
    %204 = vector.multi_reduction <add>, %203, %cst_103 [0] : vector<128x128xf32> to vector<128xf32>
    %205 = vector.shape_cast %204 : vector<128xf32> to vector<1x128xf32>
    %206 = arith.truncf %203 : vector<128x128xf32> to vector<128x128xbf16>
    %cst_104 = arith.constant dense<0.000000e+00> : vector<16x128xf32>
    %207 = tpu.matmul %194, %206, %cst_104 {dimension_numbers = #tpu.dot_dimension_numbers<[1], [0], [0], [1], [0, 0, 1, 1], [], []>} : vector<16x128xbf16>, vector<128x128xbf16>, vector<16x128xf32> -> vector<16x128xf32>
    %208 = tpu.reciprocal %205 {approx = true} : vector<1x128xf32> -> vector<1x128xf32>
    %209 = vector.broadcast %208 : vector<1x128xf32> to vector<16x128xf32>
    %210 = arith.mulf %207, %209 : vector<16x128xf32>
    %211 = arith.truncf %210 : vector<16x128xf32> to vector<16x128xbf16>
    %c48 = arith.constant 48 : index
    %c0_105 = arith.constant 0 : index
    %212 = vector.load %arg30[%c48, %c0_105] : memref<64x128xbf16, #tpu.memory_space<vmem>>, vector<16x128xbf16>
    tpu.vector_store %arg30[%c48, %c0_105], %211 {strides = array<i32>} : memref<64x128xbf16, #tpu.memory_space<vmem>>, vector<16x128xbf16>,
    %c0_106 = arith.constant 0 : index
    %c0_107 = arith.constant 0 : index
    %213 = vector.load %arg30[%c0_106, %c0_107] : memref<64x128xbf16, #tpu.memory_space<vmem>>, vector<64x128xbf16>
    %c1_108 = arith.constant 1 : index
    %c0_109 = arith.constant 0 : index
    %c0_110 = arith.constant 0 : index
    %214 = vector.load %arg11[%c1_108, %c0_109, %c0_110] : memref<2x64x64xbf16, #tpu.memory_space<vmem>>, vector<1x64x64xbf16>
    %215 = vector.shape_cast %214 : vector<1x64x64xbf16> to vector<64x64xbf16>
    %cst_111 = arith.constant dense<0.000000e+00> : vector<128x64xf32>
    %216 = tpu.matmul %213, %215, %cst_111 {dimension_numbers = #tpu.dot_dimension_numbers<[0], [1], [1], [0], [0, 1, 1, 0], [], []>} : vector<64x128xbf16>, vector<64x64xbf16>, vector<128x64xf32> -> vector<128x64xf32>
    %c1_112 = arith.constant 1 : index
    %c0_113 = arith.constant 0 : index
    %c0_114 = arith.constant 0 : index
    %217 = vector.load %arg12[%c1_112, %c0_113, %c0_114] : memref<2x1x64xf32, #tpu.memory_space<vmem>>, vector<1x1x64xf32>
    %218 = vector.shape_cast %217 : vector<1x1x64xf32> to vector<1x64xf32>
    %219 = vector.broadcast %218 : vector<1x64xf32> to vector<128x64xf32>
    %220 = arith.addf %216, %219 : vector<128x64xf32>
    %221 = arith.addf %103, %220 : vector<128x64xf32>
    %c1_115 = arith.constant 1 : index
    %c0_116 = arith.constant 0 : index
    %c0_117 = arith.constant 0 : index
    %222 = vector.load %arg17[%c1_115, %c0_116, %c0_117] : memref<2x1x64xf32, #tpu.memory_space<vmem>>, vector<1x1x64xf32>
    %223 = vector.shape_cast %222 : vector<1x1x64xf32> to vector<1x64xf32>
    %c1_118 = arith.constant 1 : index
    %c0_119 = arith.constant 0 : index
    %c0_120 = arith.constant 0 : index
    %224 = vector.load %arg18[%c1_118, %c0_119, %c0_120] : memref<2x1x64xf32, #tpu.memory_space<vmem>>, vector<1x1x64xf32>
    %225 = vector.shape_cast %224 : vector<1x1x64xf32> to vector<1x64xf32>
    %cst_121 = arith.constant dense<0.000000e+00> : vector<128xf32>
    %226 = vector.multi_reduction <add>, %221, %cst_121 [1] : vector<128x64xf32> to vector<128xf32>
    %227 = vector.shape_cast %226 : vector<128xf32> to vector<128x1xf32>
    %cst_122 = arith.constant 6.400000e+01 : f32
    %228 = vector.broadcast %cst_122 : f32 to vector<128x1xf32>
    %229 = arith.divf %227, %228 : vector<128x1xf32>
    %230 = vector.broadcast %229 : vector<128x1xf32> to vector<128x64xf32>
    %231 = arith.subf %221, %230 : vector<128x64xf32>
    %232 = arith.mulf %231, %231 : vector<128x64xf32>
    %cst_123 = arith.constant dense<0.000000e+00> : vector<128xf32>
    %233 = vector.multi_reduction <add>, %232, %cst_123 [1] : vector<128x64xf32> to vector<128xf32>
    %234 = vector.shape_cast %233 : vector<128xf32> to vector<128x1xf32>
    %cst_124 = arith.constant 6.400000e+01 : f32
    %235 = vector.broadcast %cst_124 : f32 to vector<128x1xf32>
    %236 = arith.divf %234, %235 : vector<128x1xf32>
    %237 = vector.broadcast %229 : vector<128x1xf32> to vector<128x64xf32>
    %238 = arith.subf %221, %237 : vector<128x64xf32>
    %cst_125 = arith.constant 9.99999974E-6 : f32
    %239 = vector.broadcast %cst_125 : f32 to vector<128x1xf32>
    %240 = arith.addf %236, %239 : vector<128x1xf32>
    %241 = math.rsqrt %240 : vector<128x1xf32>
    %242 = vector.broadcast %241 : vector<128x1xf32> to vector<128x64xf32>
    %243 = arith.mulf %238, %242 : vector<128x64xf32>
    %244 = vector.broadcast %223 : vector<1x64xf32> to vector<128x64xf32>
    %245 = arith.mulf %243, %244 : vector<128x64xf32>
    %246 = vector.broadcast %225 : vector<1x64xf32> to vector<128x64xf32>
    %247 = arith.addf %245, %246 : vector<128x64xf32>
    %c1_126 = arith.constant 1 : index
    %c0_127 = arith.constant 0 : index
    %c0_128 = arith.constant 0 : index
    %248 = vector.load %arg13[%c1_126, %c0_127, %c0_128] : memref<2x64x64xbf16, #tpu.memory_space<vmem>>, vector<1x64x64xbf16>
    %249 = vector.shape_cast %248 : vector<1x64x64xbf16> to vector<64x64xbf16>
    %c1_129 = arith.constant 1 : index
    %c0_130 = arith.constant 0 : index
    %c0_131 = arith.constant 0 : index
    %250 = vector.load %arg14[%c1_129, %c0_130, %c0_131] : memref<2x1x64xf32, #tpu.memory_space<vmem>>, vector<1x1x64xf32>
    %251 = vector.shape_cast %250 : vector<1x1x64xf32> to vector<1x64xf32>
    %252 = arith.truncf %12 : vector<1x64xf32> to vector<1x64xbf16>
    %cst_132 = arith.constant dense<0.000000e+00> : vector<1x64xf32>
    %253 = tpu.matmul %252, %249, %cst_132 {dimension_numbers = #tpu.dot_dimension_numbers<[1], [1], [0], [0], [0, 0, 1, 0], [], []>} : vector<1x64xbf16>, vector<64x64xbf16>, vector<1x64xf32> -> vector<1x64xf32>
    %254 = arith.addf %253, %251 : vector<1x64xf32>
    %c1_133 = arith.constant 1 : index
    %c0_134 = arith.constant 0 : index
    %c0_135 = arith.constant 0 : index
    %255 = vector.load %arg15[%c1_133, %c0_134, %c0_135] : memref<2x64x64xbf16, #tpu.memory_space<vmem>>, vector<1x64x64xbf16>
    %256 = vector.shape_cast %255 : vector<1x64x64xbf16> to vector<64x64xbf16>
    %c1_136 = arith.constant 1 : index
    %c0_137 = arith.constant 0 : index
    %c0_138 = arith.constant 0 : index
    %257 = vector.load %arg16[%c1_136, %c0_137, %c0_138] : memref<2x1x64xf32, #tpu.memory_space<vmem>>, vector<1x1x64xf32>
    %258 = vector.shape_cast %257 : vector<1x1x64xf32> to vector<1x64xf32>
    %259 = arith.truncf %254 : vector<1x64xf32> to vector<1x64xbf16>
    %cst_139 = arith.constant dense<0.000000e+00> : vector<1x64xf32>
    %260 = tpu.matmul %259, %256, %cst_139 {dimension_numbers = #tpu.dot_dimension_numbers<[1], [1], [0], [0], [0, 0, 1, 0], [], []>} : vector<1x64xbf16>, vector<64x64xbf16>, vector<1x64xf32> -> vector<1x64xf32>
    %261 = arith.addf %260, %258 : vector<1x64xf32>
    %262 = vector.shape_cast %247 : vector<128x64xf32> to vector<1x128x64xf32>
    %263 = vector.shape_cast %261 : vector<1x64xf32> to vector<1x1x64xf32>
    %264 = vector.broadcast %263 : vector<1x1x64xf32> to vector<1x128x64xf32>
    %265 = arith.addf %262, %264 : vector<1x128x64xf32>
    %266 = vector.shape_cast %265 : vector<1x128x64xf32> to vector<128x64xf32>
    %c1_140 = arith.constant 1 : index
    %c0_141 = arith.constant 0 : index
    %c0_142 = arith.constant 0 : index
    %267 = vector.load %arg19[%c1_140, %c0_141, %c0_142] : memref<2x1x64xf32, #tpu.memory_space<vmem>>, vector<1x1x64xf32>
    %268 = vector.shape_cast %267 : vector<1x1x64xf32> to vector<1x64xf32>
    %c1_143 = arith.constant 1 : index
    %c0_144 = arith.constant 0 : index
    %c0_145 = arith.constant 0 : index
    %269 = vector.load %arg20[%c1_143, %c0_144, %c0_145] : memref<2x1x64xf32, #tpu.memory_space<vmem>>, vector<1x1x64xf32>
    %270 = vector.shape_cast %269 : vector<1x1x64xf32> to vector<1x64xf32>
    %cst_146 = arith.constant dense<0.000000e+00> : vector<128xf32>
    %271 = vector.multi_reduction <add>, %266, %cst_146 [1] : vector<128x64xf32> to vector<128xf32>
    %272 = vector.shape_cast %271 : vector<128xf32> to vector<128x1xf32>
    %cst_147 = arith.constant 6.400000e+01 : f32
    %273 = vector.broadcast %cst_147 : f32 to vector<128x1xf32>
    %274 = arith.divf %272, %273 : vector<128x1xf32>
    %275 = vector.broadcast %274 : vector<128x1xf32> to vector<128x64xf32>
    %276 = arith.subf %266, %275 : vector<128x64xf32>
    %277 = arith.mulf %276, %276 : vector<128x64xf32>
    %cst_148 = arith.constant dense<0.000000e+00> : vector<128xf32>
    %278 = vector.multi_reduction <add>, %277, %cst_148 [1] : vector<128x64xf32> to vector<128xf32>
    %279 = vector.shape_cast %278 : vector<128xf32> to vector<128x1xf32>
    %cst_149 = arith.constant 6.400000e+01 : f32
    %280 = vector.broadcast %cst_149 : f32 to vector<128x1xf32>
    %281 = arith.divf %279, %280 : vector<128x1xf32>
    %282 = vector.broadcast %274 : vector<128x1xf32> to vector<128x64xf32>
    %283 = arith.subf %266, %282 : vector<128x64xf32>
    %cst_150 = arith.constant 9.99999974E-6 : f32
    %284 = vector.broadcast %cst_150 : f32 to vector<128x1xf32>
    %285 = arith.addf %281, %284 : vector<128x1xf32>
    %286 = math.rsqrt %285 : vector<128x1xf32>
    %287 = vector.broadcast %286 : vector<128x1xf32> to vector<128x64xf32>
    %288 = arith.mulf %283, %287 : vector<128x64xf32>
    %289 = vector.broadcast %268 : vector<1x64xf32> to vector<128x64xf32>
    %290 = arith.mulf %288, %289 : vector<128x64xf32>
    %291 = vector.broadcast %270 : vector<1x64xf32> to vector<128x64xf32>
    %292 = arith.addf %290, %291 : vector<128x64xf32>
    %c1_151 = arith.constant 1 : index
    %c0_152 = arith.constant 0 : index
    %c0_153 = arith.constant 0 : index
    %293 = vector.load %arg23[%c1_151, %c0_152, %c0_153] : memref<2x128x64xbf16, #tpu.memory_space<vmem>>, vector<1x128x64xbf16>
    %294 = vector.shape_cast %293 : vector<1x128x64xbf16> to vector<128x64xbf16>
    %c1_154 = arith.constant 1 : index
    %c0_155 = arith.constant 0 : index
    %c0_156 = arith.constant 0 : index
    %295 = vector.load %arg24[%c1_154, %c0_155, %c0_156] : memref<2x1x128xf32, #tpu.memory_space<vmem>>, vector<1x1x128xf32>
    %296 = vector.shape_cast %295 : vector<1x1x128xf32> to vector<1x128xf32>
    %297 = arith.truncf %292 : vector<128x64xf32> to vector<128x64xbf16>
    %cst_157 = arith.constant dense<0.000000e+00> : vector<128x128xf32>
    %298 = tpu.matmul %297, %294, %cst_157 {dimension_numbers = #tpu.dot_dimension_numbers<[1], [1], [0], [0], [0, 0, 1, 0], [], []>} : vector<128x64xbf16>, vector<128x64xbf16>, vector<128x128xf32> -> vector<128x128xf32>
    %299 = vector.broadcast %296 : vector<1x128xf32> to vector<128x128xf32>
    %300 = arith.addf %298, %299 : vector<128x128xf32>
    %cst_158 = arith.constant 0.000000e+00 : f32
    %301 = vector.broadcast %cst_158 : f32 to vector<128x128xf32>
    %302 = arith.maximumf %300, %301 : vector<128x128xf32>
    %c1_159 = arith.constant 1 : index
    %c0_160 = arith.constant 0 : index
    %c0_161 = arith.constant 0 : index
    %303 = vector.load %arg25[%c1_159, %c0_160, %c0_161] : memref<2x64x128xbf16, #tpu.memory_space<vmem>>, vector<1x64x128xbf16>
    %304 = vector.shape_cast %303 : vector<1x64x128xbf16> to vector<64x128xbf16>
    %c1_162 = arith.constant 1 : index
    %c0_163 = arith.constant 0 : index
    %c0_164 = arith.constant 0 : index
    %305 = vector.load %arg26[%c1_162, %c0_163, %c0_164] : memref<2x1x64xf32, #tpu.memory_space<vmem>>, vector<1x1x64xf32>
    %306 = vector.shape_cast %305 : vector<1x1x64xf32> to vector<1x64xf32>
    %307 = arith.truncf %302 : vector<128x128xf32> to vector<128x128xbf16>
    %cst_165 = arith.constant dense<0.000000e+00> : vector<128x64xf32>
    %308 = tpu.matmul %307, %304, %cst_165 {dimension_numbers = #tpu.dot_dimension_numbers<[1], [1], [0], [0], [0, 0, 1, 0], [], []>} : vector<128x128xbf16>, vector<64x128xbf16>, vector<128x64xf32> -> vector<128x64xf32>
    %309 = vector.broadcast %306 : vector<1x64xf32> to vector<128x64xf32>
    %310 = arith.addf %308, %309 : vector<128x64xf32>
    %311 = arith.addf %292, %310 : vector<128x64xf32>
    %c1_166 = arith.constant 1 : index
    %c0_167 = arith.constant 0 : index
    %c0_168 = arith.constant 0 : index
    %312 = vector.load %arg21[%c1_166, %c0_167, %c0_168] : memref<2x1x64xf32, #tpu.memory_space<vmem>>, vector<1x1x64xf32>
    %313 = vector.shape_cast %312 : vector<1x1x64xf32> to vector<1x64xf32>
    %c1_169 = arith.constant 1 : index
    %c0_170 = arith.constant 0 : index
    %c0_171 = arith.constant 0 : index
    %314 = vector.load %arg22[%c1_169, %c0_170, %c0_171] : memref<2x1x64xf32, #tpu.memory_space<vmem>>, vector<1x1x64xf32>
    %315 = vector.shape_cast %314 : vector<1x1x64xf32> to vector<1x64xf32>
    %cst_172 = arith.constant dense<0.000000e+00> : vector<128xf32>
    %316 = vector.multi_reduction <add>, %311, %cst_172 [1] : vector<128x64xf32> to vector<128xf32>
    %317 = vector.shape_cast %316 : vector<128xf32> to vector<128x1xf32>
    %cst_173 = arith.constant 6.400000e+01 : f32
    %318 = vector.broadcast %cst_173 : f32 to vector<128x1xf32>
    %319 = arith.divf %317, %318 : vector<128x1xf32>
    %320 = vector.broadcast %319 : vector<128x1xf32> to vector<128x64xf32>
    %321 = arith.subf %311, %320 : vector<128x64xf32>
    %322 = arith.mulf %321, %321 : vector<128x64xf32>
    %cst_174 = arith.constant dense<0.000000e+00> : vector<128xf32>
    %323 = vector.multi_reduction <add>, %322, %cst_174 [1] : vector<128x64xf32> to vector<128xf32>
    %324 = vector.shape_cast %323 : vector<128xf32> to vector<128x1xf32>
    %cst_175 = arith.constant 6.400000e+01 : f32
    %325 = vector.broadcast %cst_175 : f32 to vector<128x1xf32>
    %326 = arith.divf %324, %325 : vector<128x1xf32>
    %327 = vector.broadcast %319 : vector<128x1xf32> to vector<128x64xf32>
    %328 = arith.subf %311, %327 : vector<128x64xf32>
    %cst_176 = arith.constant 9.99999974E-6 : f32
    %329 = vector.broadcast %cst_176 : f32 to vector<128x1xf32>
    %330 = arith.addf %326, %329 : vector<128x1xf32>
    %331 = math.rsqrt %330 : vector<128x1xf32>
    %332 = vector.broadcast %331 : vector<128x1xf32> to vector<128x64xf32>
    %333 = arith.mulf %328, %332 : vector<128x64xf32>
    %334 = vector.broadcast %313 : vector<1x64xf32> to vector<128x64xf32>
    %335 = arith.mulf %333, %334 : vector<128x64xf32>
    %336 = vector.broadcast %315 : vector<1x64xf32> to vector<128x64xf32>
    %337 = arith.addf %335, %336 : vector<128x64xf32>
    %c0_177 = arith.constant 0 : index
    %c0_178 = arith.constant 0 : index
    %338 = vector.load %arg27[%c0_177, %c0_178] : memref<1x64xbf16, #tpu.memory_space<vmem>>, vector<1x64xbf16>
    %339 = arith.truncf %337 : vector<128x64xf32> to vector<128x64xbf16>
    %cst_179 = arith.constant dense<0.000000e+00> : vector<1x128xf32>
    %340 = tpu.matmul %338, %339, %cst_179 {dimension_numbers = #tpu.dot_dimension_numbers<[1], [1], [0], [0], [0, 0, 1, 0], [], []>} : vector<1x64xbf16>, vector<128x64xbf16>, vector<1x128xf32> -> vector<1x128xf32>
    %c0_180 = arith.constant 0 : index
    %c0_181 = arith.constant 0 : index
    %341 = vector.load %arg28[%c0_180, %c0_181] : memref<1x1xf32, #tpu.memory_space<vmem>>, vector<1x1xf32>
    %342 = vector.broadcast %341 : vector<1x1xf32> to vector<1x128xf32>
    %343 = arith.addf %340, %342 : vector<1x128xf32>
    %344 = vector.shape_cast %343 : vector<1x128xf32> to vector<1x1x128xf32>
    %c0_182 = arith.constant 0 : index
    %c0_183 = arith.constant 0 : index
    %c0_184 = arith.constant 0 : index
    %345 = vector.load %arg29[%c0_182, %c0_183, %c0_184] : memref<1x1x128xf32, #tpu.memory_space<vmem>>, vector<1x1x128xf32>
    tpu.vector_store %arg29[%c0_182, %c0_183, %c0_184], %344 {strides = array<i32>} : memref<1x1x128xf32, #tpu.memory_space<vmem>>, vector<1x1x128xf32>,
    return
  }
  func.func @transform_0(%arg0: i32) -> (i32, i32, i32) {
    %c0_i32 = arith.constant 0 : i32
    %c0_i32_0 = arith.constant 0 : i32
    %c0_i32_1 = arith.constant 0 : i32
    return %arg0, %c0_i32, %c0_i32_0 : i32, i32, i32
  }
  func.func @transform_1(%arg0: i32) -> (i32, i32) {
    %c0_i32 = arith.constant 0 : i32
    %c0_i32_0 = arith.constant 0 : i32
    %c0_i32_1 = arith.constant 0 : i32
    return %c0_i32, %c0_i32_0 : i32, i32
  }
  func.func @transform_2(%arg0: i32) -> (i32, i32) {
    %c0_i32 = arith.constant 0 : i32
    %c0_i32_0 = arith.constant 0 : i32
    %c0_i32_1 = arith.constant 0 : i32
    return %c0_i32, %c0_i32_0 : i32, i32
  }
  func.func @transform_3(%arg0: i32) -> (i32, i32) {
    %c0_i32 = arith.constant 0 : i32
    %c0_i32_0 = arith.constant 0 : i32
    %c0_i32_1 = arith.constant 0 : i32
    return %c0_i32, %c0_i32_0 : i32, i32
  }
  func.func @transform_4(%arg0: i32) -> (i32, i32, i32) {
    %c0_i32 = arith.constant 0 : i32
    %c0_i32_0 = arith.constant 0 : i32
    %c0_i32_1 = arith.constant 0 : i32
    %c0_i32_2 = arith.constant 0 : i32
    return %c0_i32, %c0_i32_0, %c0_i32_1 : i32, i32, i32
  }
  func.func @transform_5(%arg0: i32) -> (i32, i32, i32) {
    %c0_i32 = arith.constant 0 : i32
    %c0_i32_0 = arith.constant 0 : i32
    %c0_i32_1 = arith.constant 0 : i32
    %c0_i32_2 = arith.constant 0 : i32
    return %c0_i32, %c0_i32_0, %c0_i32_1 : i32, i32, i32
  }
  func.func @transform_6(%arg0: i32) -> (i32, i32, i32) {
    %c0_i32 = arith.constant 0 : i32
    %c0_i32_0 = arith.constant 0 : i32
    %c0_i32_1 = arith.constant 0 : i32
    %c0_i32_2 = arith.constant 0 : i32
    return %c0_i32, %c0_i32_0, %c0_i32_1 : i32, i32, i32
  }
  func.func @transform_7(%arg0: i32) -> (i32, i32, i32) {
    %c0_i32 = arith.constant 0 : i32
    %c0_i32_0 = arith.constant 0 : i32
    %c0_i32_1 = arith.constant 0 : i32
    %c0_i32_2 = arith.constant 0 : i32
    return %c0_i32, %c0_i32_0, %c0_i32_1 : i32, i32, i32
  }
  func.func @transform_8(%arg0: i32) -> (i32, i32, i32) {
    %c0_i32 = arith.constant 0 : i32
    %c0_i32_0 = arith.constant 0 : i32
    %c0_i32_1 = arith.constant 0 : i32
    %c0_i32_2 = arith.constant 0 : i32
    return %c0_i32, %c0_i32_0, %c0_i32_1 : i32, i32, i32
  }
  func.func @transform_9(%arg0: i32) -> (i32, i32, i32) {
    %c0_i32 = arith.constant 0 : i32
    %c0_i32_0 = arith.constant 0 : i32
    %c0_i32_1 = arith.constant 0 : i32
    %c0_i32_2 = arith.constant 0 : i32
    return %c0_i32, %c0_i32_0, %c0_i32_1 : i32, i32, i32
  }
  func.func @transform_10(%arg0: i32) -> (i32, i32, i32) {
    %c0_i32 = arith.constant 0 : i32
    %c0_i32_0 = arith.constant 0 : i32
    %c0_i32_1 = arith.constant 0 : i32
    %c0_i32_2 = arith.constant 0 : i32
    return %c0_i32, %c0_i32_0, %c0_i32_1 : i32, i32, i32
  }
  func.func @transform_11(%arg0: i32) -> (i32, i32, i32) {
    %c0_i32 = arith.constant 0 : i32
    %c0_i32_0 = arith.constant 0 : i32
    %c0_i32_1 = arith.constant 0 : i32
    %c0_i32_2 = arith.constant 0 : i32
    return %c0_i32, %c0_i32_0, %c0_i32_1 : i32, i32, i32
  }
  func.func @transform_12(%arg0: i32) -> (i32, i32, i32) {
    %c0_i32 = arith.constant 0 : i32
    %c0_i32_0 = arith.constant 0 : i32
    %c0_i32_1 = arith.constant 0 : i32
    %c0_i32_2 = arith.constant 0 : i32
    return %c0_i32, %c0_i32_0, %c0_i32_1 : i32, i32, i32
  }
  func.func @transform_13(%arg0: i32) -> (i32, i32, i32) {
    %c0_i32 = arith.constant 0 : i32
    %c0_i32_0 = arith.constant 0 : i32
    %c0_i32_1 = arith.constant 0 : i32
    %c0_i32_2 = arith.constant 0 : i32
    return %c0_i32, %c0_i32_0, %c0_i32_1 : i32, i32, i32
  }
  func.func @transform_14(%arg0: i32) -> (i32, i32, i32) {
    %c0_i32 = arith.constant 0 : i32
    %c0_i32_0 = arith.constant 0 : i32
    %c0_i32_1 = arith.constant 0 : i32
    %c0_i32_2 = arith.constant 0 : i32
    return %c0_i32, %c0_i32_0, %c0_i32_1 : i32, i32, i32
  }
  func.func @transform_15(%arg0: i32) -> (i32, i32, i32) {
    %c0_i32 = arith.constant 0 : i32
    %c0_i32_0 = arith.constant 0 : i32
    %c0_i32_1 = arith.constant 0 : i32
    %c0_i32_2 = arith.constant 0 : i32
    return %c0_i32, %c0_i32_0, %c0_i32_1 : i32, i32, i32
  }
  func.func @transform_16(%arg0: i32) -> (i32, i32, i32) {
    %c0_i32 = arith.constant 0 : i32
    %c0_i32_0 = arith.constant 0 : i32
    %c0_i32_1 = arith.constant 0 : i32
    %c0_i32_2 = arith.constant 0 : i32
    return %c0_i32, %c0_i32_0, %c0_i32_1 : i32, i32, i32
  }
  func.func @transform_17(%arg0: i32) -> (i32, i32, i32) {
    %c0_i32 = arith.constant 0 : i32
    %c0_i32_0 = arith.constant 0 : i32
    %c0_i32_1 = arith.constant 0 : i32
    %c0_i32_2 = arith.constant 0 : i32
    return %c0_i32, %c0_i32_0, %c0_i32_1 : i32, i32, i32
  }
  func.func @transform_18(%arg0: i32) -> (i32, i32, i32) {
    %c0_i32 = arith.constant 0 : i32
    %c0_i32_0 = arith.constant 0 : i32
    %c0_i32_1 = arith.constant 0 : i32
    %c0_i32_2 = arith.constant 0 : i32
    return %c0_i32, %c0_i32_0, %c0_i32_1 : i32, i32, i32
  }
  func.func @transform_19(%arg0: i32) -> (i32, i32, i32) {
    %c0_i32 = arith.constant 0 : i32
    %c0_i32_0 = arith.constant 0 : i32
    %c0_i32_1 = arith.constant 0 : i32
    %c0_i32_2 = arith.constant 0 : i32
    return %c0_i32, %c0_i32_0, %c0_i32_1 : i32, i32, i32
  }
  func.func @transform_20(%arg0: i32) -> (i32, i32, i32) {
    %c0_i32 = arith.constant 0 : i32
    %c0_i32_0 = arith.constant 0 : i32
    %c0_i32_1 = arith.constant 0 : i32
    %c0_i32_2 = arith.constant 0 : i32
    return %c0_i32, %c0_i32_0, %c0_i32_1 : i32, i32, i32
  }
  func.func @transform_21(%arg0: i32) -> (i32, i32, i32) {
    %c0_i32 = arith.constant 0 : i32
    %c0_i32_0 = arith.constant 0 : i32
    %c0_i32_1 = arith.constant 0 : i32
    %c0_i32_2 = arith.constant 0 : i32
    return %c0_i32, %c0_i32_0, %c0_i32_1 : i32, i32, i32
  }
  func.func @transform_22(%arg0: i32) -> (i32, i32, i32) {
    %c0_i32 = arith.constant 0 : i32
    %c0_i32_0 = arith.constant 0 : i32
    %c0_i32_1 = arith.constant 0 : i32
    %c0_i32_2 = arith.constant 0 : i32
    return %c0_i32, %c0_i32_0, %c0_i32_1 : i32, i32, i32
  }
  func.func @transform_23(%arg0: i32) -> (i32, i32, i32) {
    %c0_i32 = arith.constant 0 : i32
    %c0_i32_0 = arith.constant 0 : i32
    %c0_i32_1 = arith.constant 0 : i32
    %c0_i32_2 = arith.constant 0 : i32
    return %c0_i32, %c0_i32_0, %c0_i32_1 : i32, i32, i32
  }
  func.func @transform_24(%arg0: i32) -> (i32, i32, i32) {
    %c0_i32 = arith.constant 0 : i32
    %c0_i32_0 = arith.constant 0 : i32
    %c0_i32_1 = arith.constant 0 : i32
    %c0_i32_2 = arith.constant 0 : i32
    return %c0_i32, %c0_i32_0, %c0_i32_1 : i32, i32, i32
  }
  func.func @transform_25(%arg0: i32) -> (i32, i32, i32) {
    %c0_i32 = arith.constant 0 : i32
    %c0_i32_0 = arith.constant 0 : i32
    %c0_i32_1 = arith.constant 0 : i32
    %c0_i32_2 = arith.constant 0 : i32
    return %c0_i32, %c0_i32_0, %c0_i32_1 : i32, i32, i32
  }
  func.func @transform_26(%arg0: i32) -> (i32, i32) {
    %c0_i32 = arith.constant 0 : i32
    %c0_i32_0 = arith.constant 0 : i32
    %c0_i32_1 = arith.constant 0 : i32
    return %c0_i32, %c0_i32_0 : i32, i32
  }
  func.func @transform_27(%arg0: i32) -> (i32, i32) {
    %c0_i32 = arith.constant 0 : i32
    %c0_i32_0 = arith.constant 0 : i32
    %c0_i32_1 = arith.constant 0 : i32
    return %c0_i32, %c0_i32_0 : i32, i32
  }
  func.func @transform_28(%arg0: i32) -> (i32, i32, i32) {
    %c0_i32 = arith.constant 0 : i32
    %c0_i32_0 = arith.constant 0 : i32
    %c0_i32_1 = arith.constant 0 : i32
    return %arg0, %c0_i32, %c0_i32_0 : i32, i32, i32
  }
}

</mosaic_0001>

<llo_original>
// kernel: generator_forward.1
$region0: #{generator_forward.1}
  #allocation0 [shape = 'u32[]', space=smem, size = 0x4, offset = 0x4, fixed_abs, tag = 'smem constant byte address 0x4 - core index']
  #allocation1 [shape = 'u32[144,128]{1,0:T(1,128)}', space=vmem, size = 0x12000, scoped, tag = 'internal scratch']
  #allocation2 [shape = 'bf16[64,128]{1,0:T(16,128)(2,1)}', space=vmem, size = 0x4000, scoped, tag = 'scratch operand']
  #allocation3 [shape = 'f32[1,1]{1,0:T(1,128)S(1)}', space=vmem, size = 0x200, scoped, tag = 'scoped memory for generator_forward.1']
  %s0 = inlined_call_operand.hbm [shape: f32[2,1,16], index: 0, kind: input, shape index: {}]
  %s1 = inlined_call_operand.hbm [shape: f32[128,64], index: 1, kind: input, shape index: {}]
  %s2 = inlined_call_operand.hbm [shape: bf16[64,16], index: 2, kind: input, shape index: {}]
  %s3 = inlined_call_operand.hbm [shape: f32[1,64], index: 3, kind: input, shape index: {}]
  %s4 = inlined_call_operand.hbm [shape: bf16[2,64,64], index: 4, kind: input, shape index: {}]
  %s5 = inlined_call_operand.hbm [shape: f32[2,64,1], index: 5, kind: input, shape index: {}]
  %s6 = inlined_call_operand.hbm [shape: bf16[2,64,64], index: 6, kind: input, shape index: {}]
  %s7 = inlined_call_operand.hbm [shape: f32[2,64,1], index: 7, kind: input, shape index: {}]
  %s8 = inlined_call_operand.hbm [shape: bf16[2,64,64], index: 8, kind: input, shape index: {}]
  %s9 = inlined_call_operand.hbm [shape: f32[2,64,1], index: 9, kind: input, shape index: {}]
  %s10 = inlined_call_operand.hbm [shape: bf16[2,64,64], index: 10, kind: input, shape index: {}]
  %s11 = inlined_call_operand.hbm [shape: f32[2,1,64], index: 11, kind: input, shape index: {}]
  %s12 = inlined_call_operand.hbm [shape: bf16[2,64,64], index: 12, kind: input, shape index: {}]
  %s13 = inlined_call_operand.hbm [shape: f32[2,1,64], index: 13, kind: input, shape index: {}]
  %s14 = inlined_call_operand.hbm [shape: bf16[2,64,64], index: 14, kind: input, shape index: {}]
  %s15 = inlined_call_operand.hbm [shape: f32[2,1,64], index: 15, kind: input, shape index: {}]
  %s16 = inlined_call_operand.hbm [shape: f32[2,1,64], index: 16, kind: input, shape index: {}]
  %s17 = inlined_call_operand.hbm [shape: f32[2,1,64], index: 17, kind: input, shape index: {}]
  %s18 = inlined_call_operand.hbm [shape: f32[2,1,64], index: 18, kind: input, shape index: {}]
  %s19 = inlined_call_operand.hbm [shape: f32[2,1,64], index: 19, kind: input, shape index: {}]
  %s20 = inlined_call_operand.hbm [shape: f32[2,1,64], index: 20, kind: input, shape index: {}]
  %s21 = inlined_call_operand.hbm [shape: f32[2,1,64], index: 21, kind: input, shape index: {}]
  %s22 = inlined_call_operand.hbm [shape: bf16[2,128,64], index: 22, kind: input, shape index: {}]
  %s23 = inlined_call_operand.hbm [shape: f32[2,1,128], index: 23, kind: input, shape index: {}]
  %s24 = inlined_call_operand.hbm [shape: bf16[2,64,128], index: 24, kind: input, shape index: {}]
  %s25 = inlined_call_operand.hbm [shape: f32[2,1,64], index: 25, kind: input, shape index: {}]
  %s26 = inlined_call_operand.hbm [shape: bf16[1,64], index: 26, kind: input, shape index: {}]
  %s27 = inlined_call_operand.<no memory space> [shape: f32[1,1], index: 27, kind: input, shape index: {}]
  %s28 = inlined_call_operand.hbm [shape: f32[2,1,128], index: 28, kind: output, shape index: {}]
  %s29 = sld [smem:[#allocation0]]
  $region253: #{generator_forward.1} parent=0
    _
  %s31 = ssub.s32 1, %s29
  %s32 = scalar_select 0, %s31, %s29
  %v33 = vstv %s27
  %34 = vst [vmem:[#allocation3] sm:$0x1] %v33
  $region1: #{generator_forward.1} parent=0
    #allocation4 [shape = 'u8[1024]{0}', space=vmem, size = 0x400, scoped, tag = 'input window, operand 0']
    #allocation5 [shape = 's32[2]{0}', space=sflag, size = 0x8, scoped, tag = 'scoped memory for generator_forward.1']
    #allocation6 [shape = 's32[2]{0}', space=sflag, size = 0x8, scoped, tag = 'scoped memory for generator_forward.1']
    #allocation7 [shape = 'u8[65536]{0}', space=vmem, size = 0x10000, scoped, tag = 'input window, operand 1, single buffered']
    #allocation8 [shape = 's32[1]{0}', space=sflag, size = 0x4, scoped, tag = 'scoped memory for generator_forward.1']
    #allocation9 [shape = 'u8[16384]{0}', space=vmem, size = 0x4000, scoped, tag = 'input window, operand 2, single buffered']
    #allocation10 [shape = 'u8[512]{0}', space=vmem, size = 0x400, scoped, tag = 'input window, operand 3, single buffered']
    #allocation11 [shape = 's32[1]{0}', space=sflag, size = 0x4, scoped, tag = 'scoped memory for generator_forward.1']
    #allocation12 [shape = 'u8[32768]{0}', space=vmem, size = 0x8000, scoped, tag = 'input window, operand 4, single buffered']
    #allocation13 [shape = 'u8[65536]{0}', space=vmem, size = 0x10000, scoped, tag = 'input window, operand 5, single buffered']
    #allocation14 [shape = 's32[1]{0}', space=sflag, size = 0x4, scoped, tag = 'scoped memory for generator_forward.1']
    #allocation15 [shape = 'u8[32768]{0}', space=vmem, size = 0x8000, scoped, tag = 'input window, operand 6, single buffered']
    #allocation16 [shape = 'u8[65536]{0}', space=vmem, size = 0x10000, scoped, tag = 'input window, operand 7, single buffered']
    #allocation17 [shape = 's32[1]{0}', space=sflag, size = 0x4, scoped, tag = 'scoped memory for generator_forward.1']
    #allocation18 [shape = 'u8[32768]{0}', space=vmem, size = 0x8000, scoped, tag = 'input window, operand 8, single buffered']
    #allocation19 [shape = 'u8[65536]{0}', space=vmem, size = 0x10000, scoped, tag = 'input window, operand 9, single buffered']
    #allocation20 [shape = 's32[1]{0}', space=sflag, size = 0x4, scoped, tag = 'scoped memory for generator_forward.1']
    #allocation21 [shape = 'u8[32768]{0}', space=vmem, size = 0x8000, scoped, tag = 'input window, operand 10, single buffered']
    #allocation22 [shape = 'u8[1024]{0}', space=vmem, size = 0x400, scoped, tag = 'input window, operand 11, single buffered']
    #allocation23 [shape = 's32[1]{0}', space=sflag, size = 0x4, scoped, tag = 'scoped memory for generator_forward.1']
    #allocation24 [shape = 'u8[32768]{0}', space=vmem, size = 0x8000, scoped, tag = 'input window, operand 12, single buffered']
    #allocation25 [shape = 'u8[1024]{0}', space=vmem, size = 0x400, scoped, tag = 'input window, operand 13, single buffered']
    #allocation26 [shape = 's32[1]{0}', space=sflag, size = 0x4, scoped, tag = 'scoped memory for generator_forward.1']
    #allocation27 [shape = 'u8[32768]{0}', space=vmem, size = 0x8000, scoped, tag = 'input window, operand 14, single buffered']
    #allocation28 [shape = 'u8[1024]{0}', space=vmem, size = 0x400, scoped, tag = 'input window, operand 15, single buffered']
    #allocation29 [shape = 's32[1]{0}', space=sflag, size = 0x4, scoped, tag = 'scoped memory for generator_forward.1']
    #allocation30 [shape = 'u8[1024]{0}', space=vmem, size = 0x400, scoped, tag = 'input window, operand 16, single buffered']
    #allocation31 [shape = 'u8[1024]{0}', space=vmem, size = 0x400, scoped, tag = 'input window, operand 17, single buffered']
    #allocation32 [shape = 's32[1]{0}', space=sflag, size = 0x4, scoped, tag = 'scoped memory for generator_forward.1']
    #allocation33 [shape = 'u8[1024]{0}', space=vmem, size = 0x400, scoped, tag = 'input window, operand 18, single buffered']
    #allocation34 [shape = 'u8[1024]{0}', space=vmem, size = 0x400, scoped, tag = 'input window, operand 19, single buffered']
    #allocation35 [shape = 's32[1]{0}', space=sflag, size = 0x4, scoped, tag = 'scoped memory for generator_forward.1']
    #allocation36 [shape = 'u8[1024]{0}', space=vmem, size = 0x400, scoped, tag = 'input window, operand 20, single buffered']
    #allocation37 [shape = 'u8[1024]{0}', space=vmem, size = 0x400, scoped, tag = 'input window, operand 21, single buffered']
    #allocation38 [shape = 's32[1]{0}', space=sflag, size = 0x4, scoped, tag = 'scoped memory for generator_forward.1']
    #allocation39 [shape = 'u8[65536]{0}', space=vmem, size = 0x10000, scoped, tag = 'input window, operand 22, single buffered']
    #allocation40 [shape = 'u8[1024]{0}', space=vmem, size = 0x400, scoped, tag = 'input window, operand 23, single buffered']
    #allocation41 [shape = 's32[1]{0}', space=sflag, size = 0x4, scoped, tag = 'scoped memory for generator_forward.1']
    #allocation42 [shape = 'u8[32768]{0}', space=vmem, size = 0x8000, scoped, tag = 'input window, operand 24, single buffered']
    #allocation43 [shape = 'u8[1024]{0}', space=vmem, size = 0x400, scoped, tag = 'input window, operand 25, single buffered']
    #allocation44 [shape = 's32[1]{0}', space=sflag, size = 0x4, scoped, tag = 'scoped memory for generator_forward.1']
    #allocation45 [shape = 'u8[512]{0}', space=vmem, size = 0x400, scoped, tag = 'input window, operand 26, single buffered']
    #allocation46 [shape = 'u8[1024]{0}', space=vmem, size = 0x400, scoped, tag = 'output window, operand 0']
    %35 = vsyncpa [#allocation5], 0
    %s36 = scalar_lea.sflag [#allocation5], 1
    %37 = vsyncpa %s36, 0
    %38 = vsyncpa [#allocation8], 0
    %39 = vsyncpa [#allocation11], 0
    %40 = vsyncpa [#allocation14], 0
    %41 = vsyncpa [#allocation17], 0
    %42 = vsyncpa [#allocation20], 0
    %43 = vsyncpa [#allocation23], 0
    %44 = vsyncpa [#allocation26], 0
    %45 = vsyncpa [#allocation29], 0
    %46 = vsyncpa [#allocation32], 0
    %47 = vsyncpa [#allocation35], 0
    %48 = vsyncpa [#allocation38], 0
    %49 = vsyncpa [#allocation41], 0
    %50 = vsyncpa [#allocation44], 0
    %51 = vsyncpa [#allocation6], 0
    %s52 = scalar_lea.sflag [#allocation6], 1
    %53 = vsyncpa %s52, 0
    loop: start=0, step=1, limit=4
    $region2: #{generator_forward.1} parent=1 // loop_pre_header
      _
    $region3: #{generator_forward.1} parent=1 // loop_header
      %s55 = sphi 0, %s59
      %p56 = scmp.ge.s32.totalorder %s55, 4
      %s65 = sphi 0, %s67
      %s68 = sphi 0, %s65
      %s69 = sphi 0, %s68
      %s85 = sphi 0, %s69
      %s89 = sphi 0, %s89
      %s91 = sphi 0, %s89
      %s92 = sphi 0, %s91
      %s106 = sphi 0, %s92
      %s110 = sphi 0, %s110
      %s112 = sphi 0, %s110
      %s113 = sphi 0, %s112
      %s127 = sphi 0, %s113
      %s131 = sphi 0, %s131
      %s133 = sphi 0, %s131
      %s134 = sphi 0, %s133
      %s148 = sphi 0, %s134
      %s152 = sphi 0, %s152
      %s154 = sphi 0, %s152
      %s155 = sphi 0, %s154
      %s169 = sphi 0, %s155
      %s173 = sphi 0, %s173
      %s175 = sphi 0, %s173
      %s176 = sphi 0, %s175
      %s190 = sphi 0, %s176
      %s194 = sphi 0, %s194
      %s196 = sphi 0, %s194
      %s197 = sphi 0, %s196
      %s211 = sphi 0, %s197
      %s215 = sphi 0, %s215
      %s217 = sphi 0, %s215
      %s218 = sphi 0, %s217
      %s232 = sphi 0, %s218
      %s236 = sphi 0, %s236
      %s238 = sphi 0, %s236
      %s239 = sphi 0, %s238
      %s253 = sphi 0, %s239
      %s257 = sphi 0, %s257
      %s259 = sphi 0, %s257
      %s260 = sphi 0, %s259
      %s274 = sphi 0, %s260
      %s278 = sphi 0, %s278
      %s280 = sphi 0, %s278
      %s281 = sphi 0, %s280
      %s295 = sphi 0, %s281
      %s299 = sphi 0, %s299
      %s301 = sphi 0, %s299
      %s302 = sphi 0, %s301
      %s316 = sphi 0, %s302
      %s320 = sphi 0, %s320
      %s322 = sphi 0, %s320
      %s323 = sphi 0, %s322
      %s337 = sphi 0, %s323
      %s341 = sphi 0, %s341
      %s343 = sphi 0, %s341
      %s344 = sphi 0, %s343
      %s358 = sphi 0, %s344
      %s362 = sphi 0, %s362
      %s364 = sphi 0, %s362
      %s365 = sphi 0, %s364
      %s379 = sphi 0, %s365
      %s383 = sphi 0, %s383
      %s385 = sphi 0, %s383
      %s386 = sphi 0, %s385
      %s400 = sphi 0, %s386
      %s404 = sphi 0, %s404
      %s406 = sphi 0, %s404
      %s407 = sphi 0, %s406
      %s421 = sphi 0, %s407
      %s425 = sphi 0, %s425
      %s427 = sphi 0, %s425
      %s428 = sphi 0, %s427
      %s442 = sphi 0, %s428
      %s446 = sphi 0, %s446
      %s448 = sphi 0, %s446
      %s449 = sphi 0, %s448
      %s463 = sphi 0, %s449
      %s467 = sphi 0, %s467
      %s469 = sphi 0, %s467
      %s470 = sphi 0, %s469
      %s484 = sphi 0, %s470
      %s488 = sphi 0, %s488
      %s490 = sphi 0, %s488
      %s491 = sphi 0, %s490
      %s505 = sphi 0, %s491
      %s509 = sphi 0, %s509
      %s511 = sphi 0, %s509
      %s512 = sphi 0, %s511
      %s526 = sphi 0, %s512
      %s530 = sphi 0, %s530
      %s532 = sphi 0, %s530
      %s533 = sphi 0, %s532
      %s547 = sphi 0, %s533
      %s551 = sphi 0, %s551
      %s553 = sphi 0, %s551
      %s554 = sphi 0, %s553
      %s568 = sphi 0, %s554
      %s572 = sphi 0, %s572
      %s574 = sphi 0, %s572
      %s575 = sphi 0, %s574
      %s589 = sphi 0, %s575
      %s593 = sphi 0, %s593
      %s595 = sphi 0, %s593
      %s596 = sphi 0, %s595
      %s610 = sphi 0, %s596
      %s614 = sphi 0, %s614
      %s616 = sphi 0, %s614
      %s617 = sphi 0, %s616
      %s631 = sphi 0, %s617
      %s635 = sphi 0, %s635
      %s637 = sphi 0, %s635
      %s638 = sphi 0, %s637
      %s652 = sphi 0, %s638
      %s658 = sphi 0, %s660
      %s661 = sphi 0, %s658
      %s662 = sphi 0, %s661
      %s678 = sphi 0, %s662
    $region4: #{generator_forward.1} parent=1 // loop_header_branch
      %58 = sbr.rel (%p56) target = $region8
    $region5: #{generator_forward.1} parent=1 // loop_body
      %s60 = ssub.s32 %s55, 1
      %s61 = ssub.s32 %s55, 2
      %s62 = sadd.s32 %s55, 1
      %s63 = ssub.s32 %s55, %s62
      %p64 = scmp.eq.s32.totalorder %s63, 0
      %s66 = sadd.s32 %s65, 1
      %s67 = scalar_select %p64, %s65, %s66
      %p70 = pneg %p64
      %p71 = scmp.eq.s32.totalorder %s55, 1
      %p72 = por %p70, %p71
      %p73 = scmp.ne.s32.totalorder %s65, %s68
      %p74 = scmp.eq.s32.totalorder %s55, 0
      %p75 = por %p73, %p74
      %p76 = scmp.ne.s32.totalorder %s65, %s68
      %p77 = scmp.eq.s32.totalorder %s60, 1
      %p78 = por %p76, %p77
      %p79 = scmp.ne.s32.totalorder %s68, %s69
      %p80 = scmp.eq.s32.totalorder %s60, 0
      %p81 = por %p79, %p80
      %p82 = scmp.ne.s32.totalorder %s68, %s69
      %p83 = scmp.eq.s32.totalorder %s61, 1
      %p84 = por %p82, %p83
      %p86 = scmp.ne.s32.totalorder %s69, %s85
      %p87 = scmp.eq.s32.totalorder %s61, 0
      %p88 = por %p86, %p87
      %s90 = sadd.s32 %s89, 1
      %p93 = scmp.eq.s32.totalorder %s55, 1
      %p94 = scmp.ne.s32.totalorder %s89, %s91
      %p95 = scmp.eq.s32.totalorder %s55, 0
      %p96 = por %p94, %p95
      %p97 = scmp.ne.s32.totalorder %s89, %s91
      %p98 = scmp.eq.s32.totalorder %s60, 1
      %p99 = por %p97, %p98
      %p100 = scmp.ne.s32.totalorder %s91, %s92
      %p101 = scmp.eq.s32.totalorder %s60, 0
      %p102 = por %p100, %p101
      %p103 = scmp.ne.s32.totalorder %s91, %s92
      %p104 = scmp.eq.s32.totalorder %s61, 1
      %p105 = por %p103, %p104
      %p107 = scmp.ne.s32.totalorder %s92, %s106
      %p108 = scmp.eq.s32.totalorder %s61, 0
      %p109 = por %p107, %p108
      %s111 = sadd.s32 %s110, 1
      %p114 = scmp.eq.s32.totalorder %s55, 1
      %p115 = scmp.ne.s32.totalorder %s110, %s112
      %p116 = scmp.eq.s32.totalorder %s55, 0
      %p117 = por %p115, %p116
      %p118 = scmp.ne.s32.totalorder %s110, %s112
      %p119 = scmp.eq.s32.totalorder %s60, 1
      %p120 = por %p118, %p119
      %p121 = scmp.ne.s32.totalorder %s112, %s113
      %p122 = scmp.eq.s32.totalorder %s60, 0
      %p123 = por %p121, %p122
      %p124 = scmp.ne.s32.totalorder %s112, %s113
      %p125 = scmp.eq.s32.totalorder %s61, 1
      %p126 = por %p124, %p125
      %p128 = scmp.ne.s32.totalorder %s113, %s127
      %p129 = scmp.eq.s32.totalorder %s61, 0
      %p130 = por %p128, %p129
      %s132 = sadd.s32 %s131, 1
      %p135 = scmp.eq.s32.totalorder %s55, 1
      %p136 = scmp.ne.s32.totalorder %s131, %s133
      %p137 = scmp.eq.s32.totalorder %s55, 0
      %p138 = por %p136, %p137
      %p139 = scmp.ne.s32.totalorder %s131, %s133
      %p140 = scmp.eq.s32.totalorder %s60, 1
      %p141 = por %p139, %p140
      %p142 = scmp.ne.s32.totalorder %s133, %s134
      %p143 = scmp.eq.s32.totalorder %s60, 0
      %p144 = por %p142, %p143
      %p145 = scmp.ne.s32.totalorder %s133, %s134
      %p146 = scmp.eq.s32.totalorder %s61, 1
      %p147 = por %p145, %p146
      %p149 = scmp.ne.s32.totalorder %s134, %s148
      %p150 = scmp.eq.s32.totalorder %s61, 0
      %p151 = por %p149, %p150
      %s153 = sadd.s32 %s152, 1
      %p156 = scmp.eq.s32.totalorder %s55, 1
      %p157 = scmp.ne.s32.totalorder %s152, %s154
      %p158 = scmp.eq.s32.totalorder %s55, 0
      %p159 = por %p157, %p158
      %p160 = scmp.ne.s32.totalorder %s152, %s154
      %p161 = scmp.eq.s32.totalorder %s60, 1
      %p162 = por %p160, %p161
      %p163 = scmp.ne.s32.totalorder %s154, %s155
      %p164 = scmp.eq.s32.totalorder %s60, 0
      %p165 = por %p163, %p164
      %p166 = scmp.ne.s32.totalorder %s154, %s155
      %p167 = scmp.eq.s32.totalorder %s61, 1
      %p168 = por %p166, %p167
      %p170 = scmp.ne.s32.totalorder %s155, %s169
      %p171 = scmp.eq.s32.totalorder %s61, 0
      %p172 = por %p170, %p171
      %s174 = sadd.s32 %s173, 1
      %p177 = scmp.eq.s32.totalorder %s55, 1
      %p178 = scmp.ne.s32.totalorder %s173, %s175
      %p179 = scmp.eq.s32.totalorder %s55, 0
      %p180 = por %p178, %p179
      %p181 = scmp.ne.s32.totalorder %s173, %s175
      %p182 = scmp.eq.s32.totalorder %s60, 1
      %p183 = por %p181, %p182
      %p184 = scmp.ne.s32.totalorder %s175, %s176
      %p185 = scmp.eq.s32.totalorder %s60, 0
      %p186 = por %p184, %p185
      %p187 = scmp.ne.s32.totalorder %s175, %s176
      %p188 = scmp.eq.s32.totalorder %s61, 1
      %p189 = por %p187, %p188
      %p191 = scmp.ne.s32.totalorder %s176, %s190
      %p192 = scmp.eq.s32.totalorder %s61, 0
      %p193 = por %p191, %p192
      %s195 = sadd.s32 %s194, 1
      %p198 = scmp.eq.s32.totalorder %s55, 1
      %p199 = scmp.ne.s32.totalorder %s194, %s196
      %p200 = scmp.eq.s32.totalorder %s55, 0
      %p201 = por %p199, %p200
      %p202 = scmp.ne.s32.totalorder %s194, %s196
      %p203 = scmp.eq.s32.totalorder %s60, 1
      %p204 = por %p202, %p203
      %p205 = scmp.ne.s32.totalorder %s196, %s197
      %p206 = scmp.eq.s32.totalorder %s60, 0
      %p207 = por %p205, %p206
      %p208 = scmp.ne.s32.totalorder %s196, %s197
      %p209 = scmp.eq.s32.totalorder %s61, 1
      %p210 = por %p208, %p209
      %p212 = scmp.ne.s32.totalorder %s197, %s211
      %p213 = scmp.eq.s32.totalorder %s61, 0
      %p214 = por %p212, %p213
      %s216 = sadd.s32 %s215, 1
      %p219 = scmp.eq.s32.totalorder %s55, 1
      %p220 = scmp.ne.s32.totalorder %s215, %s217
      %p221 = scmp.eq.s32.totalorder %s55, 0
      %p222 = por %p220, %p221
      %p223 = scmp.ne.s32.totalorder %s215, %s217
      %p224 = scmp.eq.s32.totalorder %s60, 1
      %p225 = por %p223, %p224
      %p226 = scmp.ne.s32.totalorder %s217, %s218
      %p227 = scmp.eq.s32.totalorder %s60, 0
      %p228 = por %p226, %p227
      %p229 = scmp.ne.s32.totalorder %s217, %s218
      %p230 = scmp.eq.s32.totalorder %s61, 1
      %p231 = por %p229, %p230
      %p233 = scmp.ne.s32.totalorder %s218, %s232
      %p234 = scmp.eq.s32.totalorder %s61, 0
      %p235 = por %p233, %p234
      %s237 = sadd.s32 %s236, 1
      %p240 = scmp.eq.s32.totalorder %s55, 1
      %p241 = scmp.ne.s32.totalorder %s236, %s238
      %p242 = scmp.eq.s32.totalorder %s55, 0
      %p243 = por %p241, %p242
      %p244 = scmp.ne.s32.totalorder %s236, %s238
      %p245 = scmp.eq.s32.totalorder %s60, 1
      %p246 = por %p244, %p245
      %p247 = scmp.ne.s32.totalorder %s238, %s239
      %p248 = scmp.eq.s32.totalorder %s60, 0
      %p249 = por %p247, %p248
      %p250 = scmp.ne.s32.totalorder %s238, %s239
      %p251 = scmp.eq.s32.totalorder %s61, 1
      %p252 = por %p250, %p251
      %p254 = scmp.ne.s32.totalorder %s239, %s253
      %p255 = scmp.eq.s32.totalorder %s61, 0
      %p256 = por %p254, %p255
      %s258 = sadd.s32 %s257, 1
      %p261 = scmp.eq.s32.totalorder %s55, 1
      %p262 = scmp.ne.s32.totalorder %s257, %s259
      %p263 = scmp.eq.s32.totalorder %s55, 0
      %p264 = por %p262, %p263
      %p265 = scmp.ne.s32.totalorder %s257, %s259
      %p266 = scmp.eq.s32.totalorder %s60, 1
      %p267 = por %p265, %p266
      %p268 = scmp.ne.s32.totalorder %s259, %s260
      %p269 = scmp.eq.s32.totalorder %s60, 0
      %p270 = por %p268, %p269
      %p271 = scmp.ne.s32.totalorder %s259, %s260
      %p272 = scmp.eq.s32.totalorder %s61, 1
      %p273 = por %p271, %p272
      %p275 = scmp.ne.s32.totalorder %s260, %s274
      %p276 = scmp.eq.s32.totalorder %s61, 0
      %p277 = por %p275, %p276
      %s279 = sadd.s32 %s278, 1
      %p282 = scmp.eq.s32.totalorder %s55, 1
      %p283 = scmp.ne.s32.totalorder %s278, %s280
      %p284 = scmp.eq.s32.totalorder %s55, 0
      %p285 = por %p283, %p284
      %p286 = scmp.ne.s32.totalorder %s278, %s280
      %p287 = scmp.eq.s32.totalorder %s60, 1
      %p288 = por %p286, %p287
      %p289 = scmp.ne.s32.totalorder %s280, %s281
      %p290 = scmp.eq.s32.totalorder %s60, 0
      %p291 = por %p289, %p290
      %p292 = scmp.ne.s32.totalorder %s280, %s281
      %p293 = scmp.eq.s32.totalorder %s61, 1
      %p294 = por %p292, %p293
      %p296 = scmp.ne.s32.totalorder %s281, %s295
      %p297 = scmp.eq.s32.totalorder %s61, 0
      %p298 = por %p296, %p297
      %s300 = sadd.s32 %s299, 1
      %p303 = scmp.eq.s32.totalorder %s55, 1
      %p304 = scmp.ne.s32.totalorder %s299, %s301
      %p305 = scmp.eq.s32.totalorder %s55, 0
      %p306 = por %p304, %p305
      %p307 = scmp.ne.s32.totalorder %s299, %s301
      %p308 = scmp.eq.s32.totalorder %s60, 1
      %p309 = por %p307, %p308
      %p310 = scmp.ne.s32.totalorder %s301, %s302
      %p311 = scmp.eq.s32.totalorder %s60, 0
      %p312 = por %p310, %p311
      %p313 = scmp.ne.s32.totalorder %s301, %s302
      %p314 = scmp.eq.s32.totalorder %s61, 1
      %p315 = por %p313, %p314
      %p317 = scmp.ne.s32.totalorder %s302, %s316
      %p318 = scmp.eq.s32.totalorder %s61, 0
      %p319 = por %p317, %p318
      %s321 = sadd.s32 %s320, 1
      %p324 = scmp.eq.s32.totalorder %s55, 1
      %p325 = scmp.ne.s32.totalorder %s320, %s322
      %p326 = scmp.eq.s32.totalorder %s55, 0
      %p327 = por %p325, %p326
      %p328 = scmp.ne.s32.totalorder %s320, %s322
      %p329 = scmp.eq.s32.totalorder %s60, 1
      %p330 = por %p328, %p329
      %p331 = scmp.ne.s32.totalorder %s322, %s323
      %p332 = scmp.eq.s32.totalorder %s60, 0
      %p333 = por %p331, %p332
      %p334 = scmp.ne.s32.totalorder %s322, %s323
      %p335 = scmp.eq.s32.totalorder %s61, 1
      %p336 = por %p334, %p335
      %p338 = scmp.ne.s32.totalorder %s323, %s337
      %p339 = scmp.eq.s32.totalorder %s61, 0
      %p340 = por %p338, %p339
      %s342 = sadd.s32 %s341, 1
      %p345 = scmp.eq.s32.totalorder %s55, 1
      %p346 = scmp.ne.s32.totalorder %s341, %s343
      %p347 = scmp.eq.s32.totalorder %s55, 0
      %p348 = por %p346, %p347
      %p349 = scmp.ne.s32.totalorder %s341, %s343
      %p350 = scmp.eq.s32.totalorder %s60, 1
      %p351 = por %p349, %p350
      %p352 = scmp.ne.s32.totalorder %s343, %s344
      %p353 = scmp.eq.s32.totalorder %s60, 0
      %p354 = por %p352, %p353
      %p355 = scmp.ne.s32.totalorder %s343, %s344
      %p356 = scmp.eq.s32.totalorder %s61, 1
      %p357 = por %p355, %p356
      %p359 = scmp.ne.s32.totalorder %s344, %s358
      %p360 = scmp.eq.s32.totalorder %s61, 0
      %p361 = por %p359, %p360
      %s363 = sadd.s32 %s362, 1
      %p366 = scmp.eq.s32.totalorder %s55, 1
      %p367 = scmp.ne.s32.totalorder %s362, %s364
      %p368 = scmp.eq.s32.totalorder %s55, 0
      %p369 = por %p367, %p368
      %p370 = scmp.ne.s32.totalorder %s362, %s364
      %p371 = scmp.eq.s32.totalorder %s60, 1
      %p372 = por %p370, %p371
      %p373 = scmp.ne.s32.totalorder %s364, %s365
      %p374 = scmp.eq.s32.totalorder %s60, 0
      %p375 = por %p373, %p374
      %p376 = scmp.ne.s32.totalorder %s364, %s365
      %p377 = scmp.eq.s32.totalorder %s61, 1
      %p378 = por %p376, %p377
      %p380 = scmp.ne.s32.totalorder %s365, %s379
      %p381 = scmp.eq.s32.totalorder %s61, 0
      %p382 = por %p380, %p381
      %s384 = sadd.s32 %s383, 1
      %p387 = scmp.eq.s32.totalorder %s55, 1
      %p388 = scmp.ne.s32.totalorder %s383, %s385
      %p389 = scmp.eq.s32.totalorder %s55, 0
      %p390 = por %p388, %p389
      %p391 = scmp.ne.s32.totalorder %s383, %s385
      %p392 = scmp.eq.s32.totalorder %s60, 1
      %p393 = por %p391, %p392
      %p394 = scmp.ne.s32.totalorder %s385, %s386
      %p395 = scmp.eq.s32.totalorder %s60, 0
      %p396 = por %p394, %p395
      %p397 = scmp.ne.s32.totalorder %s385, %s386
      %p398 = scmp.eq.s32.totalorder %s61, 1
      %p399 = por %p397, %p398
      %p401 = scmp.ne.s32.totalorder %s386, %s400
      %p402 = scmp.eq.s32.totalorder %s61, 0
      %p403 = por %p401, %p402
      %s405 = sadd.s32 %s404, 1
      %p408 = scmp.eq.s32.totalorder %s55, 1
      %p409 = scmp.ne.s32.totalorder %s404, %s406
      %p410 = scmp.eq.s32.totalorder %s55, 0
      %p411 = por %p409, %p410
      %p412 = scmp.ne.s32.totalorder %s404, %s406
      %p413 = scmp.eq.s32.totalorder %s60, 1
      %p414 = por %p412, %p413
      %p415 = scmp.ne.s32.totalorder %s406, %s407
      %p416 = scmp.eq.s32.totalorder %s60, 0
      %p417 = por %p415, %p416
      %p418 = scmp.ne.s32.totalorder %s406, %s407
      %p419 = scmp.eq.s32.totalorder %s61, 1
      %p420 = por %p418, %p419
      %p422 = scmp.ne.s32.totalorder %s407, %s421
      %p423 = scmp.eq.s32.totalorder %s61, 0
      %p424 = por %p422, %p423
      %s426 = sadd.s32 %s425, 1
      %p429 = scmp.eq.s32.totalorder %s55, 1
      %p430 = scmp.ne.s32.totalorder %s425, %s427
      %p431 = scmp.eq.s32.totalorder %s55, 0
      %p432 = por %p430, %p431
      %p433 = scmp.ne.s32.totalorder %s425, %s427
      %p434 = scmp.eq.s32.totalorder %s60, 1
      %p435 = por %p433, %p434
      %p436 = scmp.ne.s32.totalorder %s427, %s428
      %p437 = scmp.eq.s32.totalorder %s60, 0
      %p438 = por %p436, %p437
      %p439 = scmp.ne.s32.totalorder %s427, %s428
      %p440 = scmp.eq.s32.totalorder %s61, 1
      %p441 = por %p439, %p440
      %p443 = scmp.ne.s32.totalorder %s428, %s442
      %p444 = scmp.eq.s32.totalorder %s61, 0
      %p445 = por %p443, %p444
      %s447 = sadd.s32 %s446, 1
      %p450 = scmp.eq.s32.totalorder %s55, 1
      %p451 = scmp.ne.s32.totalorder %s446, %s448
      %p452 = scmp.eq.s32.totalorder %s55, 0
      %p453 = por %p451, %p452
      %p454 = scmp.ne.s32.totalorder %s446, %s448
      %p455 = scmp.eq.s32.totalorder %s60, 1
      %p456 = por %p454, %p455
      %p457 = scmp.ne.s32.totalorder %s448, %s449
      %p458 = scmp.eq.s32.totalorder %s60, 0
      %p459 = por %p457, %p458
      %p460 = scmp.ne.s32.totalorder %s448, %s449
      %p461 = scmp.eq.s32.totalorder %s61, 1
      %p462 = por %p460, %p461
      %p464 = scmp.ne.s32.totalorder %s449, %s463
      %p465 = scmp.eq.s32.totalorder %s61, 0
      %p466 = por %p464, %p465
      %s468 = sadd.s32 %s467, 1
      %p471 = scmp.eq.s32.totalorder %s55, 1
      %p472 = scmp.ne.s32.totalorder %s467, %s469
      %p473 = scmp.eq.s32.totalorder %s55, 0
      %p474 = por %p472, %p473
      %p475 = scmp.ne.s32.totalorder %s467, %s469
      %p476 = scmp.eq.s32.totalorder %s60, 1
      %p477 = por %p475, %p476
      %p478 = scmp.ne.s32.totalorder %s469, %s470
      %p479 = scmp.eq.s32.totalorder %s60, 0
      %p480 = por %p478, %p479
      %p481 = scmp.ne.s32.totalorder %s469, %s470
      %p482 = scmp.eq.s32.totalorder %s61, 1
      %p483 = por %p481, %p482
      %p485 = scmp.ne.s32.totalorder %s470, %s484
      %p486 = scmp.eq.s32.totalorder %s61, 0
      %p487 = por %p485, %p486
      %s489 = sadd.s32 %s488, 1
      %p492 = scmp.eq.s32.totalorder %s55, 1
      %p493 = scmp.ne.s32.totalorder %s488, %s490
      %p494 = scmp.eq.s32.totalorder %s55, 0
      %p495 = por %p493, %p494
      %p496 = scmp.ne.s32.totalorder %s488, %s490
      %p497 = scmp.eq.s32.totalorder %s60, 1
      %p498 = por %p496, %p497
      %p499 = scmp.ne.s32.totalorder %s490, %s491
      %p500 = scmp.eq.s32.totalorder %s60, 0
      %p501 = por %p499, %p500
      %p502 = scmp.ne.s32.totalorder %s490, %s491
      %p503 = scmp.eq.s32.totalorder %s61, 1
      %p504 = por %p502, %p503
      %p506 = scmp.ne.s32.totalorder %s491, %s505
      %p507 = scmp.eq.s32.totalorder %s61, 0
      %p508 = por %p506, %p507
      %s510 = sadd.s32 %s509, 1
      %p513 = scmp.eq.s32.totalorder %s55, 1
      %p514 = scmp.ne.s32.totalorder %s509, %s511
      %p515 = scmp.eq.s32.totalorder %s55, 0
      %p516 = por %p514, %p515
      %p517 = scmp.ne.s32.totalorder %s509, %s511
      %p518 = scmp.eq.s32.totalorder %s60, 1
      %p519 = por %p517, %p518
      %p520 = scmp.ne.s32.totalorder %s511, %s512
      %p521 = scmp.eq.s32.totalorder %s60, 0
      %p522 = por %p520, %p521
      %p523 = scmp.ne.s32.totalorder %s511, %s512
      %p524 = scmp.eq.s32.totalorder %s61, 1
      %p525 = por %p523, %p524
      %p527 = scmp.ne.s32.totalorder %s512, %s526
      %p528 = scmp.eq.s32.totalorder %s61, 0
      %p529 = por %p527, %p528
      %s531 = sadd.s32 %s530, 1
      %p534 = scmp.eq.s32.totalorder %s55, 1
      %p535 = scmp.ne.s32.totalorder %s530, %s532
      %p536 = scmp.eq.s32.totalorder %s55, 0
      %p537 = por %p535, %p536
      %p538 = scmp.ne.s32.totalorder %s530, %s532
      %p539 = scmp.eq.s32.totalorder %s60, 1
      %p540 = por %p538, %p539
      %p541 = scmp.ne.s32.totalorder %s532, %s533
      %p542 = scmp.eq.s32.totalorder %s60, 0
      %p543 = por %p541, %p542
      %p544 = scmp.ne.s32.totalorder %s532, %s533
      %p545 = scmp.eq.s32.totalorder %s61, 1
      %p546 = por %p544, %p545
      %p548 = scmp.ne.s32.totalorder %s533, %s547
      %p549 = scmp.eq.s32.totalorder %s61, 0
      %p550 = por %p548, %p549
      %s552 = sadd.s32 %s551, 1
      %p555 = scmp.eq.s32.totalorder %s55, 1
      %p556 = scmp.ne.s32.totalorder %s551, %s553
      %p557 = scmp.eq.s32.totalorder %s55, 0
      %p558 = por %p556, %p557
      %p559 = scmp.ne.s32.totalorder %s551, %s553
      %p560 = scmp.eq.s32.totalorder %s60, 1
      %p561 = por %p559, %p560
      %p562 = scmp.ne.s32.totalorder %s553, %s554
      %p563 = scmp.eq.s32.totalorder %s60, 0
      %p564 = por %p562, %p563
      %p565 = scmp.ne.s32.totalorder %s553, %s554
      %p566 = scmp.eq.s32.totalorder %s61, 1
      %p567 = por %p565, %p566
      %p569 = scmp.ne.s32.totalorder %s554, %s568
      %p570 = scmp.eq.s32.totalorder %s61, 0
      %p571 = por %p569, %p570
      %s573 = sadd.s32 %s572, 1
      %p576 = scmp.eq.s32.totalorder %s55, 1
      %p577 = scmp.ne.s32.totalorder %s572, %s574
      %p578 = scmp.eq.s32.totalorder %s55, 0
      %p579 = por %p577, %p578
      %p580 = scmp.ne.s32.totalorder %s572, %s574
      %p581 = scmp.eq.s32.totalorder %s60, 1
      %p582 = por %p580, %p581
      %p583 = scmp.ne.s32.totalorder %s574, %s575
      %p584 = scmp.eq.s32.totalorder %s60, 0
      %p585 = por %p583, %p584
      %p586 = scmp.ne.s32.totalorder %s574, %s575
      %p587 = scmp.eq.s32.totalorder %s61, 1
      %p588 = por %p586, %p587
      %p590 = scmp.ne.s32.totalorder %s575, %s589
      %p591 = scmp.eq.s32.totalorder %s61, 0
      %p592 = por %p590, %p591
      %s594 = sadd.s32 %s593, 1
      %p597 = scmp.eq.s32.totalorder %s55, 1
      %p598 = scmp.ne.s32.totalorder %s593, %s595
      %p599 = scmp.eq.s32.totalorder %s55, 0
      %p600 = por %p598, %p599
      %p601 = scmp.ne.s32.totalorder %s593, %s595
      %p602 = scmp.eq.s32.totalorder %s60, 1
      %p603 = por %p601, %p602
      %p604 = scmp.ne.s32.totalorder %s595, %s596
      %p605 = scmp.eq.s32.totalorder %s60, 0
      %p606 = por %p604, %p605
      %p607 = scmp.ne.s32.totalorder %s595, %s596
      %p608 = scmp.eq.s32.totalorder %s61, 1
      %p609 = por %p607, %p608
      %p611 = scmp.ne.s32.totalorder %s596, %s610
      %p612 = scmp.eq.s32.totalorder %s61, 0
      %p613 = por %p611, %p612
      %s615 = sadd.s32 %s614, 1
      %p618 = scmp.eq.s32.totalorder %s55, 1
      %p619 = scmp.ne.s32.totalorder %s614, %s616
      %p620 = scmp.eq.s32.totalorder %s55, 0
      %p621 = por %p619, %p620
      %p622 = scmp.ne.s32.totalorder %s614, %s616
      %p623 = scmp.eq.s32.totalorder %s60, 1
      %p624 = por %p622, %p623
      %p625 = scmp.ne.s32.totalorder %s616, %s617
      %p626 = scmp.eq.s32.totalorder %s60, 0
      %p627 = por %p625, %p626
      %p628 = scmp.ne.s32.totalorder %s616, %s617
      %p629 = scmp.eq.s32.totalorder %s61, 1
      %p630 = por %p628, %p629
      %p632 = scmp.ne.s32.totalorder %s617, %s631
      %p633 = scmp.eq.s32.totalorder %s61, 0
      %p634 = por %p632, %p633
      %s636 = sadd.s32 %s635, 1
      %p639 = scmp.eq.s32.totalorder %s55, 1
      %p640 = scmp.ne.s32.totalorder %s635, %s637
      %p641 = scmp.eq.s32.totalorder %s55, 0
      %p642 = por %p640, %p641
      %p643 = scmp.ne.s32.totalorder %s635, %s637
      %p644 = scmp.eq.s32.totalorder %s60, 1
      %p645 = por %p643, %p644
      %p646 = scmp.ne.s32.totalorder %s637, %s638
      %p647 = scmp.eq.s32.totalorder %s60, 0
      %p648 = por %p646, %p647
      %p649 = scmp.ne.s32.totalorder %s637, %s638
      %p650 = scmp.eq.s32.totalorder %s61, 1
      %p651 = por %p649, %p650
      %p653 = scmp.ne.s32.totalorder %s638, %s652
      %p654 = scmp.eq.s32.totalorder %s61, 0
      %p655 = por %p653, %p654
      %s656 = ssub.s32 %s55, %s62
      %p657 = scmp.eq.s32.totalorder %s656, 0
      %s659 = sadd.s32 %s658, 1
      %s660 = scalar_select %p657, %s658, %s659
      %p663 = pneg %p657
      %p664 = scmp.eq.s32.totalorder %s55, 1
      %p665 = por %p663, %p664
      %p666 = scmp.ne.s32.totalorder %s658, %s661
      %p667 = scmp.eq.s32.totalorder %s55, 0
      %p668 = por %p666, %p667
      %p669 = scmp.ne.s32.totalorder %s658, %s661
      %p670 = scmp.eq.s32.totalorder %s60, 1
      %p671 = por %p669, %p670
      %p672 = scmp.ne.s32.totalorder %s661, %s662
      %p673 = scmp.eq.s32.totalorder %s60, 0
      %p674 = por %p672, %p673
      %p675 = scmp.ne.s32.totalorder %s661, %s662
      %p676 = scmp.eq.s32.totalorder %s61, 1
      %p677 = por %p675, %p676
      %p679 = scmp.ne.s32.totalorder %s662, %s678
      %p680 = scmp.eq.s32.totalorder %s61, 0
      %p681 = por %p679, %p680
      %p682 = scmp.le.s32.totalorder 1, %s55
      %p683 = scmp.lt.s32.totalorder %s55, 3
      %p684 = pnand %p682, %p683
      %p685 = pneg %p684
      // Predicated region
      $region9: #{generator_forward.1} parent=5 // pred_check
        _
      $region10: #{generator_forward.1} parent=5 // pred_check_branch
        %687 = sbr.rel (%p684) target = $region12
      $region11: #{generator_forward.1} parent=5 // pred_region
        %s688 = ssub.s32 %s55, 1
        // Predicated region
        $region13: #{generator_forward.1} parent=11 // pred_check
          %p689 = pneg %p102
        $region14: #{generator_forward.1} parent=11 // pred_check_branch
          %691 = sbr.rel (%p689) target = $region16
        $region15: #{generator_forward.1} parent=11 // pred_region
          %s693 = ssub.s32 2048, 2048
          %694 = vsyncadd [#allocation8], %s693
          %s695 = sshll.u32 [#allocation7], 4
          %s696 = int_to_ptr.vmem [resolvable:$true] %s695
          %701 = dma.hbm_to_vmem [thread:$0]  %s1, 2048, %s696, [#allocation8], 128, 128, 8
        $region16: #{generator_forward.1} parent=11 // pred_fallthru
          _
        // Predicated region
        $region17: #{generator_forward.1} parent=11 // pred_check
          %p702 = pneg %p123
        $region18: #{generator_forward.1} parent=11 // pred_check_branch
          %704 = sbr.rel (%p702) target = $region20
        $region19: #{generator_forward.1} parent=11 // pred_region
          %s706 = ssub.s32 512, 512
          %707 = vsyncadd [#allocation8], %s706
          %s708 = sshll.u32 [#allocation9], 4
          %s709 = int_to_ptr.vmem [resolvable:$true] %s708
          %714 = dma.hbm_to_vmem [thread:$0]  %s2, 512, %s709, [#allocation8], 64, 64, 4
        $region20: #{generator_forward.1} parent=11 // pred_fallthru
          _
        // Predicated region
        $region21: #{generator_forward.1} parent=11 // pred_check
          %p715 = pneg %p144
        $region22: #{generator_forward.1} parent=11 // pred_check_branch
          %717 = sbr.rel (%p715) target = $region24
        $region23: #{generator_forward.1} parent=11 // pred_region
          %s719 = ssub.s32 16, 16
          %720 = vsyncadd [#allocation11], %s719
          %s722 = sshll.u32 [#allocation10], 4
          %s723 = int_to_ptr.vmem [resolvable:$true] %s722
          %725 = dma.hbm_to_vmem [thread:$0]  %s3, 16, %s723, [#allocation11]
        $region24: #{generator_forward.1} parent=11 // pred_fallthru
          _
        // Predicated region
        $region25: #{generator_forward.1} parent=11 // pred_check
          %p726 = pneg %p165
        $region26: #{generator_forward.1} parent=11 // pred_check_branch
          %728 = sbr.rel (%p726) target = $region28
        $region27: #{generator_forward.1} parent=11 // pred_region
          %s730 = ssub.s32 1024, 1024
          %731 = vsyncadd [#allocation11], %s730
          %s732 = sshll.u32 [#allocation12], 4
          %s733 = int_to_ptr.vmem [resolvable:$true] %s732
          %738 = dma.hbm_to_vmem [thread:$0]  %s4, 1024, %s733, [#allocation11], 64, 64, 4
        $region28: #{generator_forward.1} parent=11 // pred_fallthru
          _
        // Predicated region
        $region29: #{generator_forward.1} parent=11 // pred_check
          %p739 = pneg %p186
        $region30: #{generator_forward.1} parent=11 // pred_check_branch
          %741 = sbr.rel (%p739) target = $region32
        $region31: #{generator_forward.1} parent=11 // pred_region
          %s743 = ssub.s32 2048, 2048
          %744 = vsyncadd [#allocation14], %s743
          %s745 = sshll.u32 [#allocation13], 4
          %s746 = int_to_ptr.vmem [resolvable:$true] %s745
          %751 = dma.hbm_to_vmem [thread:$0]  %s5, 2048, %s746, [#allocation14], 128, 128, 8
        $region32: #{generator_forward.1} parent=11 // pred_fallthru
          _
        // Predicated region
        $region33: #{generator_forward.1} parent=11 // pred_check
          %p752 = pneg %p207
        $region34: #{generator_forward.1} parent=11 // pred_check_branch
          %754 = sbr.rel (%p752) target = $region36
        $region35: #{generator_forward.1} parent=11 // pred_region
          %s756 = ssub.s32 1024, 1024
          %757 = vsyncadd [#allocation14], %s756
          %s758 = sshll.u32 [#allocation15], 4
          %s759 = int_to_ptr.vmem [resolvable:$true] %s758
          %764 = dma.hbm_to_vmem [thread:$0]  %s6, 1024, %s759, [#allocation14], 64, 64, 4
        $region36: #{generator_forward.1} parent=11 // pred_fallthru
          _
        // Predicated region
        $region37: #{generator_forward.1} parent=11 // pred_check
          %p765 = pneg %p228
        $region38: #{generator_forward.1} parent=11 // pred_check_branch
          %767 = sbr.rel (%p765) target = $region40
        $region39: #{generator_forward.1} parent=11 // pred_region
          %s769 = ssub.s32 2048, 2048
          %770 = vsyncadd [#allocation17], %s769
          %s771 = sshll.u32 [#allocation16], 4
          %s772 = int_to_ptr.vmem [resolvable:$true] %s771
          %777 = dma.hbm_to_vmem [thread:$0]  %s7, 2048, %s772, [#allocation17], 128, 128, 8
        $region40: #{generator_forward.1} parent=11 // pred_fallthru
          _
        // Predicated region
        $region41: #{generator_forward.1} parent=11 // pred_check
          %p778 = pneg %p249
        $region42: #{generator_forward.1} parent=11 // pred_check_branch
          %780 = sbr.rel (%p778) target = $region44
        $region43: #{generator_forward.1} parent=11 // pred_region
          %s782 = ssub.s32 1024, 1024
          %783 = vsyncadd [#allocation17], %s782
          %s784 = sshll.u32 [#allocation18], 4
          %s785 = int_to_ptr.vmem [resolvable:$true] %s784
          %790 = dma.hbm_to_vmem [thread:$0]  %s8, 1024, %s785, [#allocation17], 64, 64, 4
        $region44: #{generator_forward.1} parent=11 // pred_fallthru
          _
        // Predicated region
        $region45: #{generator_forward.1} parent=11 // pred_check
          %p791 = pneg %p270
        $region46: #{generator_forward.1} parent=11 // pred_check_branch
          %793 = sbr.rel (%p791) target = $region48
        $region47: #{generator_forward.1} parent=11 // pred_region
          %s795 = ssub.s32 2048, 2048
          %796 = vsyncadd [#allocation20], %s795
          %s797 = sshll.u32 [#allocation19], 4
          %s798 = int_to_ptr.vmem [resolvable:$true] %s797
          %803 = dma.hbm_to_vmem [thread:$0]  %s9, 2048, %s798, [#allocation20], 128, 128, 8
        $region48: #{generator_forward.1} parent=11 // pred_fallthru
          _
        // Predicated region
        $region49: #{generator_forward.1} parent=11 // pred_check
          %p804 = pneg %p291
        $region50: #{generator_forward.1} parent=11 // pred_check_branch
          %806 = sbr.rel (%p804) target = $region52
        $region51: #{generator_forward.1} parent=11 // pred_region
          %s808 = ssub.s32 1024, 1024
          %809 = vsyncadd [#allocation20], %s808
          %s810 = sshll.u32 [#allocation21], 4
          %s811 = int_to_ptr.vmem [resolvable:$true] %s810
          %816 = dma.hbm_to_vmem [thread:$0]  %s10, 1024, %s811, [#allocation20], 64, 64, 4
        $region52: #{generator_forward.1} parent=11 // pred_fallthru
          _
        // Predicated region
        $region53: #{generator_forward.1} parent=11 // pred_check
          %p817 = pneg %p312
        $region54: #{generator_forward.1} parent=11 // pred_check_branch
          %819 = sbr.rel (%p817) target = $region56
        $region55: #{generator_forward.1} parent=11 // pred_region
          %s821 = ssub.s32 32, 32
          %822 = vsyncadd [#allocation23], %s821
          %s823 = sshll.u32 [#allocation22], 4
          %s824 = int_to_ptr.vmem [resolvable:$true] %s823
          %829 = dma.hbm_to_vmem [thread:$0]  %s11, 32, %s824, [#allocation23], 16, 16, 1
        $region56: #{generator_forward.1} parent=11 // pred_fallthru
          _
        // Predicated region
        $region57: #{generator_forward.1} parent=11 // pred_check
          %p830 = pneg %p333
        $region58: #{generator_forward.1} parent=11 // pred_check_branch
          %832 = sbr.rel (%p830) target = $region60
        $region59: #{generator_forward.1} parent=11 // pred_region
          %s834 = ssub.s32 1024, 1024
          %835 = vsyncadd [#allocation23], %s834
          %s836 = sshll.u32 [#allocation24], 4
          %s837 = int_to_ptr.vmem [resolvable:$true] %s836
          %842 = dma.hbm_to_vmem [thread:$0]  %s12, 1024, %s837, [#allocation23], 64, 64, 4
        $region60: #{generator_forward.1} parent=11 // pred_fallthru
          _
        // Predicated region
        $region61: #{generator_forward.1} parent=11 // pred_check
          %p843 = pneg %p354
        $region62: #{generator_forward.1} parent=11 // pred_check_branch
          %845 = sbr.rel (%p843) target = $region64
        $region63: #{generator_forward.1} parent=11 // pred_region
          %s847 = ssub.s32 32, 32
          %848 = vsyncadd [#allocation26], %s847
          %s849 = sshll.u32 [#allocation25], 4
          %s850 = int_to_ptr.vmem [resolvable:$true] %s849
          %855 = dma.hbm_to_vmem [thread:$0]  %s13, 32, %s850, [#allocation26], 16, 16, 1
        $region64: #{generator_forward.1} parent=11 // pred_fallthru
          _
        // Predicated region
        $region65: #{generator_forward.1} parent=11 // pred_check
          %p856 = pneg %p375
        $region66: #{generator_forward.1} parent=11 // pred_check_branch
          %858 = sbr.rel (%p856) target = $region68
        $region67: #{generator_forward.1} parent=11 // pred_region
          %s860 = ssub.s32 1024, 1024
          %861 = vsyncadd [#allocation26], %s860
          %s862 = sshll.u32 [#allocation27], 4
          %s863 = int_to_ptr.vmem [resolvable:$true] %s862
          %868 = dma.hbm_to_vmem [thread:$0]  %s14, 1024, %s863, [#allocation26], 64, 64, 4
        $region68: #{generator_forward.1} parent=11 // pred_fallthru
          _
        // Predicated region
        $region69: #{generator_forward.1} parent=11 // pred_check
          %p869 = pneg %p396
        $region70: #{generator_forward.1} parent=11 // pred_check_branch
          %871 = sbr.rel (%p869) target = $region72
        $region71: #{generator_forward.1} parent=11 // pred_region
          %s873 = ssub.s32 32, 32
          %874 = vsyncadd [#allocation29], %s873
          %s875 = sshll.u32 [#allocation28], 4
          %s876 = int_to_ptr.vmem [resolvable:$true] %s875
          %881 = dma.hbm_to_vmem [thread:$0]  %s15, 32, %s876, [#allocation29], 16, 16, 1
        $region72: #{generator_forward.1} parent=11 // pred_fallthru
          _
        // Predicated region
        $region73: #{generator_forward.1} parent=11 // pred_check
          %p882 = pneg %p417
        $region74: #{generator_forward.1} parent=11 // pred_check_branch
          %884 = sbr.rel (%p882) target = $region76
        $region75: #{generator_forward.1} parent=11 // pred_region
          %s886 = ssub.s32 32, 32
          %887 = vsyncadd [#allocation29], %s886
          %s888 = sshll.u32 [#allocation30], 4
          %s889 = int_to_ptr.vmem [resolvable:$true] %s888
          %894 = dma.hbm_to_vmem [thread:$0]  %s16, 32, %s889, [#allocation29], 16, 16, 1
        $region76: #{generator_forward.1} parent=11 // pred_fallthru
          _
        // Predicated region
        $region77: #{generator_forward.1} parent=11 // pred_check
          %p895 = pneg %p438
        $region78: #{generator_forward.1} parent=11 // pred_check_branch
          %897 = sbr.rel (%p895) target = $region80
        $region79: #{generator_forward.1} parent=11 // pred_region
          %s899 = ssub.s32 32, 32
          %900 = vsyncadd [#allocation32], %s899
          %s901 = sshll.u32 [#allocation31], 4
          %s902 = int_to_ptr.vmem [resolvable:$true] %s901
          %907 = dma.hbm_to_vmem [thread:$0]  %s17, 32, %s902, [#allocation32], 16, 16, 1
        $region80: #{generator_forward.1} parent=11 // pred_fallthru
          _
        // Predicated region
        $region81: #{generator_forward.1} parent=11 // pred_check
          %p908 = pneg %p459
        $region82: #{generator_forward.1} parent=11 // pred_check_branch
          %910 = sbr.rel (%p908) target = $region84
        $region83: #{generator_forward.1} parent=11 // pred_region
          %s912 = ssub.s32 32, 32
          %913 = vsyncadd [#allocation32], %s912
          %s914 = sshll.u32 [#allocation33], 4
          %s915 = int_to_ptr.vmem [resolvable:$true] %s914
          %920 = dma.hbm_to_vmem [thread:$0]  %s18, 32, %s915, [#allocation32], 16, 16, 1
        $region84: #{generator_forward.1} parent=11 // pred_fallthru
          _
        // Predicated region
        $region85: #{generator_forward.1} parent=11 // pred_check
          %p921 = pneg %p480
        $region86: #{generator_forward.1} parent=11 // pred_check_branch
          %923 = sbr.rel (%p921) target = $region88
        $region87: #{generator_forward.1} parent=11 // pred_region
          %s925 = ssub.s32 32, 32
          %926 = vsyncadd [#allocation35], %s925
          %s927 = sshll.u32 [#allocation34], 4
          %s928 = int_to_ptr.vmem [resolvable:$true] %s927
          %933 = dma.hbm_to_vmem [thread:$0]  %s19, 32, %s928, [#allocation35], 16, 16, 1
        $region88: #{generator_forward.1} parent=11 // pred_fallthru
          _
        // Predicated region
        $region89: #{generator_forward.1} parent=11 // pred_check
          %p934 = pneg %p501
        $region90: #{generator_forward.1} parent=11 // pred_check_branch
          %936 = sbr.rel (%p934) target = $region92
        $region91: #{generator_forward.1} parent=11 // pred_region
          %s938 = ssub.s32 32, 32
          %939 = vsyncadd [#allocation35], %s938
          %s940 = sshll.u32 [#allocation36], 4
          %s941 = int_to_ptr.vmem [resolvable:$true] %s940
          %946 = dma.hbm_to_vmem [thread:$0]  %s20, 32, %s941, [#allocation35], 16, 16, 1
        $region92: #{generator_forward.1} parent=11 // pred_fallthru
          _
        // Predicated region
        $region93: #{generator_forward.1} parent=11 // pred_check
          %p947 = pneg %p522
        $region94: #{generator_forward.1} parent=11 // pred_check_branch
          %949 = sbr.rel (%p947) target = $region96
        $region95: #{generator_forward.1} parent=11 // pred_region
          %s951 = ssub.s32 32, 32
          %952 = vsyncadd [#allocation38], %s951
          %s953 = sshll.u32 [#allocation37], 4
          %s954 = int_to_ptr.vmem [resolvable:$true] %s953
          %959 = dma.hbm_to_vmem [thread:$0]  %s21, 32, %s954, [#allocation38], 16, 16, 1
        $region96: #{generator_forward.1} parent=11 // pred_fallthru
          _
        // Predicated region
        $region97: #{generator_forward.1} parent=11 // pred_check
          %p960 = pneg %p543
        $region98: #{generator_forward.1} parent=11 // pred_check_branch
          %962 = sbr.rel (%p960) target = $region100
        $region99: #{generator_forward.1} parent=11 // pred_region
          %s964 = ssub.s32 2048, 2048
          %965 = vsyncadd [#allocation38], %s964
          %s966 = sshll.u32 [#allocation39], 4
          %s967 = int_to_ptr.vmem [resolvable:$true] %s966
          %972 = dma.hbm_to_vmem [thread:$0]  %s22, 2048, %s967, [#allocation38], 64, 64, 4
        $region100: #{generator_forward.1} parent=11 // pred_fallthru
          _
        // Predicated region
        $region101: #{generator_forward.1} parent=11 // pred_check
          %p973 = pneg %p564
        $region102: #{generator_forward.1} parent=11 // pred_check_branch
          %975 = sbr.rel (%p973) target = $region104
        $region103: #{generator_forward.1} parent=11 // pred_region
          %s977 = ssub.s32 32, 32
          %978 = vsyncadd [#allocation41], %s977
          %s979 = sshll.u32 [#allocation40], 4
          %s980 = int_to_ptr.vmem [resolvable:$true] %s979
          %985 = dma.hbm_to_vmem [thread:$0]  %s23, 32, %s980, [#allocation41], 16, 16, 1
        $region104: #{generator_forward.1} parent=11 // pred_fallthru
          _
        // Predicated region
        $region105: #{generator_forward.1} parent=11 // pred_check
          %p986 = pneg %p585
        $region106: #{generator_forward.1} parent=11 // pred_check_branch
          %988 = sbr.rel (%p986) target = $region108
        $region107: #{generator_forward.1} parent=11 // pred_region
          %s990 = ssub.s32 1024, 1024
          %991 = vsyncadd [#allocation41], %s990
          %s992 = sshll.u32 [#allocation42], 4
          %s993 = int_to_ptr.vmem [resolvable:$true] %s992
          %998 = dma.hbm_to_vmem [thread:$0]  %s24, 1024, %s993, [#allocation41], 64, 64, 4
        $region108: #{generator_forward.1} parent=11 // pred_fallthru
          _
        // Predicated region
        $region109: #{generator_forward.1} parent=11 // pred_check
          %p999 = pneg %p606
        $region110: #{generator_forward.1} parent=11 // pred_check_branch
          %1001 = sbr.rel (%p999) target = $region112
        $region111: #{generator_forward.1} parent=11 // pred_region
          %s1003 = ssub.s32 32, 32
          %1004 = vsyncadd [#allocation44], %s1003
          %s1005 = sshll.u32 [#allocation43], 4
          %s1006 = int_to_ptr.vmem [resolvable:$true] %s1005
          %1011 = dma.hbm_to_vmem [thread:$0]  %s25, 32, %s1006, [#allocation44], 16, 16, 1
        $region112: #{generator_forward.1} parent=11 // pred_fallthru
          _
        // Predicated region
        $region113: #{generator_forward.1} parent=11 // pred_check
          %p1012 = pneg %p627
        $region114: #{generator_forward.1} parent=11 // pred_check_branch
          %1014 = sbr.rel (%p1012) target = $region116
        $region115: #{generator_forward.1} parent=11 // pred_region
          %s1016 = ssub.s32 16, 16
          %1017 = vsyncadd [#allocation44], %s1016
          %s1019 = sshll.u32 [#allocation45], 4
          %s1020 = int_to_ptr.vmem [resolvable:$true] %s1019
          %1022 = dma.hbm_to_vmem [thread:$0]  %s26, 16, %s1020, [#allocation44]
        $region116: #{generator_forward.1} parent=11 // pred_fallthru
          _
        // Predicated region
        $region117: #{generator_forward.1} parent=11 // pred_check
          %p1023 = pneg %p648
        $region118: #{generator_forward.1} parent=11 // pred_check_branch
          %1025 = sbr.rel (%p1023) target = $region120
        $region119: #{generator_forward.1} parent=11 // pred_region
          _
        $region120: #{generator_forward.1} parent=11 // pred_fallthru
          _
      $region12: #{generator_forward.1} parent=5 // pred_fallthru
        _
      %p1026 = scmp.lt.s32.totalorder %s55, 2
      // Predicated region
      $region121: #{generator_forward.1} parent=5 // pred_check
        %p1027 = pneg %p1026
      $region122: #{generator_forward.1} parent=5 // pred_check_branch
        %1029 = sbr.rel (%p1027) target = $region124
      $region123: #{generator_forward.1} parent=5 // pred_region
        // Predicated region
        $region125: #{generator_forward.1} parent=123 // pred_check
          %p1030 = pneg %p75
        $region126: #{generator_forward.1} parent=123 // pred_check_branch
          %1032 = sbr.rel (%p1030) target = $region128
        $region127: #{generator_forward.1} parent=123 // pred_region
          %s1033 = sand.u32 %s65, 1
          %s1034 = scalar_lea.sflag [#allocation5], %s1033
          %s1035 = sand.u32 %s65, 1
          %s1036 = scalar_lea.vmem [#allocation4], %s1035
          %s1038 = ssub.s32 16, 16
          %1039 = vsyncadd %s1034, %s1038
          %s1040 = smul.addr %s55, 16
          %s1041 = scalar_lea.hbm %s0, %s1040
          %s1043 = sshll.u32 %s1036, 4
          %s1044 = int_to_ptr.vmem [resolvable:$true] %s1043
          %1046 = dma.hbm_to_vmem [thread:$0]  %s1041, 16, %s1044, %s1034
        $region128: #{generator_forward.1} parent=123 // pred_fallthru
          _
      $region124: #{generator_forward.1} parent=5 // pred_fallthru
        _
      %p1047 = scmp.le.s32.totalorder 1, %s55
      %p1048 = scmp.lt.s32.totalorder %s55, 3
      %p1049 = pnand %p1047, %p1048
      %p1050 = pneg %p1049
      // Predicated region
      $region129: #{generator_forward.1} parent=5 // pred_check
        _
      $region130: #{generator_forward.1} parent=5 // pred_check_branch
        %1052 = sbr.rel (%p1049) target = $region132
      $region131: #{generator_forward.1} parent=5 // pred_region
        %s1053 = ssub.s32 %s55, 1
        %s1054 = sand.u32 %s68, 1
        %s1055 = scalar_lea.sflag [#allocation5], %s1054
        %s1056 = sand.u32 %s68, 1
        %s1057 = scalar_lea.vmem [#allocation4], %s1056
        // Predicated region
        $region133: #{generator_forward.1} parent=131 // pred_check
          %p1058 = pneg %p81
        $region134: #{generator_forward.1} parent=131 // pred_check_branch
          %1060 = sbr.rel (%p1058) target = $region136
        $region135: #{generator_forward.1} parent=131 // pred_region
          %1061 = dma.done %s1055, 16
        $region136: #{generator_forward.1} parent=131 // pred_fallthru
          _
        // Predicated region
        $region137: #{generator_forward.1} parent=131 // pred_check
          %p1062 = pneg %p102
        $region138: #{generator_forward.1} parent=131 // pred_check_branch
          %1064 = sbr.rel (%p1062) target = $region140
        $region139: #{generator_forward.1} parent=131 // pred_region
          %1065 = dma.done [#allocation8], 2048
        $region140: #{generator_forward.1} parent=131 // pred_fallthru
          _
        // Predicated region
        $region141: #{generator_forward.1} parent=131 // pred_check
          %p1066 = pneg %p123
        $region142: #{generator_forward.1} parent=131 // pred_check_branch
          %1068 = sbr.rel (%p1066) target = $region144
        $region143: #{generator_forward.1} parent=131 // pred_region
          %1069 = dma.done [#allocation8], 512
        $region144: #{generator_forward.1} parent=131 // pred_fallthru
          _
        // Predicated region
        $region145: #{generator_forward.1} parent=131 // pred_check
          %p1070 = pneg %p144
        $region146: #{generator_forward.1} parent=131 // pred_check_branch
          %1072 = sbr.rel (%p1070) target = $region148
        $region147: #{generator_forward.1} parent=131 // pred_region
          %1073 = dma.done [#allocation11], 16
        $region148: #{generator_forward.1} parent=131 // pred_fallthru
          _
        // Predicated region
        $region149: #{generator_forward.1} parent=131 // pred_check
          %p1074 = pneg %p165
        $region150: #{generator_forward.1} parent=131 // pred_check_branch
          %1076 = sbr.rel (%p1074) target = $region152
        $region151: #{generator_forward.1} parent=131 // pred_region
          %1077 = dma.done [#allocation11], 1024
        $region152: #{generator_forward.1} parent=131 // pred_fallthru
          _
        // Predicated region
        $region153: #{generator_forward.1} parent=131 // pred_check
          %p1078 = pneg %p186
        $region154: #{generator_forward.1} parent=131 // pred_check_branch
          %1080 = sbr.rel (%p1078) target = $region156
        $region155: #{generator_forward.1} parent=131 // pred_region
          %1081 = dma.done [#allocation14], 2048
        $region156: #{generator_forward.1} parent=131 // pred_fallthru
          _
        // Predicated region
        $region157: #{generator_forward.1} parent=131 // pred_check
          %p1082 = pneg %p207
        $region158: #{generator_forward.1} parent=131 // pred_check_branch
          %1084 = sbr.rel (%p1082) target = $region160
        $region159: #{generator_forward.1} parent=131 // pred_region
          %1085 = dma.done [#allocation14], 1024
        $region160: #{generator_forward.1} parent=131 // pred_fallthru
          _
        // Predicated region
        $region161: #{generator_forward.1} parent=131 // pred_check
          %p1086 = pneg %p228
        $region162: #{generator_forward.1} parent=131 // pred_check_branch
          %1088 = sbr.rel (%p1086) target = $region164
        $region163: #{generator_forward.1} parent=131 // pred_region
          %1089 = dma.done [#allocation17], 2048
        $region164: #{generator_forward.1} parent=131 // pred_fallthru
          _
        // Predicated region
        $region165: #{generator_forward.1} parent=131 // pred_check
          %p1090 = pneg %p249
        $region166: #{generator_forward.1} parent=131 // pred_check_branch
          %1092 = sbr.rel (%p1090) target = $region168
        $region167: #{generator_forward.1} parent=131 // pred_region
          %1093 = dma.done [#allocation17], 1024
        $region168: #{generator_forward.1} parent=131 // pred_fallthru
          _
        // Predicated region
        $region169: #{generator_forward.1} parent=131 // pred_check
          %p1094 = pneg %p270
        $region170: #{generator_forward.1} parent=131 // pred_check_branch
          %1096 = sbr.rel (%p1094) target = $region172
        $region171: #{generator_forward.1} parent=131 // pred_region
          %1097 = dma.done [#allocation20], 2048
        $region172: #{generator_forward.1} parent=131 // pred_fallthru
          _
        // Predicated region
        $region173: #{generator_forward.1} parent=131 // pred_check
          %p1098 = pneg %p291
        $region174: #{generator_forward.1} parent=131 // pred_check_branch
          %1100 = sbr.rel (%p1098) target = $region176
        $region175: #{generator_forward.1} parent=131 // pred_region
          %1101 = dma.done [#allocation20], 1024
        $region176: #{generator_forward.1} parent=131 // pred_fallthru
          _
        // Predicated region
        $region177: #{generator_forward.1} parent=131 // pred_check
          %p1102 = pneg %p312
        $region178: #{generator_forward.1} parent=131 // pred_check_branch
          %1104 = sbr.rel (%p1102) target = $region180
        $region179: #{generator_forward.1} parent=131 // pred_region
          %1105 = dma.done [#allocation23], 32
        $region180: #{generator_forward.1} parent=131 // pred_fallthru
          _
        // Predicated region
        $region181: #{generator_forward.1} parent=131 // pred_check
          %p1106 = pneg %p333
        $region182: #{generator_forward.1} parent=131 // pred_check_branch
          %1108 = sbr.rel (%p1106) target = $region184
        $region183: #{generator_forward.1} parent=131 // pred_region
          %1109 = dma.done [#allocation23], 1024
        $region184: #{generator_forward.1} parent=131 // pred_fallthru
          _
        // Predicated region
        $region185: #{generator_forward.1} parent=131 // pred_check
          %p1110 = pneg %p354
        $region186: #{generator_forward.1} parent=131 // pred_check_branch
          %1112 = sbr.rel (%p1110) target = $region188
        $region187: #{generator_forward.1} parent=131 // pred_region
          %1113 = dma.done [#allocation26], 32
        $region188: #{generator_forward.1} parent=131 // pred_fallthru
          _
        // Predicated region
        $region189: #{generator_forward.1} parent=131 // pred_check
          %p1114 = pneg %p375
        $region190: #{generator_forward.1} parent=131 // pred_check_branch
          %1116 = sbr.rel (%p1114) target = $region192
        $region191: #{generator_forward.1} parent=131 // pred_region
          %1117 = dma.done [#allocation26], 1024
        $region192: #{generator_forward.1} parent=131 // pred_fallthru
          _
        // Predicated region
        $region193: #{generator_forward.1} parent=131 // pred_check
          %p1118 = pneg %p396
        $region194: #{generator_forward.1} parent=131 // pred_check_branch
          %1120 = sbr.rel (%p1118) target = $region196
        $region195: #{generator_forward.1} parent=131 // pred_region
          %1121 = dma.done [#allocation29], 32
        $region196: #{generator_forward.1} parent=131 // pred_fallthru
          _
        // Predicated region
        $region197: #{generator_forward.1} parent=131 // pred_check
          %p1122 = pneg %p417
        $region198: #{generator_forward.1} parent=131 // pred_check_branch
          %1124 = sbr.rel (%p1122) target = $region200
        $region199: #{generator_forward.1} parent=131 // pred_region
          %1125 = dma.done [#allocation29], 32
        $region200: #{generator_forward.1} parent=131 // pred_fallthru
          _
        // Predicated region
        $region201: #{generator_forward.1} parent=131 // pred_check
          %p1126 = pneg %p438
        $region202: #{generator_forward.1} parent=131 // pred_check_branch
          %1128 = sbr.rel (%p1126) target = $region204
        $region203: #{generator_forward.1} parent=131 // pred_region
          %1129 = dma.done [#allocation32], 32
        $region204: #{generator_forward.1} parent=131 // pred_fallthru
          _
        // Predicated region
        $region205: #{generator_forward.1} parent=131 // pred_check
          %p1130 = pneg %p459
        $region206: #{generator_forward.1} parent=131 // pred_check_branch
          %1132 = sbr.rel (%p1130) target = $region208
        $region207: #{generator_forward.1} parent=131 // pred_region
          %1133 = dma.done [#allocation32], 32
        $region208: #{generator_forward.1} parent=131 // pred_fallthru
          _
        // Predicated region
        $region209: #{generator_forward.1} parent=131 // pred_check
          %p1134 = pneg %p480
        $region210: #{generator_forward.1} parent=131 // pred_check_branch
          %1136 = sbr.rel (%p1134) target = $region212
        $region211: #{generator_forward.1} parent=131 // pred_region
          %1137 = dma.done [#allocation35], 32
        $region212: #{generator_forward.1} parent=131 // pred_fallthru
          _
        // Predicated region
        $region213: #{generator_forward.1} parent=131 // pred_check
          %p1138 = pneg %p501
        $region214: #{generator_forward.1} parent=131 // pred_check_branch
          %1140 = sbr.rel (%p1138) target = $region216
        $region215: #{generator_forward.1} parent=131 // pred_region
          %1141 = dma.done [#allocation35], 32
        $region216: #{generator_forward.1} parent=131 // pred_fallthru
          _
        // Predicated region
        $region217: #{generator_forward.1} parent=131 // pred_check
          %p1142 = pneg %p522
        $region218: #{generator_forward.1} parent=131 // pred_check_branch
          %1144 = sbr.rel (%p1142) target = $region220
        $region219: #{generator_forward.1} parent=131 // pred_region
          %1145 = dma.done [#allocation38], 32
        $region220: #{generator_forward.1} parent=131 // pred_fallthru
          _
        // Predicated region
        $region221: #{generator_forward.1} parent=131 // pred_check
          %p1146 = pneg %p543
        $region222: #{generator_forward.1} parent=131 // pred_check_branch
          %1148 = sbr.rel (%p1146) target = $region224
        $region223: #{generator_forward.1} parent=131 // pred_region
          %1149 = dma.done [#allocation38], 2048
        $region224: #{generator_forward.1} parent=131 // pred_fallthru
          _
        // Predicated region
        $region225: #{generator_forward.1} parent=131 // pred_check
          %p1150 = pneg %p564
        $region226: #{generator_forward.1} parent=131 // pred_check_branch
          %1152 = sbr.rel (%p1150) target = $region228
        $region227: #{generator_forward.1} parent=131 // pred_region
          %1153 = dma.done [#allocation41], 32
        $region228: #{generator_forward.1} parent=131 // pred_fallthru
          _
        // Predicated region
        $region229: #{generator_forward.1} parent=131 // pred_check
          %p1154 = pneg %p585
        $region230: #{generator_forward.1} parent=131 // pred_check_branch
          %1156 = sbr.rel (%p1154) target = $region232
        $region231: #{generator_forward.1} parent=131 // pred_region
          %1157 = dma.done [#allocation41], 1024
        $region232: #{generator_forward.1} parent=131 // pred_fallthru
          _
        // Predicated region
        $region233: #{generator_forward.1} parent=131 // pred_check
          %p1158 = pneg %p606
        $region234: #{generator_forward.1} parent=131 // pred_check_branch
          %1160 = sbr.rel (%p1158) target = $region236
        $region235: #{generator_forward.1} parent=131 // pred_region
          %1161 = dma.done [#allocation44], 32
        $region236: #{generator_forward.1} parent=131 // pred_fallthru
          _
        // Predicated region
        $region237: #{generator_forward.1} parent=131 // pred_check
          %p1162 = pneg %p627
        $region238: #{generator_forward.1} parent=131 // pred_check_branch
          %1164 = sbr.rel (%p1162) target = $region240
        $region239: #{generator_forward.1} parent=131 // pred_region
          %1165 = dma.done [#allocation44], 16
        $region240: #{generator_forward.1} parent=131 // pred_fallthru
          _
        %s1166 = sand.u32 %s68, 1
        %s1167 = scalar_lea.sflag [#allocation5], %s1166
        %s1168 = sand.u32 %s68, 1
        %s1169 = scalar_lea.vmem [#allocation4], %s1168
        %p1170 = pneg %p81
        %p1171 = pneg %p78
        %p1172 = pneg %p102
        %p1173 = pneg %p99
        %p1174 = pneg %p123
        %p1175 = pneg %p120
        %p1176 = pneg %p144
        %p1177 = pneg %p141
        %p1178 = pneg %p165
        %p1179 = pneg %p162
        %p1180 = pneg %p186
        %p1181 = pneg %p183
        %p1182 = pneg %p207
        %p1183 = pneg %p204
        %p1184 = pneg %p228
        %p1185 = pneg %p225
        %p1186 = pneg %p249
        %p1187 = pneg %p246
        %p1188 = pneg %p270
        %p1189 = pneg %p267
        %p1190 = pneg %p291
        %p1191 = pneg %p288
        %p1192 = pneg %p312
        %p1193 = pneg %p309
        %p1194 = pneg %p333
        %p1195 = pneg %p330
        %p1196 = pneg %p354
        %p1197 = pneg %p351
        %p1198 = pneg %p375
        %p1199 = pneg %p372
        %p1200 = pneg %p396
        %p1201 = pneg %p393
        %p1202 = pneg %p417
        %p1203 = pneg %p414
        %p1204 = pneg %p438
        %p1205 = pneg %p435
        %p1206 = pneg %p459
        %p1207 = pneg %p456
        %p1208 = pneg %p480
        %p1209 = pneg %p477
        %p1210 = pneg %p501
        %p1211 = pneg %p498
        %p1212 = pneg %p522
        %p1213 = pneg %p519
        %p1214 = pneg %p543
        %p1215 = pneg %p540
        %p1216 = pneg %p564
        %p1217 = pneg %p561
        %p1218 = pneg %p585
        %p1219 = pneg %p582
        %p1220 = pneg %p606
        %p1221 = pneg %p603
        %p1222 = pneg %p627
        %p1223 = pneg %p624
        %p1224 = pneg %p648
        %p1225 = pneg %p645
        %p1226 = pneg %p674
        %p1227 = pneg %p671
        %s1228 = sand.u32 %s661, 1
        %s1229 = scalar_lea.sflag [#allocation6], %s1228
        %s1230 = sand.u32 %s661, 1
        %s1231 = scalar_lea.vmem [#allocation46], %s1230
        %v1233 = vlaneseq
        %v1234 = vshrl.u32 %v1233, 7
        %v1235 = vadd.s32 %v1234, 8
        %v1236 = vadd.s32 %v1234, 16
        %v1237 = vadd.s32 %v1234, 24
        %v1238 = vadd.s32 %v1234, 32
        %v1239 = vadd.s32 %v1234, 40
        %v1240 = vadd.s32 %v1234, 48
        %v1241 = vadd.s32 %v1234, 56
        %v1242 = vadd.s32 %v1234, 64
        %v1243 = vadd.s32 %v1234, 72
        %v1244 = vadd.s32 %v1234, 80
        %v1245 = vadd.s32 %v1234, 88
        %v1246 = vadd.s32 %v1234, 96
        %v1247 = vadd.s32 %v1234, 104
        %v1248 = vadd.s32 %v1234, 112
        %v1249 = vadd.s32 %v1234, 120
        %v1250 = vlaneseq
        %v1251 = vand.u32 %v1250, 127
        %vm1252 = vcmp.le.s32.totalorder %v1234, %v1251
        %vm1253 = vcmp.le.s32.totalorder %v1235, %v1251
        %vm1254 = vcmp.le.s32.totalorder %v1236, %v1251
        %vm1255 = vcmp.le.s32.totalorder %v1237, %v1251
        %vm1256 = vcmp.le.s32.totalorder %v1238, %v1251
        %vm1257 = vcmp.le.s32.totalorder %v1239, %v1251
        %vm1258 = vcmp.le.s32.totalorder %v1240, %v1251
        %vm1259 = vcmp.le.s32.totalorder %v1241, %v1251
        %vm1260 = vcmp.le.s32.totalorder %v1242, %v1251
        %vm1261 = vcmp.le.s32.totalorder %v1243, %v1251
        %vm1262 = vcmp.le.s32.totalorder %v1244, %v1251
        %vm1263 = vcmp.le.s32.totalorder %v1245, %v1251
        %vm1264 = vcmp.le.s32.totalorder %v1246, %v1251
        %vm1265 = vcmp.le.s32.totalorder %v1247, %v1251
        %vm1266 = vcmp.le.s32.totalorder %v1248, %v1251
        %vm1267 = vcmp.le.s32.totalorder %v1249, %v1251
        %v1268 = vsel %vm1252, 0.0, -1e+30
        %v1269 = vsel %vm1253, 0.0, -1e+30
        %v1270 = vsel %vm1254, 0.0, -1e+30
        %v1271 = vsel %vm1255, 0.0, -1e+30
        %v1272 = vsel %vm1256, 0.0, -1e+30
        %v1273 = vsel %vm1257, 0.0, -1e+30
        %v1274 = vsel %vm1258, 0.0, -1e+30
        %v1275 = vsel %vm1259, 0.0, -1e+30
        %v1276 = vsel %vm1260, 0.0, -1e+30
        %v1277 = vsel %vm1261, 0.0, -1e+30
        %v1278 = vsel %vm1262, 0.0, -1e+30
        %v1279 = vsel %vm1263, 0.0, -1e+30
        %v1280 = vsel %vm1264, 0.0, -1e+30
        %v1281 = vsel %vm1265, 0.0, -1e+30
        %v1282 = vsel %vm1266, 0.0, -1e+30
        %v1283 = vsel %vm1267, 0.0, -1e+30
        %v1284 = vld [vmem:[%s1057] sm:$0x1]
        %v1285 = vld [vmem:[#allocation9] sm:$0xf]
        %v1286 = vld [vmem:[#allocation9 + $0x4] sm:$0xf]
        %v1287 = vld [vmem:[#allocation9 + $0x8] sm:$0xf]
        %v1288 = vld [vmem:[#allocation9 + $0xc] sm:$0xf]
        %v1289 = vld [vmem:[#allocation9 + $0x10] sm:$0xf]
        %v1290 = vld [vmem:[#allocation9 + $0x14] sm:$0xf]
        %v1291 = vld [vmem:[#allocation9 + $0x18] sm:$0xf]
        %v1292 = vld [vmem:[#allocation9 + $0x1c] sm:$0xf]
        %v1293 = vld [vmem:[#allocation10] sm:$0x1]
        %v1294 = vpack.c.bf16 %v1284, %v1284
        %v1303 = vunpack.c.l.b16 %v1285
        %v1304 = vunpack.c.l.b16 %v1286
        %v1305 = vunpack.c.l.b16 %v1287
        %v1306 = vunpack.c.l.b16 %v1288
        %v1307 = vunpack.c.l.b16 %v1289
        %v1308 = vunpack.c.l.b16 %v1290
        %v1309 = vunpack.c.l.b16 %v1291
        %v1310 = vunpack.c.l.b16 %v1292
        %v1311 = vpack.c.b16 %v1304, %v1303
        %v1312 = vpack.c.b16 %v1306, %v1305
        %v1313 = vpack.c.b16 %v1308, %v1307
        %v1314 = vpack.c.b16 %v1310, %v1309
        %vm1315 = vcmask 130048
        %v1317 = vsel %vm1315, %v1294, 0
        %v1320 = vsel %vm1315, %v1311, 0
        %v1323 = vsel %vm1315, %v1312, 0
        %v1326 = vsel %vm1315, %v1313, 0
        %v1329 = vsel %vm1315, %v1314, 0
        %1331 = vmatprep.subr.bf16.mxu0 0
        %1332 = vmatpush1.bf16.xpose.msra.mxu0 %v1320
        %1333 = vmatprep.subr.bf16.mxu0 0
        %1334 = vmatpush1.bf16.xpose.msra.mxu0 %v1323
        %1335 = vmatprep.subr.bf16.mxu0 0
        %1336 = vmatpush1.bf16.xpose.msra.mxu0 %v1326
        %1337 = vmatprep.subr.bf16.mxu0 0
        %1338 = vmatpush1.bf16.xpose.msra.mxu0 %v1329
        %1339 = vmatprep.subr.bf16.mxu0 0
        %1340 = vmatpush1.bf16.xpose.msra.mxu0 0
        %1341 = vmatprep.subr.bf16.mxu0 0
        %1342 = vmatpush1.bf16.xpose.msra.mxu0 0
        %1343 = vmatprep.subr.bf16.mxu0 0
        %1344 = vmatpush1.bf16.xpose.msra.mxu0 0
        %1345 = vmatprep.subr.bf16.mxu0 0
        %1346 = vmatpush1.bf16.xpose.msra.mxu0 0
        %1347 = vmatprep.subr.bf16.mxu0 0
        %1348 = vmatpush1.bf16.xpose.msra.mxu0 0
        %1349 = vmatprep.subr.bf16.mxu0 0
        %1350 = vmatpush1.bf16.xpose.msra.mxu0 0
        %1351 = vmatprep.subr.bf16.mxu0 0
        %1352 = vmatpush1.bf16.xpose.msra.mxu0 0
        %1353 = vmatprep.subr.bf16.mxu0 0
        %1354 = vmatpush1.bf16.xpose.msra.mxu0 0
        %1355 = vmatprep.subr.bf16.mxu0 0
        %1356 = vmatpush1.bf16.xpose.msra.mxu0 0
        %1357 = vmatprep.subr.bf16.mxu0 0
        %1358 = vmatpush1.bf16.xpose.msra.mxu0 0
        %1359 = vmatprep.subr.bf16.mxu0 0
        %1360 = vmatpush1.bf16.xpose.msra.mxu0 0
        %1361 = vmatprep.subr.bf16.mxu0 0
        %1362 = vmatpush1.bf16.xpose.msra.mxu0 0
        %1363 = vmatprep.mubr.bf16.mxu0 0
        %1364 = vmatmul.mubr.bf16.gmra.mrb[0].mxu0 %v1317
        %v1365 = vpop.f32.mrb[0].mxu0
        %v1366 = vadd.f32 %v1293, %v1365
        %v1367 = vpop.f32.mrb[0].mxu0
        %v1368 = vpop.f32.mrb[0].mxu0
        %v1369 = vpop.f32.mrb[0].mxu0
        %1370 = vdwg.mxu0
        %v1371 = vld [vmem:[#allocation7] sm:$0xff]
        %v1372 = vld [vmem:[#allocation7 + $0x8] sm:$0xff]
        %v1373 = vld [vmem:[#allocation7 + $0x10] sm:$0xff]
        %v1374 = vld [vmem:[#allocation7 + $0x18] sm:$0xff]
        %v1375 = vld [vmem:[#allocation7 + $0x20] sm:$0xff]
        %v1376 = vld [vmem:[#allocation7 + $0x28] sm:$0xff]
        %v1377 = vld [vmem:[#allocation7 + $0x30] sm:$0xff]
        %v1378 = vld [vmem:[#allocation7 + $0x38] sm:$0xff]
        %v1379 = vld [vmem:[#allocation7 + $0x40] sm:$0xff]
        %v1380 = vld [vmem:[#allocation7 + $0x48] sm:$0xff]
        %v1381 = vld [vmem:[#allocation7 + $0x50] sm:$0xff]
        %v1382 = vld [vmem:[#allocation7 + $0x58] sm:$0xff]
        %v1383 = vld [vmem:[#allocation7 + $0x60] sm:$0xff]
        %v1384 = vld [vmem:[#allocation7 + $0x68] sm:$0xff]
        %v1385 = vld [vmem:[#allocation7 + $0x70] sm:$0xff]
        %v1386 = vld [vmem:[#allocation7 + $0x78] sm:$0xff]
        %v1387 = vld [vmem:[#allocation24] sm:$0xf]
        %v1388 = vld [vmem:[#allocation24 + $0x4] sm:$0xf]
        %v1389 = vld [vmem:[#allocation24 + $0x8] sm:$0xf]
        %v1390 = vld [vmem:[#allocation24 + $0xc] sm:$0xf]
        %v1391 = vld [vmem:[#allocation24 + $0x10] sm:$0xf]
        %v1392 = vld [vmem:[#allocation24 + $0x14] sm:$0xf]
        %v1393 = vld [vmem:[#allocation24 + $0x18] sm:$0xf]
        %v1394 = vld [vmem:[#allocation24 + $0x1c] sm:$0xf]
        %v1395 = vld [vmem:[#allocation25] sm:$0x1]
        %v1396 = vpack.c.bf16 %v1366, %v1366
        %v1405 = vunpack.c.l.b16 %v1387
        %v1406 = vunpack.c.l.b16 %v1388
        %v1407 = vunpack.c.l.b16 %v1389
        %v1408 = vunpack.c.l.b16 %v1390
        %v1409 = vunpack.c.l.b16 %v1391
        %v1410 = vunpack.c.l.b16 %v1392
        %v1411 = vunpack.c.l.b16 %v1393
        %v1412 = vunpack.c.l.b16 %v1394
        %v1413 = vpack.c.b16 %v1406, %v1405
        %v1414 = vpack.c.b16 %v1408, %v1407
        %v1415 = vpack.c.b16 %v1410, %v1409
        %v1416 = vpack.c.b16 %v1412, %v1411
        %vm1417 = vcmask 523264
        %v1419 = vsel %vm1417, %v1396, 0
        %v1422 = vsel %vm1417, %v1413, 0
        %v1425 = vsel %vm1417, %v1414, 0
        %v1428 = vsel %vm1417, %v1415, 0
        %v1431 = vsel %vm1417, %v1416, 0
        %1433 = vmatprep.subr.bf16.mxu0 0
        %1434 = vmatpush1.bf16.xpose.msra.mxu0 %v1422
        %1435 = vmatprep.subr.bf16.mxu0 0
        %1436 = vmatpush1.bf16.xpose.msra.mxu0 %v1425
        %1437 = vmatprep.subr.bf16.mxu0 0
        %1438 = vmatpush1.bf16.xpose.msra.mxu0 %v1428
        %1439 = vmatprep.subr.bf16.mxu0 0
        %1440 = vmatpush1.bf16.xpose.msra.mxu0 %v1431
        %1441 = vmatprep.subr.bf16.mxu0 0
        %1442 = vmatpush1.bf16.xpose.msra.mxu0 0
        %1443 = vmatprep.subr.bf16.mxu0 0
        %1444 = vmatpush1.bf16.xpose.msra.mxu0 0
        %1445 = vmatprep.subr.bf16.mxu0 0
        %1446 = vmatpush1.bf16.xpose.msra.mxu0 0
        %1447 = vmatprep.subr.bf16.mxu0 0
        %1448 = vmatpush1.bf16.xpose.msra.mxu0 0
        %1449 = vmatprep.subr.bf16.mxu0 0
        %1450 = vmatpush1.bf16.xpose.msra.mxu0 0
        %1451 = vmatprep.subr.bf16.mxu0 0
        %1452 = vmatpush1.bf16.xpose.msra.mxu0 0
        %1453 = vmatprep.subr.bf16.mxu0 0
        %1454 = vmatpush1.bf16.xpose.msra.mxu0 0
        %1455 = vmatprep.subr.bf16.mxu0 0
        %1456 = vmatpush1.bf16.xpose.msra.mxu0 0
        %1457 = vmatprep.subr.bf16.mxu0 0
        %1458 = vmatpush1.bf16.xpose.msra.mxu0 0
        %1459 = vmatprep.subr.bf16.mxu0 0
        %1460 = vmatpush1.bf16.xpose.msra.mxu0 0
        %1461 = vmatprep.subr.bf16.mxu0 0
        %1462 = vmatpush1.bf16.xpose.msra.mxu0 0
        %1463 = vmatprep.subr.bf16.mxu0 0
        %1464 = vmatpush1.bf16.xpose.msra.mxu0 0
        %1465 = vmatprep.mubr.bf16.mxu0 0
        %1466 = vmatmul.mubr.bf16.gmra.mrb[0].mxu0 %v1419
        %v1467 = vpop.f32.mrb[0].mxu0
        %v1468 = vadd.f32 %v1395, %v1467
        %v1469 = vpop.f32.mrb[0].mxu0
        %v1470 = vpop.f32.mrb[0].mxu0
        %v1471 = vpop.f32.mrb[0].mxu0
        %1472 = vdwg.mxu0
        %v1473 = vld [vmem:[#allocation27] sm:$0xf]
        %v1474 = vld [vmem:[#allocation27 + $0x4] sm:$0xf]
        %v1475 = vld [vmem:[#allocation27 + $0x8] sm:$0xf]
        %v1476 = vld [vmem:[#allocation27 + $0xc] sm:$0xf]
        %v1477 = vld [vmem:[#allocation27 + $0x10] sm:$0xf]
        %v1478 = vld [vmem:[#allocation27 + $0x14] sm:$0xf]
        %v1479 = vld [vmem:[#allocation27 + $0x18] sm:$0xf]
        %v1480 = vld [vmem:[#allocation27 + $0x1c] sm:$0xf]
        %v1481 = vld [vmem:[#allocation28] sm:$0x1]
        %v1482 = vpack.c.bf16 %v1468, %v1468
        %v1491 = vunpack.c.l.b16 %v1473
        %v1492 = vunpack.c.l.b16 %v1474
        %v1493 = vunpack.c.l.b16 %v1475
        %v1494 = vunpack.c.l.b16 %v1476
        %v1495 = vunpack.c.l.b16 %v1477
        %v1496 = vunpack.c.l.b16 %v1478
        %v1497 = vunpack.c.l.b16 %v1479
        %v1498 = vunpack.c.l.b16 %v1480
        %v1499 = vpack.c.b16 %v1492, %v1491
        %v1500 = vpack.c.b16 %v1494, %v1493
        %v1501 = vpack.c.b16 %v1496, %v1495
        %v1502 = vpack.c.b16 %v1498, %v1497
        %v1504 = vsel %vm1417, %v1482, 0
        %v1507 = vsel %vm1417, %v1499, 0
        %v1510 = vsel %vm1417, %v1500, 0
        %v1513 = vsel %vm1417, %v1501, 0
        %v1516 = vsel %vm1417, %v1502, 0
        %1518 = vmatprep.subr.bf16.mxu0 0
        %1519 = vmatpush1.bf16.xpose.msra.mxu0 %v1507
        %1520 = vmatprep.subr.bf16.mxu0 0
        %1521 = vmatpush1.bf16.xpose.msra.mxu0 %v1510
        %1522 = vmatprep.subr.bf16.mxu0 0
        %1523 = vmatpush1.bf16.xpose.msra.mxu0 %v1513
        %1524 = vmatprep.subr.bf16.mxu0 0
        %1525 = vmatpush1.bf16.xpose.msra.mxu0 %v1516
        %1526 = vmatprep.subr.bf16.mxu0 0
        %1527 = vmatpush1.bf16.xpose.msra.mxu0 0
        %1528 = vmatprep.subr.bf16.mxu0 0
        %1529 = vmatpush1.bf16.xpose.msra.mxu0 0
        %1530 = vmatprep.subr.bf16.mxu0 0
        %1531 = vmatpush1.bf16.xpose.msra.mxu0 0
        %1532 = vmatprep.subr.bf16.mxu0 0
        %1533 = vmatpush1.bf16.xpose.msra.mxu0 0
        %1534 = vmatprep.subr.bf16.mxu0 0
        %1535 = vmatpush1.bf16.xpose.msra.mxu0 0
        %1536 = vmatprep.subr.bf16.mxu0 0
        %1537 = vmatpush1.bf16.xpose.msra.mxu0 0
        %1538 = vmatprep.subr.bf16.mxu0 0
        %1539 = vmatpush1.bf16.xpose.msra.mxu0 0
        %1540 = vmatprep.subr.bf16.mxu0 0
        %1541 = vmatpush1.bf16.xpose.msra.mxu0 0
        %1542 = vmatprep.subr.bf16.mxu0 0
        %1543 = vmatpush1.bf16.xpose.msra.mxu0 0
        %1544 = vmatprep.subr.bf16.mxu0 0
        %1545 = vmatpush1.bf16.xpose.msra.mxu0 0
        %1546 = vmatprep.subr.bf16.mxu0 0
        %1547 = vmatpush1.bf16.xpose.msra.mxu0 0
        %1548 = vmatprep.subr.bf16.mxu0 0
        %1549 = vmatpush1.bf16.xpose.msra.mxu0 0
        %1550 = vmatprep.mubr.bf16.mxu0 0
        %1551 = vmatmul.mubr.bf16.gmra.mrb[0].mxu0 %v1504
        %v1552 = vpop.f32.mrb[0].mxu0
        %v1553 = vadd.f32 %v1481, %v1552
        %v1554 = vpop.f32.mrb[0].mxu0
        %v1555 = vpop.f32.mrb[0].mxu0
        %v1556 = vpop.f32.mrb[0].mxu0
        %1557 = vdwg.mxu0
        %v1558 = vlaneseq
        %v1559 = vshrl.u32 %v1558, 7
        %v1560 = vsub.s32 0, %v1559
        %v1561 = vrot.slane %v1553, %v1560
        %v1562 = vadd.f32 %v1371, %v1561
        %v1563 = vadd.f32 %v1372, %v1561
        %v1564 = vadd.f32 %v1373, %v1561
        %v1565 = vadd.f32 %v1374, %v1561
        %v1566 = vadd.f32 %v1375, %v1561
        %v1567 = vadd.f32 %v1376, %v1561
        %v1568 = vadd.f32 %v1377, %v1561
        %v1569 = vadd.f32 %v1378, %v1561
        %v1570 = vadd.f32 %v1379, %v1561
        %v1571 = vadd.f32 %v1380, %v1561
        %v1572 = vadd.f32 %v1381, %v1561
        %v1573 = vadd.f32 %v1382, %v1561
        %v1574 = vadd.f32 %v1383, %v1561
        %v1575 = vadd.f32 %v1384, %v1561
        %v1576 = vadd.f32 %v1385, %v1561
        %v1577 = vadd.f32 %v1386, %v1561
        %v1578 = vld [vmem:[#allocation33] sm:$0x1]
        %v1579 = vld [vmem:[#allocation34] sm:$0x1]
        %v1580 = vsel %vm1417, %v1562, 0.0
        %1581 = vadd.xlane.f32.xlu0 %v1580
        %v1582 = vpop.xlane.xlu0 %1581
        %v1583 = vsel %vm1417, %v1563, 0.0
        %1584 = vadd.xlane.f32.xlu0 %v1583
        %v1585 = vpop.xlane.xlu0 %1584
        %v1586 = vsel %vm1417, %v1564, 0.0
        %1587 = vadd.xlane.f32.xlu0 %v1586
        %v1588 = vpop.xlane.xlu0 %1587
        %v1589 = vsel %vm1417, %v1565, 0.0
        %1590 = vadd.xlane.f32.xlu0 %v1589
        %v1591 = vpop.xlane.xlu0 %1590
        %v1592 = vsel %vm1417, %v1566, 0.0
        %1593 = vadd.xlane.f32.xlu0 %v1592
        %v1594 = vpop.xlane.xlu0 %1593
        %v1595 = vsel %vm1417, %v1567, 0.0
        %1596 = vadd.xlane.f32.xlu0 %v1595
        %v1597 = vpop.xlane.xlu0 %1596
        %v1598 = vsel %vm1417, %v1568, 0.0
        %1599 = vadd.xlane.f32.xlu0 %v1598
        %v1600 = vpop.xlane.xlu0 %1599
        %v1601 = vsel %vm1417, %v1569, 0.0
        %1602 = vadd.xlane.f32.xlu0 %v1601
        %v1603 = vpop.xlane.xlu0 %1602
        %v1604 = vsel %vm1417, %v1570, 0.0
        %1605 = vadd.xlane.f32.xlu0 %v1604
        %v1606 = vpop.xlane.xlu0 %1605
        %v1607 = vsel %vm1417, %v1571, 0.0
        %1608 = vadd.xlane.f32.xlu0 %v1607
        %v1609 = vpop.xlane.xlu0 %1608
        %v1610 = vsel %vm1417, %v1572, 0.0
        %1611 = vadd.xlane.f32.xlu0 %v1610
        %v1612 = vpop.xlane.xlu0 %1611
        %v1613 = vsel %vm1417, %v1573, 0.0
        %1614 = vadd.xlane.f32.xlu0 %v1613
        %v1615 = vpop.xlane.xlu0 %1614
        %v1616 = vsel %vm1417, %v1574, 0.0
        %1617 = vadd.xlane.f32.xlu0 %v1616
        %v1618 = vpop.xlane.xlu0 %1617
        %v1619 = vsel %vm1417, %v1575, 0.0
        %1620 = vadd.xlane.f32.xlu0 %v1619
        %v1621 = vpop.xlane.xlu0 %1620
        %v1622 = vsel %vm1417, %v1576, 0.0
        %1623 = vadd.xlane.f32.xlu0 %v1622
        %v1624 = vpop.xlane.xlu0 %1623
        %v1625 = vsel %vm1417, %v1577, 0.0
        %1626 = vadd.xlane.f32.xlu0 %v1625
        %v1627 = vpop.xlane.xlu0 %1626
        %v1628 = vrcp.pop 64.0
        %v1629 = vmul.f32 %v1582, %v1628
        %v1630 = vmul.f32 %v1585, %v1628
        %v1631 = vmul.f32 %v1588, %v1628
        %v1632 = vmul.f32 %v1591, %v1628
        %v1633 = vmul.f32 %v1594, %v1628
        %v1634 = vmul.f32 %v1597, %v1628
        %v1635 = vmul.f32 %v1600, %v1628
        %v1636 = vmul.f32 %v1603, %v1628
        %v1637 = vmul.f32 %v1606, %v1628
        %v1638 = vmul.f32 %v1609, %v1628
        %v1639 = vmul.f32 %v1612, %v1628
        %v1640 = vmul.f32 %v1615, %v1628
        %v1641 = vmul.f32 %v1618, %v1628
        %v1642 = vmul.f32 %v1621, %v1628
        %v1643 = vmul.f32 %v1624, %v1628
        %v1644 = vmul.f32 %v1627, %v1628
        %v1645 = vsub.f32 %v1562, %v1629
        %v1646 = vsub.f32 %v1563, %v1630
        %v1647 = vsub.f32 %v1564, %v1631
        %v1648 = vsub.f32 %v1565, %v1632
        %v1649 = vsub.f32 %v1566, %v1633
        %v1650 = vsub.f32 %v1567, %v1634
        %v1651 = vsub.f32 %v1568, %v1635
        %v1652 = vsub.f32 %v1569, %v1636
        %v1653 = vsub.f32 %v1570, %v1637
        %v1654 = vsub.f32 %v1571, %v1638
        %v1655 = vsub.f32 %v1572, %v1639
        %v1656 = vsub.f32 %v1573, %v1640
        %v1657 = vsub.f32 %v1574, %v1641
        %v1658 = vsub.f32 %v1575, %v1642
        %v1659 = vsub.f32 %v1576, %v1643
        %v1660 = vsub.f32 %v1577, %v1644
        %v1661 = vmul.f32 %v1645, %v1645
        %v1662 = vmul.f32 %v1646, %v1646
        %v1663 = vmul.f32 %v1647, %v1647
        %v1664 = vmul.f32 %v1648, %v1648
        %v1665 = vmul.f32 %v1649, %v1649
        %v1666 = vmul.f32 %v1650, %v1650
        %v1667 = vmul.f32 %v1651, %v1651
        %v1668 = vmul.f32 %v1652, %v1652
        %v1669 = vmul.f32 %v1653, %v1653
        %v1670 = vmul.f32 %v1654, %v1654
        %v1671 = vmul.f32 %v1655, %v1655
        %v1672 = vmul.f32 %v1656, %v1656
        %v1673 = vmul.f32 %v1657, %v1657
        %v1674 = vmul.f32 %v1658, %v1658
        %v1675 = vmul.f32 %v1659, %v1659
        %v1676 = vmul.f32 %v1660, %v1660
        %v1677 = vsel %vm1417, %v1661, 0.0
        %1678 = vadd.xlane.f32.xlu0 %v1677
        %v1679 = vpop.xlane.xlu0 %1678
        %v1680 = vsel %vm1417, %v1662, 0.0
        %1681 = vadd.xlane.f32.xlu0 %v1680
        %v1682 = vpop.xlane.xlu0 %1681
        %v1683 = vsel %vm1417, %v1663, 0.0
        %1684 = vadd.xlane.f32.xlu0 %v1683
        %v1685 = vpop.xlane.xlu0 %1684
        %v1686 = vsel %vm1417, %v1664, 0.0
        %1687 = vadd.xlane.f32.xlu0 %v1686
        %v1688 = vpop.xlane.xlu0 %1687
        %v1689 = vsel %vm1417, %v1665, 0.0
        %1690 = vadd.xlane.f32.xlu0 %v1689
        %v1691 = vpop.xlane.xlu0 %1690
        %v1692 = vsel %vm1417, %v1666, 0.0
        %1693 = vadd.xlane.f32.xlu0 %v1692
        %v1694 = vpop.xlane.xlu0 %1693
        %v1695 = vsel %vm1417, %v1667, 0.0
        %1696 = vadd.xlane.f32.xlu0 %v1695
        %v1697 = vpop.xlane.xlu0 %1696
        %v1698 = vsel %vm1417, %v1668, 0.0
        %1699 = vadd.xlane.f32.xlu0 %v1698
        %v1700 = vpop.xlane.xlu0 %1699
        %v1701 = vsel %vm1417, %v1669, 0.0
        %1702 = vadd.xlane.f32.xlu0 %v1701
        %v1703 = vpop.xlane.xlu0 %1702
        %v1704 = vsel %vm1417, %v1670, 0.0
        %1705 = vadd.xlane.f32.xlu0 %v1704
        %v1706 = vpop.xlane.xlu0 %1705
        %v1707 = vsel %vm1417, %v1671, 0.0
        %1708 = vadd.xlane.f32.xlu0 %v1707
        %v1709 = vpop.xlane.xlu0 %1708
        %v1710 = vsel %vm1417, %v1672, 0.0
        %1711 = vadd.xlane.f32.xlu0 %v1710
        %v1712 = vpop.xlane.xlu0 %1711
        %v1713 = vsel %vm1417, %v1673, 0.0
        %1714 = vadd.xlane.f32.xlu0 %v1713
        %v1715 = vpop.xlane.xlu0 %1714
        %v1716 = vsel %vm1417, %v1674, 0.0
        %1717 = vadd.xlane.f32.xlu0 %v1716
        %v1718 = vpop.xlane.xlu0 %1717
        %v1719 = vsel %vm1417, %v1675, 0.0
        %1720 = vadd.xlane.f32.xlu0 %v1719
        %v1721 = vpop.xlane.xlu0 %1720
        %v1722 = vsel %vm1417, %v1676, 0.0
        %1723 = vadd.xlane.f32.xlu0 %v1722
        %v1724 = vpop.xlane.xlu0 %1723
        %v1725 = vmul.f32 %v1679, %v1628
        %v1726 = vmul.f32 %v1682, %v1628
        %v1727 = vmul.f32 %v1685, %v1628
        %v1728 = vmul.f32 %v1688, %v1628
        %v1729 = vmul.f32 %v1691, %v1628
        %v1730 = vmul.f32 %v1694, %v1628
        %v1731 = vmul.f32 %v1697, %v1628
        %v1732 = vmul.f32 %v1700, %v1628
        %v1733 = vmul.f32 %v1703, %v1628
        %v1734 = vmul.f32 %v1706, %v1628
        %v1735 = vmul.f32 %v1709, %v1628
        %v1736 = vmul.f32 %v1712, %v1628
        %v1737 = vmul.f32 %v1715, %v1628
        %v1738 = vmul.f32 %v1718, %v1628
        %v1739 = vmul.f32 %v1721, %v1628
        %v1740 = vmul.f32 %v1724, %v1628
        %v1741 = vadd.f32 %v1725, 1e-05
        %v1742 = vadd.f32 %v1726, 1e-05
        %v1743 = vadd.f32 %v1727, 1e-05
        %v1744 = vadd.f32 %v1728, 1e-05
        %v1745 = vadd.f32 %v1729, 1e-05
        %v1746 = vadd.f32 %v1730, 1e-05
        %v1747 = vadd.f32 %v1731, 1e-05
        %v1748 = vadd.f32 %v1732, 1e-05
        %v1749 = vadd.f32 %v1733, 1e-05
        %v1750 = vadd.f32 %v1734, 1e-05
        %v1751 = vadd.f32 %v1735, 1e-05
        %v1752 = vadd.f32 %v1736, 1e-05
        %v1753 = vadd.f32 %v1737, 1e-05
        %v1754 = vadd.f32 %v1738, 1e-05
        %v1755 = vadd.f32 %v1739, 1e-05
        %v1756 = vadd.f32 %v1740, 1e-05
        %v1757 = vrsqrt.pop %v1741
        %v1758 = vrsqrt.pop %v1742
        %v1759 = vrsqrt.pop %v1743
        %v1760 = vrsqrt.pop %v1744
        %v1761 = vrsqrt.pop %v1745
        %v1762 = vrsqrt.pop %v1746
        %v1763 = vrsqrt.pop %v1747
        %v1764 = vrsqrt.pop %v1748
        %v1765 = vrsqrt.pop %v1749
        %v1766 = vrsqrt.pop %v1750
        %v1767 = vrsqrt.pop %v1751
        %v1768 = vrsqrt.pop %v1752
        %v1769 = vrsqrt.pop %v1753
        %v1770 = vrsqrt.pop %v1754
        %v1771 = vrsqrt.pop %v1755
        %v1772 = vrsqrt.pop %v1756
        %v1773 = vmul.f32 %v1645, %v1757
        %v1774 = vmul.f32 %v1646, %v1758
        %v1775 = vmul.f32 %v1647, %v1759
        %v1776 = vmul.f32 %v1648, %v1760
        %v1777 = vmul.f32 %v1649, %v1761
        %v1778 = vmul.f32 %v1650, %v1762
        %v1779 = vmul.f32 %v1651, %v1763
        %v1780 = vmul.f32 %v1652, %v1764
        %v1781 = vmul.f32 %v1653, %v1765
        %v1782 = vmul.f32 %v1654, %v1766
        %v1783 = vmul.f32 %v1655, %v1767
        %v1784 = vmul.f32 %v1656, %v1768
        %v1785 = vmul.f32 %v1657, %v1769
        %v1786 = vmul.f32 %v1658, %v1770
        %v1787 = vmul.f32 %v1659, %v1771
        %v1788 = vmul.f32 %v1660, %v1772
        %v1790 = vlaneseq
        %v1791 = vshrl.u32 %v1790, 7
        %v1792 = vsub.s32 0, %v1791
        %v1793 = vrot.slane %v1578, %v1792
        %v1795 = vmul.f32 %v1773, %v1793
        %v1796 = vmul.f32 %v1774, %v1793
        %v1797 = vmul.f32 %v1775, %v1793
        %v1798 = vmul.f32 %v1776, %v1793
        %v1799 = vmul.f32 %v1777, %v1793
        %v1800 = vmul.f32 %v1778, %v1793
        %v1801 = vmul.f32 %v1779, %v1793
        %v1802 = vmul.f32 %v1780, %v1793
        %v1803 = vmul.f32 %v1781, %v1793
        %v1804 = vmul.f32 %v1782, %v1793
        %v1805 = vmul.f32 %v1783, %v1793
        %v1806 = vmul.f32 %v1784, %v1793
        %v1807 = vmul.f32 %v1785, %v1793
        %v1808 = vmul.f32 %v1786, %v1793
        %v1809 = vmul.f32 %v1787, %v1793
        %v1810 = vmul.f32 %v1788, %v1793
        %v1812 = vlaneseq
        %v1813 = vshrl.u32 %v1812, 7
        %v1814 = vsub.s32 0, %v1813
        %v1815 = vrot.slane %v1579, %v1814
        %v1817 = vadd.f32 %v1795, %v1815
        %v1818 = vadd.f32 %v1796, %v1815
        %v1819 = vadd.f32 %v1797, %v1815
        %v1820 = vadd.f32 %v1798, %v1815
        %v1821 = vadd.f32 %v1799, %v1815
        %v1822 = vadd.f32 %v1800, %v1815
        %v1823 = vadd.f32 %v1801, %v1815
        %v1824 = vadd.f32 %v1802, %v1815
        %v1825 = vadd.f32 %v1803, %v1815
        %v1826 = vadd.f32 %v1804, %v1815
        %v1827 = vadd.f32 %v1805, %v1815
        %v1828 = vadd.f32 %v1806, %v1815
        %v1829 = vadd.f32 %v1807, %v1815
        %v1830 = vadd.f32 %v1808, %v1815
        %v1831 = vadd.f32 %v1809, %v1815
        %v1832 = vadd.f32 %v1810, %v1815
        %v1833 = vld [vmem:[#allocation39] sm:$0xf]
        %v1834 = vld [vmem:[#allocation39 + $0x4] sm:$0xf]
        %v1835 = vld [vmem:[#allocation39 + $0x8] sm:$0xf]
        %v1836 = vld [vmem:[#allocation39 + $0xc] sm:$0xf]
        %v1837 = vld [vmem:[#allocation39 + $0x10] sm:$0xf]
        %v1838 = vld [vmem:[#allocation39 + $0x14] sm:$0xf]
        %v1839 = vld [vmem:[#allocation39 + $0x18] sm:$0xf]
        %v1840 = vld [vmem:[#allocation39 + $0x1c] sm:$0xf]
        %v1841 = vld [vmem:[#allocation39 + $0x20] sm:$0xf]
        %v1842 = vld [vmem:[#allocation39 + $0x24] sm:$0xf]
        %v1843 = vld [vmem:[#allocation39 + $0x28] sm:$0xf]
        %v1844 = vld [vmem:[#allocation39 + $0x2c] sm:$0xf]
        %v1845 = vld [vmem:[#allocation39 + $0x30] sm:$0xf]
        %v1846 = vld [vmem:[#allocation39 + $0x34] sm:$0xf]
        %v1847 = vld [vmem:[#allocation39 + $0x38] sm:$0xf]
        %v1848 = vld [vmem:[#allocation39 + $0x3c] sm:$0xf]
        %v1849 = vld [vmem:[#allocation40] sm:$0x1]
        %v1850 = vpack.c.bf16 %v1818, %v1817
        %v1851 = vpack.c.bf16 %v1820, %v1819
        %v1852 = vpack.c.bf16 %v1822, %v1821
        %v1853 = vpack.c.bf16 %v1824, %v1823
        %v1854 = vpack.c.bf16 %v1826, %v1825
        %v1855 = vpack.c.bf16 %v1828, %v1827
        %v1856 = vpack.c.bf16 %v1830, %v1829
        %v1857 = vpack.c.bf16 %v1832, %v1831
        %v1859 = vlaneseq
        %v1860 = vshrl.u32 %v1859, 7
        %v1861 = vsub.s32 0, %v1860
        %v1862 = vrot.slane %v1849, %v1861
        %v1880 = vunpack.c.l.b16 %v1833
        %v1881 = vunpack.c.l.b16 %v1834
        %v1882 = vunpack.c.l.b16 %v1835
        %v1883 = vunpack.c.l.b16 %v1836
        %v1884 = vunpack.c.l.b16 %v1837
        %v1885 = vunpack.c.l.b16 %v1838
        %v1886 = vunpack.c.l.b16 %v1839
        %v1887 = vunpack.c.l.b16 %v1840
        %v1888 = vunpack.c.l.b16 %v1841
        %v1889 = vunpack.c.l.b16 %v1842
        %v1890 = vunpack.c.l.b16 %v1843
        %v1891 = vunpack.c.l.b16 %v1844
        %v1892 = vunpack.c.l.b16 %v1845
        %v1893 = vunpack.c.l.b16 %v1846
        %v1894 = vunpack.c.l.b16 %v1847
        %v1895 = vunpack.c.l.b16 %v1848
        %v1896 = vpack.c.b16 %v1881, %v1880
        %v1897 = vpack.c.b16 %v1883, %v1882
        %v1898 = vpack.c.b16 %v1885, %v1884
        %v1899 = vpack.c.b16 %v1887, %v1886
        %v1900 = vpack.c.b16 %v1889, %v1888
        %v1901 = vpack.c.b16 %v1891, %v1890
        %v1902 = vpack.c.b16 %v1893, %v1892
        %v1903 = vpack.c.b16 %v1895, %v1894
        %v1905 = vsel %vm1417, %v1850, 0
        %v1908 = vsel %vm1417, %v1851, 0
        %v1911 = vsel %vm1417, %v1852, 0
        %v1914 = vsel %vm1417, %v1853, 0
        %v1917 = vsel %vm1417, %v1854, 0
        %v1920 = vsel %vm1417, %v1855, 0
        %v1923 = vsel %vm1417, %v1856, 0
        %v1926 = vsel %vm1417, %v1857, 0
        %v1929 = vsel %vm1417, %v1896, 0
        %v1932 = vsel %vm1417, %v1897, 0
        %v1935 = vsel %vm1417, %v1898, 0
        %v1938 = vsel %vm1417, %v1899, 0
        %v1941 = vsel %vm1417, %v1900, 0
        %v1944 = vsel %vm1417, %v1901, 0
        %v1947 = vsel %vm1417, %v1902, 0
        %v1950 = vsel %vm1417, %v1903, 0
        %1952 = vmatprep.subr.bf16.mxu0 0
        %1953 = vmatpush1.bf16.xpose.msra.mxu0 %v1929
        %1954 = vmatprep.subr.bf16.mxu0 0
        %1955 = vmatpush1.bf16.xpose.msra.mxu0 %v1932
        %1956 = vmatprep.subr.bf16.mxu0 0
        %1957 = vmatpush1.bf16.xpose.msra.mxu0 %v1935
        %1958 = vmatprep.subr.bf16.mxu0 0
        %1959 = vmatpush1.bf16.xpose.msra.mxu0 %v1938
        %1960 = vmatprep.subr.bf16.mxu0 0
        %1961 = vmatpush1.bf16.xpose.msra.mxu0 %v1941
        %1962 = vmatprep.subr.bf16.mxu0 0
        %1963 = vmatpush1.bf16.xpose.msra.mxu0 %v1944
        %1964 = vmatprep.subr.bf16.mxu0 0
        %1965 = vmatpush1.bf16.xpose.msra.mxu0 %v1947
        %1966 = vmatprep.subr.bf16.mxu0 0
        %1967 = vmatpush1.bf16.xpose.msra.mxu0 %v1950
        %1968 = vmatprep.subr.bf16.mxu0 0
        %1969 = vmatpush1.bf16.xpose.msra.mxu0 0
        %1970 = vmatprep.subr.bf16.mxu0 0
        %1971 = vmatpush1.bf16.xpose.msra.mxu0 0
        %1972 = vmatprep.subr.bf16.mxu0 0
        %1973 = vmatpush1.bf16.xpose.msra.mxu0 0
        %1974 = vmatprep.subr.bf16.mxu0 0
        %1975 = vmatpush1.bf16.xpose.msra.mxu0 0
        %1976 = vmatprep.subr.bf16.mxu0 0
        %1977 = vmatpush1.bf16.xpose.msra.mxu0 0
        %1978 = vmatprep.subr.bf16.mxu0 0
        %1979 = vmatpush1.bf16.xpose.msra.mxu0 0
        %1980 = vmatprep.subr.bf16.mxu0 0
        %1981 = vmatpush1.bf16.xpose.msra.mxu0 0
        %1982 = vmatprep.subr.bf16.mxu0 0
        %1983 = vmatpush1.bf16.xpose.msra.mxu0 0
        %1984 = vmatprep.mubr.bf16.mxu0 0
        %1985 = vmatmul.mubr.bf16.gmra.mrb[0].mxu0 %v1905
        %v1986 = vpop.f32.mrb[0].mxu0
        %v1987 = vadd.f32 %v1862, %v1986
        %v1988 = vpop.f32.mrb[0].mxu0
        %v1989 = vpop.f32.mrb[0].mxu0
        %v1990 = vadd.f32 %v1862, %v1989
        %v1991 = vpop.f32.mrb[0].mxu0
        %1992 = vmatprep.mubr.bf16.mxu0 0
        %1993 = vmatmul.mubr.bf16.gmra.mrb[0].mxu0 %v1908
        %v1994 = vpop.f32.mrb[0].mxu0
        %v1995 = vadd.f32 %v1862, %v1994
        %v1996 = vpop.f32.mrb[0].mxu0
        %v1997 = vpop.f32.mrb[0].mxu0
        %v1998 = vadd.f32 %v1862, %v1997
        %v1999 = vpop.f32.mrb[0].mxu0
        %2000 = vmatprep.mubr.bf16.mxu0 0
        %2001 = vmatmul.mubr.bf16.gmra.mrb[0].mxu0 %v1911
        %v2002 = vpop.f32.mrb[0].mxu0
        %v2003 = vadd.f32 %v1862, %v2002
        %v2004 = vpop.f32.mrb[0].mxu0
        %v2005 = vpop.f32.mrb[0].mxu0
        %v2006 = vadd.f32 %v1862, %v2005
        %v2007 = vpop.f32.mrb[0].mxu0
        %2008 = vmatprep.mubr.bf16.mxu0 0
        %2009 = vmatmul.mubr.bf16.gmra.mrb[0].mxu0 %v1914
        %v2010 = vpop.f32.mrb[0].mxu0
        %v2011 = vadd.f32 %v1862, %v2010
        %v2012 = vpop.f32.mrb[0].mxu0
        %v2013 = vpop.f32.mrb[0].mxu0
        %v2014 = vadd.f32 %v1862, %v2013
        %v2015 = vpop.f32.mrb[0].mxu0
        %2016 = vmatprep.mubr.bf16.mxu0 0
        %2017 = vmatmul.mubr.bf16.gmra.mrb[0].mxu0 %v1917
        %v2018 = vpop.f32.mrb[0].mxu0
        %v2019 = vadd.f32 %v1862, %v2018
        %v2020 = vpop.f32.mrb[0].mxu0
        %v2021 = vpop.f32.mrb[0].mxu0
        %v2022 = vadd.f32 %v1862, %v2021
        %v2023 = vpop.f32.mrb[0].mxu0
        %2024 = vmatprep.mubr.bf16.mxu0 0
        %2025 = vmatmul.mubr.bf16.gmra.mrb[0].mxu0 %v1920
        %v2026 = vpop.f32.mrb[0].mxu0
        %v2027 = vadd.f32 %v1862, %v2026
        %v2028 = vpop.f32.mrb[0].mxu0
        %v2029 = vpop.f32.mrb[0].mxu0
        %v2030 = vadd.f32 %v1862, %v2029
        %v2031 = vpop.f32.mrb[0].mxu0
        %2032 = vmatprep.mubr.bf16.mxu0 0
        %2033 = vmatmul.mubr.bf16.gmra.mrb[0].mxu0 %v1923
        %v2034 = vpop.f32.mrb[0].mxu0
        %v2035 = vadd.f32 %v1862, %v2034
        %v2036 = vpop.f32.mrb[0].mxu0
        %v2037 = vpop.f32.mrb[0].mxu0
        %v2038 = vadd.f32 %v1862, %v2037
        %v2039 = vpop.f32.mrb[0].mxu0
        %2040 = vmatprep.mubr.bf16.mxu0 0
        %2041 = vmatmul.mubr.bf16.gmra.mrb[0].mxu0 %v1926
        %v2042 = vpop.f32.mrb[0].mxu0
        %v2043 = vadd.f32 %v1862, %v2042
        %v2044 = vpop.f32.mrb[0].mxu0
        %v2045 = vpop.f32.mrb[0].mxu0
        %v2046 = vadd.f32 %v1862, %v2045
        %v2047 = vpop.f32.mrb[0].mxu0
        %2048 = vdwg.mxu0
        %v2049 = vmax.f32 %v1987, 0.0
        %v2050 = vmax.f32 %v1990, 0.0
        %v2051 = vmax.f32 %v1995, 0.0
        %v2052 = vmax.f32 %v1998, 0.0
        %v2053 = vmax.f32 %v2003, 0.0
        %v2054 = vmax.f32 %v2006, 0.0
        %v2055 = vmax.f32 %v2011, 0.0
        %v2056 = vmax.f32 %v2014, 0.0
        %v2057 = vmax.f32 %v2019, 0.0
        %v2058 = vmax.f32 %v2022, 0.0
        %v2059 = vmax.f32 %v2027, 0.0
        %v2060 = vmax.f32 %v2030, 0.0
        %v2061 = vmax.f32 %v2035, 0.0
        %v2062 = vmax.f32 %v2038, 0.0
        %v2063 = vmax.f32 %v2043, 0.0
        %v2064 = vmax.f32 %v2046, 0.0
        %v2065 = vld [vmem:[#allocation42] sm:$0xf]
        %v2066 = vld [vmem:[#allocation42 + $0x4] sm:$0xf]
        %v2067 = vld [vmem:[#allocation42 + $0x8] sm:$0xf]
        %v2068 = vld [vmem:[#allocation42 + $0xc] sm:$0xf]
        %v2069 = vld [vmem:[#allocation42 + $0x10] sm:$0xf]
        %v2070 = vld [vmem:[#allocation42 + $0x14] sm:$0xf]
        %v2071 = vld [vmem:[#allocation42 + $0x18] sm:$0xf]
        %v2072 = vld [vmem:[#allocation42 + $0x1c] sm:$0xf]
        %v2073 = vld [vmem:[#allocation43] sm:$0x1]
        %v2074 = vpack.c.bf16 %v2050, %v2049
        %v2075 = vpack.c.bf16 %v2052, %v2051
        %v2076 = vpack.c.bf16 %v2054, %v2053
        %v2077 = vpack.c.bf16 %v2056, %v2055
        %v2078 = vpack.c.bf16 %v2058, %v2057
        %v2079 = vpack.c.bf16 %v2060, %v2059
        %v2080 = vpack.c.bf16 %v2062, %v2061
        %v2081 = vpack.c.bf16 %v2064, %v2063
        %v2083 = vlaneseq
        %v2084 = vshrl.u32 %v2083, 7
        %v2085 = vsub.s32 0, %v2084
        %v2086 = vrot.slane %v2073, %v2085
        %v2096 = vunpack.c.l.b16 %v2065
        %v2097 = vunpack.c.l.b16 %v2066
        %v2098 = vunpack.c.l.b16 %v2067
        %v2099 = vunpack.c.l.b16 %v2068
        %v2100 = vunpack.c.l.b16 %v2069
        %v2101 = vunpack.c.l.b16 %v2070
        %v2102 = vunpack.c.l.b16 %v2071
        %v2103 = vunpack.c.l.b16 %v2072
        %v2104 = vpack.c.b16 %v2097, %v2096
        %v2105 = vpack.c.b16 %v2099, %v2098
        %v2106 = vpack.c.b16 %v2101, %v2100
        %v2107 = vpack.c.b16 %v2103, %v2102
        %2112 = vmatprep.subr.bf16.mxu0 0
        %2113 = vmatpush1.bf16.xpose.msra.mxu0 %v2104
        %2114 = vmatprep.subr.bf16.mxu0 0
        %2115 = vmatpush1.bf16.xpose.msra.mxu0 %v2105
        %2116 = vmatprep.subr.bf16.mxu0 0
        %2117 = vmatpush1.bf16.xpose.msra.mxu0 %v2106
        %2118 = vmatprep.subr.bf16.mxu0 0
        %2119 = vmatpush1.bf16.xpose.msra.mxu0 %v2107
        %2120 = vmatprep.subr.bf16.mxu0 0
        %2121 = vmatpush1.bf16.xpose.msra.mxu0 0
        %2122 = vmatprep.subr.bf16.mxu0 0
        %2123 = vmatpush1.bf16.xpose.msra.mxu0 0
        %2124 = vmatprep.subr.bf16.mxu0 0
        %2125 = vmatpush1.bf16.xpose.msra.mxu0 0
        %2126 = vmatprep.subr.bf16.mxu0 0
        %2127 = vmatpush1.bf16.xpose.msra.mxu0 0
        %2128 = vmatprep.subr.bf16.mxu0 0
        %2129 = vmatpush1.bf16.xpose.msra.mxu0 0
        %2130 = vmatprep.subr.bf16.mxu0 0
        %2131 = vmatpush1.bf16.xpose.msra.mxu0 0
        %2132 = vmatprep.subr.bf16.mxu0 0
        %2133 = vmatpush1.bf16.xpose.msra.mxu0 0
        %2134 = vmatprep.subr.bf16.mxu0 0
        %2135 = vmatpush1.bf16.xpose.msra.mxu0 0
        %2136 = vmatprep.subr.bf16.mxu0 0
        %2137 = vmatpush1.bf16.xpose.msra.mxu0 0
        %2138 = vmatprep.subr.bf16.mxu0 0
        %2139 = vmatpush1.bf16.xpose.msra.mxu0 0
        %2140 = vmatprep.subr.bf16.mxu0 0
        %2141 = vmatpush1.bf16.xpose.msra.mxu0 0
        %2142 = vmatprep.subr.bf16.mxu0 0
        %2143 = vmatpush1.bf16.xpose.msra.mxu0 0
        %2144 = vmatprep.mubr.bf16.mxu0 0
        %2145 = vmatmul.mubr.bf16.gmra.mrb[0].mxu0 %v2074
        %v2146 = vpop.f32.mrb[0].mxu0
        %v2147 = vadd.f32 %v2086, %v2146
        %v2148 = vpop.f32.mrb[0].mxu0
        %v2149 = vpop.f32.mrb[0].mxu0
        %v2150 = vadd.f32 %v2086, %v2149
        %v2151 = vpop.f32.mrb[0].mxu0
        %2152 = vmatprep.mubr.bf16.mxu0 0
        %2153 = vmatmul.mubr.bf16.gmra.mrb[0].mxu0 %v2075
        %v2154 = vpop.f32.mrb[0].mxu0
        %v2155 = vadd.f32 %v2086, %v2154
        %v2156 = vpop.f32.mrb[0].mxu0
        %v2157 = vpop.f32.mrb[0].mxu0
        %v2158 = vadd.f32 %v2086, %v2157
        %v2159 = vpop.f32.mrb[0].mxu0
        %2160 = vmatprep.mubr.bf16.mxu0 0
        %2161 = vmatmul.mubr.bf16.gmra.mrb[0].mxu0 %v2076
        %v2162 = vpop.f32.mrb[0].mxu0
        %v2163 = vadd.f32 %v2086, %v2162
        %v2164 = vpop.f32.mrb[0].mxu0
        %v2165 = vpop.f32.mrb[0].mxu0
        %v2166 = vadd.f32 %v2086, %v2165
        %v2167 = vpop.f32.mrb[0].mxu0
        %2168 = vmatprep.mubr.bf16.mxu0 0
        %2169 = vmatmul.mubr.bf16.gmra.mrb[0].mxu0 %v2077
        %v2170 = vpop.f32.mrb[0].mxu0
        %v2171 = vadd.f32 %v2086, %v2170
        %v2172 = vpop.f32.mrb[0].mxu0
        %v2173 = vpop.f32.mrb[0].mxu0
        %v2174 = vadd.f32 %v2086, %v2173
        %v2175 = vpop.f32.mrb[0].mxu0
        %2176 = vmatprep.mubr.bf16.mxu0 0
        %2177 = vmatmul.mubr.bf16.gmra.mrb[0].mxu0 %v2078
        %v2178 = vpop.f32.mrb[0].mxu0
        %v2179 = vadd.f32 %v2086, %v2178
        %v2180 = vpop.f32.mrb[0].mxu0
        %v2181 = vpop.f32.mrb[0].mxu0
        %v2182 = vadd.f32 %v2086, %v2181
        %v2183 = vpop.f32.mrb[0].mxu0
        %2184 = vmatprep.mubr.bf16.mxu0 0
        %2185 = vmatmul.mubr.bf16.gmra.mrb[0].mxu0 %v2079
        %v2186 = vpop.f32.mrb[0].mxu0
        %v2187 = vadd.f32 %v2086, %v2186
        %v2188 = vpop.f32.mrb[0].mxu0
        %v2189 = vpop.f32.mrb[0].mxu0
        %v2190 = vadd.f32 %v2086, %v2189
        %v2191 = vpop.f32.mrb[0].mxu0
        %2192 = vmatprep.mubr.bf16.mxu0 0
        %2193 = vmatmul.mubr.bf16.gmra.mrb[0].mxu0 %v2080
        %v2194 = vpop.f32.mrb[0].mxu0
        %v2195 = vadd.f32 %v2086, %v2194
        %v2196 = vpop.f32.mrb[0].mxu0
        %v2197 = vpop.f32.mrb[0].mxu0
        %v2198 = vadd.f32 %v2086, %v2197
        %v2199 = vpop.f32.mrb[0].mxu0
        %2200 = vmatprep.mubr.bf16.mxu0 0
        %2201 = vmatmul.mubr.bf16.gmra.mrb[0].mxu0 %v2081
        %v2202 = vpop.f32.mrb[0].mxu0
        %v2203 = vadd.f32 %v2086, %v2202
        %v2204 = vpop.f32.mrb[0].mxu0
        %v2205 = vpop.f32.mrb[0].mxu0
        %v2206 = vadd.f32 %v2086, %v2205
        %v2207 = vpop.f32.mrb[0].mxu0
        %2208 = vdwg.mxu0
        %v2209 = vadd.f32 %v1817, %v2147
        %v2210 = vadd.f32 %v1818, %v2150
        %v2211 = vadd.f32 %v1819, %v2155
        %v2212 = vadd.f32 %v1820, %v2158
        %v2213 = vadd.f32 %v1821, %v2163
        %v2214 = vadd.f32 %v1822, %v2166
        %v2215 = vadd.f32 %v1823, %v2171
        %v2216 = vadd.f32 %v1824, %v2174
        %v2217 = vadd.f32 %v1825, %v2179
        %v2218 = vadd.f32 %v1826, %v2182
        %v2219 = vadd.f32 %v1827, %v2187
        %v2220 = vadd.f32 %v1828, %v2190
        %v2221 = vadd.f32 %v1829, %v2195
        %v2222 = vadd.f32 %v1830, %v2198
        %v2223 = vadd.f32 %v1831, %v2203
        %v2224 = vadd.f32 %v1832, %v2206
        %v2225 = vld [vmem:[#allocation36] sm:$0x1]
        %v2226 = vld [vmem:[#allocation37] sm:$0x1]
        %v2227 = vsel %vm1417, %v2209, 0.0
        %2228 = vadd.xlane.f32.xlu0 %v2227
        %v2229 = vpop.xlane.xlu0 %2228
        %v2230 = vsel %vm1417, %v2210, 0.0
        %2231 = vadd.xlane.f32.xlu0 %v2230
        %v2232 = vpop.xlane.xlu0 %2231
        %v2233 = vsel %vm1417, %v2211, 0.0
        %2234 = vadd.xlane.f32.xlu0 %v2233
        %v2235 = vpop.xlane.xlu0 %2234
        %v2236 = vsel %vm1417, %v2212, 0.0
        %2237 = vadd.xlane.f32.xlu0 %v2236
        %v2238 = vpop.xlane.xlu0 %2237
        %v2239 = vsel %vm1417, %v2213, 0.0
        %2240 = vadd.xlane.f32.xlu0 %v2239
        %v2241 = vpop.xlane.xlu0 %2240
        %v2242 = vsel %vm1417, %v2214, 0.0
        %2243 = vadd.xlane.f32.xlu0 %v2242
        %v2244 = vpop.xlane.xlu0 %2243
        %v2245 = vsel %vm1417, %v2215, 0.0
        %2246 = vadd.xlane.f32.xlu0 %v2245
        %v2247 = vpop.xlane.xlu0 %2246
        %v2248 = vsel %vm1417, %v2216, 0.0
        %2249 = vadd.xlane.f32.xlu0 %v2248
        %v2250 = vpop.xlane.xlu0 %2249
        %v2251 = vsel %vm1417, %v2217, 0.0
        %2252 = vadd.xlane.f32.xlu0 %v2251
        %v2253 = vpop.xlane.xlu0 %2252
        %v2254 = vsel %vm1417, %v2218, 0.0
        %2255 = vadd.xlane.f32.xlu0 %v2254
        %v2256 = vpop.xlane.xlu0 %2255
        %v2257 = vsel %vm1417, %v2219, 0.0
        %2258 = vadd.xlane.f32.xlu0 %v2257
        %v2259 = vpop.xlane.xlu0 %2258
        %v2260 = vsel %vm1417, %v2220, 0.0
        %2261 = vadd.xlane.f32.xlu0 %v2260
        %v2262 = vpop.xlane.xlu0 %2261
        %v2263 = vsel %vm1417, %v2221, 0.0
        %2264 = vadd.xlane.f32.xlu0 %v2263
        %v2265 = vpop.xlane.xlu0 %2264
        %v2266 = vsel %vm1417, %v2222, 0.0
        %2267 = vadd.xlane.f32.xlu0 %v2266
        %v2268 = vpop.xlane.xlu0 %2267
        %v2269 = vsel %vm1417, %v2223, 0.0
        %2270 = vadd.xlane.f32.xlu0 %v2269
        %v2271 = vpop.xlane.xlu0 %2270
        %v2272 = vsel %vm1417, %v2224, 0.0
        %2273 = vadd.xlane.f32.xlu0 %v2272
        %v2274 = vpop.xlane.xlu0 %2273
        %v2275 = vmul.f32 %v2229, %v1628
        %v2276 = vmul.f32 %v2232, %v1628
        %v2277 = vmul.f32 %v2235, %v1628
        %v2278 = vmul.f32 %v2238, %v1628
        %v2279 = vmul.f32 %v2241, %v1628
        %v2280 = vmul.f32 %v2244, %v1628
        %v2281 = vmul.f32 %v2247, %v1628
        %v2282 = vmul.f32 %v2250, %v1628
        %v2283 = vmul.f32 %v2253, %v1628
        %v2284 = vmul.f32 %v2256, %v1628
        %v2285 = vmul.f32 %v2259, %v1628
        %v2286 = vmul.f32 %v2262, %v1628
        %v2287 = vmul.f32 %v2265, %v1628
        %v2288 = vmul.f32 %v2268, %v1628
        %v2289 = vmul.f32 %v2271, %v1628
        %v2290 = vmul.f32 %v2274, %v1628
        %v2291 = vsub.f32 %v2209, %v2275
        %v2292 = vsub.f32 %v2210, %v2276
        %v2293 = vsub.f32 %v2211, %v2277
        %v2294 = vsub.f32 %v2212, %v2278
        %v2295 = vsub.f32 %v2213, %v2279
        %v2296 = vsub.f32 %v2214, %v2280
        %v2297 = vsub.f32 %v2215, %v2281
        %v2298 = vsub.f32 %v2216, %v2282
        %v2299 = vsub.f32 %v2217, %v2283
        %v2300 = vsub.f32 %v2218, %v2284
        %v2301 = vsub.f32 %v2219, %v2285
        %v2302 = vsub.f32 %v2220, %v2286
        %v2303 = vsub.f32 %v2221, %v2287
        %v2304 = vsub.f32 %v2222, %v2288
        %v2305 = vsub.f32 %v2223, %v2289
        %v2306 = vsub.f32 %v2224, %v2290
        %v2307 = vmul.f32 %v2291, %v2291
        %v2308 = vmul.f32 %v2292, %v2292
        %v2309 = vmul.f32 %v2293, %v2293
        %v2310 = vmul.f32 %v2294, %v2294
        %v2311 = vmul.f32 %v2295, %v2295
        %v2312 = vmul.f32 %v2296, %v2296
        %v2313 = vmul.f32 %v2297, %v2297
        %v2314 = vmul.f32 %v2298, %v2298
        %v2315 = vmul.f32 %v2299, %v2299
        %v2316 = vmul.f32 %v2300, %v2300
        %v2317 = vmul.f32 %v2301, %v2301
        %v2318 = vmul.f32 %v2302, %v2302
        %v2319 = vmul.f32 %v2303, %v2303
        %v2320 = vmul.f32 %v2304, %v2304
        %v2321 = vmul.f32 %v2305, %v2305
        %v2322 = vmul.f32 %v2306, %v2306
        %v2323 = vsel %vm1417, %v2307, 0.0
        %2324 = vadd.xlane.f32.xlu0 %v2323
        %v2325 = vpop.xlane.xlu0 %2324
        %v2326 = vsel %vm1417, %v2308, 0.0
        %2327 = vadd.xlane.f32.xlu0 %v2326
        %v2328 = vpop.xlane.xlu0 %2327
        %v2329 = vsel %vm1417, %v2309, 0.0
        %2330 = vadd.xlane.f32.xlu0 %v2329
        %v2331 = vpop.xlane.xlu0 %2330
        %v2332 = vsel %vm1417, %v2310, 0.0
        %2333 = vadd.xlane.f32.xlu0 %v2332
        %v2334 = vpop.xlane.xlu0 %2333
        %v2335 = vsel %vm1417, %v2311, 0.0
        %2336 = vadd.xlane.f32.xlu0 %v2335
        %v2337 = vpop.xlane.xlu0 %2336
        %v2338 = vsel %vm1417, %v2312, 0.0
        %2339 = vadd.xlane.f32.xlu0 %v2338
        %v2340 = vpop.xlane.xlu0 %2339
        %v2341 = vsel %vm1417, %v2313, 0.0
        %2342 = vadd.xlane.f32.xlu0 %v2341
        %v2343 = vpop.xlane.xlu0 %2342
        %v2344 = vsel %vm1417, %v2314, 0.0
        %2345 = vadd.xlane.f32.xlu0 %v2344
        %v2346 = vpop.xlane.xlu0 %2345
        %v2347 = vsel %vm1417, %v2315, 0.0
        %2348 = vadd.xlane.f32.xlu0 %v2347
        %v2349 = vpop.xlane.xlu0 %2348
        %v2350 = vsel %vm1417, %v2316, 0.0
        %2351 = vadd.xlane.f32.xlu0 %v2350
        %v2352 = vpop.xlane.xlu0 %2351
        %v2353 = vsel %vm1417, %v2317, 0.0
        %2354 = vadd.xlane.f32.xlu0 %v2353
        %v2355 = vpop.xlane.xlu0 %2354
        %v2356 = vsel %vm1417, %v2318, 0.0
        %2357 = vadd.xlane.f32.xlu0 %v2356
        %v2358 = vpop.xlane.xlu0 %2357
        %v2359 = vsel %vm1417, %v2319, 0.0
        %2360 = vadd.xlane.f32.xlu0 %v2359
        %v2361 = vpop.xlane.xlu0 %2360
        %v2362 = vsel %vm1417, %v2320, 0.0
        %2363 = vadd.xlane.f32.xlu0 %v2362
        %v2364 = vpop.xlane.xlu0 %2363
        %v2365 = vsel %vm1417, %v2321, 0.0
        %2366 = vadd.xlane.f32.xlu0 %v2365
        %v2367 = vpop.xlane.xlu0 %2366
        %v2368 = vsel %vm1417, %v2322, 0.0
        %2369 = vadd.xlane.f32.xlu0 %v2368
        %v2370 = vpop.xlane.xlu0 %2369
        %v2371 = vmul.f32 %v2325, %v1628
        %v2372 = vmul.f32 %v2328, %v1628
        %v2373 = vmul.f32 %v2331, %v1628
        %v2374 = vmul.f32 %v2334, %v1628
        %v2375 = vmul.f32 %v2337, %v1628
        %v2376 = vmul.f32 %v2340, %v1628
        %v2377 = vmul.f32 %v2343, %v1628
        %v2378 = vmul.f32 %v2346, %v1628
        %v2379 = vmul.f32 %v2349, %v1628
        %v2380 = vmul.f32 %v2352, %v1628
        %v2381 = vmul.f32 %v2355, %v1628
        %v2382 = vmul.f32 %v2358, %v1628
        %v2383 = vmul.f32 %v2361, %v1628
        %v2384 = vmul.f32 %v2364, %v1628
        %v2385 = vmul.f32 %v2367, %v1628
        %v2386 = vmul.f32 %v2370, %v1628
        %v2387 = vadd.f32 %v2371, 1e-05
        %v2388 = vadd.f32 %v2372, 1e-05
        %v2389 = vadd.f32 %v2373, 1e-05
        %v2390 = vadd.f32 %v2374, 1e-05
        %v2391 = vadd.f32 %v2375, 1e-05
        %v2392 = vadd.f32 %v2376, 1e-05
        %v2393 = vadd.f32 %v2377, 1e-05
        %v2394 = vadd.f32 %v2378, 1e-05
        %v2395 = vadd.f32 %v2379, 1e-05
        %v2396 = vadd.f32 %v2380, 1e-05
        %v2397 = vadd.f32 %v2381, 1e-05
        %v2398 = vadd.f32 %v2382, 1e-05
        %v2399 = vadd.f32 %v2383, 1e-05
        %v2400 = vadd.f32 %v2384, 1e-05
        %v2401 = vadd.f32 %v2385, 1e-05
        %v2402 = vadd.f32 %v2386, 1e-05
        %v2403 = vrsqrt.pop %v2387
        %v2404 = vrsqrt.pop %v2388
        %v2405 = vrsqrt.pop %v2389
        %v2406 = vrsqrt.pop %v2390
        %v2407 = vrsqrt.pop %v2391
        %v2408 = vrsqrt.pop %v2392
        %v2409 = vrsqrt.pop %v2393
        %v2410 = vrsqrt.pop %v2394
        %v2411 = vrsqrt.pop %v2395
        %v2412 = vrsqrt.pop %v2396
        %v2413 = vrsqrt.pop %v2397
        %v2414 = vrsqrt.pop %v2398
        %v2415 = vrsqrt.pop %v2399
        %v2416 = vrsqrt.pop %v2400
        %v2417 = vrsqrt.pop %v2401
        %v2418 = vrsqrt.pop %v2402
        %v2419 = vmul.f32 %v2291, %v2403
        %v2420 = vmul.f32 %v2292, %v2404
        %v2421 = vmul.f32 %v2293, %v2405
        %v2422 = vmul.f32 %v2294, %v2406
        %v2423 = vmul.f32 %v2295, %v2407
        %v2424 = vmul.f32 %v2296, %v2408
        %v2425 = vmul.f32 %v2297, %v2409
        %v2426 = vmul.f32 %v2298, %v2410
        %v2427 = vmul.f32 %v2299, %v2411
        %v2428 = vmul.f32 %v2300, %v2412
        %v2429 = vmul.f32 %v2301, %v2413
        %v2430 = vmul.f32 %v2302, %v2414
        %v2431 = vmul.f32 %v2303, %v2415
        %v2432 = vmul.f32 %v2304, %v2416
        %v2433 = vmul.f32 %v2305, %v2417
        %v2434 = vmul.f32 %v2306, %v2418
        %v2436 = vlaneseq
        %v2437 = vshrl.u32 %v2436, 7
        %v2438 = vsub.s32 0, %v2437
        %v2439 = vrot.slane %v2225, %v2438
        %v2441 = vmul.f32 %v2419, %v2439
        %v2442 = vmul.f32 %v2420, %v2439
        %v2443 = vmul.f32 %v2421, %v2439
        %v2444 = vmul.f32 %v2422, %v2439
        %v2445 = vmul.f32 %v2423, %v2439
        %v2446 = vmul.f32 %v2424, %v2439
        %v2447 = vmul.f32 %v2425, %v2439
        %v2448 = vmul.f32 %v2426, %v2439
        %v2449 = vmul.f32 %v2427, %v2439
        %v2450 = vmul.f32 %v2428, %v2439
        %v2451 = vmul.f32 %v2429, %v2439
        %v2452 = vmul.f32 %v2430, %v2439
        %v2453 = vmul.f32 %v2431, %v2439
        %v2454 = vmul.f32 %v2432, %v2439
        %v2455 = vmul.f32 %v2433, %v2439
        %v2456 = vmul.f32 %v2434, %v2439
        %v2458 = vlaneseq
        %v2459 = vshrl.u32 %v2458, 7
        %v2460 = vsub.s32 0, %v2459
        %v2461 = vrot.slane %v2226, %v2460
        %v2463 = vadd.f32 %v2441, %v2461
        %v2464 = vadd.f32 %v2442, %v2461
        %v2465 = vadd.f32 %v2443, %v2461
        %v2466 = vadd.f32 %v2444, %v2461
        %v2467 = vadd.f32 %v2445, %v2461
        %v2468 = vadd.f32 %v2446, %v2461
        %v2469 = vadd.f32 %v2447, %v2461
        %v2470 = vadd.f32 %v2448, %v2461
        %v2471 = vadd.f32 %v2449, %v2461
        %v2472 = vadd.f32 %v2450, %v2461
        %v2473 = vadd.f32 %v2451, %v2461
        %v2474 = vadd.f32 %v2452, %v2461
        %v2475 = vadd.f32 %v2453, %v2461
        %v2476 = vadd.f32 %v2454, %v2461
        %v2477 = vadd.f32 %v2455, %v2461
        %v2478 = vadd.f32 %v2456, %v2461
        %v2479 = vpack.c.bf16 %v2464, %v2463
        %v2480 = vpack.c.bf16 %v2466, %v2465
        %v2481 = vpack.c.bf16 %v2468, %v2467
        %v2482 = vpack.c.bf16 %v2470, %v2469
        %v2483 = vpack.c.bf16 %v2472, %v2471
        %v2484 = vpack.c.bf16 %v2474, %v2473
        %v2485 = vpack.c.bf16 %v2476, %v2475
        %v2486 = vpack.c.bf16 %v2478, %v2477
        %s2487 = scalar_lea.vmem [#allocation12], 32
        %v2488 = vld [vmem:[%s2487] sm:$0xf]
        %v2489 = vld [vmem:[%s2487 + $0x4] sm:$0xf]
        %v2490 = vld [vmem:[%s2487 + $0x8] sm:$0xf]
        %v2491 = vld [vmem:[%s2487 + $0xc] sm:$0xf]
        %v2492 = vld [vmem:[%s2487 + $0x10] sm:$0xf]
        %v2493 = vld [vmem:[%s2487 + $0x14] sm:$0xf]
        %v2494 = vld [vmem:[%s2487 + $0x18] sm:$0xf]
        %v2495 = vld [vmem:[%s2487 + $0x1c] sm:$0xf]
        %s2496 = scalar_lea.vmem [#allocation13], 64
        %v2497 = vld [vmem:[%s2496] sm:$0xff]
        %v2498 = vld [vmem:[%s2496 + $0x8] sm:$0xff]
        %v2499 = vld [vmem:[%s2496 + $0x10] sm:$0xff]
        %v2500 = vld [vmem:[%s2496 + $0x18] sm:$0xff]
        %v2501 = vld [vmem:[%s2496 + $0x20] sm:$0xff]
        %v2502 = vld [vmem:[%s2496 + $0x28] sm:$0xff]
        %v2503 = vld [vmem:[%s2496 + $0x30] sm:$0xff]
        %v2504 = vld [vmem:[%s2496 + $0x38] sm:$0xff]
        %2506 = vset.pattern.permute.xlu0 0
        %2507 = vperm.xlu0 %2506, %v2497
        %v2508 = vpop.permute.xlu0 %2507
        %2511 = vset.pattern.permute.xlu0 0
        %2512 = vperm.xlu0 %2511, %v2498
        %v2513 = vpop.permute.xlu0 %2512
        %2516 = vset.pattern.permute.xlu0 0
        %2517 = vperm.xlu0 %2516, %v2499
        %v2518 = vpop.permute.xlu0 %2517
        %2521 = vset.pattern.permute.xlu0 0
        %2522 = vperm.xlu0 %2521, %v2500
        %v2523 = vpop.permute.xlu0 %2522
        %2526 = vset.pattern.permute.xlu0 0
        %2527 = vperm.xlu0 %2526, %v2501
        %v2528 = vpop.permute.xlu0 %2527
        %2531 = vset.pattern.permute.xlu0 0
        %2532 = vperm.xlu0 %2531, %v2502
        %v2533 = vpop.permute.xlu0 %2532
        %2536 = vset.pattern.permute.xlu0 0
        %2537 = vperm.xlu0 %2536, %v2503
        %v2538 = vpop.permute.xlu0 %2537
        %2541 = vset.pattern.permute.xlu0 0
        %2542 = vperm.xlu0 %2541, %v2504
        %v2543 = vpop.permute.xlu0 %2542
        %v2553 = vunpack.c.l.b16 %v2488
        %v2554 = vunpack.c.l.b16 %v2489
        %v2555 = vunpack.c.l.b16 %v2490
        %v2556 = vunpack.c.l.b16 %v2491
        %v2557 = vunpack.c.l.b16 %v2492
        %v2558 = vunpack.c.l.b16 %v2493
        %v2559 = vunpack.c.l.b16 %v2494
        %v2560 = vunpack.c.l.b16 %v2495
        %v2561 = vpack.c.b16 %v2554, %v2553
        %v2562 = vpack.c.b16 %v2556, %v2555
        %v2563 = vpack.c.b16 %v2558, %v2557
        %v2564 = vpack.c.b16 %v2560, %v2559
        %v2566 = vsel %vm1417, %v2561, 0
        %v2569 = vsel %vm1417, %v2562, 0
        %v2572 = vsel %vm1417, %v2563, 0
        %v2575 = vsel %vm1417, %v2564, 0
        %v2578 = vsel %vm1417, %v2479, 0
        %v2581 = vsel %vm1417, %v2480, 0
        %v2584 = vsel %vm1417, %v2481, 0
        %v2587 = vsel %vm1417, %v2482, 0
        %v2590 = vsel %vm1417, %v2483, 0
        %v2593 = vsel %vm1417, %v2484, 0
        %v2596 = vsel %vm1417, %v2485, 0
        %v2599 = vsel %vm1417, %v2486, 0
        %2601 = vmatprep.subr.bf16.mxu0 0
        %2602 = vmatpush1.bf16.xpose.msra.mxu0 %v2578
        %2603 = vmatprep.subr.bf16.mxu0 0
        %2604 = vmatpush1.bf16.xpose.msra.mxu0 %v2581
        %2605 = vmatprep.subr.bf16.mxu0 0
        %2606 = vmatpush1.bf16.xpose.msra.mxu0 %v2584
        %2607 = vmatprep.subr.bf16.mxu0 0
        %2608 = vmatpush1.bf16.xpose.msra.mxu0 %v2587
        %2609 = vmatprep.subr.bf16.mxu0 0
        %2610 = vmatpush1.bf16.xpose.msra.mxu0 %v2590
        %2611 = vmatprep.subr.bf16.mxu0 0
        %2612 = vmatpush1.bf16.xpose.msra.mxu0 %v2593
        %2613 = vmatprep.subr.bf16.mxu0 0
        %2614 = vmatpush1.bf16.xpose.msra.mxu0 %v2596
        %2615 = vmatprep.subr.bf16.mxu0 0
        %2616 = vmatpush1.bf16.xpose.msra.mxu0 %v2599
        %2617 = vmatprep.subr.bf16.mxu0 0
        %2618 = vmatpush1.bf16.xpose.msra.mxu0 0
        %2619 = vmatprep.subr.bf16.mxu0 0
        %2620 = vmatpush1.bf16.xpose.msra.mxu0 0
        %2621 = vmatprep.subr.bf16.mxu0 0
        %2622 = vmatpush1.bf16.xpose.msra.mxu0 0
        %2623 = vmatprep.subr.bf16.mxu0 0
        %2624 = vmatpush1.bf16.xpose.msra.mxu0 0
        %2625 = vmatprep.subr.bf16.mxu0 0
        %2626 = vmatpush1.bf16.xpose.msra.mxu0 0
        %2627 = vmatprep.subr.bf16.mxu0 0
        %2628 = vmatpush1.bf16.xpose.msra.mxu0 0
        %2629 = vmatprep.subr.bf16.mxu0 0
        %2630 = vmatpush1.bf16.xpose.msra.mxu0 0
        %2631 = vmatprep.subr.bf16.mxu0 0
        %2632 = vmatpush1.bf16.xpose.msra.mxu0 0
        %2633 = vmatprep.mubr.bf16.mxu0 0
        %2634 = vmatmul.mubr.bf16.gmra.mrb[0].mxu0 %v2566
        %v2635 = vpop.f32.mrb[0].mxu0
        %v2636 = vadd.f32 %v2508, %v2635
        %v2637 = vpop.f32.mrb[0].mxu0
        %v2638 = vpop.f32.mrb[0].mxu0
        %v2639 = vadd.f32 %v2513, %v2638
        %v2640 = vpop.f32.mrb[0].mxu0
        %2641 = vmatprep.mubr.bf16.mxu0 0
        %2642 = vmatmul.mubr.bf16.gmra.mrb[0].mxu0 %v2569
        %v2643 = vpop.f32.mrb[0].mxu0
        %v2644 = vadd.f32 %v2518, %v2643
        %v2645 = vpop.f32.mrb[0].mxu0
        %v2646 = vpop.f32.mrb[0].mxu0
        %v2647 = vadd.f32 %v2523, %v2646
        %v2648 = vpop.f32.mrb[0].mxu0
        %2649 = vmatprep.mubr.bf16.mxu0 0
        %2650 = vmatmul.mubr.bf16.gmra.mrb[0].mxu0 %v2572
        %v2651 = vpop.f32.mrb[0].mxu0
        %v2652 = vadd.f32 %v2528, %v2651
        %v2653 = vpop.f32.mrb[0].mxu0
        %v2654 = vpop.f32.mrb[0].mxu0
        %v2655 = vadd.f32 %v2533, %v2654
        %v2656 = vpop.f32.mrb[0].mxu0
        %2657 = vmatprep.mubr.bf16.mxu0 0
        %2658 = vmatmul.mubr.bf16.gmra.mrb[0].mxu0 %v2575
        %v2659 = vpop.f32.mrb[0].mxu0
        %v2660 = vadd.f32 %v2538, %v2659
        %v2661 = vpop.f32.mrb[0].mxu0
        %v2662 = vpop.f32.mrb[0].mxu0
        %v2663 = vadd.f32 %v2543, %v2662
        %v2664 = vpop.f32.mrb[0].mxu0
        %2665 = vdwg.mxu0
        %v2666 = vpack.c.bf16 %v2639, %v2636
        %v2667 = vpack.c.bf16 %v2647, %v2644
        %v2668 = vpack.c.bf16 %v2655, %v2652
        %v2669 = vpack.c.bf16 %v2663, %v2660
        %s2670 = scalar_lea.vmem [#allocation15], 32
        %v2671 = vld [vmem:[%s2670] sm:$0xf]
        %v2672 = vld [vmem:[%s2670 + $0x4] sm:$0xf]
        %v2673 = vld [vmem:[%s2670 + $0x8] sm:$0xf]
        %v2674 = vld [vmem:[%s2670 + $0xc] sm:$0xf]
        %v2675 = vld [vmem:[%s2670 + $0x10] sm:$0xf]
        %v2676 = vld [vmem:[%s2670 + $0x14] sm:$0xf]
        %v2677 = vld [vmem:[%s2670 + $0x18] sm:$0xf]
        %v2678 = vld [vmem:[%s2670 + $0x1c] sm:$0xf]
        %s2679 = scalar_lea.vmem [#allocation16], 64
        %v2680 = vld [vmem:[%s2679] sm:$0xff]
        %v2681 = vld [vmem:[%s2679 + $0x8] sm:$0xff]
        %v2682 = vld [vmem:[%s2679 + $0x10] sm:$0xff]
        %v2683 = vld [vmem:[%s2679 + $0x18] sm:$0xff]
        %v2684 = vld [vmem:[%s2679 + $0x20] sm:$0xff]
        %v2685 = vld [vmem:[%s2679 + $0x28] sm:$0xff]
        %v2686 = vld [vmem:[%s2679 + $0x30] sm:$0xff]
        %v2687 = vld [vmem:[%s2679 + $0x38] sm:$0xff]
        %2689 = vset.pattern.permute.xlu0 0
        %2690 = vperm.xlu0 %2689, %v2680
        %v2691 = vpop.permute.xlu0 %2690
        %2694 = vset.pattern.permute.xlu0 0
        %2695 = vperm.xlu0 %2694, %v2681
        %v2696 = vpop.permute.xlu0 %2695
        %2699 = vset.pattern.permute.xlu0 0
        %2700 = vperm.xlu0 %2699, %v2682
        %v2701 = vpop.permute.xlu0 %2700
        %2704 = vset.pattern.permute.xlu0 0
        %2705 = vperm.xlu0 %2704, %v2683
        %v2706 = vpop.permute.xlu0 %2705
        %2709 = vset.pattern.permute.xlu0 0
        %2710 = vperm.xlu0 %2709, %v2684
        %v2711 = vpop.permute.xlu0 %2710
        %2714 = vset.pattern.permute.xlu0 0
        %2715 = vperm.xlu0 %2714, %v2685
        %v2716 = vpop.permute.xlu0 %2715
        %2719 = vset.pattern.permute.xlu0 0
        %2720 = vperm.xlu0 %2719, %v2686
        %v2721 = vpop.permute.xlu0 %2720
        %2724 = vset.pattern.permute.xlu0 0
        %2725 = vperm.xlu0 %2724, %v2687
        %v2726 = vpop.permute.xlu0 %2725
        %v2736 = vunpack.c.l.b16 %v2671
        %v2737 = vunpack.c.l.b16 %v2672
        %v2738 = vunpack.c.l.b16 %v2673
        %v2739 = vunpack.c.l.b16 %v2674
        %v2740 = vunpack.c.l.b16 %v2675
        %v2741 = vunpack.c.l.b16 %v2676
        %v2742 = vunpack.c.l.b16 %v2677
        %v2743 = vunpack.c.l.b16 %v2678
        %v2744 = vpack.c.b16 %v2737, %v2736
        %v2745 = vpack.c.b16 %v2739, %v2738
        %v2746 = vpack.c.b16 %v2741, %v2740
        %v2747 = vpack.c.b16 %v2743, %v2742
        %v2749 = vsel %vm1417, %v2744, 0
        %v2752 = vsel %vm1417, %v2745, 0
        %v2755 = vsel %vm1417, %v2746, 0
        %v2758 = vsel %vm1417, %v2747, 0
        %2760 = vmatprep.subr.bf16.mxu0 0
        %2761 = vmatpush1.bf16.xpose.msra.mxu0 %v2578
        %2762 = vmatprep.subr.bf16.mxu0 0
        %2763 = vmatpush1.bf16.xpose.msra.mxu0 %v2581
        %2764 = vmatprep.subr.bf16.mxu0 0
        %2765 = vmatpush1.bf16.xpose.msra.mxu0 %v2584
        %2766 = vmatprep.subr.bf16.mxu0 0
        %2767 = vmatpush1.bf16.xpose.msra.mxu0 %v2587
        %2768 = vmatprep.subr.bf16.mxu0 0
        %2769 = vmatpush1.bf16.xpose.msra.mxu0 %v2590
        %2770 = vmatprep.subr.bf16.mxu0 0
        %2771 = vmatpush1.bf16.xpose.msra.mxu0 %v2593
        %2772 = vmatprep.subr.bf16.mxu0 0
        %2773 = vmatpush1.bf16.xpose.msra.mxu0 %v2596
        %2774 = vmatprep.subr.bf16.mxu0 0
        %2775 = vmatpush1.bf16.xpose.msra.mxu0 %v2599
        %2776 = vmatprep.subr.bf16.mxu0 0
        %2777 = vmatpush1.bf16.xpose.msra.mxu0 0
        %2778 = vmatprep.subr.bf16.mxu0 0
        %2779 = vmatpush1.bf16.xpose.msra.mxu0 0
        %2780 = vmatprep.subr.bf16.mxu0 0
        %2781 = vmatpush1.bf16.xpose.msra.mxu0 0
        %2782 = vmatprep.subr.bf16.mxu0 0
        %2783 = vmatpush1.bf16.xpose.msra.mxu0 0
        %2784 = vmatprep.subr.bf16.mxu0 0
        %2785 = vmatpush1.bf16.xpose.msra.mxu0 0
        %2786 = vmatprep.subr.bf16.mxu0 0
        %2787 = vmatpush1.bf16.xpose.msra.mxu0 0
        %2788 = vmatprep.subr.bf16.mxu0 0
        %2789 = vmatpush1.bf16.xpose.msra.mxu0 0
        %2790 = vmatprep.subr.bf16.mxu0 0
        %2791 = vmatpush1.bf16.xpose.msra.mxu0 0
        %2792 = vmatprep.mubr.bf16.mxu0 0
        %2793 = vmatmul.mubr.bf16.gmra.mrb[0].mxu0 %v2749
        %v2794 = vpop.f32.mrb[0].mxu0
        %v2795 = vadd.f32 %v2691, %v2794
        %v2796 = vpop.f32.mrb[0].mxu0
        %v2797 = vpop.f32.mrb[0].mxu0
        %v2798 = vadd.f32 %v2696, %v2797
        %v2799 = vpop.f32.mrb[0].mxu0
        %2800 = vmatprep.mubr.bf16.mxu0 0
        %2801 = vmatmul.mubr.bf16.gmra.mrb[0].mxu0 %v2752
        %v2802 = vpop.f32.mrb[0].mxu0
        %v2803 = vadd.f32 %v2701, %v2802
        %v2804 = vpop.f32.mrb[0].mxu0
        %v2805 = vpop.f32.mrb[0].mxu0
        %v2806 = vadd.f32 %v2706, %v2805
        %v2807 = vpop.f32.mrb[0].mxu0
        %2808 = vmatprep.mubr.bf16.mxu0 0
        %2809 = vmatmul.mubr.bf16.gmra.mrb[0].mxu0 %v2755
        %v2810 = vpop.f32.mrb[0].mxu0
        %v2811 = vadd.f32 %v2711, %v2810
        %v2812 = vpop.f32.mrb[0].mxu0
        %v2813 = vpop.f32.mrb[0].mxu0
        %v2814 = vadd.f32 %v2716, %v2813
        %v2815 = vpop.f32.mrb[0].mxu0
        %2816 = vmatprep.mubr.bf16.mxu0 0
        %2817 = vmatmul.mubr.bf16.gmra.mrb[0].mxu0 %v2758
        %v2818 = vpop.f32.mrb[0].mxu0
        %v2819 = vadd.f32 %v2721, %v2818
        %v2820 = vpop.f32.mrb[0].mxu0
        %v2821 = vpop.f32.mrb[0].mxu0
        %v2822 = vadd.f32 %v2726, %v2821
        %v2823 = vpop.f32.mrb[0].mxu0
        %2824 = vdwg.mxu0
        %v2825 = vpack.c.bf16 %v2798, %v2795
        %v2826 = vpack.c.bf16 %v2806, %v2803
        %v2827 = vpack.c.bf16 %v2814, %v2811
        %v2828 = vpack.c.bf16 %v2822, %v2819
        %s2829 = scalar_lea.vmem [#allocation18], 32
        %v2830 = vld [vmem:[%s2829] sm:$0xf]
        %v2831 = vld [vmem:[%s2829 + $0x4] sm:$0xf]
        %v2832 = vld [vmem:[%s2829 + $0x8] sm:$0xf]
        %v2833 = vld [vmem:[%s2829 + $0xc] sm:$0xf]
        %v2834 = vld [vmem:[%s2829 + $0x10] sm:$0xf]
        %v2835 = vld [vmem:[%s2829 + $0x14] sm:$0xf]
        %v2836 = vld [vmem:[%s2829 + $0x18] sm:$0xf]
        %v2837 = vld [vmem:[%s2829 + $0x1c] sm:$0xf]
        %s2838 = scalar_lea.vmem [#allocation19], 64
        %v2839 = vld [vmem:[%s2838] sm:$0xff]
        %v2840 = vld [vmem:[%s2838 + $0x8] sm:$0xff]
        %v2841 = vld [vmem:[%s2838 + $0x10] sm:$0xff]
        %v2842 = vld [vmem:[%s2838 + $0x18] sm:$0xff]
        %v2843 = vld [vmem:[%s2838 + $0x20] sm:$0xff]
        %v2844 = vld [vmem:[%s2838 + $0x28] sm:$0xff]
        %v2845 = vld [vmem:[%s2838 + $0x30] sm:$0xff]
        %v2846 = vld [vmem:[%s2838 + $0x38] sm:$0xff]
        %2848 = vset.pattern.permute.xlu0 0
        %2849 = vperm.xlu0 %2848, %v2839
        %v2850 = vpop.permute.xlu0 %2849
        %2853 = vset.pattern.permute.xlu0 0
        %2854 = vperm.xlu0 %2853, %v2840
        %v2855 = vpop.permute.xlu0 %2854
        %2858 = vset.pattern.permute.xlu0 0
        %2859 = vperm.xlu0 %2858, %v2841
        %v2860 = vpop.permute.xlu0 %2859
        %2863 = vset.pattern.permute.xlu0 0
        %2864 = vperm.xlu0 %2863, %v2842
        %v2865 = vpop.permute.xlu0 %2864
        %2868 = vset.pattern.permute.xlu0 0
        %2869 = vperm.xlu0 %2868, %v2843
        %v2870 = vpop.permute.xlu0 %2869
        %2873 = vset.pattern.permute.xlu0 0
        %2874 = vperm.xlu0 %2873, %v2844
        %v2875 = vpop.permute.xlu0 %2874
        %2878 = vset.pattern.permute.xlu0 0
        %2879 = vperm.xlu0 %2878, %v2845
        %v2880 = vpop.permute.xlu0 %2879
        %2883 = vset.pattern.permute.xlu0 0
        %2884 = vperm.xlu0 %2883, %v2846
        %v2885 = vpop.permute.xlu0 %2884
        %v2895 = vunpack.c.l.b16 %v2830
        %v2896 = vunpack.c.l.b16 %v2831
        %v2897 = vunpack.c.l.b16 %v2832
        %v2898 = vunpack.c.l.b16 %v2833
        %v2899 = vunpack.c.l.b16 %v2834
        %v2900 = vunpack.c.l.b16 %v2835
        %v2901 = vunpack.c.l.b16 %v2836
        %v2902 = vunpack.c.l.b16 %v2837
        %v2903 = vpack.c.b16 %v2896, %v2895
        %v2904 = vpack.c.b16 %v2898, %v2897
        %v2905 = vpack.c.b16 %v2900, %v2899
        %v2906 = vpack.c.b16 %v2902, %v2901
        %v2908 = vsel %vm1417, %v2903, 0
        %v2911 = vsel %vm1417, %v2904, 0
        %v2914 = vsel %vm1417, %v2905, 0
        %v2917 = vsel %vm1417, %v2906, 0
        %2919 = vmatprep.subr.bf16.mxu0 0
        %2920 = vmatpush1.bf16.xpose.msra.mxu0 %v2578
        %2921 = vmatprep.subr.bf16.mxu0 0
        %2922 = vmatpush1.bf16.xpose.msra.mxu0 %v2581
        %2923 = vmatprep.subr.bf16.mxu0 0
        %2924 = vmatpush1.bf16.xpose.msra.mxu0 %v2584
        %2925 = vmatprep.subr.bf16.mxu0 0
        %2926 = vmatpush1.bf16.xpose.msra.mxu0 %v2587
        %2927 = vmatprep.subr.bf16.mxu0 0
        %2928 = vmatpush1.bf16.xpose.msra.mxu0 %v2590
        %2929 = vmatprep.subr.bf16.mxu0 0
        %2930 = vmatpush1.bf16.xpose.msra.mxu0 %v2593
        %2931 = vmatprep.subr.bf16.mxu0 0
        %2932 = vmatpush1.bf16.xpose.msra.mxu0 %v2596
        %2933 = vmatprep.subr.bf16.mxu0 0
        %2934 = vmatpush1.bf16.xpose.msra.mxu0 %v2599
        %2935 = vmatprep.subr.bf16.mxu0 0
        %2936 = vmatpush1.bf16.xpose.msra.mxu0 0
        %2937 = vmatprep.subr.bf16.mxu0 0
        %2938 = vmatpush1.bf16.xpose.msra.mxu0 0
        %2939 = vmatprep.subr.bf16.mxu0 0
        %2940 = vmatpush1.bf16.xpose.msra.mxu0 0
        %2941 = vmatprep.subr.bf16.mxu0 0
        %2942 = vmatpush1.bf16.xpose.msra.mxu0 0
        %2943 = vmatprep.subr.bf16.mxu0 0
        %2944 = vmatpush1.bf16.xpose.msra.mxu0 0
        %2945 = vmatprep.subr.bf16.mxu0 0
        %2946 = vmatpush1.bf16.xpose.msra.mxu0 0
        %2947 = vmatprep.subr.bf16.mxu0 0
        %2948 = vmatpush1.bf16.xpose.msra.mxu0 0
        %2949 = vmatprep.subr.bf16.mxu0 0
        %2950 = vmatpush1.bf16.xpose.msra.mxu0 0
        %2951 = vmatprep.mubr.bf16.mxu0 0
        %2952 = vmatmul.mubr.bf16.gmra.mrb[0].mxu0 %v2908
        %v2953 = vpop.f32.mrb[0].mxu0
        %v2954 = vadd.f32 %v2850, %v2953
        %v2955 = vpop.f32.mrb[0].mxu0
        %v2956 = vpop.f32.mrb[0].mxu0
        %v2957 = vadd.f32 %v2855, %v2956
        %v2958 = vpop.f32.mrb[0].mxu0
        %2959 = vmatprep.mubr.bf16.mxu0 0
        %2960 = vmatmul.mubr.bf16.gmra.mrb[0].mxu0 %v2911
        %v2961 = vpop.f32.mrb[0].mxu0
        %v2962 = vadd.f32 %v2860, %v2961
        %v2963 = vpop.f32.mrb[0].mxu0
        %v2964 = vpop.f32.mrb[0].mxu0
        %v2965 = vadd.f32 %v2865, %v2964
        %v2966 = vpop.f32.mrb[0].mxu0
        %2967 = vmatprep.mubr.bf16.mxu0 0
        %2968 = vmatmul.mubr.bf16.gmra.mrb[0].mxu0 %v2914
        %v2969 = vpop.f32.mrb[0].mxu0
        %v2970 = vadd.f32 %v2870, %v2969
        %v2971 = vpop.f32.mrb[0].mxu0
        %v2972 = vpop.f32.mrb[0].mxu0
        %v2973 = vadd.f32 %v2875, %v2972
        %v2974 = vpop.f32.mrb[0].mxu0
        %2975 = vmatprep.mubr.bf16.mxu0 0
        %2976 = vmatmul.mubr.bf16.gmra.mrb[0].mxu0 %v2917
        %v2977 = vpop.f32.mrb[0].mxu0
        %v2978 = vadd.f32 %v2880, %v2977
        %v2979 = vpop.f32.mrb[0].mxu0
        %v2980 = vpop.f32.mrb[0].mxu0
        %v2981 = vadd.f32 %v2885, %v2980
        %v2982 = vpop.f32.mrb[0].mxu0
        %2983 = vdwg.mxu0
        %v2984 = vpack.c.bf16 %v2957, %v2954
        %v2985 = vpack.c.bf16 %v2965, %v2962
        %v2986 = vpack.c.bf16 %v2973, %v2970
        %v2987 = vpack.c.bf16 %v2981, %v2978
        %2988 = vxpose.xlu0.c.b16.start [1/8] %v2825, 128
        %2989 = vxpose.xlu0.c.b16.cont [2/8] 0, 128
        %2990 = vxpose.xlu0.c.b16.cont [3/8] 0, 128
        %2991 = vxpose.xlu0.c.b16.cont [4/8] 0, 128
        %2992 = vxpose.xlu0.c.b16.cont [5/8] 0, 128
        %2993 = vxpose.xlu0.c.b16.cont [6/8] 0, 128
        %2994 = vxpose.xlu0.c.b16.cont [7/8] 0, 128
        %2995 = vxpose.xlu0.c.b16.end [8/8] 0, 128
        %v2996 = vpop.trf.xlu0
        %v2997 = vpop.trf.xlu0
        %v2998 = vpop.trf.xlu0
        %v2999 = vpop.trf.xlu0
        %v3000 = vpop.trf.xlu0
        %v3001 = vpop.trf.xlu0
        %v3002 = vpop.trf.xlu0
        %v3003 = vpop.trf.xlu0
        %v3005 = vsel %vm1315, %v2996, 0
        %v3008 = vsel %vm1315, %v2997, 0
        %v3011 = vsel %vm1315, %v2998, 0
        %v3014 = vsel %vm1315, %v2999, 0
        %v3017 = vsel %vm1315, %v3000, 0
        %v3020 = vsel %vm1315, %v3001, 0
        %v3023 = vsel %vm1315, %v3002, 0
        %v3026 = vsel %vm1315, %v3003, 0
        %3028 = vmatprep.subr.bf16.mxu0 0
        %3029 = vmatpush1.bf16.msra.mxu0 %v2666
        %3030 = vmatprep.subr.bf16.mxu0 0
        %3031 = vmatpush1.bf16.msra.mxu0 0
        %3032 = vmatprep.subr.bf16.mxu0 0
        %3033 = vmatpush1.bf16.msra.mxu0 0
        %3034 = vmatprep.subr.bf16.mxu0 0
        %3035 = vmatpush1.bf16.msra.mxu0 0
        %3036 = vmatprep.subr.bf16.mxu0 0
        %3037 = vmatpush1.bf16.msra.mxu0 0
        %3038 = vmatprep.subr.bf16.mxu0 0
        %3039 = vmatpush1.bf16.msra.mxu0 0
        %3040 = vmatprep.subr.bf16.mxu0 0
        %3041 = vmatpush1.bf16.msra.mxu0 0
        %3042 = vmatprep.subr.bf16.mxu0 0
        %3043 = vmatpush1.bf16.msra.mxu0 0
        %3044 = vmatprep.subr.bf16.mxu0 0
        %3045 = vmatpush1.bf16.msra.mxu0 0
        %3046 = vmatprep.subr.bf16.mxu0 0
        %3047 = vmatpush1.bf16.msra.mxu0 0
        %3048 = vmatprep.subr.bf16.mxu0 0
        %3049 = vmatpush1.bf16.msra.mxu0 0
        %3050 = vmatprep.subr.bf16.mxu0 0
        %3051 = vmatpush1.bf16.msra.mxu0 0
        %3052 = vmatprep.subr.bf16.mxu0 0
        %3053 = vmatpush1.bf16.msra.mxu0 0
        %3054 = vmatprep.subr.bf16.mxu0 0
        %3055 = vmatpush1.bf16.msra.mxu0 0
        %3056 = vmatprep.subr.bf16.mxu0 0
        %3057 = vmatpush1.bf16.msra.mxu0 0
        %3058 = vmatprep.subr.bf16.mxu0 0
        %3059 = vmatpush1.bf16.msra.mxu0 0
        %3060 = vmatprep.mubr.bf16.mxu0 0
        %3061 = vmatmul.mubr.bf16.gmra.mrb[0].mxu0 %v3005
        %v3062 = vpop.f32.mrb[0].mxu0
        %v3063 = vadd.f32 0.0, %v3062
        %v3064 = vpop.f32.mrb[0].mxu0
        %v3065 = vpop.f32.mrb[0].mxu0
        %v3066 = vadd.f32 0.0, %v3065
        %v3067 = vpop.f32.mrb[0].mxu0
        %3068 = vmatprep.mubr.bf16.mxu0 0
        %3069 = vmatmul.mubr.bf16.gmra.mrb[0].mxu0 %v3008
        %v3070 = vpop.f32.mrb[0].mxu0
        %v3071 = vadd.f32 0.0, %v3070
        %v3072 = vpop.f32.mrb[0].mxu0
        %v3073 = vpop.f32.mrb[0].mxu0
        %v3074 = vadd.f32 0.0, %v3073
        %v3075 = vpop.f32.mrb[0].mxu0
        %3076 = vmatprep.mubr.bf16.mxu0 0
        %3077 = vmatmul.mubr.bf16.gmra.mrb[0].mxu0 %v3011
        %v3078 = vpop.f32.mrb[0].mxu0
        %v3079 = vadd.f32 0.0, %v3078
        %v3080 = vpop.f32.mrb[0].mxu0
        %v3081 = vpop.f32.mrb[0].mxu0
        %v3082 = vadd.f32 0.0, %v3081
        %v3083 = vpop.f32.mrb[0].mxu0
        %3084 = vmatprep.mubr.bf16.mxu0 0
        %3085 = vmatmul.mubr.bf16.gmra.mrb[0].mxu0 %v3014
        %v3086 = vpop.f32.mrb[0].mxu0
        %v3087 = vadd.f32 0.0, %v3086
        %v3088 = vpop.f32.mrb[0].mxu0
        %v3089 = vpop.f32.mrb[0].mxu0
        %v3090 = vadd.f32 0.0, %v3089
        %v3091 = vpop.f32.mrb[0].mxu0
        %3092 = vmatprep.mubr.bf16.mxu0 0
        %3093 = vmatmul.mubr.bf16.gmra.mrb[0].mxu0 %v3017
        %v3094 = vpop.f32.mrb[0].mxu0
        %v3095 = vadd.f32 0.0, %v3094
        %v3096 = vpop.f32.mrb[0].mxu0
        %v3097 = vpop.f32.mrb[0].mxu0
        %v3098 = vadd.f32 0.0, %v3097
        %v3099 = vpop.f32.mrb[0].mxu0
        %3100 = vmatprep.mubr.bf16.mxu0 0
        %3101 = vmatmul.mubr.bf16.gmra.mrb[0].mxu0 %v3020
        %v3102 = vpop.f32.mrb[0].mxu0
        %v3103 = vadd.f32 0.0, %v3102
        %v3104 = vpop.f32.mrb[0].mxu0
        %v3105 = vpop.f32.mrb[0].mxu0
        %v3106 = vadd.f32 0.0, %v3105
        %v3107 = vpop.f32.mrb[0].mxu0
        %3108 = vmatprep.mubr.bf16.mxu0 0
        %3109 = vmatmul.mubr.bf16.gmra.mrb[0].mxu0 %v3023
        %v3110 = vpop.f32.mrb[0].mxu0
        %v3111 = vadd.f32 0.0, %v3110
        %v3112 = vpop.f32.mrb[0].mxu0
        %v3113 = vpop.f32.mrb[0].mxu0
        %v3114 = vadd.f32 0.0, %v3113
        %v3115 = vpop.f32.mrb[0].mxu0
        %3116 = vmatprep.mubr.bf16.mxu0 0
        %3117 = vmatmul.mubr.bf16.gmra.mrb[0].mxu0 %v3026
        %v3118 = vpop.f32.mrb[0].mxu0
        %v3119 = vadd.f32 0.0, %v3118
        %v3120 = vpop.f32.mrb[0].mxu0
        %v3121 = vpop.f32.mrb[0].mxu0
        %v3122 = vadd.f32 0.0, %v3121
        %v3123 = vpop.f32.mrb[0].mxu0
        %3124 = vdwg.mxu0
        %v3125 = vmul.f32 %v3063, 0.25
        %v3126 = vmul.f32 %v3066, 0.25
        %v3127 = vmul.f32 %v3071, 0.25
        %v3128 = vmul.f32 %v3074, 0.25
        %v3129 = vmul.f32 %v3079, 0.25
        %v3130 = vmul.f32 %v3082, 0.25
        %v3131 = vmul.f32 %v3087, 0.25
        %v3132 = vmul.f32 %v3090, 0.25
        %v3133 = vmul.f32 %v3095, 0.25
        %v3134 = vmul.f32 %v3098, 0.25
        %v3135 = vmul.f32 %v3103, 0.25
        %v3136 = vmul.f32 %v3106, 0.25
        %v3137 = vmul.f32 %v3111, 0.25
        %v3138 = vmul.f32 %v3114, 0.25
        %v3139 = vmul.f32 %v3119, 0.25
        %v3140 = vmul.f32 %v3122, 0.25
        %v3141 = vadd.f32 %v3125, %v1268
        %v3142 = vadd.f32 %v3126, %v1269
        %v3143 = vadd.f32 %v3127, %v1270
        %v3144 = vadd.f32 %v3128, %v1271
        %v3145 = vadd.f32 %v3129, %v1272
        %v3146 = vadd.f32 %v3130, %v1273
        %v3147 = vadd.f32 %v3131, %v1274
        %v3148 = vadd.f32 %v3132, %v1275
        %v3149 = vadd.f32 %v3133, %v1276
        %v3150 = vadd.f32 %v3134, %v1277
        %v3151 = vadd.f32 %v3135, %v1278
        %v3152 = vadd.f32 %v3136, %v1279
        %v3153 = vadd.f32 %v3137, %v1280
        %v3154 = vadd.f32 %v3138, %v1281
        %v3155 = vadd.f32 %v3139, %v1282
        %v3156 = vadd.f32 %v3140, %v1283
        %v3157 = vmax.f32 %v3141, %v3145
        %v3158 = vmax.f32 %v3142, %v3146
        %v3159 = vmax.f32 %v3143, %v3147
        %v3160 = vmax.f32 %v3144, %v3148
        %v3161 = vmax.f32 %v3157, %v3149
        %v3162 = vmax.f32 %v3158, %v3150
        %v3163 = vmax.f32 %v3159, %v3151
        %v3164 = vmax.f32 %v3160, %v3152
        %v3165 = vmax.f32 %v3161, %v3153
        %v3166 = vmax.f32 %v3162, %v3154
        %v3167 = vmax.f32 %v3163, %v3155
        %v3168 = vmax.f32 %v3164, %v3156
        %v3169 = vmax.f32 %v3165, %v3166
        %v3170 = vmax.f32 %v3167, %v3168
        %v3171 = vmax.f32 %v3169, %v3170
        %v3172 = vrot.slane %v3171, 4
        %v3173 = vmax.f32 %v3171, %v3172
        %v3174 = vrot.slane %v3173, 2
        %v3175 = vmax.f32 %v3173, %v3174
        %v3176 = vrot.slane %v3175, 1
        %v3177 = vmax.f32 %v3175, %v3176
        %v3178 = vsub.f32 %v3141, %v3177
        %v3179 = vsub.f32 %v3142, %v3177
        %v3180 = vsub.f32 %v3143, %v3177
        %v3181 = vsub.f32 %v3144, %v3177
        %v3182 = vsub.f32 %v3145, %v3177
        %v3183 = vsub.f32 %v3146, %v3177
        %v3184 = vsub.f32 %v3147, %v3177
        %v3185 = vsub.f32 %v3148, %v3177
        %v3186 = vsub.f32 %v3149, %v3177
        %v3187 = vsub.f32 %v3150, %v3177
        %v3188 = vsub.f32 %v3151, %v3177
        %v3189 = vsub.f32 %v3152, %v3177
        %v3190 = vsub.f32 %v3153, %v3177
        %v3191 = vsub.f32 %v3154, %v3177
        %v3192 = vsub.f32 %v3155, %v3177
        %v3193 = vsub.f32 %v3156, %v3177
        %v3194 = vmul.f32 %v3178, 1.442695
        %v3195 = vpow.pop %v3194
        %v3196 = vmul.f32 %v3179, 1.442695
        %v3197 = vpow.pop %v3196
        %v3198 = vmul.f32 %v3180, 1.442695
        %v3199 = vpow.pop %v3198
        %v3200 = vmul.f32 %v3181, 1.442695
        %v3201 = vpow.pop %v3200
        %v3202 = vmul.f32 %v3182, 1.442695
        %v3203 = vpow.pop %v3202
        %v3204 = vmul.f32 %v3183, 1.442695
        %v3205 = vpow.pop %v3204
        %v3206 = vmul.f32 %v3184, 1.442695
        %v3207 = vpow.pop %v3206
        %v3208 = vmul.f32 %v3185, 1.442695
        %v3209 = vpow.pop %v3208
        %v3210 = vmul.f32 %v3186, 1.442695
        %v3211 = vpow.pop %v3210
        %v3212 = vmul.f32 %v3187, 1.442695
        %v3213 = vpow.pop %v3212
        %v3214 = vmul.f32 %v3188, 1.442695
        %v3215 = vpow.pop %v3214
        %v3216 = vmul.f32 %v3189, 1.442695
        %v3217 = vpow.pop %v3216
        %v3218 = vmul.f32 %v3190, 1.442695
        %v3219 = vpow.pop %v3218
        %v3220 = vmul.f32 %v3191, 1.442695
        %v3221 = vpow.pop %v3220
        %v3222 = vmul.f32 %v3192, 1.442695
        %v3223 = vpow.pop %v3222
        %v3224 = vmul.f32 %v3193, 1.442695
        %v3225 = vpow.pop %v3224
        %v3226 = vadd.f32 %v3195, %v3197
        %v3227 = vadd.f32 %v3226, %v3199
        %v3228 = vadd.f32 %v3227, %v3201
        %v3229 = vadd.f32 %v3228, %v3203
        %v3230 = vadd.f32 %v3229, %v3205
        %v3231 = vadd.f32 %v3230, %v3207
        %v3232 = vadd.f32 %v3231, %v3209
        %v3233 = vadd.f32 %v3232, %v3211
        %v3234 = vadd.f32 %v3233, %v3213
        %v3235 = vadd.f32 %v3234, %v3215
        %v3236 = vadd.f32 %v3235, %v3217
        %v3237 = vadd.f32 %v3236, %v3219
        %v3238 = vadd.f32 %v3237, %v3221
        %v3239 = vadd.f32 %v3238, %v3223
        %v3240 = vadd.f32 %v3239, %v3225
        %v3241 = vrot.slane %v3240, 4
        %v3242 = vadd.f32 %v3240, %v3241
        %v3243 = vrot.slane %v3242, 2
        %v3244 = vadd.f32 %v3242, %v3243
        %v3245 = vrot.slane %v3244, 1
        %v3246 = vadd.f32 %v3244, %v3245
        %v3247 = vpack.c.bf16 %v3197, %v3195
        %v3248 = vpack.c.bf16 %v3201, %v3199
        %v3249 = vpack.c.bf16 %v3205, %v3203
        %v3250 = vpack.c.bf16 %v3209, %v3207
        %v3251 = vpack.c.bf16 %v3213, %v3211
        %v3252 = vpack.c.bf16 %v3217, %v3215
        %v3253 = vpack.c.bf16 %v3221, %v3219
        %v3254 = vpack.c.bf16 %v3225, %v3223
        %3255 = vmatprep.subr.bf16.mxu0 0
        %3256 = vmatpush1.bf16.msra.mxu0 %v3247
        %3257 = vmatprep.subr.bf16.mxu0 0
        %3258 = vmatpush1.bf16.msra.mxu0 %v3248
        %3259 = vmatprep.subr.bf16.mxu0 0
        %3260 = vmatpush1.bf16.msra.mxu0 %v3249
        %3261 = vmatprep.subr.bf16.mxu0 0
        %3262 = vmatpush1.bf16.msra.mxu0 %v3250
        %3263 = vmatprep.subr.bf16.mxu0 0
        %3264 = vmatpush1.bf16.msra.mxu0 %v3251
        %3265 = vmatprep.subr.bf16.mxu0 0
        %3266 = vmatpush1.bf16.msra.mxu0 %v3252
        %3267 = vmatprep.subr.bf16.mxu0 0
        %3268 = vmatpush1.bf16.msra.mxu0 %v3253
        %3269 = vmatprep.subr.bf16.mxu0 0
        %3270 = vmatpush1.bf16.msra.mxu0 %v3254
        %3271 = vmatprep.subr.bf16.mxu0 0
        %3272 = vmatpush1.bf16.msra.mxu0 0
        %3273 = vmatprep.subr.bf16.mxu0 0
        %3274 = vmatpush1.bf16.msra.mxu0 0
        %3275 = vmatprep.subr.bf16.mxu0 0
        %3276 = vmatpush1.bf16.msra.mxu0 0
        %3277 = vmatprep.subr.bf16.mxu0 0
        %3278 = vmatpush1.bf16.msra.mxu0 0
        %3279 = vmatprep.subr.bf16.mxu0 0
        %3280 = vmatpush1.bf16.msra.mxu0 0
        %3281 = vmatprep.subr.bf16.mxu0 0
        %3282 = vmatpush1.bf16.msra.mxu0 0
        %3283 = vmatprep.subr.bf16.mxu0 0
        %3284 = vmatpush1.bf16.msra.mxu0 0
        %3285 = vmatprep.subr.bf16.mxu0 0
        %3286 = vmatpush1.bf16.msra.mxu0 0
        %3287 = vmatprep.mubr.bf16.mxu0 0
        %3288 = vmatmul.mubr.bf16.gmra.mrb[0].mxu0 %v2984
        %v3289 = vpop.f32.mrb[0].mxu0
        %v3290 = vadd.f32 0.0, %v3289
        %v3291 = vpop.f32.mrb[0].mxu0
        %v3292 = vpop.f32.mrb[0].mxu0
        %v3293 = vadd.f32 0.0, %v3292
        %v3294 = vpop.f32.mrb[0].mxu0
        %3295 = vdwg.mxu0
        %v3296 = vrcp.pop %v3246
        %v3297 = vmul.f32 %v3290, %v3296
        %v3298 = vmul.f32 %v3293, %v3296
        %v3299 = vpack.c.bf16 %v3298, %v3297
        %3300 = vst [vmem:[#allocation2] sm:$0xff] %v3299
        %3301 = vxpose.xlu0.c.b16.start [1/8] %v2826, 128
        %3302 = vxpose.xlu0.c.b16.cont [2/8] 0, 128
        %3303 = vxpose.xlu0.c.b16.cont [3/8] 0, 128
        %3304 = vxpose.xlu0.c.b16.cont [4/8] 0, 128
        %3305 = vxpose.xlu0.c.b16.cont [5/8] 0, 128
        %3306 = vxpose.xlu0.c.b16.cont [6/8] 0, 128
        %3307 = vxpose.xlu0.c.b16.cont [7/8] 0, 128
        %3308 = vxpose.xlu0.c.b16.end [8/8] 0, 128
        %v3309 = vpop.trf.xlu0
        %v3310 = vpop.trf.xlu0
        %v3311 = vpop.trf.xlu0
        %v3312 = vpop.trf.xlu0
        %v3313 = vpop.trf.xlu0
        %v3314 = vpop.trf.xlu0
        %v3315 = vpop.trf.xlu0
        %v3316 = vpop.trf.xlu0
        %v3318 = vsel %vm1315, %v3309, 0
        %v3321 = vsel %vm1315, %v3310, 0
        %v3324 = vsel %vm1315, %v3311, 0
        %v3327 = vsel %vm1315, %v3312, 0
        %v3330 = vsel %vm1315, %v3313, 0
        %v3333 = vsel %vm1315, %v3314, 0
        %v3336 = vsel %vm1315, %v3315, 0
        %v3339 = vsel %vm1315, %v3316, 0
        %3341 = vmatprep.subr.bf16.mxu0 0
        %3342 = vmatpush1.bf16.msra.mxu0 %v2667
        %3343 = vmatprep.subr.bf16.mxu0 0
        %3344 = vmatpush1.bf16.msra.mxu0 0
        %3345 = vmatprep.subr.bf16.mxu0 0
        %3346 = vmatpush1.bf16.msra.mxu0 0
        %3347 = vmatprep.subr.bf16.mxu0 0
        %3348 = vmatpush1.bf16.msra.mxu0 0
        %3349 = vmatprep.subr.bf16.mxu0 0
        %3350 = vmatpush1.bf16.msra.mxu0 0
        %3351 = vmatprep.subr.bf16.mxu0 0
        %3352 = vmatpush1.bf16.msra.mxu0 0
        %3353 = vmatprep.subr.bf16.mxu0 0
        %3354 = vmatpush1.bf16.msra.mxu0 0
        %3355 = vmatprep.subr.bf16.mxu0 0
        %3356 = vmatpush1.bf16.msra.mxu0 0
        %3357 = vmatprep.subr.bf16.mxu0 0
        %3358 = vmatpush1.bf16.msra.mxu0 0
        %3359 = vmatprep.subr.bf16.mxu0 0
        %3360 = vmatpush1.bf16.msra.mxu0 0
        %3361 = vmatprep.subr.bf16.mxu0 0
        %3362 = vmatpush1.bf16.msra.mxu0 0
        %3363 = vmatprep.subr.bf16.mxu0 0
        %3364 = vmatpush1.bf16.msra.mxu0 0
        %3365 = vmatprep.subr.bf16.mxu0 0
        %3366 = vmatpush1.bf16.msra.mxu0 0
        %3367 = vmatprep.subr.bf16.mxu0 0
        %3368 = vmatpush1.bf16.msra.mxu0 0
        %3369 = vmatprep.subr.bf16.mxu0 0
        %3370 = vmatpush1.bf16.msra.mxu0 0
        %3371 = vmatprep.subr.bf16.mxu0 0
        %3372 = vmatpush1.bf16.msra.mxu0 0
        %3373 = vmatprep.mubr.bf16.mxu0 0
        %3374 = vmatmul.mubr.bf16.gmra.mrb[0].mxu0 %v3318
        %v3375 = vpop.f32.mrb[0].mxu0
        %v3376 = vadd.f32 0.0, %v3375
        %v3377 = vpop.f32.mrb[0].mxu0
        %v3378 = vpop.f32.mrb[0].mxu0
        %v3379 = vadd.f32 0.0, %v3378
        %v3380 = vpop.f32.mrb[0].mxu0
        %3381 = vmatprep.mubr.bf16.mxu0 0
        %3382 = vmatmul.mubr.bf16.gmra.mrb[0].mxu0 %v3321
        %v3383 = vpop.f32.mrb[0].mxu0
        %v3384 = vadd.f32 0.0, %v3383
        %v3385 = vpop.f32.mrb[0].mxu0
        %v3386 = vpop.f32.mrb[0].mxu0
        %v3387 = vadd.f32 0.0, %v3386
        %v3388 = vpop.f32.mrb[0].mxu0
        %3389 = vmatprep.mubr.bf16.mxu0 0
        %3390 = vmatmul.mubr.bf16.gmra.mrb[0].mxu0 %v3324
        %v3391 = vpop.f32.mrb[0].mxu0
        %v3392 = vadd.f32 0.0, %v3391
        %v3393 = vpop.f32.mrb[0].mxu0
        %v3394 = vpop.f32.mrb[0].mxu0
        %v3395 = vadd.f32 0.0, %v3394
        %v3396 = vpop.f32.mrb[0].mxu0
        %3397 = vmatprep.mubr.bf16.mxu0 0
        %3398 = vmatmul.mubr.bf16.gmra.mrb[0].mxu0 %v3327
        %v3399 = vpop.f32.mrb[0].mxu0
        %v3400 = vadd.f32 0.0, %v3399
        %v3401 = vpop.f32.mrb[0].mxu0
        %v3402 = vpop.f32.mrb[0].mxu0
        %v3403 = vadd.f32 0.0, %v3402
        %v3404 = vpop.f32.mrb[0].mxu0
        %3405 = vmatprep.mubr.bf16.mxu0 0
        %3406 = vmatmul.mubr.bf16.gmra.mrb[0].mxu0 %v3330
        %v3407 = vpop.f32.mrb[0].mxu0
        %v3408 = vadd.f32 0.0, %v3407
        %v3409 = vpop.f32.mrb[0].mxu0
        %v3410 = vpop.f32.mrb[0].mxu0
        %v3411 = vadd.f32 0.0, %v3410
        %v3412 = vpop.f32.mrb[0].mxu0
        %3413 = vmatprep.mubr.bf16.mxu0 0
        %3414 = vmatmul.mubr.bf16.gmra.mrb[0].mxu0 %v3333
        %v3415 = vpop.f32.mrb[0].mxu0
        %v3416 = vadd.f32 0.0, %v3415
        %v3417 = vpop.f32.mrb[0].mxu0
        %v3418 = vpop.f32.mrb[0].mxu0
        %v3419 = vadd.f32 0.0, %v3418
        %v3420 = vpop.f32.mrb[0].mxu0
        %3421 = vmatprep.mubr.bf16.mxu0 0
        %3422 = vmatmul.mubr.bf16.gmra.mrb[0].mxu0 %v3336
        %v3423 = vpop.f32.mrb[0].mxu0
        %v3424 = vadd.f32 0.0, %v3423
        %v3425 = vpop.f32.mrb[0].mxu0
        %v3426 = vpop.f32.mrb[0].mxu0
        %v3427 = vadd.f32 0.0, %v3426
        %v3428 = vpop.f32.mrb[0].mxu0
        %3429 = vmatprep.mubr.bf16.mxu0 0
        %3430 = vmatmul.mubr.bf16.gmra.mrb[0].mxu0 %v3339
        %v3431 = vpop.f32.mrb[0].mxu0
        %v3432 = vadd.f32 0.0, %v3431
        %v3433 = vpop.f32.mrb[0].mxu0
        %v3434 = vpop.f32.mrb[0].mxu0
        %v3435 = vadd.f32 0.0, %v3434
        %v3436 = vpop.f32.mrb[0].mxu0
        %3437 = vdwg.mxu0
        %v3438 = vmul.f32 %v3376, 0.25
        %v3439 = vmul.f32 %v3379, 0.25
        %v3440 = vmul.f32 %v3384, 0.25
        %v3441 = vmul.f32 %v3387, 0.25
        %v3442 = vmul.f32 %v3392, 0.25
        %v3443 = vmul.f32 %v3395, 0.25
        %v3444 = vmul.f32 %v3400, 0.25
        %v3445 = vmul.f32 %v3403, 0.25
        %v3446 = vmul.f32 %v3408, 0.25
        %v3447 = vmul.f32 %v3411, 0.25
        %v3448 = vmul.f32 %v3416, 0.25
        %v3449 = vmul.f32 %v3419, 0.25
        %v3450 = vmul.f32 %v3424, 0.25
        %v3451 = vmul.f32 %v3427, 0.25
        %v3452 = vmul.f32 %v3432, 0.25
        %v3453 = vmul.f32 %v3435, 0.25
        %v3454 = vadd.f32 %v3438, %v1268
        %v3455 = vadd.f32 %v3439, %v1269
        %v3456 = vadd.f32 %v3440, %v1270
        %v3457 = vadd.f32 %v3441, %v1271
        %v3458 = vadd.f32 %v3442, %v1272
        %v3459 = vadd.f32 %v3443, %v1273
        %v3460 = vadd.f32 %v3444, %v1274
        %v3461 = vadd.f32 %v3445, %v1275
        %v3462 = vadd.f32 %v3446, %v1276
        %v3463 = vadd.f32 %v3447, %v1277
        %v3464 = vadd.f32 %v3448, %v1278
        %v3465 = vadd.f32 %v3449, %v1279
        %v3466 = vadd.f32 %v3450, %v1280
        %v3467 = vadd.f32 %v3451, %v1281
        %v3468 = vadd.f32 %v3452, %v1282
        %v3469 = vadd.f32 %v3453, %v1283
        %v3470 = vmax.f32 %v3454, %v3458
        %v3471 = vmax.f32 %v3455, %v3459
        %v3472 = vmax.f32 %v3456, %v3460
        %v3473 = vmax.f32 %v3457, %v3461
        %v3474 = vmax.f32 %v3470, %v3462
        %v3475 = vmax.f32 %v3471, %v3463
        %v3476 = vmax.f32 %v3472, %v3464
        %v3477 = vmax.f32 %v3473, %v3465
        %v3478 = vmax.f32 %v3474, %v3466
        %v3479 = vmax.f32 %v3475, %v3467
        %v3480 = vmax.f32 %v3476, %v3468
        %v3481 = vmax.f32 %v3477, %v3469
        %v3482 = vmax.f32 %v3478, %v3479
        %v3483 = vmax.f32 %v3480, %v3481
        %v3484 = vmax.f32 %v3482, %v3483
        %v3485 = vrot.slane %v3484, 4
        %v3486 = vmax.f32 %v3484, %v3485
        %v3487 = vrot.slane %v3486, 2
        %v3488 = vmax.f32 %v3486, %v3487
        %v3489 = vrot.slane %v3488, 1
        %v3490 = vmax.f32 %v3488, %v3489
        %v3491 = vsub.f32 %v3454, %v3490
        %v3492 = vsub.f32 %v3455, %v3490
        %v3493 = vsub.f32 %v3456, %v3490
        %v3494 = vsub.f32 %v3457, %v3490
        %v3495 = vsub.f32 %v3458, %v3490
        %v3496 = vsub.f32 %v3459, %v3490
        %v3497 = vsub.f32 %v3460, %v3490
        %v3498 = vsub.f32 %v3461, %v3490
        %v3499 = vsub.f32 %v3462, %v3490
        %v3500 = vsub.f32 %v3463, %v3490
        %v3501 = vsub.f32 %v3464, %v3490
        %v3502 = vsub.f32 %v3465, %v3490
        %v3503 = vsub.f32 %v3466, %v3490
        %v3504 = vsub.f32 %v3467, %v3490
        %v3505 = vsub.f32 %v3468, %v3490
        %v3506 = vsub.f32 %v3469, %v3490
        %v3507 = vmul.f32 %v3491, 1.442695
        %v3508 = vpow.pop %v3507
        %v3509 = vmul.f32 %v3492, 1.442695
        %v3510 = vpow.pop %v3509
        %v3511 = vmul.f32 %v3493, 1.442695
        %v3512 = vpow.pop %v3511
        %v3513 = vmul.f32 %v3494, 1.442695
        %v3514 = vpow.pop %v3513
        %v3515 = vmul.f32 %v3495, 1.442695
        %v3516 = vpow.pop %v3515
        %v3517 = vmul.f32 %v3496, 1.442695
        %v3518 = vpow.pop %v3517
        %v3519 = vmul.f32 %v3497, 1.442695
        %v3520 = vpow.pop %v3519
        %v3521 = vmul.f32 %v3498, 1.442695
        %v3522 = vpow.pop %v3521
        %v3523 = vmul.f32 %v3499, 1.442695
        %v3524 = vpow.pop %v3523
        %v3525 = vmul.f32 %v3500, 1.442695
        %v3526 = vpow.pop %v3525
        %v3527 = vmul.f32 %v3501, 1.442695
        %v3528 = vpow.pop %v3527
        %v3529 = vmul.f32 %v3502, 1.442695
        %v3530 = vpow.pop %v3529
        %v3531 = vmul.f32 %v3503, 1.442695
        %v3532 = vpow.pop %v3531
        %v3533 = vmul.f32 %v3504, 1.442695
        %v3534 = vpow.pop %v3533
        %v3535 = vmul.f32 %v3505, 1.442695
        %v3536 = vpow.pop %v3535
        %v3537 = vmul.f32 %v3506, 1.442695
        %v3538 = vpow.pop %v3537
        %v3539 = vadd.f32 %v3508, %v3510
        %v3540 = vadd.f32 %v3539, %v3512
        %v3541 = vadd.f32 %v3540, %v3514
        %v3542 = vadd.f32 %v3541, %v3516
        %v3543 = vadd.f32 %v3542, %v3518
        %v3544 = vadd.f32 %v3543, %v3520
        %v3545 = vadd.f32 %v3544, %v3522
        %v3546 = vadd.f32 %v3545, %v3524
        %v3547 = vadd.f32 %v3546, %v3526
        %v3548 = vadd.f32 %v3547, %v3528
        %v3549 = vadd.f32 %v3548, %v3530
        %v3550 = vadd.f32 %v3549, %v3532
        %v3551 = vadd.f32 %v3550, %v3534
        %v3552 = vadd.f32 %v3551, %v3536
        %v3553 = vadd.f32 %v3552, %v3538
        %v3554 = vrot.slane %v3553, 4
        %v3555 = vadd.f32 %v3553, %v3554
        %v3556 = vrot.slane %v3555, 2
        %v3557 = vadd.f32 %v3555, %v3556
        %v3558 = vrot.slane %v3557, 1
        %v3559 = vadd.f32 %v3557, %v3558
        %v3560 = vpack.c.bf16 %v3510, %v3508
        %v3561 = vpack.c.bf16 %v3514, %v3512
        %v3562 = vpack.c.bf16 %v3518, %v3516
        %v3563 = vpack.c.bf16 %v3522, %v3520
        %v3564 = vpack.c.bf16 %v3526, %v3524
        %v3565 = vpack.c.bf16 %v3530, %v3528
        %v3566 = vpack.c.bf16 %v3534, %v3532
        %v3567 = vpack.c.bf16 %v3538, %v3536
        %3568 = vmatprep.subr.bf16.mxu0 0
        %3569 = vmatpush1.bf16.msra.mxu0 %v3560
        %3570 = vmatprep.subr.bf16.mxu0 0
        %3571 = vmatpush1.bf16.msra.mxu0 %v3561
        %3572 = vmatprep.subr.bf16.mxu0 0
        %3573 = vmatpush1.bf16.msra.mxu0 %v3562
        %3574 = vmatprep.subr.bf16.mxu0 0
        %3575 = vmatpush1.bf16.msra.mxu0 %v3563
        %3576 = vmatprep.subr.bf16.mxu0 0
        %3577 = vmatpush1.bf16.msra.mxu0 %v3564
        %3578 = vmatprep.subr.bf16.mxu0 0
        %3579 = vmatpush1.bf16.msra.mxu0 %v3565
        %3580 = vmatprep.subr.bf16.mxu0 0
        %3581 = vmatpush1.bf16.msra.mxu0 %v3566
        %3582 = vmatprep.subr.bf16.mxu0 0
        %3583 = vmatpush1.bf16.msra.mxu0 %v3567
        %3584 = vmatprep.subr.bf16.mxu0 0
        %3585 = vmatpush1.bf16.msra.mxu0 0
        %3586 = vmatprep.subr.bf16.mxu0 0
        %3587 = vmatpush1.bf16.msra.mxu0 0
        %3588 = vmatprep.subr.bf16.mxu0 0
        %3589 = vmatpush1.bf16.msra.mxu0 0
        %3590 = vmatprep.subr.bf16.mxu0 0
        %3591 = vmatpush1.bf16.msra.mxu0 0
        %3592 = vmatprep.subr.bf16.mxu0 0
        %3593 = vmatpush1.bf16.msra.mxu0 0
        %3594 = vmatprep.subr.bf16.mxu0 0
        %3595 = vmatpush1.bf16.msra.mxu0 0
        %3596 = vmatprep.subr.bf16.mxu0 0
        %3597 = vmatpush1.bf16.msra.mxu0 0
        %3598 = vmatprep.subr.bf16.mxu0 0
        %3599 = vmatpush1.bf16.msra.mxu0 0
        %3600 = vmatprep.mubr.bf16.mxu0 0
        %3601 = vmatmul.mubr.bf16.gmra.mrb[0].mxu0 %v2985
        %v3602 = vpop.f32.mrb[0].mxu0
        %v3603 = vadd.f32 0.0, %v3602
        %v3604 = vpop.f32.mrb[0].mxu0
        %v3605 = vpop.f32.mrb[0].mxu0
        %v3606 = vadd.f32 0.0, %v3605
        %v3607 = vpop.f32.mrb[0].mxu0
        %3608 = vdwg.mxu0
        %v3609 = vrcp.pop %v3559
        %v3610 = vmul.f32 %v3603, %v3609
        %v3611 = vmul.f32 %v3606, %v3609
        %v3612 = vpack.c.bf16 %v3611, %v3610
        %3613 = vst [vmem:[#allocation2 + $0x8] sm:$0xff] %v3612
        %3614 = vxpose.xlu0.c.b16.start [1/8] %v2827, 128
        %3615 = vxpose.xlu0.c.b16.cont [2/8] 0, 128
        %3616 = vxpose.xlu0.c.b16.cont [3/8] 0, 128
        %3617 = vxpose.xlu0.c.b16.cont [4/8] 0, 128
        %3618 = vxpose.xlu0.c.b16.cont [5/8] 0, 128
        %3619 = vxpose.xlu0.c.b16.cont [6/8] 0, 128
        %3620 = vxpose.xlu0.c.b16.cont [7/8] 0, 128
        %3621 = vxpose.xlu0.c.b16.end [8/8] 0, 128
        %v3622 = vpop.trf.xlu0
        %v3623 = vpop.trf.xlu0
        %v3624 = vpop.trf.xlu0
        %v3625 = vpop.trf.xlu0
        %v3626 = vpop.trf.xlu0
        %v3627 = vpop.trf.xlu0
        %v3628 = vpop.trf.xlu0
        %v3629 = vpop.trf.xlu0
        %v3631 = vsel %vm1315, %v3622, 0
        %v3634 = vsel %vm1315, %v3623, 0
        %v3637 = vsel %vm1315, %v3624, 0
        %v3640 = vsel %vm1315, %v3625, 0
        %v3643 = vsel %vm1315, %v3626, 0
        %v3646 = vsel %vm1315, %v3627, 0
        %v3649 = vsel %vm1315, %v3628, 0
        %v3652 = vsel %vm1315, %v3629, 0
        %3654 = vmatprep.subr.bf16.mxu0 0
        %3655 = vmatpush1.bf16.msra.mxu0 %v2668
        %3656 = vmatprep.subr.bf16.mxu0 0
        %3657 = vmatpush1.bf16.msra.mxu0 0
        %3658 = vmatprep.subr.bf16.mxu0 0
        %3659 = vmatpush1.bf16.msra.mxu0 0
        %3660 = vmatprep.subr.bf16.mxu0 0
        %3661 = vmatpush1.bf16.msra.mxu0 0
        %3662 = vmatprep.subr.bf16.mxu0 0
        %3663 = vmatpush1.bf16.msra.mxu0 0
        %3664 = vmatprep.subr.bf16.mxu0 0
        %3665 = vmatpush1.bf16.msra.mxu0 0
        %3666 = vmatprep.subr.bf16.mxu0 0
        %3667 = vmatpush1.bf16.msra.mxu0 0
        %3668 = vmatprep.subr.bf16.mxu0 0
        %3669 = vmatpush1.bf16.msra.mxu0 0
        %3670 = vmatprep.subr.bf16.mxu0 0
        %3671 = vmatpush1.bf16.msra.mxu0 0
        %3672 = vmatprep.subr.bf16.mxu0 0
        %3673 = vmatpush1.bf16.msra.mxu0 0
        %3674 = vmatprep.subr.bf16.mxu0 0
        %3675 = vmatpush1.bf16.msra.mxu0 0
        %3676 = vmatprep.subr.bf16.mxu0 0
        %3677 = vmatpush1.bf16.msra.mxu0 0
        %3678 = vmatprep.subr.bf16.mxu0 0
        %3679 = vmatpush1.bf16.msra.mxu0 0
        %3680 = vmatprep.subr.bf16.mxu0 0
        %3681 = vmatpush1.bf16.msra.mxu0 0
        %3682 = vmatprep.subr.bf16.mxu0 0
        %3683 = vmatpush1.bf16.msra.mxu0 0
        %3684 = vmatprep.subr.bf16.mxu0 0
        %3685 = vmatpush1.bf16.msra.mxu0 0
        %3686 = vmatprep.mubr.bf16.mxu0 0
        %3687 = vmatmul.mubr.bf16.gmra.mrb[0].mxu0 %v3631
        %v3688 = vpop.f32.mrb[0].mxu0
        %v3689 = vadd.f32 0.0, %v3688
        %v3690 = vpop.f32.mrb[0].mxu0
        %v3691 = vpop.f32.mrb[0].mxu0
        %v3692 = vadd.f32 0.0, %v3691
        %v3693 = vpop.f32.mrb[0].mxu0
        %3694 = vmatprep.mubr.bf16.mxu0 0
        %3695 = vmatmul.mubr.bf16.gmra.mrb[0].mxu0 %v3634
        %v3696 = vpop.f32.mrb[0].mxu0
        %v3697 = vadd.f32 0.0, %v3696
        %v3698 = vpop.f32.mrb[0].mxu0
        %v3699 = vpop.f32.mrb[0].mxu0
        %v3700 = vadd.f32 0.0, %v3699
        %v3701 = vpop.f32.mrb[0].mxu0
        %3702 = vmatprep.mubr.bf16.mxu0 0
        %3703 = vmatmul.mubr.bf16.gmra.mrb[0].mxu0 %v3637
        %v3704 = vpop.f32.mrb[0].mxu0
        %v3705 = vadd.f32 0.0, %v3704
        %v3706 = vpop.f32.mrb[0].mxu0
        %v3707 = vpop.f32.mrb[0].mxu0
        %v3708 = vadd.f32 0.0, %v3707
        %v3709 = vpop.f32.mrb[0].mxu0
        %3710 = vmatprep.mubr.bf16.mxu0 0
        %3711 = vmatmul.mubr.bf16.gmra.mrb[0].mxu0 %v3640
        %v3712 = vpop.f32.mrb[0].mxu0
        %v3713 = vadd.f32 0.0, %v3712
        %v3714 = vpop.f32.mrb[0].mxu0
        %v3715 = vpop.f32.mrb[0].mxu0
        %v3716 = vadd.f32 0.0, %v3715
        %v3717 = vpop.f32.mrb[0].mxu0
        %3718 = vmatprep.mubr.bf16.mxu0 0
        %3719 = vmatmul.mubr.bf16.gmra.mrb[0].mxu0 %v3643
        %v3720 = vpop.f32.mrb[0].mxu0
        %v3721 = vadd.f32 0.0, %v3720
        %v3722 = vpop.f32.mrb[0].mxu0
        %v3723 = vpop.f32.mrb[0].mxu0
        %v3724 = vadd.f32 0.0, %v3723
        %v3725 = vpop.f32.mrb[0].mxu0
        %3726 = vmatprep.mubr.bf16.mxu0 0
        %3727 = vmatmul.mubr.bf16.gmra.mrb[0].mxu0 %v3646
        %v3728 = vpop.f32.mrb[0].mxu0
        %v3729 = vadd.f32 0.0, %v3728
        %v3730 = vpop.f32.mrb[0].mxu0
        %v3731 = vpop.f32.mrb[0].mxu0
        %v3732 = vadd.f32 0.0, %v3731
        %v3733 = vpop.f32.mrb[0].mxu0
        %3734 = vmatprep.mubr.bf16.mxu0 0
        %3735 = vmatmul.mubr.bf16.gmra.mrb[0].mxu0 %v3649
        %v3736 = vpop.f32.mrb[0].mxu0
        %v3737 = vadd.f32 0.0, %v3736
        %v3738 = vpop.f32.mrb[0].mxu0
        %v3739 = vpop.f32.mrb[0].mxu0
        %v3740 = vadd.f32 0.0, %v3739
        %v3741 = vpop.f32.mrb[0].mxu0
        %3742 = vmatprep.mubr.bf16.mxu0 0
        %3743 = vmatmul.mubr.bf16.gmra.mrb[0].mxu0 %v3652
        %v3744 = vpop.f32.mrb[0].mxu0
        %v3745 = vadd.f32 0.0, %v3744
        %v3746 = vpop.f32.mrb[0].mxu0
        %v3747 = vpop.f32.mrb[0].mxu0
        %v3748 = vadd.f32 0.0, %v3747
        %v3749 = vpop.f32.mrb[0].mxu0
        %3750 = vdwg.mxu0
        %v3751 = vmul.f32 %v3689, 0.25
        %v3752 = vmul.f32 %v3692, 0.25
        %v3753 = vmul.f32 %v3697, 0.25
        %v3754 = vmul.f32 %v3700, 0.25
        %v3755 = vmul.f32 %v3705, 0.25
        %v3756 = vmul.f32 %v3708, 0.25
        %v3757 = vmul.f32 %v3713, 0.25
        %v3758 = vmul.f32 %v3716, 0.25
        %v3759 = vmul.f32 %v3721, 0.25
        %v3760 = vmul.f32 %v3724, 0.25
        %v3761 = vmul.f32 %v3729, 0.25
        %v3762 = vmul.f32 %v3732, 0.25
        %v3763 = vmul.f32 %v3737, 0.25
        %v3764 = vmul.f32 %v3740, 0.25
        %v3765 = vmul.f32 %v3745, 0.25
        %v3766 = vmul.f32 %v3748, 0.25
        %v3767 = vadd.f32 %v3751, %v1268
        %v3768 = vadd.f32 %v3752, %v1269
        %v3769 = vadd.f32 %v3753, %v1270
        %v3770 = vadd.f32 %v3754, %v1271
        %v3771 = vadd.f32 %v3755, %v1272
        %v3772 = vadd.f32 %v3756, %v1273
        %v3773 = vadd.f32 %v3757, %v1274
        %v3774 = vadd.f32 %v3758, %v1275
        %v3775 = vadd.f32 %v3759, %v1276
        %v3776 = vadd.f32 %v3760, %v1277
        %v3777 = vadd.f32 %v3761, %v1278
        %v3778 = vadd.f32 %v3762, %v1279
        %v3779 = vadd.f32 %v3763, %v1280
        %v3780 = vadd.f32 %v3764, %v1281
        %v3781 = vadd.f32 %v3765, %v1282
        %v3782 = vadd.f32 %v3766, %v1283
        %v3783 = vmax.f32 %v3767, %v3771
        %v3784 = vmax.f32 %v3768, %v3772
        %v3785 = vmax.f32 %v3769, %v3773
        %v3786 = vmax.f32 %v3770, %v3774
        %v3787 = vmax.f32 %v3783, %v3775
        %v3788 = vmax.f32 %v3784, %v3776
        %v3789 = vmax.f32 %v3785, %v3777
        %v3790 = vmax.f32 %v3786, %v3778
        %v3791 = vmax.f32 %v3787, %v3779
        %v3792 = vmax.f32 %v3788, %v3780
        %v3793 = vmax.f32 %v3789, %v3781
        %v3794 = vmax.f32 %v3790, %v3782
        %v3795 = vmax.f32 %v3791, %v3792
        %v3796 = vmax.f32 %v3793, %v3794
        %v3797 = vmax.f32 %v3795, %v3796
        %v3798 = vrot.slane %v3797, 4
        %v3799 = vmax.f32 %v3797, %v3798
        %v3800 = vrot.slane %v3799, 2
        %v3801 = vmax.f32 %v3799, %v3800
        %v3802 = vrot.slane %v3801, 1
        %v3803 = vmax.f32 %v3801, %v3802
        %v3804 = vsub.f32 %v3767, %v3803
        %v3805 = vsub.f32 %v3768, %v3803
        %v3806 = vsub.f32 %v3769, %v3803
        %v3807 = vsub.f32 %v3770, %v3803
        %v3808 = vsub.f32 %v3771, %v3803
        %v3809 = vsub.f32 %v3772, %v3803
        %v3810 = vsub.f32 %v3773, %v3803
        %v3811 = vsub.f32 %v3774, %v3803
        %v3812 = vsub.f32 %v3775, %v3803
        %v3813 = vsub.f32 %v3776, %v3803
        %v3814 = vsub.f32 %v3777, %v3803
        %v3815 = vsub.f32 %v3778, %v3803
        %v3816 = vsub.f32 %v3779, %v3803
        %v3817 = vsub.f32 %v3780, %v3803
        %v3818 = vsub.f32 %v3781, %v3803
        %v3819 = vsub.f32 %v3782, %v3803
        %v3820 = vmul.f32 %v3804, 1.442695
        %v3821 = vpow.pop %v3820
        %v3822 = vmul.f32 %v3805, 1.442695
        %v3823 = vpow.pop %v3822
        %v3824 = vmul.f32 %v3806, 1.442695
        %v3825 = vpow.pop %v3824
        %v3826 = vmul.f32 %v3807, 1.442695
        %v3827 = vpow.pop %v3826
        %v3828 = vmul.f32 %v3808, 1.442695
        %v3829 = vpow.pop %v3828
        %v3830 = vmul.f32 %v3809, 1.442695
        %v3831 = vpow.pop %v3830
        %v3832 = vmul.f32 %v3810, 1.442695
        %v3833 = vpow.pop %v3832
        %v3834 = vmul.f32 %v3811, 1.442695
        %v3835 = vpow.pop %v3834
        %v3836 = vmul.f32 %v3812, 1.442695
        %v3837 = vpow.pop %v3836
        %v3838 = vmul.f32 %v3813, 1.442695
        %v3839 = vpow.pop %v3838
        %v3840 = vmul.f32 %v3814, 1.442695
        %v3841 = vpow.pop %v3840
        %v3842 = vmul.f32 %v3815, 1.442695
        %v3843 = vpow.pop %v3842
        %v3844 = vmul.f32 %v3816, 1.442695
        %v3845 = vpow.pop %v3844
        %v3846 = vmul.f32 %v3817, 1.442695
        %v3847 = vpow.pop %v3846
        %v3848 = vmul.f32 %v3818, 1.442695
        %v3849 = vpow.pop %v3848
        %v3850 = vmul.f32 %v3819, 1.442695
        %v3851 = vpow.pop %v3850
        %v3852 = vadd.f32 %v3821, %v3823
        %v3853 = vadd.f32 %v3852, %v3825
        %v3854 = vadd.f32 %v3853, %v3827
        %v3855 = vadd.f32 %v3854, %v3829
        %v3856 = vadd.f32 %v3855, %v3831
        %v3857 = vadd.f32 %v3856, %v3833
        %v3858 = vadd.f32 %v3857, %v3835
        %v3859 = vadd.f32 %v3858, %v3837
        %v3860 = vadd.f32 %v3859, %v3839
        %v3861 = vadd.f32 %v3860, %v3841
        %v3862 = vadd.f32 %v3861, %v3843
        %v3863 = vadd.f32 %v3862, %v3845
        %v3864 = vadd.f32 %v3863, %v3847
        %v3865 = vadd.f32 %v3864, %v3849
        %v3866 = vadd.f32 %v3865, %v3851
        %v3867 = vrot.slane %v3866, 4
        %v3868 = vadd.f32 %v3866, %v3867
        %v3869 = vrot.slane %v3868, 2
        %v3870 = vadd.f32 %v3868, %v3869
        %v3871 = vrot.slane %v3870, 1
        %v3872 = vadd.f32 %v3870, %v3871
        %v3873 = vpack.c.bf16 %v3823, %v3821
        %v3874 = vpack.c.bf16 %v3827, %v3825
        %v3875 = vpack.c.bf16 %v3831, %v3829
        %v3876 = vpack.c.bf16 %v3835, %v3833
        %v3877 = vpack.c.bf16 %v3839, %v3837
        %v3878 = vpack.c.bf16 %v3843, %v3841
        %v3879 = vpack.c.bf16 %v3847, %v3845
        %v3880 = vpack.c.bf16 %v3851, %v3849
        %3881 = vmatprep.subr.bf16.mxu0 0
        %3882 = vmatpush1.bf16.msra.mxu0 %v3873
        %3883 = vmatprep.subr.bf16.mxu0 0
        %3884 = vmatpush1.bf16.msra.mxu0 %v3874
        %3885 = vmatprep.subr.bf16.mxu0 0
        %3886 = vmatpush1.bf16.msra.mxu0 %v3875
        %3887 = vmatprep.subr.bf16.mxu0 0
        %3888 = vmatpush1.bf16.msra.mxu0 %v3876
        %3889 = vmatprep.subr.bf16.mxu0 0
        %3890 = vmatpush1.bf16.msra.mxu0 %v3877
        %3891 = vmatprep.subr.bf16.mxu0 0
        %3892 = vmatpush1.bf16.msra.mxu0 %v3878
        %3893 = vmatprep.subr.bf16.mxu0 0
        %3894 = vmatpush1.bf16.msra.mxu0 %v3879
        %3895 = vmatprep.subr.bf16.mxu0 0
        %3896 = vmatpush1.bf16.msra.mxu0 %v3880
        %3897 = vmatprep.subr.bf16.mxu0 0
        %3898 = vmatpush1.bf16.msra.mxu0 0
        %3899 = vmatprep.subr.bf16.mxu0 0
        %3900 = vmatpush1.bf16.msra.mxu0 0
        %3901 = vmatprep.subr.bf16.mxu0 0
        %3902 = vmatpush1.bf16.msra.mxu0 0
        %3903 = vmatprep.subr.bf16.mxu0 0
        %3904 = vmatpush1.bf16.msra.mxu0 0
        %3905 = vmatprep.subr.bf16.mxu0 0
        %3906 = vmatpush1.bf16.msra.mxu0 0
        %3907 = vmatprep.subr.bf16.mxu0 0
        %3908 = vmatpush1.bf16.msra.mxu0 0
        %3909 = vmatprep.subr.bf16.mxu0 0
        %3910 = vmatpush1.bf16.msra.mxu0 0
        %3911 = vmatprep.subr.bf16.mxu0 0
        %3912 = vmatpush1.bf16.msra.mxu0 0
        %3913 = vmatprep.mubr.bf16.mxu0 0
        %3914 = vmatmul.mubr.bf16.gmra.mrb[0].mxu0 %v2986
        %v3915 = vpop.f32.mrb[0].mxu0
        %v3916 = vadd.f32 0.0, %v3915
        %v3917 = vpop.f32.mrb[0].mxu0
        %v3918 = vpop.f32.mrb[0].mxu0
        %v3919 = vadd.f32 0.0, %v3918
        %v3920 = vpop.f32.mrb[0].mxu0
        %3921 = vdwg.mxu0
        %v3922 = vrcp.pop %v3872
        %v3923 = vmul.f32 %v3916, %v3922
        %v3924 = vmul.f32 %v3919, %v3922
        %v3925 = vpack.c.bf16 %v3924, %v3923
        %3926 = vst [vmem:[#allocation2 + $0x10] sm:$0xff] %v3925
        %3927 = vxpose.xlu0.c.b16.start [1/8] %v2828, 128
        %3928 = vxpose.xlu0.c.b16.cont [2/8] 0, 128
        %3929 = vxpose.xlu0.c.b16.cont [3/8] 0, 128
        %3930 = vxpose.xlu0.c.b16.cont [4/8] 0, 128
        %3931 = vxpose.xlu0.c.b16.cont [5/8] 0, 128
        %3932 = vxpose.xlu0.c.b16.cont [6/8] 0, 128
        %3933 = vxpose.xlu0.c.b16.cont [7/8] 0, 128
        %3934 = vxpose.xlu0.c.b16.end [8/8] 0, 128
        %v3935 = vpop.trf.xlu0
        %v3936 = vpop.trf.xlu0
        %v3937 = vpop.trf.xlu0
        %v3938 = vpop.trf.xlu0
        %v3939 = vpop.trf.xlu0
        %v3940 = vpop.trf.xlu0
        %v3941 = vpop.trf.xlu0
        %v3942 = vpop.trf.xlu0
        %v3944 = vsel %vm1315, %v3935, 0
        %v3947 = vsel %vm1315, %v3936, 0
        %v3950 = vsel %vm1315, %v3937, 0
        %v3953 = vsel %vm1315, %v3938, 0
        %v3956 = vsel %vm1315, %v3939, 0
        %v3959 = vsel %vm1315, %v3940, 0
        %v3962 = vsel %vm1315, %v3941, 0
        %v3965 = vsel %vm1315, %v3942, 0
        %3967 = vmatprep.subr.bf16.mxu0 0
        %3968 = vmatpush1.bf16.msra.mxu0 %v2669
        %3969 = vmatprep.subr.bf16.mxu0 0
        %3970 = vmatpush1.bf16.msra.mxu0 0
        %3971 = vmatprep.subr.bf16.mxu0 0
        %3972 = vmatpush1.bf16.msra.mxu0 0
        %3973 = vmatprep.subr.bf16.mxu0 0
        %3974 = vmatpush1.bf16.msra.mxu0 0
        %3975 = vmatprep.subr.bf16.mxu0 0
        %3976 = vmatpush1.bf16.msra.mxu0 0
        %3977 = vmatprep.subr.bf16.mxu0 0
        %3978 = vmatpush1.bf16.msra.mxu0 0
        %3979 = vmatprep.subr.bf16.mxu0 0
        %3980 = vmatpush1.bf16.msra.mxu0 0
        %3981 = vmatprep.subr.bf16.mxu0 0
        %3982 = vmatpush1.bf16.msra.mxu0 0
        %3983 = vmatprep.subr.bf16.mxu0 0
        %3984 = vmatpush1.bf16.msra.mxu0 0
        %3985 = vmatprep.subr.bf16.mxu0 0
        %3986 = vmatpush1.bf16.msra.mxu0 0
        %3987 = vmatprep.subr.bf16.mxu0 0
        %3988 = vmatpush1.bf16.msra.mxu0 0
        %3989 = vmatprep.subr.bf16.mxu0 0
        %3990 = vmatpush1.bf16.msra.mxu0 0
        %3991 = vmatprep.subr.bf16.mxu0 0
        %3992 = vmatpush1.bf16.msra.mxu0 0
        %3993 = vmatprep.subr.bf16.mxu0 0
        %3994 = vmatpush1.bf16.msra.mxu0 0
        %3995 = vmatprep.subr.bf16.mxu0 0
        %3996 = vmatpush1.bf16.msra.mxu0 0
        %3997 = vmatprep.subr.bf16.mxu0 0
        %3998 = vmatpush1.bf16.msra.mxu0 0
        %3999 = vmatprep.mubr.bf16.mxu0 0
        %4000 = vmatmul.mubr.bf16.gmra.mrb[0].mxu0 %v3944
        %v4001 = vpop.f32.mrb[0].mxu0
        %v4002 = vadd.f32 0.0, %v4001
        %v4003 = vpop.f32.mrb[0].mxu0
        %v4004 = vpop.f32.mrb[0].mxu0
        %v4005 = vadd.f32 0.0, %v4004
        %v4006 = vpop.f32.mrb[0].mxu0
        %4007 = vmatprep.mubr.bf16.mxu0 0
        %4008 = vmatmul.mubr.bf16.gmra.mrb[0].mxu0 %v3947
        %v4009 = vpop.f32.mrb[0].mxu0
        %v4010 = vadd.f32 0.0, %v4009
        %v4011 = vpop.f32.mrb[0].mxu0
        %v4012 = vpop.f32.mrb[0].mxu0
        %v4013 = vadd.f32 0.0, %v4012
        %v4014 = vpop.f32.mrb[0].mxu0
        %4015 = vmatprep.mubr.bf16.mxu0 0
        %4016 = vmatmul.mubr.bf16.gmra.mrb[0].mxu0 %v3950
        %v4017 = vpop.f32.mrb[0].mxu0
        %v4018 = vadd.f32 0.0, %v4017
        %v4019 = vpop.f32.mrb[0].mxu0
        %v4020 = vpop.f32.mrb[0].mxu0
        %v4021 = vadd.f32 0.0, %v4020
        %v4022 = vpop.f32.mrb[0].mxu0
        %4023 = vmatprep.mubr.bf16.mxu0 0
        %4024 = vmatmul.mubr.bf16.gmra.mrb[0].mxu0 %v3953
        %v4025 = vpop.f32.mrb[0].mxu0
        %v4026 = vadd.f32 0.0, %v4025
        %v4027 = vpop.f32.mrb[0].mxu0
        %v4028 = vpop.f32.mrb[0].mxu0
        %v4029 = vadd.f32 0.0, %v4028
        %v4030 = vpop.f32.mrb[0].mxu0
        %4031 = vmatprep.mubr.bf16.mxu0 0
        %4032 = vmatmul.mubr.bf16.gmra.mrb[0].mxu0 %v3956
        %v4033 = vpop.f32.mrb[0].mxu0
        %v4034 = vadd.f32 0.0, %v4033
        %v4035 = vpop.f32.mrb[0].mxu0
        %v4036 = vpop.f32.mrb[0].mxu0
        %v4037 = vadd.f32 0.0, %v4036
        %v4038 = vpop.f32.mrb[0].mxu0
        %4039 = vmatprep.mubr.bf16.mxu0 0
        %4040 = vmatmul.mubr.bf16.gmra.mrb[0].mxu0 %v3959
        %v4041 = vpop.f32.mrb[0].mxu0
        %v4042 = vadd.f32 0.0, %v4041
        %v4043 = vpop.f32.mrb[0].mxu0
        %v4044 = vpop.f32.mrb[0].mxu0
        %v4045 = vadd.f32 0.0, %v4044
        %v4046 = vpop.f32.mrb[0].mxu0
        %4047 = vmatprep.mubr.bf16.mxu0 0
        %4048 = vmatmul.mubr.bf16.gmra.mrb[0].mxu0 %v3962
        %v4049 = vpop.f32.mrb[0].mxu0
        %v4050 = vadd.f32 0.0, %v4049
        %v4051 = vpop.f32.mrb[0].mxu0
        %v4052 = vpop.f32.mrb[0].mxu0
        %v4053 = vadd.f32 0.0, %v4052
        %v4054 = vpop.f32.mrb[0].mxu0
        %4055 = vmatprep.mubr.bf16.mxu0 0
        %4056 = vmatmul.mubr.bf16.gmra.mrb[0].mxu0 %v3965
        %v4057 = vpop.f32.mrb[0].mxu0
        %v4058 = vadd.f32 0.0, %v4057
        %v4059 = vpop.f32.mrb[0].mxu0
        %v4060 = vpop.f32.mrb[0].mxu0
        %v4061 = vadd.f32 0.0, %v4060
        %v4062 = vpop.f32.mrb[0].mxu0
        %4063 = vdwg.mxu0
        %v4064 = vmul.f32 %v4002, 0.25
        %v4065 = vmul.f32 %v4005, 0.25
        %v4066 = vmul.f32 %v4010, 0.25
        %v4067 = vmul.f32 %v4013, 0.25
        %v4068 = vmul.f32 %v4018, 0.25
        %v4069 = vmul.f32 %v4021, 0.25
        %v4070 = vmul.f32 %v4026, 0.25
        %v4071 = vmul.f32 %v4029, 0.25
        %v4072 = vmul.f32 %v4034, 0.25
        %v4073 = vmul.f32 %v4037, 0.25
        %v4074 = vmul.f32 %v4042, 0.25
        %v4075 = vmul.f32 %v4045, 0.25
        %v4076 = vmul.f32 %v4050, 0.25
        %v4077 = vmul.f32 %v4053, 0.25
        %v4078 = vmul.f32 %v4058, 0.25
        %v4079 = vmul.f32 %v4061, 0.25
        %v4080 = vadd.f32 %v4064, %v1268
        %v4081 = vadd.f32 %v4065, %v1269
        %v4082 = vadd.f32 %v4066, %v1270
        %v4083 = vadd.f32 %v4067, %v1271
        %v4084 = vadd.f32 %v4068, %v1272
        %v4085 = vadd.f32 %v4069, %v1273
        %v4086 = vadd.f32 %v4070, %v1274
        %v4087 = vadd.f32 %v4071, %v1275
        %v4088 = vadd.f32 %v4072, %v1276
        %v4089 = vadd.f32 %v4073, %v1277
        %v4090 = vadd.f32 %v4074, %v1278
        %v4091 = vadd.f32 %v4075, %v1279
        %v4092 = vadd.f32 %v4076, %v1280
        %v4093 = vadd.f32 %v4077, %v1281
        %v4094 = vadd.f32 %v4078, %v1282
        %v4095 = vadd.f32 %v4079, %v1283
        %v4096 = vmax.f32 %v4080, %v4084
        %v4097 = vmax.f32 %v4081, %v4085
        %v4098 = vmax.f32 %v4082, %v4086
        %v4099 = vmax.f32 %v4083, %v4087
        %v4100 = vmax.f32 %v4096, %v4088
        %v4101 = vmax.f32 %v4097, %v4089
        %v4102 = vmax.f32 %v4098, %v4090
        %v4103 = vmax.f32 %v4099, %v4091
        %v4104 = vmax.f32 %v4100, %v4092
        %v4105 = vmax.f32 %v4101, %v4093
        %v4106 = vmax.f32 %v4102, %v4094
        %v4107 = vmax.f32 %v4103, %v4095
        %v4108 = vmax.f32 %v4104, %v4105
        %v4109 = vmax.f32 %v4106, %v4107
        %v4110 = vmax.f32 %v4108, %v4109
        %v4111 = vrot.slane %v4110, 4
        %v4112 = vmax.f32 %v4110, %v4111
        %v4113 = vrot.slane %v4112, 2
        %v4114 = vmax.f32 %v4112, %v4113
        %v4115 = vrot.slane %v4114, 1
        %v4116 = vmax.f32 %v4114, %v4115
        %v4117 = vsub.f32 %v4080, %v4116
        %v4118 = vsub.f32 %v4081, %v4116
        %v4119 = vsub.f32 %v4082, %v4116
        %v4120 = vsub.f32 %v4083, %v4116
        %v4121 = vsub.f32 %v4084, %v4116
        %v4122 = vsub.f32 %v4085, %v4116
        %v4123 = vsub.f32 %v4086, %v4116
        %v4124 = vsub.f32 %v4087, %v4116
        %v4125 = vsub.f32 %v4088, %v4116
        %v4126 = vsub.f32 %v4089, %v4116
        %v4127 = vsub.f32 %v4090, %v4116
        %v4128 = vsub.f32 %v4091, %v4116
        %v4129 = vsub.f32 %v4092, %v4116
        %v4130 = vsub.f32 %v4093, %v4116
        %v4131 = vsub.f32 %v4094, %v4116
        %v4132 = vsub.f32 %v4095, %v4116
        %v4133 = vmul.f32 %v4117, 1.442695
        %v4134 = vpow.pop %v4133
        %v4135 = vmul.f32 %v4118, 1.442695
        %v4136 = vpow.pop %v4135
        %v4137 = vmul.f32 %v4119, 1.442695
        %v4138 = vpow.pop %v4137
        %v4139 = vmul.f32 %v4120, 1.442695
        %v4140 = vpow.pop %v4139
        %v4141 = vmul.f32 %v4121, 1.442695
        %v4142 = vpow.pop %v4141
        %v4143 = vmul.f32 %v4122, 1.442695
        %v4144 = vpow.pop %v4143
        %v4145 = vmul.f32 %v4123, 1.442695
        %v4146 = vpow.pop %v4145
        %v4147 = vmul.f32 %v4124, 1.442695
        %v4148 = vpow.pop %v4147
        %v4149 = vmul.f32 %v4125, 1.442695
        %v4150 = vpow.pop %v4149
        %v4151 = vmul.f32 %v4126, 1.442695
        %v4152 = vpow.pop %v4151
        %v4153 = vmul.f32 %v4127, 1.442695
        %v4154 = vpow.pop %v4153
        %v4155 = vmul.f32 %v4128, 1.442695
        %v4156 = vpow.pop %v4155
        %v4157 = vmul.f32 %v4129, 1.442695
        %v4158 = vpow.pop %v4157
        %v4159 = vmul.f32 %v4130, 1.442695
        %v4160 = vpow.pop %v4159
        %v4161 = vmul.f32 %v4131, 1.442695
        %v4162 = vpow.pop %v4161
        %v4163 = vmul.f32 %v4132, 1.442695
        %v4164 = vpow.pop %v4163
        %v4165 = vadd.f32 %v4134, %v4136
        %v4166 = vadd.f32 %v4165, %v4138
        %v4167 = vadd.f32 %v4166, %v4140
        %v4168 = vadd.f32 %v4167, %v4142
        %v4169 = vadd.f32 %v4168, %v4144
        %v4170 = vadd.f32 %v4169, %v4146
        %v4171 = vadd.f32 %v4170, %v4148
        %v4172 = vadd.f32 %v4171, %v4150
        %v4173 = vadd.f32 %v4172, %v4152
        %v4174 = vadd.f32 %v4173, %v4154
        %v4175 = vadd.f32 %v4174, %v4156
        %v4176 = vadd.f32 %v4175, %v4158
        %v4177 = vadd.f32 %v4176, %v4160
        %v4178 = vadd.f32 %v4177, %v4162
        %v4179 = vadd.f32 %v4178, %v4164
        %v4180 = vrot.slane %v4179, 4
        %v4181 = vadd.f32 %v4179, %v4180
        %v4182 = vrot.slane %v4181, 2
        %v4183 = vadd.f32 %v4181, %v4182
        %v4184 = vrot.slane %v4183, 1
        %v4185 = vadd.f32 %v4183, %v4184
        %v4186 = vpack.c.bf16 %v4136, %v4134
        %v4187 = vpack.c.bf16 %v4140, %v4138
        %v4188 = vpack.c.bf16 %v4144, %v4142
        %v4189 = vpack.c.bf16 %v4148, %v4146
        %v4190 = vpack.c.bf16 %v4152, %v4150
        %v4191 = vpack.c.bf16 %v4156, %v4154
        %v4192 = vpack.c.bf16 %v4160, %v4158
        %v4193 = vpack.c.bf16 %v4164, %v4162
        %4194 = vmatprep.subr.bf16.mxu0 0
        %4195 = vmatpush1.bf16.msra.mxu0 %v4186
        %4196 = vmatprep.subr.bf16.mxu0 0
        %4197 = vmatpush1.bf16.msra.mxu0 %v4187
        %4198 = vmatprep.subr.bf16.mxu0 0
        %4199 = vmatpush1.bf16.msra.mxu0 %v4188
        %4200 = vmatprep.subr.bf16.mxu0 0
        %4201 = vmatpush1.bf16.msra.mxu0 %v4189
        %4202 = vmatprep.subr.bf16.mxu0 0
        %4203 = vmatpush1.bf16.msra.mxu0 %v4190
        %4204 = vmatprep.subr.bf16.mxu0 0
        %4205 = vmatpush1.bf16.msra.mxu0 %v4191
        %4206 = vmatprep.subr.bf16.mxu0 0
        %4207 = vmatpush1.bf16.msra.mxu0 %v4192
        %4208 = vmatprep.subr.bf16.mxu0 0
        %4209 = vmatpush1.bf16.msra.mxu0 %v4193
        %4210 = vmatprep.subr.bf16.mxu0 0
        %4211 = vmatpush1.bf16.msra.mxu0 0
        %4212 = vmatprep.subr.bf16.mxu0 0
        %4213 = vmatpush1.bf16.msra.mxu0 0
        %4214 = vmatprep.subr.bf16.mxu0 0
        %4215 = vmatpush1.bf16.msra.mxu0 0
        %4216 = vmatprep.subr.bf16.mxu0 0
        %4217 = vmatpush1.bf16.msra.mxu0 0
        %4218 = vmatprep.subr.bf16.mxu0 0
        %4219 = vmatpush1.bf16.msra.mxu0 0
        %4220 = vmatprep.subr.bf16.mxu0 0
        %4221 = vmatpush1.bf16.msra.mxu0 0
        %4222 = vmatprep.subr.bf16.mxu0 0
        %4223 = vmatpush1.bf16.msra.mxu0 0
        %4224 = vmatprep.subr.bf16.mxu0 0
        %4225 = vmatpush1.bf16.msra.mxu0 0
        %4226 = vmatprep.mubr.bf16.mxu0 0
        %4227 = vmatmul.mubr.bf16.gmra.mrb[0].mxu0 %v2987
        %v4228 = vpop.f32.mrb[0].mxu0
        %v4229 = vadd.f32 0.0, %v4228
        %v4230 = vpop.f32.mrb[0].mxu0
        %v4231 = vpop.f32.mrb[0].mxu0
        %v4232 = vadd.f32 0.0, %v4231
        %v4233 = vpop.f32.mrb[0].mxu0
        %4234 = vdwg.mxu0
        %v4235 = vrcp.pop %v4185
        %v4236 = vmul.f32 %v4229, %v4235
        %v4237 = vmul.f32 %v4232, %v4235
        %v4238 = vpack.c.bf16 %v4237, %v4236
        %4239 = vst [vmem:[#allocation2 + $0x18] sm:$0xff] %v4238
        %v4240 = vld [vmem:[#allocation2] sm:$0xff]
        %v4241 = vld [vmem:[#allocation2 + $0x8] sm:$0xff]
        %v4242 = vld [vmem:[#allocation2 + $0x10] sm:$0xff]
        %v4243 = vld [vmem:[#allocation2 + $0x18] sm:$0xff]
        %s4244 = scalar_lea.vmem [#allocation21], 32
        %v4245 = vld [vmem:[%s4244] sm:$0xf]
        %v4246 = vld [vmem:[%s4244 + $0x4] sm:$0xf]
        %v4247 = vld [vmem:[%s4244 + $0x8] sm:$0xf]
        %v4248 = vld [vmem:[%s4244 + $0xc] sm:$0xf]
        %v4249 = vld [vmem:[%s4244 + $0x10] sm:$0xf]
        %v4250 = vld [vmem:[%s4244 + $0x14] sm:$0xf]
        %v4251 = vld [vmem:[%s4244 + $0x18] sm:$0xf]
        %v4252 = vld [vmem:[%s4244 + $0x1c] sm:$0xf]
        %s4253 = scalar_lea.vmem [#allocation22], 1
        %v4254 = vld [vmem:[%s4253] sm:$0x1]
        %v4256 = vlaneseq
        %v4257 = vshrl.u32 %v4256, 7
        %v4258 = vsub.s32 0, %v4257
        %v4259 = vrot.slane %v4254, %v4258
        %4261 = vxpose.xlu0.c.b16.start [1/8] %v4240, 128
        %4262 = vxpose.xlu0.c.b16.cont [2/8] %v4241, 128
        %4263 = vxpose.xlu0.c.b16.cont [3/8] %v4242, 128
        %4264 = vxpose.xlu0.c.b16.cont [4/8] %v4243, 128
        %4265 = vxpose.xlu0.c.b16.cont [5/8] 0, 128
        %4266 = vxpose.xlu0.c.b16.cont [6/8] 0, 128
        %4267 = vxpose.xlu0.c.b16.cont [7/8] 0, 128
        %4268 = vxpose.xlu0.c.b16.end [8/8] 0, 128
        %v4269 = vpop.trf.xlu0
        %v4270 = vpop.trf.xlu0
        %v4271 = vpop.trf.xlu0
        %v4272 = vpop.trf.xlu0
        %v4273 = vpop.trf.xlu0
        %v4274 = vpop.trf.xlu0
        %v4275 = vpop.trf.xlu0
        %v4276 = vpop.trf.xlu0
        %v4285 = vunpack.c.l.b16 %v4245
        %v4286 = vunpack.c.l.b16 %v4246
        %v4287 = vunpack.c.l.b16 %v4247
        %v4288 = vunpack.c.l.b16 %v4248
        %v4289 = vunpack.c.l.b16 %v4249
        %v4290 = vunpack.c.l.b16 %v4250
        %v4291 = vunpack.c.l.b16 %v4251
        %v4292 = vunpack.c.l.b16 %v4252
        %v4293 = vpack.c.b16 %v4286, %v4285
        %v4294 = vpack.c.b16 %v4288, %v4287
        %v4295 = vpack.c.b16 %v4290, %v4289
        %v4296 = vpack.c.b16 %v4292, %v4291
        %v4298 = vsel %vm1417, %v4269, 0
        %v4301 = vsel %vm1417, %v4270, 0
        %v4304 = vsel %vm1417, %v4271, 0
        %v4307 = vsel %vm1417, %v4272, 0
        %v4310 = vsel %vm1417, %v4273, 0
        %v4313 = vsel %vm1417, %v4274, 0
        %v4316 = vsel %vm1417, %v4275, 0
        %v4319 = vsel %vm1417, %v4276, 0
        %v4322 = vsel %vm1417, %v4293, 0
        %v4325 = vsel %vm1417, %v4294, 0
        %v4328 = vsel %vm1417, %v4295, 0
        %v4331 = vsel %vm1417, %v4296, 0
        %4333 = vmatprep.subr.bf16.mxu0 0
        %4334 = vmatpush1.bf16.xpose.msra.mxu0 %v4322
        %4335 = vmatprep.subr.bf16.mxu0 0
        %4336 = vmatpush1.bf16.xpose.msra.mxu0 %v4325
        %4337 = vmatprep.subr.bf16.mxu0 0
        %4338 = vmatpush1.bf16.xpose.msra.mxu0 %v4328
        %4339 = vmatprep.subr.bf16.mxu0 0
        %4340 = vmatpush1.bf16.xpose.msra.mxu0 %v4331
        %4341 = vmatprep.subr.bf16.mxu0 0
        %4342 = vmatpush1.bf16.xpose.msra.mxu0 0
        %4343 = vmatprep.subr.bf16.mxu0 0
        %4344 = vmatpush1.bf16.xpose.msra.mxu0 0
        %4345 = vmatprep.subr.bf16.mxu0 0
        %4346 = vmatpush1.bf16.xpose.msra.mxu0 0
        %4347 = vmatprep.subr.bf16.mxu0 0
        %4348 = vmatpush1.bf16.xpose.msra.mxu0 0
        %4349 = vmatprep.subr.bf16.mxu0 0
        %4350 = vmatpush1.bf16.xpose.msra.mxu0 0
        %4351 = vmatprep.subr.bf16.mxu0 0
        %4352 = vmatpush1.bf16.xpose.msra.mxu0 0
        %4353 = vmatprep.subr.bf16.mxu0 0
        %4354 = vmatpush1.bf16.xpose.msra.mxu0 0
        %4355 = vmatprep.subr.bf16.mxu0 0
        %4356 = vmatpush1.bf16.xpose.msra.mxu0 0
        %4357 = vmatprep.subr.bf16.mxu0 0
        %4358 = vmatpush1.bf16.xpose.msra.mxu0 0
        %4359 = vmatprep.subr.bf16.mxu0 0
        %4360 = vmatpush1.bf16.xpose.msra.mxu0 0
        %4361 = vmatprep.subr.bf16.mxu0 0
        %4362 = vmatpush1.bf16.xpose.msra.mxu0 0
        %4363 = vmatprep.subr.bf16.mxu0 0
        %4364 = vmatpush1.bf16.xpose.msra.mxu0 0
        %4365 = vmatprep.mubr.bf16.mxu0 0
        %4366 = vmatmul.mubr.bf16.gmra.mrb[0].mxu0 %v4298
        %v4367 = vpop.f32.mrb[0].mxu0
        %v4368 = vadd.f32 %v4259, %v4367
        %v4369 = vpop.f32.mrb[0].mxu0
        %v4370 = vpop.f32.mrb[0].mxu0
        %v4371 = vadd.f32 %v4259, %v4370
        %v4372 = vpop.f32.mrb[0].mxu0
        %4373 = vmatprep.mubr.bf16.mxu0 0
        %4374 = vmatmul.mubr.bf16.gmra.mrb[0].mxu0 %v4301
        %v4375 = vpop.f32.mrb[0].mxu0
        %v4376 = vadd.f32 %v4259, %v4375
        %v4377 = vpop.f32.mrb[0].mxu0
        %v4378 = vpop.f32.mrb[0].mxu0
        %v4379 = vadd.f32 %v4259, %v4378
        %v4380 = vpop.f32.mrb[0].mxu0
        %4381 = vmatprep.mubr.bf16.mxu0 0
        %4382 = vmatmul.mubr.bf16.gmra.mrb[0].mxu0 %v4304
        %v4383 = vpop.f32.mrb[0].mxu0
        %v4384 = vadd.f32 %v4259, %v4383
        %v4385 = vpop.f32.mrb[0].mxu0
        %v4386 = vpop.f32.mrb[0].mxu0
        %v4387 = vadd.f32 %v4259, %v4386
        %v4388 = vpop.f32.mrb[0].mxu0
        %4389 = vmatprep.mubr.bf16.mxu0 0
        %4390 = vmatmul.mubr.bf16.gmra.mrb[0].mxu0 %v4307
        %v4391 = vpop.f32.mrb[0].mxu0
        %v4392 = vadd.f32 %v4259, %v4391
        %v4393 = vpop.f32.mrb[0].mxu0
        %v4394 = vpop.f32.mrb[0].mxu0
        %v4395 = vadd.f32 %v4259, %v4394
        %v4396 = vpop.f32.mrb[0].mxu0
        %4397 = vmatprep.mubr.bf16.mxu0 0
        %4398 = vmatmul.mubr.bf16.gmra.mrb[0].mxu0 %v4310
        %v4399 = vpop.f32.mrb[0].mxu0
        %v4400 = vadd.f32 %v4259, %v4399
        %v4401 = vpop.f32.mrb[0].mxu0
        %v4402 = vpop.f32.mrb[0].mxu0
        %v4403 = vadd.f32 %v4259, %v4402
        %v4404 = vpop.f32.mrb[0].mxu0
        %4405 = vmatprep.mubr.bf16.mxu0 0
        %4406 = vmatmul.mubr.bf16.gmra.mrb[0].mxu0 %v4313
        %v4407 = vpop.f32.mrb[0].mxu0
        %v4408 = vadd.f32 %v4259, %v4407
        %v4409 = vpop.f32.mrb[0].mxu0
        %v4410 = vpop.f32.mrb[0].mxu0
        %v4411 = vadd.f32 %v4259, %v4410
        %v4412 = vpop.f32.mrb[0].mxu0
        %4413 = vmatprep.mubr.bf16.mxu0 0
        %4414 = vmatmul.mubr.bf16.gmra.mrb[0].mxu0 %v4316
        %v4415 = vpop.f32.mrb[0].mxu0
        %v4416 = vadd.f32 %v4259, %v4415
        %v4417 = vpop.f32.mrb[0].mxu0
        %v4418 = vpop.f32.mrb[0].mxu0
        %v4419 = vadd.f32 %v4259, %v4418
        %v4420 = vpop.f32.mrb[0].mxu0
        %4421 = vmatprep.mubr.bf16.mxu0 0
        %4422 = vmatmul.mubr.bf16.gmra.mrb[0].mxu0 %v4319
        %v4423 = vpop.f32.mrb[0].mxu0
        %v4424 = vadd.f32 %v4259, %v4423
        %v4425 = vpop.f32.mrb[0].mxu0
        %v4426 = vpop.f32.mrb[0].mxu0
        %v4427 = vadd.f32 %v4259, %v4426
        %v4428 = vpop.f32.mrb[0].mxu0
        %4429 = vdwg.mxu0
        %v4430 = vadd.f32 %v2463, %v4368
        %v4431 = vadd.f32 %v2464, %v4371
        %v4432 = vadd.f32 %v2465, %v4376
        %v4433 = vadd.f32 %v2466, %v4379
        %v4434 = vadd.f32 %v2467, %v4384
        %v4435 = vadd.f32 %v2468, %v4387
        %v4436 = vadd.f32 %v2469, %v4392
        %v4437 = vadd.f32 %v2470, %v4395
        %v4438 = vadd.f32 %v2471, %v4400
        %v4439 = vadd.f32 %v2472, %v4403
        %v4440 = vadd.f32 %v2473, %v4408
        %v4441 = vadd.f32 %v2474, %v4411
        %v4442 = vadd.f32 %v2475, %v4416
        %v4443 = vadd.f32 %v2476, %v4419
        %v4444 = vadd.f32 %v2477, %v4424
        %v4445 = vadd.f32 %v2478, %v4427
        %s4446 = scalar_lea.vmem [#allocation30], 1
        %v4447 = vld [vmem:[%s4446] sm:$0x1]
        %s4448 = scalar_lea.vmem [#allocation31], 1
        %v4449 = vld [vmem:[%s4448] sm:$0x1]
        %v4450 = vsel %vm1417, %v4430, 0.0
        %4451 = vadd.xlane.f32.xlu0 %v4450
        %v4452 = vpop.xlane.xlu0 %4451
        %v4453 = vsel %vm1417, %v4431, 0.0
        %4454 = vadd.xlane.f32.xlu0 %v4453
        %v4455 = vpop.xlane.xlu0 %4454
        %v4456 = vsel %vm1417, %v4432, 0.0
        %4457 = vadd.xlane.f32.xlu0 %v4456
        %v4458 = vpop.xlane.xlu0 %4457
        %v4459 = vsel %vm1417, %v4433, 0.0
        %4460 = vadd.xlane.f32.xlu0 %v4459
        %v4461 = vpop.xlane.xlu0 %4460
        %v4462 = vsel %vm1417, %v4434, 0.0
        %4463 = vadd.xlane.f32.xlu0 %v4462
        %v4464 = vpop.xlane.xlu0 %4463
        %v4465 = vsel %vm1417, %v4435, 0.0
        %4466 = vadd.xlane.f32.xlu0 %v4465
        %v4467 = vpop.xlane.xlu0 %4466
        %v4468 = vsel %vm1417, %v4436, 0.0
        %4469 = vadd.xlane.f32.xlu0 %v4468
        %v4470 = vpop.xlane.xlu0 %4469
        %v4471 = vsel %vm1417, %v4437, 0.0
        %4472 = vadd.xlane.f32.xlu0 %v4471
        %v4473 = vpop.xlane.xlu0 %4472
        %v4474 = vsel %vm1417, %v4438, 0.0
        %4475 = vadd.xlane.f32.xlu0 %v4474
        %v4476 = vpop.xlane.xlu0 %4475
        %v4477 = vsel %vm1417, %v4439, 0.0
        %4478 = vadd.xlane.f32.xlu0 %v4477
        %v4479 = vpop.xlane.xlu0 %4478
        %v4480 = vsel %vm1417, %v4440, 0.0
        %4481 = vadd.xlane.f32.xlu0 %v4480
        %v4482 = vpop.xlane.xlu0 %4481
        %v4483 = vsel %vm1417, %v4441, 0.0
        %4484 = vadd.xlane.f32.xlu0 %v4483
        %v4485 = vpop.xlane.xlu0 %4484
        %v4486 = vsel %vm1417, %v4442, 0.0
        %4487 = vadd.xlane.f32.xlu0 %v4486
        %v4488 = vpop.xlane.xlu0 %4487
        %v4489 = vsel %vm1417, %v4443, 0.0
        %4490 = vadd.xlane.f32.xlu0 %v4489
        %v4491 = vpop.xlane.xlu0 %4490
        %v4492 = vsel %vm1417, %v4444, 0.0
        %4493 = vadd.xlane.f32.xlu0 %v4492
        %v4494 = vpop.xlane.xlu0 %4493
        %v4495 = vsel %vm1417, %v4445, 0.0
        %4496 = vadd.xlane.f32.xlu0 %v4495
        %v4497 = vpop.xlane.xlu0 %4496
        %v4498 = vmul.f32 %v4452, %v1628
        %v4499 = vmul.f32 %v4455, %v1628
        %v4500 = vmul.f32 %v4458, %v1628
        %v4501 = vmul.f32 %v4461, %v1628
        %v4502 = vmul.f32 %v4464, %v1628
        %v4503 = vmul.f32 %v4467, %v1628
        %v4504 = vmul.f32 %v4470, %v1628
        %v4505 = vmul.f32 %v4473, %v1628
        %v4506 = vmul.f32 %v4476, %v1628
        %v4507 = vmul.f32 %v4479, %v1628
        %v4508 = vmul.f32 %v4482, %v1628
        %v4509 = vmul.f32 %v4485, %v1628
        %v4510 = vmul.f32 %v4488, %v1628
        %v4511 = vmul.f32 %v4491, %v1628
        %v4512 = vmul.f32 %v4494, %v1628
        %v4513 = vmul.f32 %v4497, %v1628
        %v4514 = vsub.f32 %v4430, %v4498
        %v4515 = vsub.f32 %v4431, %v4499
        %v4516 = vsub.f32 %v4432, %v4500
        %v4517 = vsub.f32 %v4433, %v4501
        %v4518 = vsub.f32 %v4434, %v4502
        %v4519 = vsub.f32 %v4435, %v4503
        %v4520 = vsub.f32 %v4436, %v4504
        %v4521 = vsub.f32 %v4437, %v4505
        %v4522 = vsub.f32 %v4438, %v4506
        %v4523 = vsub.f32 %v4439, %v4507
        %v4524 = vsub.f32 %v4440, %v4508
        %v4525 = vsub.f32 %v4441, %v4509
        %v4526 = vsub.f32 %v4442, %v4510
        %v4527 = vsub.f32 %v4443, %v4511
        %v4528 = vsub.f32 %v4444, %v4512
        %v4529 = vsub.f32 %v4445, %v4513
        %v4530 = vmul.f32 %v4514, %v4514
        %v4531 = vmul.f32 %v4515, %v4515
        %v4532 = vmul.f32 %v4516, %v4516
        %v4533 = vmul.f32 %v4517, %v4517
        %v4534 = vmul.f32 %v4518, %v4518
        %v4535 = vmul.f32 %v4519, %v4519
        %v4536 = vmul.f32 %v4520, %v4520
        %v4537 = vmul.f32 %v4521, %v4521
        %v4538 = vmul.f32 %v4522, %v4522
        %v4539 = vmul.f32 %v4523, %v4523
        %v4540 = vmul.f32 %v4524, %v4524
        %v4541 = vmul.f32 %v4525, %v4525
        %v4542 = vmul.f32 %v4526, %v4526
        %v4543 = vmul.f32 %v4527, %v4527
        %v4544 = vmul.f32 %v4528, %v4528
        %v4545 = vmul.f32 %v4529, %v4529
        %v4546 = vsel %vm1417, %v4530, 0.0
        %4547 = vadd.xlane.f32.xlu0 %v4546
        %v4548 = vpop.xlane.xlu0 %4547
        %v4549 = vsel %vm1417, %v4531, 0.0
        %4550 = vadd.xlane.f32.xlu0 %v4549
        %v4551 = vpop.xlane.xlu0 %4550
        %v4552 = vsel %vm1417, %v4532, 0.0
        %4553 = vadd.xlane.f32.xlu0 %v4552
        %v4554 = vpop.xlane.xlu0 %4553
        %v4555 = vsel %vm1417, %v4533, 0.0
        %4556 = vadd.xlane.f32.xlu0 %v4555
        %v4557 = vpop.xlane.xlu0 %4556
        %v4558 = vsel %vm1417, %v4534, 0.0
        %4559 = vadd.xlane.f32.xlu0 %v4558
        %v4560 = vpop.xlane.xlu0 %4559
        %v4561 = vsel %vm1417, %v4535, 0.0
        %4562 = vadd.xlane.f32.xlu0 %v4561
        %v4563 = vpop.xlane.xlu0 %4562
        %v4564 = vsel %vm1417, %v4536, 0.0
        %4565 = vadd.xlane.f32.xlu0 %v4564
        %v4566 = vpop.xlane.xlu0 %4565
        %v4567 = vsel %vm1417, %v4537, 0.0
        %4568 = vadd.xlane.f32.xlu0 %v4567
        %v4569 = vpop.xlane.xlu0 %4568
        %v4570 = vsel %vm1417, %v4538, 0.0
        %4571 = vadd.xlane.f32.xlu0 %v4570
        %v4572 = vpop.xlane.xlu0 %4571
        %v4573 = vsel %vm1417, %v4539, 0.0
        %4574 = vadd.xlane.f32.xlu0 %v4573
        %v4575 = vpop.xlane.xlu0 %4574
        %v4576 = vsel %vm1417, %v4540, 0.0
        %4577 = vadd.xlane.f32.xlu0 %v4576
        %v4578 = vpop.xlane.xlu0 %4577
        %v4579 = vsel %vm1417, %v4541, 0.0
        %4580 = vadd.xlane.f32.xlu0 %v4579
        %v4581 = vpop.xlane.xlu0 %4580
        %v4582 = vsel %vm1417, %v4542, 0.0
        %4583 = vadd.xlane.f32.xlu0 %v4582
        %v4584 = vpop.xlane.xlu0 %4583
        %v4585 = vsel %vm1417, %v4543, 0.0
        %4586 = vadd.xlane.f32.xlu0 %v4585
        %v4587 = vpop.xlane.xlu0 %4586
        %v4588 = vsel %vm1417, %v4544, 0.0
        %4589 = vadd.xlane.f32.xlu0 %v4588
        %v4590 = vpop.xlane.xlu0 %4589
        %v4591 = vsel %vm1417, %v4545, 0.0
        %4592 = vadd.xlane.f32.xlu0 %v4591
        %v4593 = vpop.xlane.xlu0 %4592
        %v4594 = vmul.f32 %v4548, %v1628
        %v4595 = vmul.f32 %v4551, %v1628
        %v4596 = vmul.f32 %v4554, %v1628
        %v4597 = vmul.f32 %v4557, %v1628
        %v4598 = vmul.f32 %v4560, %v1628
        %v4599 = vmul.f32 %v4563, %v1628
        %v4600 = vmul.f32 %v4566, %v1628
        %v4601 = vmul.f32 %v4569, %v1628
        %v4602 = vmul.f32 %v4572, %v1628
        %v4603 = vmul.f32 %v4575, %v1628
        %v4604 = vmul.f32 %v4578, %v1628
        %v4605 = vmul.f32 %v4581, %v1628
        %v4606 = vmul.f32 %v4584, %v1628
        %v4607 = vmul.f32 %v4587, %v1628
        %v4608 = vmul.f32 %v4590, %v1628
        %v4609 = vmul.f32 %v4593, %v1628
        %v4610 = vadd.f32 %v4594, 1e-05
        %v4611 = vadd.f32 %v4595, 1e-05
        %v4612 = vadd.f32 %v4596, 1e-05
        %v4613 = vadd.f32 %v4597, 1e-05
        %v4614 = vadd.f32 %v4598, 1e-05
        %v4615 = vadd.f32 %v4599, 1e-05
        %v4616 = vadd.f32 %v4600, 1e-05
        %v4617 = vadd.f32 %v4601, 1e-05
        %v4618 = vadd.f32 %v4602, 1e-05
        %v4619 = vadd.f32 %v4603, 1e-05
        %v4620 = vadd.f32 %v4604, 1e-05
        %v4621 = vadd.f32 %v4605, 1e-05
        %v4622 = vadd.f32 %v4606, 1e-05
        %v4623 = vadd.f32 %v4607, 1e-05
        %v4624 = vadd.f32 %v4608, 1e-05
        %v4625 = vadd.f32 %v4609, 1e-05
        %v4626 = vrsqrt.pop %v4610
        %v4627 = vrsqrt.pop %v4611
        %v4628 = vrsqrt.pop %v4612
        %v4629 = vrsqrt.pop %v4613
        %v4630 = vrsqrt.pop %v4614
        %v4631 = vrsqrt.pop %v4615
        %v4632 = vrsqrt.pop %v4616
        %v4633 = vrsqrt.pop %v4617
        %v4634 = vrsqrt.pop %v4618
        %v4635 = vrsqrt.pop %v4619
        %v4636 = vrsqrt.pop %v4620
        %v4637 = vrsqrt.pop %v4621
        %v4638 = vrsqrt.pop %v4622
        %v4639 = vrsqrt.pop %v4623
        %v4640 = vrsqrt.pop %v4624
        %v4641 = vrsqrt.pop %v4625
        %v4642 = vmul.f32 %v4514, %v4626
        %v4643 = vmul.f32 %v4515, %v4627
        %v4644 = vmul.f32 %v4516, %v4628
        %v4645 = vmul.f32 %v4517, %v4629
        %v4646 = vmul.f32 %v4518, %v4630
        %v4647 = vmul.f32 %v4519, %v4631
        %v4648 = vmul.f32 %v4520, %v4632
        %v4649 = vmul.f32 %v4521, %v4633
        %v4650 = vmul.f32 %v4522, %v4634
        %v4651 = vmul.f32 %v4523, %v4635
        %v4652 = vmul.f32 %v4524, %v4636
        %v4653 = vmul.f32 %v4525, %v4637
        %v4654 = vmul.f32 %v4526, %v4638
        %v4655 = vmul.f32 %v4527, %v4639
        %v4656 = vmul.f32 %v4528, %v4640
        %v4657 = vmul.f32 %v4529, %v4641
        %v4659 = vlaneseq
        %v4660 = vshrl.u32 %v4659, 7
        %v4661 = vsub.s32 0, %v4660
        %v4662 = vrot.slane %v4447, %v4661
        %v4664 = vmul.f32 %v4642, %v4662
        %v4665 = vmul.f32 %v4643, %v4662
        %v4666 = vmul.f32 %v4644, %v4662
        %v4667 = vmul.f32 %v4645, %v4662
        %v4668 = vmul.f32 %v4646, %v4662
        %v4669 = vmul.f32 %v4647, %v4662
        %v4670 = vmul.f32 %v4648, %v4662
        %v4671 = vmul.f32 %v4649, %v4662
        %v4672 = vmul.f32 %v4650, %v4662
        %v4673 = vmul.f32 %v4651, %v4662
        %v4674 = vmul.f32 %v4652, %v4662
        %v4675 = vmul.f32 %v4653, %v4662
        %v4676 = vmul.f32 %v4654, %v4662
        %v4677 = vmul.f32 %v4655, %v4662
        %v4678 = vmul.f32 %v4656, %v4662
        %v4679 = vmul.f32 %v4657, %v4662
        %v4681 = vlaneseq
        %v4682 = vshrl.u32 %v4681, 7
        %v4683 = vsub.s32 0, %v4682
        %v4684 = vrot.slane %v4449, %v4683
        %v4686 = vadd.f32 %v4664, %v4684
        %v4687 = vadd.f32 %v4665, %v4684
        %v4688 = vadd.f32 %v4666, %v4684
        %v4689 = vadd.f32 %v4667, %v4684
        %v4690 = vadd.f32 %v4668, %v4684
        %v4691 = vadd.f32 %v4669, %v4684
        %v4692 = vadd.f32 %v4670, %v4684
        %v4693 = vadd.f32 %v4671, %v4684
        %v4694 = vadd.f32 %v4672, %v4684
        %v4695 = vadd.f32 %v4673, %v4684
        %v4696 = vadd.f32 %v4674, %v4684
        %v4697 = vadd.f32 %v4675, %v4684
        %v4698 = vadd.f32 %v4676, %v4684
        %v4699 = vadd.f32 %v4677, %v4684
        %v4700 = vadd.f32 %v4678, %v4684
        %v4701 = vadd.f32 %v4679, %v4684
        %s4702 = scalar_lea.vmem [#allocation24], 32
        %v4703 = vld [vmem:[%s4702] sm:$0xf]
        %v4704 = vld [vmem:[%s4702 + $0x4] sm:$0xf]
        %v4705 = vld [vmem:[%s4702 + $0x8] sm:$0xf]
        %v4706 = vld [vmem:[%s4702 + $0xc] sm:$0xf]
        %v4707 = vld [vmem:[%s4702 + $0x10] sm:$0xf]
        %v4708 = vld [vmem:[%s4702 + $0x14] sm:$0xf]
        %v4709 = vld [vmem:[%s4702 + $0x18] sm:$0xf]
        %v4710 = vld [vmem:[%s4702 + $0x1c] sm:$0xf]
        %s4711 = scalar_lea.vmem [#allocation25], 1
        %v4712 = vld [vmem:[%s4711] sm:$0x1]
        %v4721 = vunpack.c.l.b16 %v4703
        %v4722 = vunpack.c.l.b16 %v4704
        %v4723 = vunpack.c.l.b16 %v4705
        %v4724 = vunpack.c.l.b16 %v4706
        %v4725 = vunpack.c.l.b16 %v4707
        %v4726 = vunpack.c.l.b16 %v4708
        %v4727 = vunpack.c.l.b16 %v4709
        %v4728 = vunpack.c.l.b16 %v4710
        %v4729 = vpack.c.b16 %v4722, %v4721
        %v4730 = vpack.c.b16 %v4724, %v4723
        %v4731 = vpack.c.b16 %v4726, %v4725
        %v4732 = vpack.c.b16 %v4728, %v4727
        %v4734 = vsel %vm1417, %v4729, 0
        %v4737 = vsel %vm1417, %v4730, 0
        %v4740 = vsel %vm1417, %v4731, 0
        %v4743 = vsel %vm1417, %v4732, 0
        %4745 = vmatprep.subr.bf16.mxu0 0
        %4746 = vmatpush1.bf16.xpose.msra.mxu0 %v4734
        %4747 = vmatprep.subr.bf16.mxu0 0
        %4748 = vmatpush1.bf16.xpose.msra.mxu0 %v4737
        %4749 = vmatprep.subr.bf16.mxu0 0
        %4750 = vmatpush1.bf16.xpose.msra.mxu0 %v4740
        %4751 = vmatprep.subr.bf16.mxu0 0
        %4752 = vmatpush1.bf16.xpose.msra.mxu0 %v4743
        %4753 = vmatprep.subr.bf16.mxu0 0
        %4754 = vmatpush1.bf16.xpose.msra.mxu0 0
        %4755 = vmatprep.subr.bf16.mxu0 0
        %4756 = vmatpush1.bf16.xpose.msra.mxu0 0
        %4757 = vmatprep.subr.bf16.mxu0 0
        %4758 = vmatpush1.bf16.xpose.msra.mxu0 0
        %4759 = vmatprep.subr.bf16.mxu0 0
        %4760 = vmatpush1.bf16.xpose.msra.mxu0 0
        %4761 = vmatprep.subr.bf16.mxu0 0
        %4762 = vmatpush1.bf16.xpose.msra.mxu0 0
        %4763 = vmatprep.subr.bf16.mxu0 0
        %4764 = vmatpush1.bf16.xpose.msra.mxu0 0
        %4765 = vmatprep.subr.bf16.mxu0 0
        %4766 = vmatpush1.bf16.xpose.msra.mxu0 0
        %4767 = vmatprep.subr.bf16.mxu0 0
        %4768 = vmatpush1.bf16.xpose.msra.mxu0 0
        %4769 = vmatprep.subr.bf16.mxu0 0
        %4770 = vmatpush1.bf16.xpose.msra.mxu0 0
        %4771 = vmatprep.subr.bf16.mxu0 0
        %4772 = vmatpush1.bf16.xpose.msra.mxu0 0
        %4773 = vmatprep.subr.bf16.mxu0 0
        %4774 = vmatpush1.bf16.xpose.msra.mxu0 0
        %4775 = vmatprep.subr.bf16.mxu0 0
        %4776 = vmatpush1.bf16.xpose.msra.mxu0 0
        %4777 = vmatprep.mubr.bf16.mxu0 0
        %4778 = vmatmul.mubr.bf16.gmra.mrb[0].mxu0 %v1419
        %v4779 = vpop.f32.mrb[0].mxu0
        %v4780 = vadd.f32 %v4712, %v4779
        %v4781 = vpop.f32.mrb[0].mxu0
        %v4782 = vpop.f32.mrb[0].mxu0
        %v4783 = vpop.f32.mrb[0].mxu0
        %4784 = vdwg.mxu0
        %s4785 = scalar_lea.vmem [#allocation27], 32
        %v4786 = vld [vmem:[%s4785] sm:$0xf]
        %v4787 = vld [vmem:[%s4785 + $0x4] sm:$0xf]
        %v4788 = vld [vmem:[%s4785 + $0x8] sm:$0xf]
        %v4789 = vld [vmem:[%s4785 + $0xc] sm:$0xf]
        %v4790 = vld [vmem:[%s4785 + $0x10] sm:$0xf]
        %v4791 = vld [vmem:[%s4785 + $0x14] sm:$0xf]
        %v4792 = vld [vmem:[%s4785 + $0x18] sm:$0xf]
        %v4793 = vld [vmem:[%s4785 + $0x1c] sm:$0xf]
        %s4794 = scalar_lea.vmem [#allocation28], 1
        %v4795 = vld [vmem:[%s4794] sm:$0x1]
        %v4796 = vpack.c.bf16 %v4780, %v4780
        %v4805 = vunpack.c.l.b16 %v4786
        %v4806 = vunpack.c.l.b16 %v4787
        %v4807 = vunpack.c.l.b16 %v4788
        %v4808 = vunpack.c.l.b16 %v4789
        %v4809 = vunpack.c.l.b16 %v4790
        %v4810 = vunpack.c.l.b16 %v4791
        %v4811 = vunpack.c.l.b16 %v4792
        %v4812 = vunpack.c.l.b16 %v4793
        %v4813 = vpack.c.b16 %v4806, %v4805
        %v4814 = vpack.c.b16 %v4808, %v4807
        %v4815 = vpack.c.b16 %v4810, %v4809
        %v4816 = vpack.c.b16 %v4812, %v4811
        %v4818 = vsel %vm1417, %v4796, 0
        %v4821 = vsel %vm1417, %v4813, 0
        %v4824 = vsel %vm1417, %v4814, 0
        %v4827 = vsel %vm1417, %v4815, 0
        %v4830 = vsel %vm1417, %v4816, 0
        %4832 = vmatprep.subr.bf16.mxu0 0
        %4833 = vmatpush1.bf16.xpose.msra.mxu0 %v4821
        %4834 = vmatprep.subr.bf16.mxu0 0
        %4835 = vmatpush1.bf16.xpose.msra.mxu0 %v4824
        %4836 = vmatprep.subr.bf16.mxu0 0
        %4837 = vmatpush1.bf16.xpose.msra.mxu0 %v4827
        %4838 = vmatprep.subr.bf16.mxu0 0
        %4839 = vmatpush1.bf16.xpose.msra.mxu0 %v4830
        %4840 = vmatprep.subr.bf16.mxu0 0
        %4841 = vmatpush1.bf16.xpose.msra.mxu0 0
        %4842 = vmatprep.subr.bf16.mxu0 0
        %4843 = vmatpush1.bf16.xpose.msra.mxu0 0
        %4844 = vmatprep.subr.bf16.mxu0 0
        %4845 = vmatpush1.bf16.xpose.msra.mxu0 0
        %4846 = vmatprep.subr.bf16.mxu0 0
        %4847 = vmatpush1.bf16.xpose.msra.mxu0 0
        %4848 = vmatprep.subr.bf16.mxu0 0
        %4849 = vmatpush1.bf16.xpose.msra.mxu0 0
        %4850 = vmatprep.subr.bf16.mxu0 0
        %4851 = vmatpush1.bf16.xpose.msra.mxu0 0
        %4852 = vmatprep.subr.bf16.mxu0 0
        %4853 = vmatpush1.bf16.xpose.msra.mxu0 0
        %4854 = vmatprep.subr.bf16.mxu0 0
        %4855 = vmatpush1.bf16.xpose.msra.mxu0 0
        %4856 = vmatprep.subr.bf16.mxu0 0
        %4857 = vmatpush1.bf16.xpose.msra.mxu0 0
        %4858 = vmatprep.subr.bf16.mxu0 0
        %4859 = vmatpush1.bf16.xpose.msra.mxu0 0
        %4860 = vmatprep.subr.bf16.mxu0 0
        %4861 = vmatpush1.bf16.xpose.msra.mxu0 0
        %4862 = vmatprep.subr.bf16.mxu0 0
        %4863 = vmatpush1.bf16.xpose.msra.mxu0 0
        %4864 = vmatprep.mubr.bf16.mxu0 0
        %4865 = vmatmul.mubr.bf16.gmra.mrb[0].mxu0 %v4818
        %v4866 = vpop.f32.mrb[0].mxu0
        %v4867 = vadd.f32 %v4795, %v4866
        %v4868 = vpop.f32.mrb[0].mxu0
        %v4869 = vpop.f32.mrb[0].mxu0
        %v4870 = vpop.f32.mrb[0].mxu0
        %4871 = vdwg.mxu0
        %v4872 = vlaneseq
        %v4873 = vshrl.u32 %v4872, 7
        %v4874 = vsub.s32 0, %v4873
        %v4875 = vrot.slane %v4867, %v4874
        %v4876 = vadd.f32 %v4686, %v4875
        %v4877 = vadd.f32 %v4687, %v4875
        %v4878 = vadd.f32 %v4688, %v4875
        %v4879 = vadd.f32 %v4689, %v4875
        %v4880 = vadd.f32 %v4690, %v4875
        %v4881 = vadd.f32 %v4691, %v4875
        %v4882 = vadd.f32 %v4692, %v4875
        %v4883 = vadd.f32 %v4693, %v4875
        %v4884 = vadd.f32 %v4694, %v4875
        %v4885 = vadd.f32 %v4695, %v4875
        %v4886 = vadd.f32 %v4696, %v4875
        %v4887 = vadd.f32 %v4697, %v4875
        %v4888 = vadd.f32 %v4698, %v4875
        %v4889 = vadd.f32 %v4699, %v4875
        %v4890 = vadd.f32 %v4700, %v4875
        %v4891 = vadd.f32 %v4701, %v4875
        %s4892 = scalar_lea.vmem [#allocation33], 1
        %v4893 = vld [vmem:[%s4892] sm:$0x1]
        %s4894 = scalar_lea.vmem [#allocation34], 1
        %v4895 = vld [vmem:[%s4894] sm:$0x1]
        %v4896 = vsel %vm1417, %v4876, 0.0
        %4897 = vadd.xlane.f32.xlu0 %v4896
        %v4898 = vpop.xlane.xlu0 %4897
        %v4899 = vsel %vm1417, %v4877, 0.0
        %4900 = vadd.xlane.f32.xlu0 %v4899
        %v4901 = vpop.xlane.xlu0 %4900
        %v4902 = vsel %vm1417, %v4878, 0.0
        %4903 = vadd.xlane.f32.xlu0 %v4902
        %v4904 = vpop.xlane.xlu0 %4903
        %v4905 = vsel %vm1417, %v4879, 0.0
        %4906 = vadd.xlane.f32.xlu0 %v4905
        %v4907 = vpop.xlane.xlu0 %4906
        %v4908 = vsel %vm1417, %v4880, 0.0
        %4909 = vadd.xlane.f32.xlu0 %v4908
        %v4910 = vpop.xlane.xlu0 %4909
        %v4911 = vsel %vm1417, %v4881, 0.0
        %4912 = vadd.xlane.f32.xlu0 %v4911
        %v4913 = vpop.xlane.xlu0 %4912
        %v4914 = vsel %vm1417, %v4882, 0.0
        %4915 = vadd.xlane.f32.xlu0 %v4914
        %v4916 = vpop.xlane.xlu0 %4915
        %v4917 = vsel %vm1417, %v4883, 0.0
        %4918 = vadd.xlane.f32.xlu0 %v4917
        %v4919 = vpop.xlane.xlu0 %4918
        %v4920 = vsel %vm1417, %v4884, 0.0
        %4921 = vadd.xlane.f32.xlu0 %v4920
        %v4922 = vpop.xlane.xlu0 %4921
        %v4923 = vsel %vm1417, %v4885, 0.0
        %4924 = vadd.xlane.f32.xlu0 %v4923
        %v4925 = vpop.xlane.xlu0 %4924
        %v4926 = vsel %vm1417, %v4886, 0.0
        %4927 = vadd.xlane.f32.xlu0 %v4926
        %v4928 = vpop.xlane.xlu0 %4927
        %v4929 = vsel %vm1417, %v4887, 0.0
        %4930 = vadd.xlane.f32.xlu0 %v4929
        %v4931 = vpop.xlane.xlu0 %4930
        %v4932 = vsel %vm1417, %v4888, 0.0
        %4933 = vadd.xlane.f32.xlu0 %v4932
        %v4934 = vpop.xlane.xlu0 %4933
        %v4935 = vsel %vm1417, %v4889, 0.0
        %4936 = vadd.xlane.f32.xlu0 %v4935
        %v4937 = vpop.xlane.xlu0 %4936
        %v4938 = vsel %vm1417, %v4890, 0.0
        %4939 = vadd.xlane.f32.xlu0 %v4938
        %v4940 = vpop.xlane.xlu0 %4939
        %v4941 = vsel %vm1417, %v4891, 0.0
        %4942 = vadd.xlane.f32.xlu0 %v4941
        %v4943 = vpop.xlane.xlu0 %4942
        %v4944 = vmul.f32 %v4898, %v1628
        %v4945 = vmul.f32 %v4901, %v1628
        %v4946 = vmul.f32 %v4904, %v1628
        %v4947 = vmul.f32 %v4907, %v1628
        %v4948 = vmul.f32 %v4910, %v1628
        %v4949 = vmul.f32 %v4913, %v1628
        %v4950 = vmul.f32 %v4916, %v1628
        %v4951 = vmul.f32 %v4919, %v1628
        %v4952 = vmul.f32 %v4922, %v1628
        %v4953 = vmul.f32 %v4925, %v1628
        %v4954 = vmul.f32 %v4928, %v1628
        %v4955 = vmul.f32 %v4931, %v1628
        %v4956 = vmul.f32 %v4934, %v1628
        %v4957 = vmul.f32 %v4937, %v1628
        %v4958 = vmul.f32 %v4940, %v1628
        %v4959 = vmul.f32 %v4943, %v1628
        %v4960 = vsub.f32 %v4876, %v4944
        %v4961 = vsub.f32 %v4877, %v4945
        %v4962 = vsub.f32 %v4878, %v4946
        %v4963 = vsub.f32 %v4879, %v4947
        %v4964 = vsub.f32 %v4880, %v4948
        %v4965 = vsub.f32 %v4881, %v4949
        %v4966 = vsub.f32 %v4882, %v4950
        %v4967 = vsub.f32 %v4883, %v4951
        %v4968 = vsub.f32 %v4884, %v4952
        %v4969 = vsub.f32 %v4885, %v4953
        %v4970 = vsub.f32 %v4886, %v4954
        %v4971 = vsub.f32 %v4887, %v4955
        %v4972 = vsub.f32 %v4888, %v4956
        %v4973 = vsub.f32 %v4889, %v4957
        %v4974 = vsub.f32 %v4890, %v4958
        %v4975 = vsub.f32 %v4891, %v4959
        %v4976 = vmul.f32 %v4960, %v4960
        %v4977 = vmul.f32 %v4961, %v4961
        %v4978 = vmul.f32 %v4962, %v4962
        %v4979 = vmul.f32 %v4963, %v4963
        %v4980 = vmul.f32 %v4964, %v4964
        %v4981 = vmul.f32 %v4965, %v4965
        %v4982 = vmul.f32 %v4966, %v4966
        %v4983 = vmul.f32 %v4967, %v4967
        %v4984 = vmul.f32 %v4968, %v4968
        %v4985 = vmul.f32 %v4969, %v4969
        %v4986 = vmul.f32 %v4970, %v4970
        %v4987 = vmul.f32 %v4971, %v4971
        %v4988 = vmul.f32 %v4972, %v4972
        %v4989 = vmul.f32 %v4973, %v4973
        %v4990 = vmul.f32 %v4974, %v4974
        %v4991 = vmul.f32 %v4975, %v4975
        %v4992 = vsel %vm1417, %v4976, 0.0
        %4993 = vadd.xlane.f32.xlu0 %v4992
        %v4994 = vpop.xlane.xlu0 %4993
        %v4995 = vsel %vm1417, %v4977, 0.0
        %4996 = vadd.xlane.f32.xlu0 %v4995
        %v4997 = vpop.xlane.xlu0 %4996
        %v4998 = vsel %vm1417, %v4978, 0.0
        %4999 = vadd.xlane.f32.xlu0 %v4998
        %v5000 = vpop.xlane.xlu0 %4999
        %v5001 = vsel %vm1417, %v4979, 0.0
        %5002 = vadd.xlane.f32.xlu0 %v5001
        %v5003 = vpop.xlane.xlu0 %5002
        %v5004 = vsel %vm1417, %v4980, 0.0
        %5005 = vadd.xlane.f32.xlu0 %v5004
        %v5006 = vpop.xlane.xlu0 %5005
        %v5007 = vsel %vm1417, %v4981, 0.0
        %5008 = vadd.xlane.f32.xlu0 %v5007
        %v5009 = vpop.xlane.xlu0 %5008
        %v5010 = vsel %vm1417, %v4982, 0.0
        %5011 = vadd.xlane.f32.xlu0 %v5010
        %v5012 = vpop.xlane.xlu0 %5011
        %v5013 = vsel %vm1417, %v4983, 0.0
        %5014 = vadd.xlane.f32.xlu0 %v5013
        %v5015 = vpop.xlane.xlu0 %5014
        %v5016 = vsel %vm1417, %v4984, 0.0
        %5017 = vadd.xlane.f32.xlu0 %v5016
        %v5018 = vpop.xlane.xlu0 %5017
        %v5019 = vsel %vm1417, %v4985, 0.0
        %5020 = vadd.xlane.f32.xlu0 %v5019
        %v5021 = vpop.xlane.xlu0 %5020
        %v5022 = vsel %vm1417, %v4986, 0.0
        %5023 = vadd.xlane.f32.xlu0 %v5022
        %v5024 = vpop.xlane.xlu0 %5023
        %v5025 = vsel %vm1417, %v4987, 0.0
        %5026 = vadd.xlane.f32.xlu0 %v5025
        %v5027 = vpop.xlane.xlu0 %5026
        %v5028 = vsel %vm1417, %v4988, 0.0
        %5029 = vadd.xlane.f32.xlu0 %v5028
        %v5030 = vpop.xlane.xlu0 %5029
        %v5031 = vsel %vm1417, %v4989, 0.0
        %5032 = vadd.xlane.f32.xlu0 %v5031
        %v5033 = vpop.xlane.xlu0 %5032
        %v5034 = vsel %vm1417, %v4990, 0.0
        %5035 = vadd.xlane.f32.xlu0 %v5034
        %v5036 = vpop.xlane.xlu0 %5035
        %v5037 = vsel %vm1417, %v4991, 0.0
        %5038 = vadd.xlane.f32.xlu0 %v5037
        %v5039 = vpop.xlane.xlu0 %5038
        %v5040 = vmul.f32 %v4994, %v1628
        %v5041 = vmul.f32 %v4997, %v1628
        %v5042 = vmul.f32 %v5000, %v1628
        %v5043 = vmul.f32 %v5003, %v1628
        %v5044 = vmul.f32 %v5006, %v1628
        %v5045 = vmul.f32 %v5009, %v1628
        %v5046 = vmul.f32 %v5012, %v1628
        %v5047 = vmul.f32 %v5015, %v1628
        %v5048 = vmul.f32 %v5018, %v1628
        %v5049 = vmul.f32 %v5021, %v1628
        %v5050 = vmul.f32 %v5024, %v1628
        %v5051 = vmul.f32 %v5027, %v1628
        %v5052 = vmul.f32 %v5030, %v1628
        %v5053 = vmul.f32 %v5033, %v1628
        %v5054 = vmul.f32 %v5036, %v1628
        %v5055 = vmul.f32 %v5039, %v1628
        %v5056 = vadd.f32 %v5040, 1e-05
        %v5057 = vadd.f32 %v5041, 1e-05
        %v5058 = vadd.f32 %v5042, 1e-05
        %v5059 = vadd.f32 %v5043, 1e-05
        %v5060 = vadd.f32 %v5044, 1e-05
        %v5061 = vadd.f32 %v5045, 1e-05
        %v5062 = vadd.f32 %v5046, 1e-05
        %v5063 = vadd.f32 %v5047, 1e-05
        %v5064 = vadd.f32 %v5048, 1e-05
        %v5065 = vadd.f32 %v5049, 1e-05
        %v5066 = vadd.f32 %v5050, 1e-05
        %v5067 = vadd.f32 %v5051, 1e-05
        %v5068 = vadd.f32 %v5052, 1e-05
        %v5069 = vadd.f32 %v5053, 1e-05
        %v5070 = vadd.f32 %v5054, 1e-05
        %v5071 = vadd.f32 %v5055, 1e-05
        %v5072 = vrsqrt.pop %v5056
        %v5073 = vrsqrt.pop %v5057
        %v5074 = vrsqrt.pop %v5058
        %v5075 = vrsqrt.pop %v5059
        %v5076 = vrsqrt.pop %v5060
        %v5077 = vrsqrt.pop %v5061
        %v5078 = vrsqrt.pop %v5062
        %v5079 = vrsqrt.pop %v5063
        %v5080 = vrsqrt.pop %v5064
        %v5081 = vrsqrt.pop %v5065
        %v5082 = vrsqrt.pop %v5066
        %v5083 = vrsqrt.pop %v5067
        %v5084 = vrsqrt.pop %v5068
        %v5085 = vrsqrt.pop %v5069
        %v5086 = vrsqrt.pop %v5070
        %v5087 = vrsqrt.pop %v5071
        %v5088 = vmul.f32 %v4960, %v5072
        %v5089 = vmul.f32 %v4961, %v5073
        %v5090 = vmul.f32 %v4962, %v5074
        %v5091 = vmul.f32 %v4963, %v5075
        %v5092 = vmul.f32 %v4964, %v5076
        %v5093 = vmul.f32 %v4965, %v5077
        %v5094 = vmul.f32 %v4966, %v5078
        %v5095 = vmul.f32 %v4967, %v5079
        %v5096 = vmul.f32 %v4968, %v5080
        %v5097 = vmul.f32 %v4969, %v5081
        %v5098 = vmul.f32 %v4970, %v5082
        %v5099 = vmul.f32 %v4971, %v5083
        %v5100 = vmul.f32 %v4972, %v5084
        %v5101 = vmul.f32 %v4973, %v5085
        %v5102 = vmul.f32 %v4974, %v5086
        %v5103 = vmul.f32 %v4975, %v5087
        %v5105 = vlaneseq
        %v5106 = vshrl.u32 %v5105, 7
        %v5107 = vsub.s32 0, %v5106
        %v5108 = vrot.slane %v4893, %v5107
        %v5110 = vmul.f32 %v5088, %v5108
        %v5111 = vmul.f32 %v5089, %v5108
        %v5112 = vmul.f32 %v5090, %v5108
        %v5113 = vmul.f32 %v5091, %v5108
        %v5114 = vmul.f32 %v5092, %v5108
        %v5115 = vmul.f32 %v5093, %v5108
        %v5116 = vmul.f32 %v5094, %v5108
        %v5117 = vmul.f32 %v5095, %v5108
        %v5118 = vmul.f32 %v5096, %v5108
        %v5119 = vmul.f32 %v5097, %v5108
        %v5120 = vmul.f32 %v5098, %v5108
        %v5121 = vmul.f32 %v5099, %v5108
        %v5122 = vmul.f32 %v5100, %v5108
        %v5123 = vmul.f32 %v5101, %v5108
        %v5124 = vmul.f32 %v5102, %v5108
        %v5125 = vmul.f32 %v5103, %v5108
        %v5127 = vlaneseq
        %v5128 = vshrl.u32 %v5127, 7
        %v5129 = vsub.s32 0, %v5128
        %v5130 = vrot.slane %v4895, %v5129
        %v5132 = vadd.f32 %v5110, %v5130
        %v5133 = vadd.f32 %v5111, %v5130
        %v5134 = vadd.f32 %v5112, %v5130
        %v5135 = vadd.f32 %v5113, %v5130
        %v5136 = vadd.f32 %v5114, %v5130
        %v5137 = vadd.f32 %v5115, %v5130
        %v5138 = vadd.f32 %v5116, %v5130
        %v5139 = vadd.f32 %v5117, %v5130
        %v5140 = vadd.f32 %v5118, %v5130
        %v5141 = vadd.f32 %v5119, %v5130
        %v5142 = vadd.f32 %v5120, %v5130
        %v5143 = vadd.f32 %v5121, %v5130
        %v5144 = vadd.f32 %v5122, %v5130
        %v5145 = vadd.f32 %v5123, %v5130
        %v5146 = vadd.f32 %v5124, %v5130
        %v5147 = vadd.f32 %v5125, %v5130
        %s5148 = scalar_lea.vmem [#allocation39], 64
        %v5149 = vld [vmem:[%s5148] sm:$0xf]
        %v5150 = vld [vmem:[%s5148 + $0x4] sm:$0xf]
        %v5151 = vld [vmem:[%s5148 + $0x8] sm:$0xf]
        %v5152 = vld [vmem:[%s5148 + $0xc] sm:$0xf]
        %v5153 = vld [vmem:[%s5148 + $0x10] sm:$0xf]
        %v5154 = vld [vmem:[%s5148 + $0x14] sm:$0xf]
        %v5155 = vld [vmem:[%s5148 + $0x18] sm:$0xf]
        %v5156 = vld [vmem:[%s5148 + $0x1c] sm:$0xf]
        %v5157 = vld [vmem:[%s5148 + $0x20] sm:$0xf]
        %v5158 = vld [vmem:[%s5148 + $0x24] sm:$0xf]
        %v5159 = vld [vmem:[%s5148 + $0x28] sm:$0xf]
        %v5160 = vld [vmem:[%s5148 + $0x2c] sm:$0xf]
        %v5161 = vld [vmem:[%s5148 + $0x30] sm:$0xf]
        %v5162 = vld [vmem:[%s5148 + $0x34] sm:$0xf]
        %v5163 = vld [vmem:[%s5148 + $0x38] sm:$0xf]
        %v5164 = vld [vmem:[%s5148 + $0x3c] sm:$0xf]
        %s5165 = scalar_lea.vmem [#allocation40], 1
        %v5166 = vld [vmem:[%s5165] sm:$0x1]
        %v5167 = vpack.c.bf16 %v5133, %v5132
        %v5168 = vpack.c.bf16 %v5135, %v5134
        %v5169 = vpack.c.bf16 %v5137, %v5136
        %v5170 = vpack.c.bf16 %v5139, %v5138
        %v5171 = vpack.c.bf16 %v5141, %v5140
        %v5172 = vpack.c.bf16 %v5143, %v5142
        %v5173 = vpack.c.bf16 %v5145, %v5144
        %v5174 = vpack.c.bf16 %v5147, %v5146
        %v5176 = vlaneseq
        %v5177 = vshrl.u32 %v5176, 7
        %v5178 = vsub.s32 0, %v5177
        %v5179 = vrot.slane %v5166, %v5178
        %v5197 = vunpack.c.l.b16 %v5149
        %v5198 = vunpack.c.l.b16 %v5150
        %v5199 = vunpack.c.l.b16 %v5151
        %v5200 = vunpack.c.l.b16 %v5152
        %v5201 = vunpack.c.l.b16 %v5153
        %v5202 = vunpack.c.l.b16 %v5154
        %v5203 = vunpack.c.l.b16 %v5155
        %v5204 = vunpack.c.l.b16 %v5156
        %v5205 = vunpack.c.l.b16 %v5157
        %v5206 = vunpack.c.l.b16 %v5158
        %v5207 = vunpack.c.l.b16 %v5159
        %v5208 = vunpack.c.l.b16 %v5160
        %v5209 = vunpack.c.l.b16 %v5161
        %v5210 = vunpack.c.l.b16 %v5162
        %v5211 = vunpack.c.l.b16 %v5163
        %v5212 = vunpack.c.l.b16 %v5164
        %v5213 = vpack.c.b16 %v5198, %v5197
        %v5214 = vpack.c.b16 %v5200, %v5199
        %v5215 = vpack.c.b16 %v5202, %v5201
        %v5216 = vpack.c.b16 %v5204, %v5203
        %v5217 = vpack.c.b16 %v5206, %v5205
        %v5218 = vpack.c.b16 %v5208, %v5207
        %v5219 = vpack.c.b16 %v5210, %v5209
        %v5220 = vpack.c.b16 %v5212, %v5211
        %v5222 = vsel %vm1417, %v5167, 0
        %v5225 = vsel %vm1417, %v5168, 0
        %v5228 = vsel %vm1417, %v5169, 0
        %v5231 = vsel %vm1417, %v5170, 0
        %v5234 = vsel %vm1417, %v5171, 0
        %v5237 = vsel %vm1417, %v5172, 0
        %v5240 = vsel %vm1417, %v5173, 0
        %v5243 = vsel %vm1417, %v5174, 0
        %v5246 = vsel %vm1417, %v5213, 0
        %v5249 = vsel %vm1417, %v5214, 0
        %v5252 = vsel %vm1417, %v5215, 0
        %v5255 = vsel %vm1417, %v5216, 0
        %v5258 = vsel %vm1417, %v5217, 0
        %v5261 = vsel %vm1417, %v5218, 0
        %v5264 = vsel %vm1417, %v5219, 0
        %v5267 = vsel %vm1417, %v5220, 0
        %5269 = vmatprep.subr.bf16.mxu0 0
        %5270 = vmatpush1.bf16.xpose.msra.mxu0 %v5246
        %5271 = vmatprep.subr.bf16.mxu0 0
        %5272 = vmatpush1.bf16.xpose.msra.mxu0 %v5249
        %5273 = vmatprep.subr.bf16.mxu0 0
        %5274 = vmatpush1.bf16.xpose.msra.mxu0 %v5252
        %5275 = vmatprep.subr.bf16.mxu0 0
        %5276 = vmatpush1.bf16.xpose.msra.mxu0 %v5255
        %5277 = vmatprep.subr.bf16.mxu0 0
        %5278 = vmatpush1.bf16.xpose.msra.mxu0 %v5258
        %5279 = vmatprep.subr.bf16.mxu0 0
        %5280 = vmatpush1.bf16.xpose.msra.mxu0 %v5261
        %5281 = vmatprep.subr.bf16.mxu0 0
        %5282 = vmatpush1.bf16.xpose.msra.mxu0 %v5264
        %5283 = vmatprep.subr.bf16.mxu0 0
        %5284 = vmatpush1.bf16.xpose.msra.mxu0 %v5267
        %5285 = vmatprep.subr.bf16.mxu0 0
        %5286 = vmatpush1.bf16.xpose.msra.mxu0 0
        %5287 = vmatprep.subr.bf16.mxu0 0
        %5288 = vmatpush1.bf16.xpose.msra.mxu0 0
        %5289 = vmatprep.subr.bf16.mxu0 0
        %5290 = vmatpush1.bf16.xpose.msra.mxu0 0
        %5291 = vmatprep.subr.bf16.mxu0 0
        %5292 = vmatpush1.bf16.xpose.msra.mxu0 0
        %5293 = vmatprep.subr.bf16.mxu0 0
        %5294 = vmatpush1.bf16.xpose.msra.mxu0 0
        %5295 = vmatprep.subr.bf16.mxu0 0
        %5296 = vmatpush1.bf16.xpose.msra.mxu0 0
        %5297 = vmatprep.subr.bf16.mxu0 0
        %5298 = vmatpush1.bf16.xpose.msra.mxu0 0
        %5299 = vmatprep.subr.bf16.mxu0 0
        %5300 = vmatpush1.bf16.xpose.msra.mxu0 0
        %5301 = vmatprep.mubr.bf16.mxu0 0
        %5302 = vmatmul.mubr.bf16.gmra.mrb[0].mxu0 %v5222
        %v5303 = vpop.f32.mrb[0].mxu0
        %v5304 = vadd.f32 %v5179, %v5303
        %v5305 = vpop.f32.mrb[0].mxu0
        %v5306 = vpop.f32.mrb[0].mxu0
        %v5307 = vadd.f32 %v5179, %v5306
        %v5308 = vpop.f32.mrb[0].mxu0
        %5309 = vmatprep.mubr.bf16.mxu0 0
        %5310 = vmatmul.mubr.bf16.gmra.mrb[0].mxu0 %v5225
        %v5311 = vpop.f32.mrb[0].mxu0
        %v5312 = vadd.f32 %v5179, %v5311
        %v5313 = vpop.f32.mrb[0].mxu0
        %v5314 = vpop.f32.mrb[0].mxu0
        %v5315 = vadd.f32 %v5179, %v5314
        %v5316 = vpop.f32.mrb[0].mxu0
        %5317 = vmatprep.mubr.bf16.mxu0 0
        %5318 = vmatmul.mubr.bf16.gmra.mrb[0].mxu0 %v5228
        %v5319 = vpop.f32.mrb[0].mxu0
        %v5320 = vadd.f32 %v5179, %v5319
        %v5321 = vpop.f32.mrb[0].mxu0
        %v5322 = vpop.f32.mrb[0].mxu0
        %v5323 = vadd.f32 %v5179, %v5322
        %v5324 = vpop.f32.mrb[0].mxu0
        %5325 = vmatprep.mubr.bf16.mxu0 0
        %5326 = vmatmul.mubr.bf16.gmra.mrb[0].mxu0 %v5231
        %v5327 = vpop.f32.mrb[0].mxu0
        %v5328 = vadd.f32 %v5179, %v5327
        %v5329 = vpop.f32.mrb[0].mxu0
        %v5330 = vpop.f32.mrb[0].mxu0
        %v5331 = vadd.f32 %v5179, %v5330
        %v5332 = vpop.f32.mrb[0].mxu0
        %5333 = vmatprep.mubr.bf16.mxu0 0
        %5334 = vmatmul.mubr.bf16.gmra.mrb[0].mxu0 %v5234
        %v5335 = vpop.f32.mrb[0].mxu0
        %v5336 = vadd.f32 %v5179, %v5335
        %v5337 = vpop.f32.mrb[0].mxu0
        %v5338 = vpop.f32.mrb[0].mxu0
        %v5339 = vadd.f32 %v5179, %v5338
        %v5340 = vpop.f32.mrb[0].mxu0
        %5341 = vmatprep.mubr.bf16.mxu0 0
        %5342 = vmatmul.mubr.bf16.gmra.mrb[0].mxu0 %v5237
        %v5343 = vpop.f32.mrb[0].mxu0
        %v5344 = vadd.f32 %v5179, %v5343
        %v5345 = vpop.f32.mrb[0].mxu0
        %v5346 = vpop.f32.mrb[0].mxu0
        %v5347 = vadd.f32 %v5179, %v5346
        %v5348 = vpop.f32.mrb[0].mxu0
        %5349 = vmatprep.mubr.bf16.mxu0 0
        %5350 = vmatmul.mubr.bf16.gmra.mrb[0].mxu0 %v5240
        %v5351 = vpop.f32.mrb[0].mxu0
        %v5352 = vadd.f32 %v5179, %v5351
        %v5353 = vpop.f32.mrb[0].mxu0
        %v5354 = vpop.f32.mrb[0].mxu0
        %v5355 = vadd.f32 %v5179, %v5354
        %v5356 = vpop.f32.mrb[0].mxu0
        %5357 = vmatprep.mubr.bf16.mxu0 0
        %5358 = vmatmul.mubr.bf16.gmra.mrb[0].mxu0 %v5243
        %v5359 = vpop.f32.mrb[0].mxu0
        %v5360 = vadd.f32 %v5179, %v5359
        %v5361 = vpop.f32.mrb[0].mxu0
        %v5362 = vpop.f32.mrb[0].mxu0
        %v5363 = vadd.f32 %v5179, %v5362
        %v5364 = vpop.f32.mrb[0].mxu0
        %5365 = vdwg.mxu0
        %v5366 = vmax.f32 %v5304, 0.0
        %v5367 = vmax.f32 %v5307, 0.0
        %v5368 = vmax.f32 %v5312, 0.0
        %v5369 = vmax.f32 %v5315, 0.0
        %v5370 = vmax.f32 %v5320, 0.0
        %v5371 = vmax.f32 %v5323, 0.0
        %v5372 = vmax.f32 %v5328, 0.0
        %v5373 = vmax.f32 %v5331, 0.0
        %v5374 = vmax.f32 %v5336, 0.0
        %v5375 = vmax.f32 %v5339, 0.0
        %v5376 = vmax.f32 %v5344, 0.0
        %v5377 = vmax.f32 %v5347, 0.0
        %v5378 = vmax.f32 %v5352, 0.0
        %v5379 = vmax.f32 %v5355, 0.0
        %v5380 = vmax.f32 %v5360, 0.0
        %v5381 = vmax.f32 %v5363, 0.0
        %s5382 = scalar_lea.vmem [#allocation42], 32
        %v5383 = vld [vmem:[%s5382] sm:$0xf]
        %v5384 = vld [vmem:[%s5382 + $0x4] sm:$0xf]
        %v5385 = vld [vmem:[%s5382 + $0x8] sm:$0xf]
        %v5386 = vld [vmem:[%s5382 + $0xc] sm:$0xf]
        %v5387 = vld [vmem:[%s5382 + $0x10] sm:$0xf]
        %v5388 = vld [vmem:[%s5382 + $0x14] sm:$0xf]
        %v5389 = vld [vmem:[%s5382 + $0x18] sm:$0xf]
        %v5390 = vld [vmem:[%s5382 + $0x1c] sm:$0xf]
        %s5391 = scalar_lea.vmem [#allocation43], 1
        %v5392 = vld [vmem:[%s5391] sm:$0x1]
        %v5393 = vpack.c.bf16 %v5367, %v5366
        %v5394 = vpack.c.bf16 %v5369, %v5368
        %v5395 = vpack.c.bf16 %v5371, %v5370
        %v5396 = vpack.c.bf16 %v5373, %v5372
        %v5397 = vpack.c.bf16 %v5375, %v5374
        %v5398 = vpack.c.bf16 %v5377, %v5376
        %v5399 = vpack.c.bf16 %v5379, %v5378
        %v5400 = vpack.c.bf16 %v5381, %v5380
        %v5402 = vlaneseq
        %v5403 = vshrl.u32 %v5402, 7
        %v5404 = vsub.s32 0, %v5403
        %v5405 = vrot.slane %v5392, %v5404
        %v5415 = vunpack.c.l.b16 %v5383
        %v5416 = vunpack.c.l.b16 %v5384
        %v5417 = vunpack.c.l.b16 %v5385
        %v5418 = vunpack.c.l.b16 %v5386
        %v5419 = vunpack.c.l.b16 %v5387
        %v5420 = vunpack.c.l.b16 %v5388
        %v5421 = vunpack.c.l.b16 %v5389
        %v5422 = vunpack.c.l.b16 %v5390
        %v5423 = vpack.c.b16 %v5416, %v5415
        %v5424 = vpack.c.b16 %v5418, %v5417
        %v5425 = vpack.c.b16 %v5420, %v5419
        %v5426 = vpack.c.b16 %v5422, %v5421
        %5431 = vmatprep.subr.bf16.mxu0 0
        %5432 = vmatpush1.bf16.xpose.msra.mxu0 %v5423
        %5433 = vmatprep.subr.bf16.mxu0 0
        %5434 = vmatpush1.bf16.xpose.msra.mxu0 %v5424
        %5435 = vmatprep.subr.bf16.mxu0 0
        %5436 = vmatpush1.bf16.xpose.msra.mxu0 %v5425
        %5437 = vmatprep.subr.bf16.mxu0 0
        %5438 = vmatpush1.bf16.xpose.msra.mxu0 %v5426
        %5439 = vmatprep.subr.bf16.mxu0 0
        %5440 = vmatpush1.bf16.xpose.msra.mxu0 0
        %5441 = vmatprep.subr.bf16.mxu0 0
        %5442 = vmatpush1.bf16.xpose.msra.mxu0 0
        %5443 = vmatprep.subr.bf16.mxu0 0
        %5444 = vmatpush1.bf16.xpose.msra.mxu0 0
        %5445 = vmatprep.subr.bf16.mxu0 0
        %5446 = vmatpush1.bf16.xpose.msra.mxu0 0
        %5447 = vmatprep.subr.bf16.mxu0 0
        %5448 = vmatpush1.bf16.xpose.msra.mxu0 0
        %5449 = vmatprep.subr.bf16.mxu0 0
        %5450 = vmatpush1.bf16.xpose.msra.mxu0 0
        %5451 = vmatprep.subr.bf16.mxu0 0
        %5452 = vmatpush1.bf16.xpose.msra.mxu0 0
        %5453 = vmatprep.subr.bf16.mxu0 0
        %5454 = vmatpush1.bf16.xpose.msra.mxu0 0
        %5455 = vmatprep.subr.bf16.mxu0 0
        %5456 = vmatpush1.bf16.xpose.msra.mxu0 0
        %5457 = vmatprep.subr.bf16.mxu0 0
        %5458 = vmatpush1.bf16.xpose.msra.mxu0 0
        %5459 = vmatprep.subr.bf16.mxu0 0
        %5460 = vmatpush1.bf16.xpose.msra.mxu0 0
        %5461 = vmatprep.subr.bf16.mxu0 0
        %5462 = vmatpush1.bf16.xpose.msra.mxu0 0
        %5463 = vmatprep.mubr.bf16.mxu0 0
        %5464 = vmatmul.mubr.bf16.gmra.mrb[0].mxu0 %v5393
        %v5465 = vpop.f32.mrb[0].mxu0
        %v5466 = vadd.f32 %v5405, %v5465
        %v5467 = vpop.f32.mrb[0].mxu0
        %v5468 = vpop.f32.mrb[0].mxu0
        %v5469 = vadd.f32 %v5405, %v5468
        %v5470 = vpop.f32.mrb[0].mxu0
        %5471 = vmatprep.mubr.bf16.mxu0 0
        %5472 = vmatmul.mubr.bf16.gmra.mrb[0].mxu0 %v5394
        %v5473 = vpop.f32.mrb[0].mxu0
        %v5474 = vadd.f32 %v5405, %v5473
        %v5475 = vpop.f32.mrb[0].mxu0
        %v5476 = vpop.f32.mrb[0].mxu0
        %v5477 = vadd.f32 %v5405, %v5476
        %v5478 = vpop.f32.mrb[0].mxu0
        %5479 = vmatprep.mubr.bf16.mxu0 0
        %5480 = vmatmul.mubr.bf16.gmra.mrb[0].mxu0 %v5395
        %v5481 = vpop.f32.mrb[0].mxu0
        %v5482 = vadd.f32 %v5405, %v5481
        %v5483 = vpop.f32.mrb[0].mxu0
        %v5484 = vpop.f32.mrb[0].mxu0
        %v5485 = vadd.f32 %v5405, %v5484
        %v5486 = vpop.f32.mrb[0].mxu0
        %5487 = vmatprep.mubr.bf16.mxu0 0
        %5488 = vmatmul.mubr.bf16.gmra.mrb[0].mxu0 %v5396
        %v5489 = vpop.f32.mrb[0].mxu0
        %v5490 = vadd.f32 %v5405, %v5489
        %v5491 = vpop.f32.mrb[0].mxu0
        %v5492 = vpop.f32.mrb[0].mxu0
        %v5493 = vadd.f32 %v5405, %v5492
        %v5494 = vpop.f32.mrb[0].mxu0
        %5495 = vmatprep.mubr.bf16.mxu0 0
        %5496 = vmatmul.mubr.bf16.gmra.mrb[0].mxu0 %v5397
        %v5497 = vpop.f32.mrb[0].mxu0
        %v5498 = vadd.f32 %v5405, %v5497
        %v5499 = vpop.f32.mrb[0].mxu0
        %v5500 = vpop.f32.mrb[0].mxu0
        %v5501 = vadd.f32 %v5405, %v5500
        %v5502 = vpop.f32.mrb[0].mxu0
        %5503 = vmatprep.mubr.bf16.mxu0 0
        %5504 = vmatmul.mubr.bf16.gmra.mrb[0].mxu0 %v5398
        %v5505 = vpop.f32.mrb[0].mxu0
        %v5506 = vadd.f32 %v5405, %v5505
        %v5507 = vpop.f32.mrb[0].mxu0
        %v5508 = vpop.f32.mrb[0].mxu0
        %v5509 = vadd.f32 %v5405, %v5508
        %v5510 = vpop.f32.mrb[0].mxu0
        %5511 = vmatprep.mubr.bf16.mxu0 0
        %5512 = vmatmul.mubr.bf16.gmra.mrb[0].mxu0 %v5399
        %v5513 = vpop.f32.mrb[0].mxu0
        %v5514 = vadd.f32 %v5405, %v5513
        %v5515 = vpop.f32.mrb[0].mxu0
        %v5516 = vpop.f32.mrb[0].mxu0
        %v5517 = vadd.f32 %v5405, %v5516
        %v5518 = vpop.f32.mrb[0].mxu0
        %5519 = vmatprep.mubr.bf16.mxu0 0
        %5520 = vmatmul.mubr.bf16.gmra.mrb[0].mxu0 %v5400
        %v5521 = vpop.f32.mrb[0].mxu0
        %v5522 = vadd.f32 %v5405, %v5521
        %v5523 = vpop.f32.mrb[0].mxu0
        %v5524 = vpop.f32.mrb[0].mxu0
        %v5525 = vadd.f32 %v5405, %v5524
        %v5526 = vpop.f32.mrb[0].mxu0
        %5527 = vdwg.mxu0
        %v5528 = vadd.f32 %v5132, %v5466
        %v5529 = vadd.f32 %v5133, %v5469
        %v5530 = vadd.f32 %v5134, %v5474
        %v5531 = vadd.f32 %v5135, %v5477
        %v5532 = vadd.f32 %v5136, %v5482
        %v5533 = vadd.f32 %v5137, %v5485
        %v5534 = vadd.f32 %v5138, %v5490
        %v5535 = vadd.f32 %v5139, %v5493
        %v5536 = vadd.f32 %v5140, %v5498
        %v5537 = vadd.f32 %v5141, %v5501
        %v5538 = vadd.f32 %v5142, %v5506
        %v5539 = vadd.f32 %v5143, %v5509
        %v5540 = vadd.f32 %v5144, %v5514
        %v5541 = vadd.f32 %v5145, %v5517
        %v5542 = vadd.f32 %v5146, %v5522
        %v5543 = vadd.f32 %v5147, %v5525
        %s5544 = scalar_lea.vmem [#allocation36], 1
        %v5545 = vld [vmem:[%s5544] sm:$0x1]
        %s5546 = scalar_lea.vmem [#allocation37], 1
        %v5547 = vld [vmem:[%s5546] sm:$0x1]
        %v5548 = vsel %vm1417, %v5528, 0.0
        %5549 = vadd.xlane.f32.xlu0 %v5548
        %v5550 = vpop.xlane.xlu0 %5549
        %v5551 = vsel %vm1417, %v5529, 0.0
        %5552 = vadd.xlane.f32.xlu0 %v5551
        %v5553 = vpop.xlane.xlu0 %5552
        %v5554 = vsel %vm1417, %v5530, 0.0
        %5555 = vadd.xlane.f32.xlu0 %v5554
        %v5556 = vpop.xlane.xlu0 %5555
        %v5557 = vsel %vm1417, %v5531, 0.0
        %5558 = vadd.xlane.f32.xlu0 %v5557
        %v5559 = vpop.xlane.xlu0 %5558
        %v5560 = vsel %vm1417, %v5532, 0.0
        %5561 = vadd.xlane.f32.xlu0 %v5560
        %v5562 = vpop.xlane.xlu0 %5561
        %v5563 = vsel %vm1417, %v5533, 0.0
        %5564 = vadd.xlane.f32.xlu0 %v5563
        %v5565 = vpop.xlane.xlu0 %5564
        %v5566 = vsel %vm1417, %v5534, 0.0
        %5567 = vadd.xlane.f32.xlu0 %v5566
        %v5568 = vpop.xlane.xlu0 %5567
        %v5569 = vsel %vm1417, %v5535, 0.0
        %5570 = vadd.xlane.f32.xlu0 %v5569
        %v5571 = vpop.xlane.xlu0 %5570
        %v5572 = vsel %vm1417, %v5536, 0.0
        %5573 = vadd.xlane.f32.xlu0 %v5572
        %v5574 = vpop.xlane.xlu0 %5573
        %v5575 = vsel %vm1417, %v5537, 0.0
        %5576 = vadd.xlane.f32.xlu0 %v5575
        %v5577 = vpop.xlane.xlu0 %5576
        %v5578 = vsel %vm1417, %v5538, 0.0
        %5579 = vadd.xlane.f32.xlu0 %v5578
        %v5580 = vpop.xlane.xlu0 %5579
        %v5581 = vsel %vm1417, %v5539, 0.0
        %5582 = vadd.xlane.f32.xlu0 %v5581
        %v5583 = vpop.xlane.xlu0 %5582
        %v5584 = vsel %vm1417, %v5540, 0.0
        %5585 = vadd.xlane.f32.xlu0 %v5584
        %v5586 = vpop.xlane.xlu0 %5585
        %v5587 = vsel %vm1417, %v5541, 0.0
        %5588 = vadd.xlane.f32.xlu0 %v5587
        %v5589 = vpop.xlane.xlu0 %5588
        %v5590 = vsel %vm1417, %v5542, 0.0
        %5591 = vadd.xlane.f32.xlu0 %v5590
        %v5592 = vpop.xlane.xlu0 %5591
        %v5593 = vsel %vm1417, %v5543, 0.0
        %5594 = vadd.xlane.f32.xlu0 %v5593
        %v5595 = vpop.xlane.xlu0 %5594
        %v5596 = vmul.f32 %v5550, %v1628
        %v5597 = vmul.f32 %v5553, %v1628
        %v5598 = vmul.f32 %v5556, %v1628
        %v5599 = vmul.f32 %v5559, %v1628
        %v5600 = vmul.f32 %v5562, %v1628
        %v5601 = vmul.f32 %v5565, %v1628
        %v5602 = vmul.f32 %v5568, %v1628
        %v5603 = vmul.f32 %v5571, %v1628
        %v5604 = vmul.f32 %v5574, %v1628
        %v5605 = vmul.f32 %v5577, %v1628
        %v5606 = vmul.f32 %v5580, %v1628
        %v5607 = vmul.f32 %v5583, %v1628
        %v5608 = vmul.f32 %v5586, %v1628
        %v5609 = vmul.f32 %v5589, %v1628
        %v5610 = vmul.f32 %v5592, %v1628
        %v5611 = vmul.f32 %v5595, %v1628
        %v5612 = vsub.f32 %v5528, %v5596
        %v5613 = vsub.f32 %v5529, %v5597
        %v5614 = vsub.f32 %v5530, %v5598
        %v5615 = vsub.f32 %v5531, %v5599
        %v5616 = vsub.f32 %v5532, %v5600
        %v5617 = vsub.f32 %v5533, %v5601
        %v5618 = vsub.f32 %v5534, %v5602
        %v5619 = vsub.f32 %v5535, %v5603
        %v5620 = vsub.f32 %v5536, %v5604
        %v5621 = vsub.f32 %v5537, %v5605
        %v5622 = vsub.f32 %v5538, %v5606
        %v5623 = vsub.f32 %v5539, %v5607
        %v5624 = vsub.f32 %v5540, %v5608
        %v5625 = vsub.f32 %v5541, %v5609
        %v5626 = vsub.f32 %v5542, %v5610
        %v5627 = vsub.f32 %v5543, %v5611
        %v5628 = vmul.f32 %v5612, %v5612
        %v5629 = vmul.f32 %v5613, %v5613
        %v5630 = vmul.f32 %v5614, %v5614
        %v5631 = vmul.f32 %v5615, %v5615
        %v5632 = vmul.f32 %v5616, %v5616
        %v5633 = vmul.f32 %v5617, %v5617
        %v5634 = vmul.f32 %v5618, %v5618
        %v5635 = vmul.f32 %v5619, %v5619
        %v5636 = vmul.f32 %v5620, %v5620
        %v5637 = vmul.f32 %v5621, %v5621
        %v5638 = vmul.f32 %v5622, %v5622
        %v5639 = vmul.f32 %v5623, %v5623
        %v5640 = vmul.f32 %v5624, %v5624
        %v5641 = vmul.f32 %v5625, %v5625
        %v5642 = vmul.f32 %v5626, %v5626
        %v5643 = vmul.f32 %v5627, %v5627
        %v5644 = vsel %vm1417, %v5628, 0.0
        %5645 = vadd.xlane.f32.xlu0 %v5644
        %v5646 = vpop.xlane.xlu0 %5645
        %v5647 = vsel %vm1417, %v5629, 0.0
        %5648 = vadd.xlane.f32.xlu0 %v5647
        %v5649 = vpop.xlane.xlu0 %5648
        %v5650 = vsel %vm1417, %v5630, 0.0
        %5651 = vadd.xlane.f32.xlu0 %v5650
        %v5652 = vpop.xlane.xlu0 %5651
        %v5653 = vsel %vm1417, %v5631, 0.0
        %5654 = vadd.xlane.f32.xlu0 %v5653
        %v5655 = vpop.xlane.xlu0 %5654
        %v5656 = vsel %vm1417, %v5632, 0.0
        %5657 = vadd.xlane.f32.xlu0 %v5656
        %v5658 = vpop.xlane.xlu0 %5657
        %v5659 = vsel %vm1417, %v5633, 0.0
        %5660 = vadd.xlane.f32.xlu0 %v5659
        %v5661 = vpop.xlane.xlu0 %5660
        %v5662 = vsel %vm1417, %v5634, 0.0
        %5663 = vadd.xlane.f32.xlu0 %v5662
        %v5664 = vpop.xlane.xlu0 %5663
        %v5665 = vsel %vm1417, %v5635, 0.0
        %5666 = vadd.xlane.f32.xlu0 %v5665
        %v5667 = vpop.xlane.xlu0 %5666
        %v5668 = vsel %vm1417, %v5636, 0.0
        %5669 = vadd.xlane.f32.xlu0 %v5668
        %v5670 = vpop.xlane.xlu0 %5669
        %v5671 = vsel %vm1417, %v5637, 0.0
        %5672 = vadd.xlane.f32.xlu0 %v5671
        %v5673 = vpop.xlane.xlu0 %5672
        %v5674 = vsel %vm1417, %v5638, 0.0
        %5675 = vadd.xlane.f32.xlu0 %v5674
        %v5676 = vpop.xlane.xlu0 %5675
        %v5677 = vsel %vm1417, %v5639, 0.0
        %5678 = vadd.xlane.f32.xlu0 %v5677
        %v5679 = vpop.xlane.xlu0 %5678
        %v5680 = vsel %vm1417, %v5640, 0.0
        %5681 = vadd.xlane.f32.xlu0 %v5680
        %v5682 = vpop.xlane.xlu0 %5681
        %v5683 = vsel %vm1417, %v5641, 0.0
        %5684 = vadd.xlane.f32.xlu0 %v5683
        %v5685 = vpop.xlane.xlu0 %5684
        %v5686 = vsel %vm1417, %v5642, 0.0
        %5687 = vadd.xlane.f32.xlu0 %v5686
        %v5688 = vpop.xlane.xlu0 %5687
        %v5689 = vsel %vm1417, %v5643, 0.0
        %5690 = vadd.xlane.f32.xlu0 %v5689
        %v5691 = vpop.xlane.xlu0 %5690
        %v5692 = vmul.f32 %v5646, %v1628
        %v5693 = vmul.f32 %v5649, %v1628
        %v5694 = vmul.f32 %v5652, %v1628
        %v5695 = vmul.f32 %v5655, %v1628
        %v5696 = vmul.f32 %v5658, %v1628
        %v5697 = vmul.f32 %v5661, %v1628
        %v5698 = vmul.f32 %v5664, %v1628
        %v5699 = vmul.f32 %v5667, %v1628
        %v5700 = vmul.f32 %v5670, %v1628
        %v5701 = vmul.f32 %v5673, %v1628
        %v5702 = vmul.f32 %v5676, %v1628
        %v5703 = vmul.f32 %v5679, %v1628
        %v5704 = vmul.f32 %v5682, %v1628
        %v5705 = vmul.f32 %v5685, %v1628
        %v5706 = vmul.f32 %v5688, %v1628
        %v5707 = vmul.f32 %v5691, %v1628
        %v5708 = vadd.f32 %v5692, 1e-05
        %v5709 = vadd.f32 %v5693, 1e-05
        %v5710 = vadd.f32 %v5694, 1e-05
        %v5711 = vadd.f32 %v5695, 1e-05
        %v5712 = vadd.f32 %v5696, 1e-05
        %v5713 = vadd.f32 %v5697, 1e-05
        %v5714 = vadd.f32 %v5698, 1e-05
        %v5715 = vadd.f32 %v5699, 1e-05
        %v5716 = vadd.f32 %v5700, 1e-05
        %v5717 = vadd.f32 %v5701, 1e-05
        %v5718 = vadd.f32 %v5702, 1e-05
        %v5719 = vadd.f32 %v5703, 1e-05
        %v5720 = vadd.f32 %v5704, 1e-05
        %v5721 = vadd.f32 %v5705, 1e-05
        %v5722 = vadd.f32 %v5706, 1e-05
        %v5723 = vadd.f32 %v5707, 1e-05
        %v5724 = vrsqrt.pop %v5708
        %v5725 = vrsqrt.pop %v5709
        %v5726 = vrsqrt.pop %v5710
        %v5727 = vrsqrt.pop %v5711
        %v5728 = vrsqrt.pop %v5712
        %v5729 = vrsqrt.pop %v5713
        %v5730 = vrsqrt.pop %v5714
        %v5731 = vrsqrt.pop %v5715
        %v5732 = vrsqrt.pop %v5716
        %v5733 = vrsqrt.pop %v5717
        %v5734 = vrsqrt.pop %v5718
        %v5735 = vrsqrt.pop %v5719
        %v5736 = vrsqrt.pop %v5720
        %v5737 = vrsqrt.pop %v5721
        %v5738 = vrsqrt.pop %v5722
        %v5739 = vrsqrt.pop %v5723
        %v5740 = vmul.f32 %v5612, %v5724
        %v5741 = vmul.f32 %v5613, %v5725
        %v5742 = vmul.f32 %v5614, %v5726
        %v5743 = vmul.f32 %v5615, %v5727
        %v5744 = vmul.f32 %v5616, %v5728
        %v5745 = vmul.f32 %v5617, %v5729
        %v5746 = vmul.f32 %v5618, %v5730
        %v5747 = vmul.f32 %v5619, %v5731
        %v5748 = vmul.f32 %v5620, %v5732
        %v5749 = vmul.f32 %v5621, %v5733
        %v5750 = vmul.f32 %v5622, %v5734
        %v5751 = vmul.f32 %v5623, %v5735
        %v5752 = vmul.f32 %v5624, %v5736
        %v5753 = vmul.f32 %v5625, %v5737
        %v5754 = vmul.f32 %v5626, %v5738
        %v5755 = vmul.f32 %v5627, %v5739
        %v5757 = vlaneseq
        %v5758 = vshrl.u32 %v5757, 7
        %v5759 = vsub.s32 0, %v5758
        %v5760 = vrot.slane %v5545, %v5759
        %v5762 = vmul.f32 %v5740, %v5760
        %v5763 = vmul.f32 %v5741, %v5760
        %v5764 = vmul.f32 %v5742, %v5760
        %v5765 = vmul.f32 %v5743, %v5760
        %v5766 = vmul.f32 %v5744, %v5760
        %v5767 = vmul.f32 %v5745, %v5760
        %v5768 = vmul.f32 %v5746, %v5760
        %v5769 = vmul.f32 %v5747, %v5760
        %v5770 = vmul.f32 %v5748, %v5760
        %v5771 = vmul.f32 %v5749, %v5760
        %v5772 = vmul.f32 %v5750, %v5760
        %v5773 = vmul.f32 %v5751, %v5760
        %v5774 = vmul.f32 %v5752, %v5760
        %v5775 = vmul.f32 %v5753, %v5760
        %v5776 = vmul.f32 %v5754, %v5760
        %v5777 = vmul.f32 %v5755, %v5760
        %v5779 = vlaneseq
        %v5780 = vshrl.u32 %v5779, 7
        %v5781 = vsub.s32 0, %v5780
        %v5782 = vrot.slane %v5547, %v5781
        %v5784 = vadd.f32 %v5762, %v5782
        %v5785 = vadd.f32 %v5763, %v5782
        %v5786 = vadd.f32 %v5764, %v5782
        %v5787 = vadd.f32 %v5765, %v5782
        %v5788 = vadd.f32 %v5766, %v5782
        %v5789 = vadd.f32 %v5767, %v5782
        %v5790 = vadd.f32 %v5768, %v5782
        %v5791 = vadd.f32 %v5769, %v5782
        %v5792 = vadd.f32 %v5770, %v5782
        %v5793 = vadd.f32 %v5771, %v5782
        %v5794 = vadd.f32 %v5772, %v5782
        %v5795 = vadd.f32 %v5773, %v5782
        %v5796 = vadd.f32 %v5774, %v5782
        %v5797 = vadd.f32 %v5775, %v5782
        %v5798 = vadd.f32 %v5776, %v5782
        %v5799 = vadd.f32 %v5777, %v5782
        %v5800 = vld [vmem:[#allocation45] sm:$0x1]
        %v5801 = vpack.c.bf16 %v5785, %v5784
        %v5802 = vpack.c.bf16 %v5787, %v5786
        %v5803 = vpack.c.bf16 %v5789, %v5788
        %v5804 = vpack.c.bf16 %v5791, %v5790
        %v5805 = vpack.c.bf16 %v5793, %v5792
        %v5806 = vpack.c.bf16 %v5795, %v5794
        %v5807 = vpack.c.bf16 %v5797, %v5796
        %v5808 = vpack.c.bf16 %v5799, %v5798
        %v5809 = vld [vmem:[#allocation3] sm:$0x1]
        %5811 = vset.pattern.permute.xlu0 0
        %5812 = vperm.xlu0 %5811, %v5809
        %v5813 = vpop.permute.xlu0 %5812
        %v5815 = vlaneseq
        %v5816 = vshrl.u32 %v5815, 7
        %v5817 = vsub.s32 0, %v5816
        %v5818 = vrot.slane %v5813, %v5817
        %v5820 = vsel %vm1417, %v5800, 0
        %v5823 = vsel %vm1417, %v5801, 0
        %v5826 = vsel %vm1417, %v5802, 0
        %v5829 = vsel %vm1417, %v5803, 0
        %v5832 = vsel %vm1417, %v5804, 0
        %v5835 = vsel %vm1417, %v5805, 0
        %v5838 = vsel %vm1417, %v5806, 0
        %v5841 = vsel %vm1417, %v5807, 0
        %v5844 = vsel %vm1417, %v5808, 0
        %5846 = vmatprep.subr.bf16.mxu0 0
        %5847 = vmatpush1.bf16.xpose.msra.mxu0 %v5823
        %5848 = vmatprep.subr.bf16.mxu0 0
        %5849 = vmatpush1.bf16.xpose.msra.mxu0 %v5826
        %5850 = vmatprep.subr.bf16.mxu0 0
        %5851 = vmatpush1.bf16.xpose.msra.mxu0 %v5829
        %5852 = vmatprep.subr.bf16.mxu0 0
        %5853 = vmatpush1.bf16.xpose.msra.mxu0 %v5832
        %5854 = vmatprep.subr.bf16.mxu0 0
        %5855 = vmatpush1.bf16.xpose.msra.mxu0 %v5835
        %5856 = vmatprep.subr.bf16.mxu0 0
        %5857 = vmatpush1.bf16.xpose.msra.mxu0 %v5838
        %5858 = vmatprep.subr.bf16.mxu0 0
        %5859 = vmatpush1.bf16.xpose.msra.mxu0 %v5841
        %5860 = vmatprep.subr.bf16.mxu0 0
        %5861 = vmatpush1.bf16.xpose.msra.mxu0 %v5844
        %5862 = vmatprep.subr.bf16.mxu0 0
        %5863 = vmatpush1.bf16.xpose.msra.mxu0 0
        %5864 = vmatprep.subr.bf16.mxu0 0
        %5865 = vmatpush1.bf16.xpose.msra.mxu0 0
        %5866 = vmatprep.subr.bf16.mxu0 0
        %5867 = vmatpush1.bf16.xpose.msra.mxu0 0
        %5868 = vmatprep.subr.bf16.mxu0 0
        %5869 = vmatpush1.bf16.xpose.msra.mxu0 0
        %5870 = vmatprep.subr.bf16.mxu0 0
        %5871 = vmatpush1.bf16.xpose.msra.mxu0 0
        %5872 = vmatprep.subr.bf16.mxu0 0
        %5873 = vmatpush1.bf16.xpose.msra.mxu0 0
        %5874 = vmatprep.subr.bf16.mxu0 0
        %5875 = vmatpush1.bf16.xpose.msra.mxu0 0
        %5876 = vmatprep.subr.bf16.mxu0 0
        %5877 = vmatpush1.bf16.xpose.msra.mxu0 0
        %5878 = vmatprep.mubr.bf16.mxu0 0
        %5879 = vmatmul.mubr.bf16.gmra.mrb[0].mxu0 %v5820
        %v5880 = vpop.f32.mrb[0].mxu0
        %v5881 = vadd.f32 %v5818, %v5880
        %v5882 = vpop.f32.mrb[0].mxu0
        %v5883 = vpop.f32.mrb[0].mxu0
        %v5884 = vpop.f32.mrb[0].mxu0
        %5885 = vdwg.mxu0
        %5886 = vst [vmem:[%s1231] sm:$0x1] %v5881
        %s5887 = sand.u32 %s661, 1
        %s5888 = scalar_lea.sflag [#allocation6], %s5887
        %s5889 = sand.u32 %s661, 1
        %s5890 = scalar_lea.vmem [#allocation46], %s5889
        // Predicated region
        $region241: #{generator_forward.1} parent=131 // pred_check
          %p5891 = pneg %p671
        $region242: #{generator_forward.1} parent=131 // pred_check_branch
          %5893 = sbr.rel (%p5891) target = $region244
        $region243: #{generator_forward.1} parent=131 // pred_region
          %s5895 = ssub.s32 16, 16
          %5896 = vsyncadd %s5888, %s5895
          %s5897 = smul.addr %s60, 16
          %s5898 = scalar_lea.hbm %s28, %s5897
          %s5900 = sshll.u32 %s5890, 4
          %s5901 = int_to_ptr.vmem [resolvable:$true] %s5900
          %5903 = dma.vmem_to_hbm [thread:$0]  %s5901, 16, %s5898, %s5888
        $region244: #{generator_forward.1} parent=131 // pred_fallthru
          _
      $region132: #{generator_forward.1} parent=5 // pred_fallthru
        _
      %p5904 = scmp.le.s32.totalorder 2, %s55
      // Predicated region
      $region245: #{generator_forward.1} parent=5 // pred_check
        %p5905 = pneg %p5904
      $region246: #{generator_forward.1} parent=5 // pred_check_branch
        %5907 = sbr.rel (%p5905) target = $region248
      $region247: #{generator_forward.1} parent=5 // pred_region
        %s5908 = ssub.s32 %s55, 2
        // Predicated region
        $region249: #{generator_forward.1} parent=247 // pred_check
          %p5909 = pneg %p677
        $region250: #{generator_forward.1} parent=247 // pred_check_branch
          %5911 = sbr.rel (%p5909) target = $region252
        $region251: #{generator_forward.1} parent=247 // pred_region
          %s5912 = sand.u32 %s662, 1
          %s5913 = scalar_lea.sflag [#allocation6], %s5912
          %s5914 = sand.u32 %s662, 1
          %s5915 = scalar_lea.vmem [#allocation46], %s5914
          %5916 = dma.done %s5913, 16
        $region252: #{generator_forward.1} parent=247 // pred_fallthru
          _
      $region248: #{generator_forward.1} parent=5 // pred_fallthru
        _
    $region6: #{generator_forward.1} parent=1 // loop_footer
      %s59 = sadd.s32 1, %s55
    $region7: #{generator_forward.1} parent=1 // loop_footer_branch
      %54 = sbr.rel target = $region3
    $region8: #{generator_forward.1} parent=1 // loop_exit
      _
    %5917 = vsyncpa [#allocation5], 1
    %s5918 = scalar_lea.sflag [#allocation5], 1
    %5919 = vsyncpa %s5918, 1
    %5920 = vsyncpa [#allocation8], 1
    %5921 = vsyncpa [#allocation11], 1
    %5922 = vsyncpa [#allocation14], 1
    %5923 = vsyncpa [#allocation17], 1
    %5924 = vsyncpa [#allocation20], 1
    %5925 = vsyncpa [#allocation23], 1
    %5926 = vsyncpa [#allocation26], 1
    %5927 = vsyncpa [#allocation29], 1
    %5928 = vsyncpa [#allocation32], 1
    %5929 = vsyncpa [#allocation35], 1
    %5930 = vsyncpa [#allocation38], 1
    %5931 = vsyncpa [#allocation41], 1
    %5932 = vsyncpa [#allocation44], 1
    %5933 = vsyncpa [#allocation6], 1
    %s5934 = scalar_lea.sflag [#allocation6], 1
    %5935 = vsyncpa %s5934, 1

</llo_original>
